<compile_context>
chip_gen: v7x
topology: tpu7x:2x2x1
jax: 0.10.0
libtpu: 0.0.40
codegen_flags: <defaults>
</compile_context>

<pallas_src>
import math
from functools import partial

import numpy as np

import jax
import jax.numpy as jnp
from jax import lax
from jax.experimental import pallas as pl
from jax.experimental.pallas import tpu as pltpu

LANE = 128      # TPU lane width; hidden zero-padded to a multiple of this
SUBLANE = 8     # sublane tile; gather loops are blocked to this many rows
VMEM_LIMIT = 64 * 1024 * 1024


def _round_up(x, m):
    return ((x + m - 1) // m) * m


def _pad2(x, rows, cols):
    r, c = x.shape
    return jnp.pad(x, ((0, rows - r), (0, cols - c)))


def _pad1(x, n):
    return jnp.pad(x, (0, n - x.shape[0]))


# ----------------------------------------------------------------------------
# Kernel 1: fused CMPNN message passing (whole depth loop, VMEM-resident state)
# ----------------------------------------------------------------------------
def _mp_kernel(a2b_ref, b2a_ref, b2revb_ref,             # scalar prefetch (SMEM)
               fa_ref, fb_ref, wia_ref, wib_ref, wh_ref,
               wl1_ref, wl2_ref, wl3_ref, gbias_ref,     # VMEM inputs
               node_ref, gmsg_ref,                       # outputs
               ia_scr, ib_scr, ma_scr, mb_scr, m_scr, agg_scr,  # VMEM scratch
               *, depth, na, nb, max_nb):
    f32 = jnp.float32
    bf16 = jnp.bfloat16

    # input_atom = relu(f_atoms @ W_i_atom); input_bond = relu(f_bonds @ W_i_bond)
    ia_scr[...] = jnp.maximum(
        jnp.dot(fa_ref[...], wia_ref[...], preferred_element_type=f32), 0.0)
    ib_scr[...] = jnp.maximum(
        jnp.dot(fb_ref[...], wib_ref[...], preferred_element_type=f32), 0.0)
    ma_scr[...] = ia_scr[...]
    mb_scr[...] = ib_scr[...]

    def neighbor_sum_times_max():
        # agg[a] = (sum_j mb[a2b[a, j]]) * (max_j mb[a2b[a, j]])
        # 8-row sublane-blocked: 8*max_nb independent gathers in flight, one
        # dense (8, HP) store per block (instead of 8 masked vst).
        @pl.loop(0, na // SUBLANE)
        def _(blk):
            base = pl.multiple_of(blk * SUBLANE, SUBLANE)
            rows = []
            for r in range(SUBLANE):
                a = base + r
                v = mb_scr[pl.ds(a2b_ref[a * max_nb + 0], 1), :]
                s, mx = v, v
                for j in range(1, max_nb):
                    v = mb_scr[pl.ds(a2b_ref[a * max_nb + j], 1), :]
                    s = s + v
                    mx = jnp.maximum(mx, v)
                rows.append(s * mx)
            agg_scr[pl.ds(base, SUBLANE), :] = jnp.concatenate(rows, axis=0)

    for d in range(depth - 1):
        neighbor_sum_times_max()
        ma_scr[...] = ma_scr[...] + agg_scr[...]

        # m = message_atom[b2a] - message_bond[b2revb]   (8-row blocked gathers)
        @pl.loop(0, nb // SUBLANE)
        def _(blk):
            base = pl.multiple_of(blk * SUBLANE, SUBLANE)
            rows = []
            for r in range(SUBLANE):
                b = base + r
                rows.append(ma_scr[pl.ds(b2a_ref[b], 1), :]
                            - mb_scr[pl.ds(b2revb_ref[b], 1), :])
            m_scr[pl.ds(base, SUBLANE), :] = jnp.concatenate(rows, axis=0)

        # message_bond = relu(input_bond + m @ W_h[d]); dropout = identity (eval)
        mb_scr[...] = jnp.maximum(
            ib_scr[...] + jnp.dot(m_scr[...].astype(bf16), wh_ref[d],
                                  preferred_element_type=f32), 0.0)

    neighbor_sum_times_max()

    # lr(concat([agg, message_atom, input_atom])) == sum of three matmuls
    # TODO(synk): on v5e/v6e a single K-concat (NA,3HP)@(3HP,HP) matmul would
    #             accumulate inside the MXU instead of two VPU adds.
    node = (jnp.dot(agg_scr[...].astype(bf16), wl1_ref[...], preferred_element_type=f32)
            + jnp.dot(ma_scr[...].astype(bf16), wl2_ref[...], preferred_element_type=f32)
            + jnp.dot(ia_scr[...].astype(bf16), wl3_ref[...], preferred_element_type=f32))
    node_ref[...] = node
    # BatchGRU preamble fused here: message = relu(node + gru_bias)
    gmsg_ref[...] = jnp.maximum(node + gbias_ref[...], 0.0)


# ----------------------------------------------------------------------------
# Kernel 2: bidirectional GRU — hoisted input projection, separate directions
# ----------------------------------------------------------------------------
def _bigru_kernel(xf_ref, xb_ref, h0_ref,
                  wif_ref, wib_ref, bif_ref, bib_ref,
                  whf_ref, whb_ref, bhf_ref, bhb_ref,
                  of_ref, ob_ref,
                  gif_scr, gib_scr,
                  *, t_len, bp, hp, unroll):
    f32 = jnp.float32
    bf16 = jnp.bfloat16

    # Hoisted input projections: one big matmul per direction, outside the loop
    gif_scr[...] = (jnp.dot(xf_ref[...], wif_ref[...],
                            preferred_element_type=f32) + bif_ref[...])
    gib_scr[...] = (jnp.dot(xb_ref[...], wib_ref[...],
                            preferred_element_type=f32) + bib_ref[...])

    whf = whf_ref[...]
    whb = whb_ref[...]
    bhf = bhf_ref[...]
    bhb = bhb_ref[...]

    def gru_gates(gi, gh, h):
        r = jax.nn.sigmoid(gi[:, :hp] + gh[:, :hp])
        z = jax.nn.sigmoid(gi[:, hp:2 * hp] + gh[:, hp:2 * hp])
        n = jnp.tanh(gi[:, 2 * hp:] + r * gh[:, 2 * hp:])
        return (1.0 - z) * n + z * h

    def step(t, carry):
        h_f, h_b = carry
        base = pl.multiple_of(t * bp, bp)
        # two small (BP,HP)@(HP,3HP) matmuls — no discarded half, no concat
        gh_f = jnp.dot(h_f.astype(bf16), whf, preferred_element_type=f32) + bhf
        gh_b = jnp.dot(h_b.astype(bf16), whb, preferred_element_type=f32) + bhb
        h_f = gru_gates(gif_scr[pl.ds(base, bp), :], gh_f, h_f)
        h_b = gru_gates(gib_scr[pl.ds(base, bp), :], gh_b, h_b)
        of_ref[pl.ds(base, bp), :] = h_f
        ob_ref[pl.ds(base, bp), :] = h_b
        return (h_f, h_b)

    # both directions share the same initial hidden (PyTorch h0.repeat(2,1,1))
    h0 = h0_ref[...]
    lax.fori_loop(0, t_len, step, (h0, h0), unroll=unroll)


# ----------------------------------------------------------------------------
# Kernel 3: W_o + ReLU + per-molecule mean pooling, row-tiled with resident
#           (MOLP, HP) accumulator output across the "arbitrary" row-tile axis
# ----------------------------------------------------------------------------
def _readout_kernel(x_ref, wo_ref, bo_ref, pool_ref, mol_ref):
    @pl.when(pl.program_id(0) == 0)
    def _():
        mol_ref[...] = jnp.zeros_like(mol_ref)
    hid = jnp.maximum(
        jnp.dot(x_ref[...], wo_ref[...], preferred_element_type=jnp.float32)
        + bo_ref[...], 0.0)
    mol_ref[...] += jnp.dot(pool_ref[...], hid, preferred_element_type=jnp.float32)


# ----------------------------------------------------------------------------
# MPNEncoder forward
# ----------------------------------------------------------------------------
def _mpn_forward(params, f_atoms, f_bonds, a2b, b2a, b2revb, a_scope, depth):
    hidden = params['W_o_b'].shape[0]
    HP = _round_up(hidden, LANE)
    n_atoms, atom_fdim = f_atoms.shape
    n_bonds, bond_fdim = f_bonds.shape
    max_nb = a2b.shape[1]

    NA = _round_up(n_atoms, SUBLANE)
    NB = _round_up(n_bonds, SUBLANE)
    AFP = _round_up(atom_fdim, LANE)
    BFP = _round_up(bond_fdim, LANE)

    bf16 = jnp.bfloat16

    # ---- lane-dense zero padding (pad rows/cols stay zero throughout) -------
    fa_p = _pad2(f_atoms.astype(jnp.float32), NA, AFP).astype(bf16)
    fb_p = _pad2(f_bonds.astype(jnp.float32), NB, BFP).astype(bf16)
    # a2b flattened to 1-D for SMEM (avoids 2-D SMEM lane padding)
    a2b_flat = jnp.zeros((NA * max_nb,), jnp.int32).at[:n_atoms * max_nb].set(
        a2b.astype(jnp.int32).reshape(-1))
    b2a_p = jnp.zeros((NB,), jnp.int32).at[:n_bonds].set(b2a.astype(jnp.int32))
    b2revb_p = jnp.zeros((NB,), jnp.int32).at[:n_bonds].set(b2revb.astype(jnp.int32))

    wia = _pad2(params['W_i_atom'], AFP, HP).astype(bf16)
    wib = _pad2(params['W_i_bond'], BFP, HP).astype(bf16)
    wh = jnp.stack([_pad2(w, HP, HP) for w in params['W_h']], axis=0).astype(bf16)
    lr_w = params['lr']
    wl1 = _pad2(lr_w[0 * hidden:1 * hidden], HP, HP).astype(bf16)
    wl2 = _pad2(lr_w[1 * hidden:2 * hidden], HP, HP).astype(bf16)
    wl3 = _pad2(lr_w[2 * hidden:3 * hidden], HP, HP).astype(bf16)
    gbias = _pad1(params['gru_bias'], HP).reshape(1, HP)

    node, gmsg = pl.pallas_call(
        partial(_mp_kernel, depth=depth, na=NA, nb=NB, max_nb=max_nb),
        out_shape=(jax.ShapeDtypeStruct((NA, HP), jnp.float32),
                   jax.ShapeDtypeStruct((NA, HP), jnp.float32)),
        grid_spec=pltpu.PrefetchScalarGridSpec(
            num_scalar_prefetch=3,
            grid=(1,),
            in_specs=[
                pl.BlockSpec((NA, AFP), lambda i, *_: (0, 0)),
                pl.BlockSpec((NB, BFP), lambda i, *_: (0, 0)),
                pl.BlockSpec((AFP, HP), lambda i, *_: (0, 0)),
                pl.BlockSpec((BFP, HP), lambda i, *_: (0, 0)),
                pl.BlockSpec((depth - 1, HP, HP), lambda i, *_: (0, 0, 0)),
                pl.BlockSpec((HP, HP), lambda i, *_: (0, 0)),
                pl.BlockSpec((HP, HP), lambda i, *_: (0, 0)),
                pl.BlockSpec((HP, HP), lambda i, *_: (0, 0)),
                pl.BlockSpec((1, HP), lambda i, *_: (0, 0)),
            ],
            out_specs=(pl.BlockSpec((NA, HP), lambda i, *_: (0, 0)),
                       pl.BlockSpec((NA, HP), lambda i, *_: (0, 0))),
            scratch_shapes=[
                pltpu.VMEM((NA, HP), jnp.float32),   # input_atom
                pltpu.VMEM((NB, HP), jnp.float32),   # input_bond
                pltpu.VMEM((NA, HP), jnp.float32),   # message_atom
                pltpu.VMEM((NB, HP), jnp.float32),   # message_bond
                pltpu.VMEM((NB, HP), jnp.float32),   # bond message temp
                pltpu.VMEM((NA, HP), jnp.float32),   # neighbor agg
            ]),
        compiler_params=pltpu.CompilerParams(
            dimension_semantics=("arbitrary",), vmem_limit_bytes=VMEM_LIMIT),
    )(a2b_flat, b2a_p, b2revb_p, fa_p, fb_p, wia, wib, wh, wl1, wl2, wl3, gbias)

    # ---- BatchGRU: vectorised pack driven by static a_scope (trace-time numpy)
    starts = np.asarray([s for s, _ in a_scope], dtype=np.int32)
    sizes = np.asarray([z for _, z in a_scope], dtype=np.int32)
    n_mols = len(a_scope)
    T = int(sizes.max())
    BP = _round_up(n_mols, SUBLANE)

    t_idx = np.arange(T, dtype=np.int32)
    valid = t_idx[None, :] < sizes[:, None]                       # (n_mols, T)
    seq_idx = np.where(valid, starts[:, None] + t_idx[None, :], 0)
    seq_idx_p = np.zeros((BP, T), np.int32); seq_idx_p[:n_mols] = seq_idx
    valid_p = np.zeros((BP, T), bool); valid_p[:n_mols] = valid
    valid_f = jnp.asarray(valid_p[..., None].astype(np.float32))

    node_seq = node[seq_idx_p]                                    # (BP, T, HP)
    msg_seq = gmsg[seq_idx_p] * valid_f                           # ZeroPad2d equiv
    h0 = jnp.max(jnp.where(jnp.asarray(valid_p)[..., None], node_seq, -jnp.inf), axis=1)
    h0 = jnp.where(jnp.asarray(valid_p.any(axis=1))[:, None], h0, 0.0)   # (BP, HP)

    xf = msg_seq.transpose(1, 0, 2).reshape(T * BP, HP).astype(bf16)        # fwd
    xb = msg_seq[:, ::-1, :].transpose(1, 0, 2).reshape(T * BP, HP).astype(bf16)

    (w_ih_f, w_hh_f, b_ih_f, b_hh_f, w_ih_b, w_hh_b, b_ih_b, b_hh_b) = params['gru']

    def pad_gate_w(w):   # (hidden, 3*hidden) -> (HP, 3*HP), lane-aligned gates
        return jnp.concatenate(
            [_pad2(w[:, g * hidden:(g + 1) * hidden], HP, HP) for g in range(3)], axis=1)

    def pad_gate_b(b):   # (3*hidden,) -> (1, 3*HP)
        return jnp.concatenate(
            [_pad1(b[g * hidden:(g + 1) * hidden], HP) for g in range(3)]).reshape(1, 3 * HP)

    wif_p = pad_gate_w(w_ih_f).astype(bf16)
    wib_p = pad_gate_w(w_ih_b).astype(bf16)
    whf_p = pad_gate_w(w_hh_f).astype(bf16)
    whb_p = pad_gate_w(w_hh_b).astype(bf16)
    bif_p = pad_gate_b(b_ih_f)
    bib_p = pad_gate_b(b_ih_b)
    bhf_p = pad_gate_b(b_hh_f)
    bhb_p = pad_gate_b(b_hh_b)

    spec2 = lambda shape: pl.BlockSpec(shape, lambda i: (0, 0))

    out_f, out_b = pl.pallas_call(
        partial(_bigru_kernel, t_len=T, bp=BP, hp=HP, unroll=min(8, T)),
        out_shape=(jax.ShapeDtypeStruct((T * BP, HP), jnp.float32),
                   jax.ShapeDtypeStruct((T * BP, HP), jnp.float32)),
        grid=(1,),
        in_specs=[
            spec2((T * BP, HP)), spec2((T * BP, HP)), spec2((BP, HP)),
            spec2((HP, 3 * HP)), spec2((HP, 3 * HP)),
            spec2((1, 3 * HP)), spec2((1, 3 * HP)),
            spec2((HP, 3 * HP)), spec2((HP, 3 * HP)),
            spec2((1, 3 * HP)), spec2((1, 3 * HP)),
        ],
        out_specs=(spec2((T * BP, HP)), spec2((T * BP, HP))),
        scratch_shapes=[pltpu.VMEM((T * BP, 3 * HP), jnp.float32),
                        pltpu.VMEM((T * BP, 3 * HP), jnp.float32)],
        compiler_params=pltpu.CompilerParams(
            dimension_semantics=("arbitrary",), vmem_limit_bytes=VMEM_LIMIT),
    )(xf, xb, h0, wif_p, wib_p, bif_p, bib_p, whf_p, whb_p, bhf_p, bhb_p)

    # ---- unpad GRU output back to per-atom rows (vectorised gather) ----
    of_bt = out_f.reshape(T, BP, HP).transpose(1, 0, 2)               # (BP, T, HP)
    ob_bt = out_b.reshape(T, BP, HP)[::-1].transpose(1, 0, 2)         # bwd at orig t
    gru_out = jnp.concatenate([of_bt, ob_bt], axis=-1)                # (BP, T, 2*HP)

    mol_of = np.concatenate([np.full(int(sz), i, np.int32) for i, sz in enumerate(sizes)])
    pos_of = np.concatenate([np.arange(int(sz), dtype=np.int32) for sz in sizes])
    unpad = gru_out[mol_of, pos_of]                                   # (sum(sizes), 2*HP)
    row0 = jnp.concatenate([gmsg[0], gmsg[0]], axis=0)[None, :]       # (1, 2*HP)
    agg_rows = jnp.concatenate([row0, unpad], axis=0)                 # (n_atoms, 2*HP)

    n_rows = agg_rows.shape[0]
    if n_rows <= 512:                      # one tile covers everything
        NR = _round_up(n_rows, SUBLANE)
        TR = NR
    else:                                  # row-tiled readout for big graphs
        TR = 512
        NR = _round_up(n_rows, TR)
    agg_rows = jnp.pad(agg_rows, ((0, NR - n_rows), (0, 0))).astype(bf16)

    # ---- W_o + ReLU + segment-mean pooling ----
    wo = params['W_o']
    wo_p = jnp.zeros((2 * HP, HP), jnp.float32)
    wo_p = wo_p.at[:hidden, :hidden].set(wo[:hidden])
    wo_p = wo_p.at[HP:HP + hidden, :hidden].set(wo[hidden:])
    wo_p = wo_p.astype(bf16)
    bo_p = _pad1(params['W_o_b'], HP).reshape(1, HP)

    MOLP = _round_up(n_mols, SUBLANE)
    atom_r = np.arange(NR, dtype=np.int32)
    pmask = ((atom_r[None, :] >= starts[:, None])
             & (atom_r[None, :] < (starts + sizes)[:, None])).astype(np.float32)
    pool = np.zeros((MOLP, NR), np.float32)
    pool[:n_mols] = pmask / sizes[:, None].astype(np.float32)
    pool = jnp.asarray(pool)

    mol_p = pl.pallas_call(
        _readout_kernel,
        out_shape=jax.ShapeDtypeStruct((MOLP, HP), jnp.float32),
        grid=(NR // TR,),
        in_specs=[pl.BlockSpec((TR, 2 * HP), lambda i: (i, 0)),
                  pl.BlockSpec((2 * HP, HP), lambda i: (0, 0)),
                  pl.BlockSpec((1, HP), lambda i: (0, 0)),
                  pl.BlockSpec((MOLP, TR), lambda i: (0, i))],
        out_specs=pl.BlockSpec((MOLP, HP), lambda i: (0, 0)),
        compiler_params=pltpu.CompilerParams(
            dimension_semantics=("arbitrary",), vmem_limit_bytes=VMEM_LIMIT),
    )(agg_rows, wo_p, bo_p, pool)

    return mol_p[:n_mols, :hidden]


mpn_encoder_forward = jax.jit(_mpn_forward, static_argnames=("a_scope", "depth"))


# ----------------------------------------------------------------------------
# Deterministic synthetic parameters + graph
# ----------------------------------------------------------------------------
def init_params(key, atom_fdim, bond_fdim, hidden, depth):
    def uni(k, shape, fan_in):
        s = 1.0 / math.sqrt(fan_in)
        return jax.random.uniform(k, shape, jnp.float32, -s, s)

    keys = iter(jax.random.split(key, 32))
    return {
        'W_i_atom': uni(next(keys), (atom_fdim, hidden), atom_fdim),
        'W_i_bond': uni(next(keys), (bond_fdim, hidden), bond_fdim),
        'W_h': [uni(next(keys), (hidden, hidden), hidden) for _ in range(depth - 1)],
        'lr': uni(next(keys), (3 * hidden, hidden), 3 * hidden),
        'W_o': uni(next(keys), (2 * hidden, hidden), 2 * hidden),
        'W_o_b': uni(next(keys), (hidden,), 2 * hidden),
        'gru_bias': uni(next(keys), (hidden,), hidden),
        'gru': tuple(
            uni(next(keys), shape, hidden)
            for shape in [(hidden, 3 * hidden), (hidden, 3 * hidden),
                          (3 * hidden,), (3 * hidden,),
                          (hidden, 3 * hidden), (hidden, 3 * hidden),
                          (3 * hidden,), (3 * hidden,)]
        ),
    }


if __name__ == "__main__":
    hidden_size = 32
    atom_fdim = 16
    bond_fdim = 24
    depth = 3

    key = jax.random.PRNGKey(0)
    k_par, k_atom, k_bond = jax.random.split(key, 3)
    params = init_params(k_par, atom_fdim, bond_fdim, hidden_size, depth)

    # synthetic 2-molecule batch (row / bond 0 are the chemprop zero-padding rows)
    n_atoms, n_bonds = 9, 15
    f_atoms = jax.random.normal(k_atom, (n_atoms, atom_fdim), jnp.float32)
    f_atoms = f_atoms.at[0].set(0.0)
    f_bonds = jax.random.normal(k_bond, (n_bonds, bond_fdim), jnp.float32)
    f_bonds = f_bonds.at[0].set(0.0)

    a2b = jnp.asarray([
        [0, 0, 0],
        [2, 10, 0],
        [1, 4, 0],
        [3, 6, 9],
        [5, 8, 0],
        [7, 0, 0],
        [12, 0, 0],
        [11, 14, 0],
        [13, 0, 0],
    ], dtype=jnp.int32)
    b2a = jnp.asarray([0, 1, 2, 2, 3, 3, 4, 4, 5, 1, 3, 6, 7, 7, 8], dtype=jnp.int32)
    b2revb = jnp.asarray([0, 2, 1, 4, 3, 6, 5, 8, 7, 10, 9, 12, 11, 14, 13],
                         dtype=jnp.int32)
    a_scope = ((1, 5), (6, 3))   # static python metadata (as in BatchMolGraph)

    mol_vecs = mpn_encoder_forward(params, f_atoms, f_bonds, a2b, b2a, b2revb,
                                   a_scope=a_scope, depth=depth)
    mol_vecs = jax.block_until_ready(mol_vecs)
    assert mol_vecs.shape == (len(a_scope), hidden_size)
    assert bool(jnp.all(jnp.isfinite(mol_vecs)))
    print("KERNEL_OK")
</pallas_src>

<mosaic_0001>
module attributes {stable_mosaic.version = 11 : i64} {
  func.func @_mp_kernel(%arg0: i32, %arg1: memref<48xi32, #tpu.memory_space<smem>>, %arg2: memref<16xi32, #tpu.memory_space<smem>>, %arg3: memref<16xi32, #tpu.memory_space<smem>>, %arg4: memref<16x128xbf16, #tpu.memory_space<vmem>>, %arg5: memref<16x128xbf16, #tpu.memory_space<vmem>>, %arg6: memref<128x128xbf16, #tpu.memory_space<vmem>>, %arg7: memref<128x128xbf16, #tpu.memory_space<vmem>>, %arg8: memref<2x128x128xbf16, #tpu.memory_space<vmem>>, %arg9: memref<128x128xbf16, #tpu.memory_space<vmem>>, %arg10: memref<128x128xbf16, #tpu.memory_space<vmem>>, %arg11: memref<128x128xbf16, #tpu.memory_space<vmem>>, %arg12: memref<1x128xf32, #tpu.memory_space<vmem>>, %arg13: memref<16x128xf32, #tpu.memory_space<vmem>>, %arg14: memref<16x128xf32, #tpu.memory_space<vmem>>, %arg15: memref<16x128xf32, #tpu.memory_space<vmem>>, %arg16: memref<16x128xf32, #tpu.memory_space<vmem>>, %arg17: memref<16x128xf32, #tpu.memory_space<vmem>>, %arg18: memref<16x128xf32, #tpu.memory_space<vmem>>, %arg19: memref<16x128xf32, #tpu.memory_space<vmem>>, %arg20: memref<16x128xf32, #tpu.memory_space<vmem>>) attributes {dimension_semantics = [#tpu.dimension_semantics<arbitrary>], iteration_bounds = array<i64: 1>, scalar_prefetch = 3 : i64, scratch_operands = 6 : i64, tpu.core_type = #tpu.core_type<tc>, window_params = [{pipeline_mode = #tpu.pipeline_mode<synchronous>, transform_indices = @transform_0, window_bounds = array<i64: 16, 128>}, {pipeline_mode = #tpu.pipeline_mode<synchronous>, transform_indices = @transform_1, window_bounds = array<i64: 16, 128>}, {pipeline_mode = #tpu.pipeline_mode<synchronous>, transform_indices = @transform_2, window_bounds = array<i64: 128, 128>}, {pipeline_mode = #tpu.pipeline_mode<synchronous>, transform_indices = @transform_3, window_bounds = array<i64: 128, 128>}, {pipeline_mode = #tpu.pipeline_mode<synchronous>, transform_indices = @transform_4, window_bounds = array<i64: 2, 128, 128>}, {pipeline_mode = #tpu.pipeline_mode<synchronous>, transform_indices = @transform_5, window_bounds = array<i64: 128, 128>}, {pipeline_mode = #tpu.pipeline_mode<synchronous>, transform_indices = @transform_6, window_bounds = array<i64: 128, 128>}, {pipeline_mode = #tpu.pipeline_mode<synchronous>, transform_indices = @transform_7, window_bounds = array<i64: 128, 128>}, {pipeline_mode = #tpu.pipeline_mode<synchronous>, transform_indices = @transform_8, window_bounds = array<i64: 1, 128>}, {pipeline_mode = #tpu.pipeline_mode<synchronous>, transform_indices = @transform_9, window_bounds = array<i64: 16, 128>}, {pipeline_mode = #tpu.pipeline_mode<synchronous>, transform_indices = @transform_10, window_bounds = array<i64: 16, 128>}]} {
    %c0 = arith.constant 0 : index
    %c0_0 = arith.constant 0 : index
    %0 = vector.load %arg4[%c0, %c0_0] : memref<16x128xbf16, #tpu.memory_space<vmem>>, vector<16x128xbf16>
    %c0_1 = arith.constant 0 : index
    %c0_2 = arith.constant 0 : index
    %1 = vector.load %arg6[%c0_1, %c0_2] : memref<128x128xbf16, #tpu.memory_space<vmem>>, vector<128x128xbf16>
    %cst = arith.constant dense<0.000000e+00> : vector<16x128xf32>
    %2 = tpu.matmul %0, %1, %cst {dimension_numbers = #tpu.dot_dimension_numbers<[1], [0], [0], [1], [0, 0, 1, 1], [], []>} : vector<16x128xbf16>, vector<128x128xbf16>, vector<16x128xf32> -> vector<16x128xf32>
    %cst_3 = arith.constant 0.000000e+00 : f32
    %3 = vector.broadcast %cst_3 : f32 to vector<16x128xf32>
    %4 = arith.maximumf %2, %3 : vector<16x128xf32>
    %c0_4 = arith.constant 0 : index
    %c0_5 = arith.constant 0 : index
    %5 = vector.load %arg15[%c0_4, %c0_5] : memref<16x128xf32, #tpu.memory_space<vmem>>, vector<16x128xf32>
    tpu.vector_store %arg15[%c0_4, %c0_5], %4 {strides = array<i32>} : memref<16x128xf32, #tpu.memory_space<vmem>>, vector<16x128xf32>,
    %c0_6 = arith.constant 0 : index
    %c0_7 = arith.constant 0 : index
    %6 = vector.load %arg5[%c0_6, %c0_7] : memref<16x128xbf16, #tpu.memory_space<vmem>>, vector<16x128xbf16>
    %c0_8 = arith.constant 0 : index
    %c0_9 = arith.constant 0 : index
    %7 = vector.load %arg7[%c0_8, %c0_9] : memref<128x128xbf16, #tpu.memory_space<vmem>>, vector<128x128xbf16>
    %cst_10 = arith.constant dense<0.000000e+00> : vector<16x128xf32>
    %8 = tpu.matmul %6, %7, %cst_10 {dimension_numbers = #tpu.dot_dimension_numbers<[1], [0], [0], [1], [0, 0, 1, 1], [], []>} : vector<16x128xbf16>, vector<128x128xbf16>, vector<16x128xf32> -> vector<16x128xf32>
    %cst_11 = arith.constant 0.000000e+00 : f32
    %9 = vector.broadcast %cst_11 : f32 to vector<16x128xf32>
    %10 = arith.maximumf %8, %9 : vector<16x128xf32>
    %c0_12 = arith.constant 0 : index
    %c0_13 = arith.constant 0 : index
    %11 = vector.load %arg16[%c0_12, %c0_13] : memref<16x128xf32, #tpu.memory_space<vmem>>, vector<16x128xf32>
    tpu.vector_store %arg16[%c0_12, %c0_13], %10 {strides = array<i32>} : memref<16x128xf32, #tpu.memory_space<vmem>>, vector<16x128xf32>,
    %c0_14 = arith.constant 0 : index
    %c0_15 = arith.constant 0 : index
    %12 = vector.load %arg15[%c0_14, %c0_15] : memref<16x128xf32, #tpu.memory_space<vmem>>, vector<16x128xf32>
    %c0_16 = arith.constant 0 : index
    %c0_17 = arith.constant 0 : index
    %13 = vector.load %arg17[%c0_16, %c0_17] : memref<16x128xf32, #tpu.memory_space<vmem>>, vector<16x128xf32>
    tpu.vector_store %arg17[%c0_16, %c0_17], %12 {strides = array<i32>} : memref<16x128xf32, #tpu.memory_space<vmem>>, vector<16x128xf32>,
    %c0_18 = arith.constant 0 : index
    %c0_19 = arith.constant 0 : index
    %14 = vector.load %arg16[%c0_18, %c0_19] : memref<16x128xf32, #tpu.memory_space<vmem>>, vector<16x128xf32>
    %c0_20 = arith.constant 0 : index
    %c0_21 = arith.constant 0 : index
    %15 = vector.load %arg18[%c0_20, %c0_21] : memref<16x128xf32, #tpu.memory_space<vmem>>, vector<16x128xf32>
    tpu.vector_store %arg18[%c0_20, %c0_21], %14 {strides = array<i32>} : memref<16x128xf32, #tpu.memory_space<vmem>>, vector<16x128xf32>,
    %c0_i32 = arith.constant 0 : i32
    %c2_i32 = arith.constant 2 : i32
    %16 = arith.addi %c0_i32, %c2_i32 : i32
    %c1_i32 = arith.constant 1 : i32
    scf.for %arg21 = %c0_i32 to %16 step %c1_i32  : i32 {
      %c1_i32_94 = arith.constant 1 : i32
      %70 = arith.muli %arg21, %c1_i32_94 : i32
      %c0_i32_95 = arith.constant 0 : i32
      %71 = arith.addi %c0_i32_95, %70 : i32
      %c8_i32 = arith.constant 8 : i32
      %72 = arith.muli %71, %c8_i32 : i32
      %73 = tpu.assume_multiple %72, 8 : i32
      %c0_i32_96 = arith.constant 0 : i32
      %74 = arith.addi %73, %c0_i32_96 : i32
      %c3_i32 = arith.constant 3 : i32
      %75 = arith.muli %74, %c3_i32 : i32
      %c0_i32_97 = arith.constant 0 : i32
      %76 = arith.addi %75, %c0_i32_97 : i32
      %77 = arith.index_cast %76 : i32 to index
      %78 = memref.load %arg1[%77] : memref<48xi32, #tpu.memory_space<smem>>
      %79 = arith.index_cast %78 : i32 to index
      %c0_98 = arith.constant 0 : index
      %80 = vector.load %arg18[%79, %c0_98] : memref<16x128xf32, #tpu.memory_space<vmem>>, vector<1x128xf32>
      %c3_i32_99 = arith.constant 3 : i32
      %81 = arith.muli %74, %c3_i32_99 : i32
      %c1_i32_100 = arith.constant 1 : i32
      %82 = arith.addi %81, %c1_i32_100 : i32
      %83 = arith.index_cast %82 : i32 to index
      %84 = memref.load %arg1[%83] : memref<48xi32, #tpu.memory_space<smem>>
      %85 = arith.index_cast %84 : i32 to index
      %c0_101 = arith.constant 0 : index
      %86 = vector.load %arg18[%85, %c0_101] : memref<16x128xf32, #tpu.memory_space<vmem>>, vector<1x128xf32>
      %87 = arith.addf %80, %86 : vector<1x128xf32>
      %88 = arith.maximumf %80, %86 : vector<1x128xf32>
      %c3_i32_102 = arith.constant 3 : i32
      %89 = arith.muli %74, %c3_i32_102 : i32
      %c2_i32_103 = arith.constant 2 : i32
      %90 = arith.addi %89, %c2_i32_103 : i32
      %91 = arith.index_cast %90 : i32 to index
      %92 = memref.load %arg1[%91] : memref<48xi32, #tpu.memory_space<smem>>
      %93 = arith.index_cast %92 : i32 to index
      %c0_104 = arith.constant 0 : index
      %94 = vector.load %arg18[%93, %c0_104] : memref<16x128xf32, #tpu.memory_space<vmem>>, vector<1x128xf32>
      %95 = arith.addf %87, %94 : vector<1x128xf32>
      %96 = arith.maximumf %88, %94 : vector<1x128xf32>
      %97 = arith.mulf %95, %96 : vector<1x128xf32>
      %c1_i32_105 = arith.constant 1 : i32
      %98 = arith.addi %73, %c1_i32_105 : i32
      %c3_i32_106 = arith.constant 3 : i32
      %99 = arith.muli %98, %c3_i32_106 : i32
      %c0_i32_107 = arith.constant 0 : i32
      %100 = arith.addi %99, %c0_i32_107 : i32
      %101 = arith.index_cast %100 : i32 to index
      %102 = memref.load %arg1[%101] : memref<48xi32, #tpu.memory_space<smem>>
      %103 = arith.index_cast %102 : i32 to index
      %c0_108 = arith.constant 0 : index
      %104 = vector.load %arg18[%103, %c0_108] : memref<16x128xf32, #tpu.memory_space<vmem>>, vector<1x128xf32>
      %c3_i32_109 = arith.constant 3 : i32
      %105 = arith.muli %98, %c3_i32_109 : i32
      %c1_i32_110 = arith.constant 1 : i32
      %106 = arith.addi %105, %c1_i32_110 : i32
      %107 = arith.index_cast %106 : i32 to index
      %108 = memref.load %arg1[%107] : memref<48xi32, #tpu.memory_space<smem>>
      %109 = arith.index_cast %108 : i32 to index
      %c0_111 = arith.constant 0 : index
      %110 = vector.load %arg18[%109, %c0_111] : memref<16x128xf32, #tpu.memory_space<vmem>>, vector<1x128xf32>
      %111 = arith.addf %104, %110 : vector<1x128xf32>
      %112 = arith.maximumf %104, %110 : vector<1x128xf32>
      %c3_i32_112 = arith.constant 3 : i32
      %113 = arith.muli %98, %c3_i32_112 : i32
      %c2_i32_113 = arith.constant 2 : i32
      %114 = arith.addi %113, %c2_i32_113 : i32
      %115 = arith.index_cast %114 : i32 to index
      %116 = memref.load %arg1[%115] : memref<48xi32, #tpu.memory_space<smem>>
      %117 = arith.index_cast %116 : i32 to index
      %c0_114 = arith.constant 0 : index
      %118 = vector.load %arg18[%117, %c0_114] : memref<16x128xf32, #tpu.memory_space<vmem>>, vector<1x128xf32>
      %119 = arith.addf %111, %118 : vector<1x128xf32>
      %120 = arith.maximumf %112, %118 : vector<1x128xf32>
      %121 = arith.mulf %119, %120 : vector<1x128xf32>
      %c2_i32_115 = arith.constant 2 : i32
      %122 = arith.addi %73, %c2_i32_115 : i32
      %c3_i32_116 = arith.constant 3 : i32
      %123 = arith.muli %122, %c3_i32_116 : i32
      %c0_i32_117 = arith.constant 0 : i32
      %124 = arith.addi %123, %c0_i32_117 : i32
      %125 = arith.index_cast %124 : i32 to index
      %126 = memref.load %arg1[%125] : memref<48xi32, #tpu.memory_space<smem>>
      %127 = arith.index_cast %126 : i32 to index
      %c0_118 = arith.constant 0 : index
      %128 = vector.load %arg18[%127, %c0_118] : memref<16x128xf32, #tpu.memory_space<vmem>>, vector<1x128xf32>
      %c3_i32_119 = arith.constant 3 : i32
      %129 = arith.muli %122, %c3_i32_119 : i32
      %c1_i32_120 = arith.constant 1 : i32
      %130 = arith.addi %129, %c1_i32_120 : i32
      %131 = arith.index_cast %130 : i32 to index
      %132 = memref.load %arg1[%131] : memref<48xi32, #tpu.memory_space<smem>>
      %133 = arith.index_cast %132 : i32 to index
      %c0_121 = arith.constant 0 : index
      %134 = vector.load %arg18[%133, %c0_121] : memref<16x128xf32, #tpu.memory_space<vmem>>, vector<1x128xf32>
      %135 = arith.addf %128, %134 : vector<1x128xf32>
      %136 = arith.maximumf %128, %134 : vector<1x128xf32>
      %c3_i32_122 = arith.constant 3 : i32
      %137 = arith.muli %122, %c3_i32_122 : i32
      %c2_i32_123 = arith.constant 2 : i32
      %138 = arith.addi %137, %c2_i32_123 : i32
      %139 = arith.index_cast %138 : i32 to index
      %140 = memref.load %arg1[%139] : memref<48xi32, #tpu.memory_space<smem>>
      %141 = arith.index_cast %140 : i32 to index
      %c0_124 = arith.constant 0 : index
      %142 = vector.load %arg18[%141, %c0_124] : memref<16x128xf32, #tpu.memory_space<vmem>>, vector<1x128xf32>
      %143 = arith.addf %135, %142 : vector<1x128xf32>
      %144 = arith.maximumf %136, %142 : vector<1x128xf32>
      %145 = arith.mulf %143, %144 : vector<1x128xf32>
      %c3_i32_125 = arith.constant 3 : i32
      %146 = arith.addi %73, %c3_i32_125 : i32
      %c3_i32_126 = arith.constant 3 : i32
      %147 = arith.muli %146, %c3_i32_126 : i32
      %c0_i32_127 = arith.constant 0 : i32
      %148 = arith.addi %147, %c0_i32_127 : i32
      %149 = arith.index_cast %148 : i32 to index
      %150 = memref.load %arg1[%149] : memref<48xi32, #tpu.memory_space<smem>>
      %151 = arith.index_cast %150 : i32 to index
      %c0_128 = arith.constant 0 : index
      %152 = vector.load %arg18[%151, %c0_128] : memref<16x128xf32, #tpu.memory_space<vmem>>, vector<1x128xf32>
      %c3_i32_129 = arith.constant 3 : i32
      %153 = arith.muli %146, %c3_i32_129 : i32
      %c1_i32_130 = arith.constant 1 : i32
      %154 = arith.addi %153, %c1_i32_130 : i32
      %155 = arith.index_cast %154 : i32 to index
      %156 = memref.load %arg1[%155] : memref<48xi32, #tpu.memory_space<smem>>
      %157 = arith.index_cast %156 : i32 to index
      %c0_131 = arith.constant 0 : index
      %158 = vector.load %arg18[%157, %c0_131] : memref<16x128xf32, #tpu.memory_space<vmem>>, vector<1x128xf32>
      %159 = arith.addf %152, %158 : vector<1x128xf32>
      %160 = arith.maximumf %152, %158 : vector<1x128xf32>
      %c3_i32_132 = arith.constant 3 : i32
      %161 = arith.muli %146, %c3_i32_132 : i32
      %c2_i32_133 = arith.constant 2 : i32
      %162 = arith.addi %161, %c2_i32_133 : i32
      %163 = arith.index_cast %162 : i32 to index
      %164 = memref.load %arg1[%163] : memref<48xi32, #tpu.memory_space<smem>>
      %165 = arith.index_cast %164 : i32 to index
      %c0_134 = arith.constant 0 : index
      %166 = vector.load %arg18[%165, %c0_134] : memref<16x128xf32, #tpu.memory_space<vmem>>, vector<1x128xf32>
      %167 = arith.addf %159, %166 : vector<1x128xf32>
      %168 = arith.maximumf %160, %166 : vector<1x128xf32>
      %169 = arith.mulf %167, %168 : vector<1x128xf32>
      %c4_i32 = arith.constant 4 : i32
      %170 = arith.addi %73, %c4_i32 : i32
      %c3_i32_135 = arith.constant 3 : i32
      %171 = arith.muli %170, %c3_i32_135 : i32
      %c0_i32_136 = arith.constant 0 : i32
      %172 = arith.addi %171, %c0_i32_136 : i32
      %173 = arith.index_cast %172 : i32 to index
      %174 = memref.load %arg1[%173] : memref<48xi32, #tpu.memory_space<smem>>
      %175 = arith.index_cast %174 : i32 to index
      %c0_137 = arith.constant 0 : index
      %176 = vector.load %arg18[%175, %c0_137] : memref<16x128xf32, #tpu.memory_space<vmem>>, vector<1x128xf32>
      %c3_i32_138 = arith.constant 3 : i32
      %177 = arith.muli %170, %c3_i32_138 : i32
      %c1_i32_139 = arith.constant 1 : i32
      %178 = arith.addi %177, %c1_i32_139 : i32
      %179 = arith.index_cast %178 : i32 to index
      %180 = memref.load %arg1[%179] : memref<48xi32, #tpu.memory_space<smem>>
      %181 = arith.index_cast %180 : i32 to index
      %c0_140 = arith.constant 0 : index
      %182 = vector.load %arg18[%181, %c0_140] : memref<16x128xf32, #tpu.memory_space<vmem>>, vector<1x128xf32>
      %183 = arith.addf %176, %182 : vector<1x128xf32>
      %184 = arith.maximumf %176, %182 : vector<1x128xf32>
      %c3_i32_141 = arith.constant 3 : i32
      %185 = arith.muli %170, %c3_i32_141 : i32
      %c2_i32_142 = arith.constant 2 : i32
      %186 = arith.addi %185, %c2_i32_142 : i32
      %187 = arith.index_cast %186 : i32 to index
      %188 = memref.load %arg1[%187] : memref<48xi32, #tpu.memory_space<smem>>
      %189 = arith.index_cast %188 : i32 to index
      %c0_143 = arith.constant 0 : index
      %190 = vector.load %arg18[%189, %c0_143] : memref<16x128xf32, #tpu.memory_space<vmem>>, vector<1x128xf32>
      %191 = arith.addf %183, %190 : vector<1x128xf32>
      %192 = arith.maximumf %184, %190 : vector<1x128xf32>
      %193 = arith.mulf %191, %192 : vector<1x128xf32>
      %c5_i32 = arith.constant 5 : i32
      %194 = arith.addi %73, %c5_i32 : i32
      %c3_i32_144 = arith.constant 3 : i32
      %195 = arith.muli %194, %c3_i32_144 : i32
      %c0_i32_145 = arith.constant 0 : i32
      %196 = arith.addi %195, %c0_i32_145 : i32
      %197 = arith.index_cast %196 : i32 to index
      %198 = memref.load %arg1[%197] : memref<48xi32, #tpu.memory_space<smem>>
      %199 = arith.index_cast %198 : i32 to index
      %c0_146 = arith.constant 0 : index
      %200 = vector.load %arg18[%199, %c0_146] : memref<16x128xf32, #tpu.memory_space<vmem>>, vector<1x128xf32>
      %c3_i32_147 = arith.constant 3 : i32
      %201 = arith.muli %194, %c3_i32_147 : i32
      %c1_i32_148 = arith.constant 1 : i32
      %202 = arith.addi %201, %c1_i32_148 : i32
      %203 = arith.index_cast %202 : i32 to index
      %204 = memref.load %arg1[%203] : memref<48xi32, #tpu.memory_space<smem>>
      %205 = arith.index_cast %204 : i32 to index
      %c0_149 = arith.constant 0 : index
      %206 = vector.load %arg18[%205, %c0_149] : memref<16x128xf32, #tpu.memory_space<vmem>>, vector<1x128xf32>
      %207 = arith.addf %200, %206 : vector<1x128xf32>
      %208 = arith.maximumf %200, %206 : vector<1x128xf32>
      %c3_i32_150 = arith.constant 3 : i32
      %209 = arith.muli %194, %c3_i32_150 : i32
      %c2_i32_151 = arith.constant 2 : i32
      %210 = arith.addi %209, %c2_i32_151 : i32
      %211 = arith.index_cast %210 : i32 to index
      %212 = memref.load %arg1[%211] : memref<48xi32, #tpu.memory_space<smem>>
      %213 = arith.index_cast %212 : i32 to index
      %c0_152 = arith.constant 0 : index
      %214 = vector.load %arg18[%213, %c0_152] : memref<16x128xf32, #tpu.memory_space<vmem>>, vector<1x128xf32>
      %215 = arith.addf %207, %214 : vector<1x128xf32>
      %216 = arith.maximumf %208, %214 : vector<1x128xf32>
      %217 = arith.mulf %215, %216 : vector<1x128xf32>
      %c6_i32 = arith.constant 6 : i32
      %218 = arith.addi %73, %c6_i32 : i32
      %c3_i32_153 = arith.constant 3 : i32
      %219 = arith.muli %218, %c3_i32_153 : i32
      %c0_i32_154 = arith.constant 0 : i32
      %220 = arith.addi %219, %c0_i32_154 : i32
      %221 = arith.index_cast %220 : i32 to index
      %222 = memref.load %arg1[%221] : memref<48xi32, #tpu.memory_space<smem>>
      %223 = arith.index_cast %222 : i32 to index
      %c0_155 = arith.constant 0 : index
      %224 = vector.load %arg18[%223, %c0_155] : memref<16x128xf32, #tpu.memory_space<vmem>>, vector<1x128xf32>
      %c3_i32_156 = arith.constant 3 : i32
      %225 = arith.muli %218, %c3_i32_156 : i32
      %c1_i32_157 = arith.constant 1 : i32
      %226 = arith.addi %225, %c1_i32_157 : i32
      %227 = arith.index_cast %226 : i32 to index
      %228 = memref.load %arg1[%227] : memref<48xi32, #tpu.memory_space<smem>>
      %229 = arith.index_cast %228 : i32 to index
      %c0_158 = arith.constant 0 : index
      %230 = vector.load %arg18[%229, %c0_158] : memref<16x128xf32, #tpu.memory_space<vmem>>, vector<1x128xf32>
      %231 = arith.addf %224, %230 : vector<1x128xf32>
      %232 = arith.maximumf %224, %230 : vector<1x128xf32>
      %c3_i32_159 = arith.constant 3 : i32
      %233 = arith.muli %218, %c3_i32_159 : i32
      %c2_i32_160 = arith.constant 2 : i32
      %234 = arith.addi %233, %c2_i32_160 : i32
      %235 = arith.index_cast %234 : i32 to index
      %236 = memref.load %arg1[%235] : memref<48xi32, #tpu.memory_space<smem>>
      %237 = arith.index_cast %236 : i32 to index
      %c0_161 = arith.constant 0 : index
      %238 = vector.load %arg18[%237, %c0_161] : memref<16x128xf32, #tpu.memory_space<vmem>>, vector<1x128xf32>
      %239 = arith.addf %231, %238 : vector<1x128xf32>
      %240 = arith.maximumf %232, %238 : vector<1x128xf32>
      %241 = arith.mulf %239, %240 : vector<1x128xf32>
      %c7_i32 = arith.constant 7 : i32
      %242 = arith.addi %73, %c7_i32 : i32
      %c3_i32_162 = arith.constant 3 : i32
      %243 = arith.muli %242, %c3_i32_162 : i32
      %c0_i32_163 = arith.constant 0 : i32
      %244 = arith.addi %243, %c0_i32_163 : i32
      %245 = arith.index_cast %244 : i32 to index
      %246 = memref.load %arg1[%245] : memref<48xi32, #tpu.memory_space<smem>>
      %247 = arith.index_cast %246 : i32 to index
      %c0_164 = arith.constant 0 : index
      %248 = vector.load %arg18[%247, %c0_164] : memref<16x128xf32, #tpu.memory_space<vmem>>, vector<1x128xf32>
      %c3_i32_165 = arith.constant 3 : i32
      %249 = arith.muli %242, %c3_i32_165 : i32
      %c1_i32_166 = arith.constant 1 : i32
      %250 = arith.addi %249, %c1_i32_166 : i32
      %251 = arith.index_cast %250 : i32 to index
      %252 = memref.load %arg1[%251] : memref<48xi32, #tpu.memory_space<smem>>
      %253 = arith.index_cast %252 : i32 to index
      %c0_167 = arith.constant 0 : index
      %254 = vector.load %arg18[%253, %c0_167] : memref<16x128xf32, #tpu.memory_space<vmem>>, vector<1x128xf32>
      %255 = arith.addf %248, %254 : vector<1x128xf32>
      %256 = arith.maximumf %248, %254 : vector<1x128xf32>
      %c3_i32_168 = arith.constant 3 : i32
      %257 = arith.muli %242, %c3_i32_168 : i32
      %c2_i32_169 = arith.constant 2 : i32
      %258 = arith.addi %257, %c2_i32_169 : i32
      %259 = arith.index_cast %258 : i32 to index
      %260 = memref.load %arg1[%259] : memref<48xi32, #tpu.memory_space<smem>>
      %261 = arith.index_cast %260 : i32 to index
      %c0_170 = arith.constant 0 : index
      %262 = vector.load %arg18[%261, %c0_170] : memref<16x128xf32, #tpu.memory_space<vmem>>, vector<1x128xf32>
      %263 = arith.addf %255, %262 : vector<1x128xf32>
      %264 = arith.maximumf %256, %262 : vector<1x128xf32>
      %265 = arith.mulf %263, %264 : vector<1x128xf32>
      %266 = tpu.concatenate %97, %121, %145, %169, %193, %217, %241, %265 in 0 : vector<1x128xf32>, vector<1x128xf32>, vector<1x128xf32>, vector<1x128xf32>, vector<1x128xf32>, vector<1x128xf32>, vector<1x128xf32>, vector<1x128xf32> -> vector<8x128xf32>
      %267 = arith.index_cast %73 : i32 to index
      %c0_171 = arith.constant 0 : index
      %268 = vector.load %arg20[%267, %c0_171] : memref<16x128xf32, #tpu.memory_space<vmem>>, vector<8x128xf32>
      tpu.vector_store %arg20[%267, %c0_171], %266 {strides = array<i32>} : memref<16x128xf32, #tpu.memory_space<vmem>>, vector<8x128xf32>,
    }
    %c2_i32_22 = arith.constant 2 : i32
    %c0_23 = arith.constant 0 : index
    %c0_24 = arith.constant 0 : index
    %17 = vector.load %arg17[%c0_23, %c0_24] : memref<16x128xf32, #tpu.memory_space<vmem>>, vector<16x128xf32>
    %c0_25 = arith.constant 0 : index
    %c0_26 = arith.constant 0 : index
    %18 = vector.load %arg20[%c0_25, %c0_26] : memref<16x128xf32, #tpu.memory_space<vmem>>, vector<16x128xf32>
    %19 = arith.addf %17, %18 : vector<16x128xf32>
    %c0_27 = arith.constant 0 : index
    %c0_28 = arith.constant 0 : index
    %20 = vector.load %arg17[%c0_27, %c0_28] : memref<16x128xf32, #tpu.memory_space<vmem>>, vector<16x128xf32>
    tpu.vector_store %arg17[%c0_27, %c0_28], %19 {strides = array<i32>} : memref<16x128xf32, #tpu.memory_space<vmem>>, vector<16x128xf32>,
    %c0_i32_29 = arith.constant 0 : i32
    %c2_i32_30 = arith.constant 2 : i32
    %21 = arith.addi %c0_i32_29, %c2_i32_30 : i32
    %c1_i32_31 = arith.constant 1 : i32
    scf.for %arg21 = %c0_i32_29 to %21 step %c1_i32_31  : i32 {
      %c1_i32_94 = arith.constant 1 : i32
      %70 = arith.muli %arg21, %c1_i32_94 : i32
      %c0_i32_95 = arith.constant 0 : i32
      %71 = arith.addi %c0_i32_95, %70 : i32
      %c8_i32 = arith.constant 8 : i32
      %72 = arith.muli %71, %c8_i32 : i32
      %73 = tpu.assume_multiple %72, 8 : i32
      %c0_i32_96 = arith.constant 0 : i32
      %74 = arith.addi %73, %c0_i32_96 : i32
      %75 = arith.index_cast %74 : i32 to index
      %76 = memref.load %arg2[%75] : memref<16xi32, #tpu.memory_space<smem>>
      %77 = arith.index_cast %76 : i32 to index
      %c0_97 = arith.constant 0 : index
      %78 = vector.load %arg17[%77, %c0_97] : memref<16x128xf32, #tpu.memory_space<vmem>>, vector<1x128xf32>
      %79 = arith.index_cast %74 : i32 to index
      %80 = memref.load %arg3[%79] : memref<16xi32, #tpu.memory_space<smem>>
      %81 = arith.index_cast %80 : i32 to index
      %c0_98 = arith.constant 0 : index
      %82 = vector.load %arg18[%81, %c0_98] : memref<16x128xf32, #tpu.memory_space<vmem>>, vector<1x128xf32>
      %83 = arith.subf %78, %82 : vector<1x128xf32>
      %c1_i32_99 = arith.constant 1 : i32
      %84 = arith.addi %73, %c1_i32_99 : i32
      %85 = arith.index_cast %84 : i32 to index
      %86 = memref.load %arg2[%85] : memref<16xi32, #tpu.memory_space<smem>>
      %87 = arith.index_cast %86 : i32 to index
      %c0_100 = arith.constant 0 : index
      %88 = vector.load %arg17[%87, %c0_100] : memref<16x128xf32, #tpu.memory_space<vmem>>, vector<1x128xf32>
      %89 = arith.index_cast %84 : i32 to index
      %90 = memref.load %arg3[%89] : memref<16xi32, #tpu.memory_space<smem>>
      %91 = arith.index_cast %90 : i32 to index
      %c0_101 = arith.constant 0 : index
      %92 = vector.load %arg18[%91, %c0_101] : memref<16x128xf32, #tpu.memory_space<vmem>>, vector<1x128xf32>
      %93 = arith.subf %88, %92 : vector<1x128xf32>
      %c2_i32_102 = arith.constant 2 : i32
      %94 = arith.addi %73, %c2_i32_102 : i32
      %95 = arith.index_cast %94 : i32 to index
      %96 = memref.load %arg2[%95] : memref<16xi32, #tpu.memory_space<smem>>
      %97 = arith.index_cast %96 : i32 to index
      %c0_103 = arith.constant 0 : index
      %98 = vector.load %arg17[%97, %c0_103] : memref<16x128xf32, #tpu.memory_space<vmem>>, vector<1x128xf32>
      %99 = arith.index_cast %94 : i32 to index
      %100 = memref.load %arg3[%99] : memref<16xi32, #tpu.memory_space<smem>>
      %101 = arith.index_cast %100 : i32 to index
      %c0_104 = arith.constant 0 : index
      %102 = vector.load %arg18[%101, %c0_104] : memref<16x128xf32, #tpu.memory_space<vmem>>, vector<1x128xf32>
      %103 = arith.subf %98, %102 : vector<1x128xf32>
      %c3_i32 = arith.constant 3 : i32
      %104 = arith.addi %73, %c3_i32 : i32
      %105 = arith.index_cast %104 : i32 to index
      %106 = memref.load %arg2[%105] : memref<16xi32, #tpu.memory_space<smem>>
      %107 = arith.index_cast %106 : i32 to index
      %c0_105 = arith.constant 0 : index
      %108 = vector.load %arg17[%107, %c0_105] : memref<16x128xf32, #tpu.memory_space<vmem>>, vector<1x128xf32>
      %109 = arith.index_cast %104 : i32 to index
      %110 = memref.load %arg3[%109] : memref<16xi32, #tpu.memory_space<smem>>
      %111 = arith.index_cast %110 : i32 to index
      %c0_106 = arith.constant 0 : index
      %112 = vector.load %arg18[%111, %c0_106] : memref<16x128xf32, #tpu.memory_space<vmem>>, vector<1x128xf32>
      %113 = arith.subf %108, %112 : vector<1x128xf32>
      %c4_i32 = arith.constant 4 : i32
      %114 = arith.addi %73, %c4_i32 : i32
      %115 = arith.index_cast %114 : i32 to index
      %116 = memref.load %arg2[%115] : memref<16xi32, #tpu.memory_space<smem>>
      %117 = arith.index_cast %116 : i32 to index
      %c0_107 = arith.constant 0 : index
      %118 = vector.load %arg17[%117, %c0_107] : memref<16x128xf32, #tpu.memory_space<vmem>>, vector<1x128xf32>
      %119 = arith.index_cast %114 : i32 to index
      %120 = memref.load %arg3[%119] : memref<16xi32, #tpu.memory_space<smem>>
      %121 = arith.index_cast %120 : i32 to index
      %c0_108 = arith.constant 0 : index
      %122 = vector.load %arg18[%121, %c0_108] : memref<16x128xf32, #tpu.memory_space<vmem>>, vector<1x128xf32>
      %123 = arith.subf %118, %122 : vector<1x128xf32>
      %c5_i32 = arith.constant 5 : i32
      %124 = arith.addi %73, %c5_i32 : i32
      %125 = arith.index_cast %124 : i32 to index
      %126 = memref.load %arg2[%125] : memref<16xi32, #tpu.memory_space<smem>>
      %127 = arith.index_cast %126 : i32 to index
      %c0_109 = arith.constant 0 : index
      %128 = vector.load %arg17[%127, %c0_109] : memref<16x128xf32, #tpu.memory_space<vmem>>, vector<1x128xf32>
      %129 = arith.index_cast %124 : i32 to index
      %130 = memref.load %arg3[%129] : memref<16xi32, #tpu.memory_space<smem>>
      %131 = arith.index_cast %130 : i32 to index
      %c0_110 = arith.constant 0 : index
      %132 = vector.load %arg18[%131, %c0_110] : memref<16x128xf32, #tpu.memory_space<vmem>>, vector<1x128xf32>
      %133 = arith.subf %128, %132 : vector<1x128xf32>
      %c6_i32 = arith.constant 6 : i32
      %134 = arith.addi %73, %c6_i32 : i32
      %135 = arith.index_cast %134 : i32 to index
      %136 = memref.load %arg2[%135] : memref<16xi32, #tpu.memory_space<smem>>
      %137 = arith.index_cast %136 : i32 to index
      %c0_111 = arith.constant 0 : index
      %138 = vector.load %arg17[%137, %c0_111] : memref<16x128xf32, #tpu.memory_space<vmem>>, vector<1x128xf32>
      %139 = arith.index_cast %134 : i32 to index
      %140 = memref.load %arg3[%139] : memref<16xi32, #tpu.memory_space<smem>>
      %141 = arith.index_cast %140 : i32 to index
      %c0_112 = arith.constant 0 : index
      %142 = vector.load %arg18[%141, %c0_112] : memref<16x128xf32, #tpu.memory_space<vmem>>, vector<1x128xf32>
      %143 = arith.subf %138, %142 : vector<1x128xf32>
      %c7_i32 = arith.constant 7 : i32
      %144 = arith.addi %73, %c7_i32 : i32
      %145 = arith.index_cast %144 : i32 to index
      %146 = memref.load %arg2[%145] : memref<16xi32, #tpu.memory_space<smem>>
      %147 = arith.index_cast %146 : i32 to index
      %c0_113 = arith.constant 0 : index
      %148 = vector.load %arg17[%147, %c0_113] : memref<16x128xf32, #tpu.memory_space<vmem>>, vector<1x128xf32>
      %149 = arith.index_cast %144 : i32 to index
      %150 = memref.load %arg3[%149] : memref<16xi32, #tpu.memory_space<smem>>
      %151 = arith.index_cast %150 : i32 to index
      %c0_114 = arith.constant 0 : index
      %152 = vector.load %arg18[%151, %c0_114] : memref<16x128xf32, #tpu.memory_space<vmem>>, vector<1x128xf32>
      %153 = arith.subf %148, %152 : vector<1x128xf32>
      %154 = tpu.concatenate %83, %93, %103, %113, %123, %133, %143, %153 in 0 : vector<1x128xf32>, vector<1x128xf32>, vector<1x128xf32>, vector<1x128xf32>, vector<1x128xf32>, vector<1x128xf32>, vector<1x128xf32>, vector<1x128xf32> -> vector<8x128xf32>
      %155 = arith.index_cast %73 : i32 to index
      %c0_115 = arith.constant 0 : index
      %156 = vector.load %arg19[%155, %c0_115] : memref<16x128xf32, #tpu.memory_space<vmem>>, vector<8x128xf32>
      tpu.vector_store %arg19[%155, %c0_115], %154 {strides = array<i32>} : memref<16x128xf32, #tpu.memory_space<vmem>>, vector<8x128xf32>,
    }
    %c2_i32_32 = arith.constant 2 : i32
    %c0_33 = arith.constant 0 : index
    %c0_34 = arith.constant 0 : index
    %22 = vector.load %arg16[%c0_33, %c0_34] : memref<16x128xf32, #tpu.memory_space<vmem>>, vector<16x128xf32>
    %c0_35 = arith.constant 0 : index
    %c0_36 = arith.constant 0 : index
    %23 = vector.load %arg19[%c0_35, %c0_36] : memref<16x128xf32, #tpu.memory_space<vmem>>, vector<16x128xf32>
    %24 = arith.truncf %23 : vector<16x128xf32> to vector<16x128xbf16>
    %c0_37 = arith.constant 0 : index
    %c0_38 = arith.constant 0 : index
    %c0_39 = arith.constant 0 : index
    %25 = vector.load %arg8[%c0_37, %c0_38, %c0_39] : memref<2x128x128xbf16, #tpu.memory_space<vmem>>, vector<1x128x128xbf16>
    %26 = vector.shape_cast %25 : vector<1x128x128xbf16> to vector<128x128xbf16>
    %cst_40 = arith.constant dense<0.000000e+00> : vector<16x128xf32>
    %27 = tpu.matmul %24, %26, %cst_40 {dimension_numbers = #tpu.dot_dimension_numbers<[1], [0], [0], [1], [0, 0, 1, 1], [], []>} : vector<16x128xbf16>, vector<128x128xbf16>, vector<16x128xf32> -> vector<16x128xf32>
    %28 = arith.addf %22, %27 : vector<16x128xf32>
    %cst_41 = arith.constant 0.000000e+00 : f32
    %29 = vector.broadcast %cst_41 : f32 to vector<16x128xf32>
    %30 = arith.maximumf %28, %29 : vector<16x128xf32>
    %c0_42 = arith.constant 0 : index
    %c0_43 = arith.constant 0 : index
    %31 = vector.load %arg18[%c0_42, %c0_43] : memref<16x128xf32, #tpu.memory_space<vmem>>, vector<16x128xf32>
    tpu.vector_store %arg18[%c0_42, %c0_43], %30 {strides = array<i32>} : memref<16x128xf32, #tpu.memory_space<vmem>>, vector<16x128xf32>,
    %c0_i32_44 = arith.constant 0 : i32
    %c2_i32_45 = arith.constant 2 : i32
    %32 = arith.addi %c0_i32_44, %c2_i32_45 : i32
    %c1_i32_46 = arith.constant 1 : i32
    scf.for %arg21 = %c0_i32_44 to %32 step %c1_i32_46  : i32 {
      %c1_i32_94 = arith.constant 1 : i32
      %70 = arith.muli %arg21, %c1_i32_94 : i32
      %c0_i32_95 = arith.constant 0 : i32
      %71 = arith.addi %c0_i32_95, %70 : i32
      %c8_i32 = arith.constant 8 : i32
      %72 = arith.muli %71, %c8_i32 : i32
      %73 = tpu.assume_multiple %72, 8 : i32
      %c0_i32_96 = arith.constant 0 : i32
      %74 = arith.addi %73, %c0_i32_96 : i32
      %c3_i32 = arith.constant 3 : i32
      %75 = arith.muli %74, %c3_i32 : i32
      %c0_i32_97 = arith.constant 0 : i32
      %76 = arith.addi %75, %c0_i32_97 : i32
      %77 = arith.index_cast %76 : i32 to index
      %78 = memref.load %arg1[%77] : memref<48xi32, #tpu.memory_space<smem>>
      %79 = arith.index_cast %78 : i32 to index
      %c0_98 = arith.constant 0 : index
      %80 = vector.load %arg18[%79, %c0_98] : memref<16x128xf32, #tpu.memory_space<vmem>>, vector<1x128xf32>
      %c3_i32_99 = arith.constant 3 : i32
      %81 = arith.muli %74, %c3_i32_99 : i32
      %c1_i32_100 = arith.constant 1 : i32
      %82 = arith.addi %81, %c1_i32_100 : i32
      %83 = arith.index_cast %82 : i32 to index
      %84 = memref.load %arg1[%83] : memref<48xi32, #tpu.memory_space<smem>>
      %85 = arith.index_cast %84 : i32 to index
      %c0_101 = arith.constant 0 : index
      %86 = vector.load %arg18[%85, %c0_101] : memref<16x128xf32, #tpu.memory_space<vmem>>, vector<1x128xf32>
      %87 = arith.addf %80, %86 : vector<1x128xf32>
      %88 = arith.maximumf %80, %86 : vector<1x128xf32>
      %c3_i32_102 = arith.constant 3 : i32
      %89 = arith.muli %74, %c3_i32_102 : i32
      %c2_i32_103 = arith.constant 2 : i32
      %90 = arith.addi %89, %c2_i32_103 : i32
      %91 = arith.index_cast %90 : i32 to index
      %92 = memref.load %arg1[%91] : memref<48xi32, #tpu.memory_space<smem>>
      %93 = arith.index_cast %92 : i32 to index
      %c0_104 = arith.constant 0 : index
      %94 = vector.load %arg18[%93, %c0_104] : memref<16x128xf32, #tpu.memory_space<vmem>>, vector<1x128xf32>
      %95 = arith.addf %87, %94 : vector<1x128xf32>
      %96 = arith.maximumf %88, %94 : vector<1x128xf32>
      %97 = arith.mulf %95, %96 : vector<1x128xf32>
      %c1_i32_105 = arith.constant 1 : i32
      %98 = arith.addi %73, %c1_i32_105 : i32
      %c3_i32_106 = arith.constant 3 : i32
      %99 = arith.muli %98, %c3_i32_106 : i32
      %c0_i32_107 = arith.constant 0 : i32
      %100 = arith.addi %99, %c0_i32_107 : i32
      %101 = arith.index_cast %100 : i32 to index
      %102 = memref.load %arg1[%101] : memref<48xi32, #tpu.memory_space<smem>>
      %103 = arith.index_cast %102 : i32 to index
      %c0_108 = arith.constant 0 : index
      %104 = vector.load %arg18[%103, %c0_108] : memref<16x128xf32, #tpu.memory_space<vmem>>, vector<1x128xf32>
      %c3_i32_109 = arith.constant 3 : i32
      %105 = arith.muli %98, %c3_i32_109 : i32
      %c1_i32_110 = arith.constant 1 : i32
      %106 = arith.addi %105, %c1_i32_110 : i32
      %107 = arith.index_cast %106 : i32 to index
      %108 = memref.load %arg1[%107] : memref<48xi32, #tpu.memory_space<smem>>
      %109 = arith.index_cast %108 : i32 to index
      %c0_111 = arith.constant 0 : index
      %110 = vector.load %arg18[%109, %c0_111] : memref<16x128xf32, #tpu.memory_space<vmem>>, vector<1x128xf32>
      %111 = arith.addf %104, %110 : vector<1x128xf32>
      %112 = arith.maximumf %104, %110 : vector<1x128xf32>
      %c3_i32_112 = arith.constant 3 : i32
      %113 = arith.muli %98, %c3_i32_112 : i32
      %c2_i32_113 = arith.constant 2 : i32
      %114 = arith.addi %113, %c2_i32_113 : i32
      %115 = arith.index_cast %114 : i32 to index
      %116 = memref.load %arg1[%115] : memref<48xi32, #tpu.memory_space<smem>>
      %117 = arith.index_cast %116 : i32 to index
      %c0_114 = arith.constant 0 : index
      %118 = vector.load %arg18[%117, %c0_114] : memref<16x128xf32, #tpu.memory_space<vmem>>, vector<1x128xf32>
      %119 = arith.addf %111, %118 : vector<1x128xf32>
      %120 = arith.maximumf %112, %118 : vector<1x128xf32>
      %121 = arith.mulf %119, %120 : vector<1x128xf32>
      %c2_i32_115 = arith.constant 2 : i32
      %122 = arith.addi %73, %c2_i32_115 : i32
      %c3_i32_116 = arith.constant 3 : i32
      %123 = arith.muli %122, %c3_i32_116 : i32
      %c0_i32_117 = arith.constant 0 : i32
      %124 = arith.addi %123, %c0_i32_117 : i32
      %125 = arith.index_cast %124 : i32 to index
      %126 = memref.load %arg1[%125] : memref<48xi32, #tpu.memory_space<smem>>
      %127 = arith.index_cast %126 : i32 to index
      %c0_118 = arith.constant 0 : index
      %128 = vector.load %arg18[%127, %c0_118] : memref<16x128xf32, #tpu.memory_space<vmem>>, vector<1x128xf32>
      %c3_i32_119 = arith.constant 3 : i32
      %129 = arith.muli %122, %c3_i32_119 : i32
      %c1_i32_120 = arith.constant 1 : i32
      %130 = arith.addi %129, %c1_i32_120 : i32
      %131 = arith.index_cast %130 : i32 to index
      %132 = memref.load %arg1[%131] : memref<48xi32, #tpu.memory_space<smem>>
      %133 = arith.index_cast %132 : i32 to index
      %c0_121 = arith.constant 0 : index
      %134 = vector.load %arg18[%133, %c0_121] : memref<16x128xf32, #tpu.memory_space<vmem>>, vector<1x128xf32>
      %135 = arith.addf %128, %134 : vector<1x128xf32>
      %136 = arith.maximumf %128, %134 : vector<1x128xf32>
      %c3_i32_122 = arith.constant 3 : i32
      %137 = arith.muli %122, %c3_i32_122 : i32
      %c2_i32_123 = arith.constant 2 : i32
      %138 = arith.addi %137, %c2_i32_123 : i32
      %139 = arith.index_cast %138 : i32 to index
      %140 = memref.load %arg1[%139] : memref<48xi32, #tpu.memory_space<smem>>
      %141 = arith.index_cast %140 : i32 to index
      %c0_124 = arith.constant 0 : index
      %142 = vector.load %arg18[%141, %c0_124] : memref<16x128xf32, #tpu.memory_space<vmem>>, vector<1x128xf32>
      %143 = arith.addf %135, %142 : vector<1x128xf32>
      %144 = arith.maximumf %136, %142 : vector<1x128xf32>
      %145 = arith.mulf %143, %144 : vector<1x128xf32>
      %c3_i32_125 = arith.constant 3 : i32
      %146 = arith.addi %73, %c3_i32_125 : i32
      %c3_i32_126 = arith.constant 3 : i32
      %147 = arith.muli %146, %c3_i32_126 : i32
      %c0_i32_127 = arith.constant 0 : i32
      %148 = arith.addi %147, %c0_i32_127 : i32
      %149 = arith.index_cast %148 : i32 to index
      %150 = memref.load %arg1[%149] : memref<48xi32, #tpu.memory_space<smem>>
      %151 = arith.index_cast %150 : i32 to index
      %c0_128 = arith.constant 0 : index
      %152 = vector.load %arg18[%151, %c0_128] : memref<16x128xf32, #tpu.memory_space<vmem>>, vector<1x128xf32>
      %c3_i32_129 = arith.constant 3 : i32
      %153 = arith.muli %146, %c3_i32_129 : i32
      %c1_i32_130 = arith.constant 1 : i32
      %154 = arith.addi %153, %c1_i32_130 : i32
      %155 = arith.index_cast %154 : i32 to index
      %156 = memref.load %arg1[%155] : memref<48xi32, #tpu.memory_space<smem>>
      %157 = arith.index_cast %156 : i32 to index
      %c0_131 = arith.constant 0 : index
      %158 = vector.load %arg18[%157, %c0_131] : memref<16x128xf32, #tpu.memory_space<vmem>>, vector<1x128xf32>
      %159 = arith.addf %152, %158 : vector<1x128xf32>
      %160 = arith.maximumf %152, %158 : vector<1x128xf32>
      %c3_i32_132 = arith.constant 3 : i32
      %161 = arith.muli %146, %c3_i32_132 : i32
      %c2_i32_133 = arith.constant 2 : i32
      %162 = arith.addi %161, %c2_i32_133 : i32
      %163 = arith.index_cast %162 : i32 to index
      %164 = memref.load %arg1[%163] : memref<48xi32, #tpu.memory_space<smem>>
      %165 = arith.index_cast %164 : i32 to index
      %c0_134 = arith.constant 0 : index
      %166 = vector.load %arg18[%165, %c0_134] : memref<16x128xf32, #tpu.memory_space<vmem>>, vector<1x128xf32>
      %167 = arith.addf %159, %166 : vector<1x128xf32>
      %168 = arith.maximumf %160, %166 : vector<1x128xf32>
      %169 = arith.mulf %167, %168 : vector<1x128xf32>
      %c4_i32 = arith.constant 4 : i32
      %170 = arith.addi %73, %c4_i32 : i32
      %c3_i32_135 = arith.constant 3 : i32
      %171 = arith.muli %170, %c3_i32_135 : i32
      %c0_i32_136 = arith.constant 0 : i32
      %172 = arith.addi %171, %c0_i32_136 : i32
      %173 = arith.index_cast %172 : i32 to index
      %174 = memref.load %arg1[%173] : memref<48xi32, #tpu.memory_space<smem>>
      %175 = arith.index_cast %174 : i32 to index
      %c0_137 = arith.constant 0 : index
      %176 = vector.load %arg18[%175, %c0_137] : memref<16x128xf32, #tpu.memory_space<vmem>>, vector<1x128xf32>
      %c3_i32_138 = arith.constant 3 : i32
      %177 = arith.muli %170, %c3_i32_138 : i32
      %c1_i32_139 = arith.constant 1 : i32
      %178 = arith.addi %177, %c1_i32_139 : i32
      %179 = arith.index_cast %178 : i32 to index
      %180 = memref.load %arg1[%179] : memref<48xi32, #tpu.memory_space<smem>>
      %181 = arith.index_cast %180 : i32 to index
      %c0_140 = arith.constant 0 : index
      %182 = vector.load %arg18[%181, %c0_140] : memref<16x128xf32, #tpu.memory_space<vmem>>, vector<1x128xf32>
      %183 = arith.addf %176, %182 : vector<1x128xf32>
      %184 = arith.maximumf %176, %182 : vector<1x128xf32>
      %c3_i32_141 = arith.constant 3 : i32
      %185 = arith.muli %170, %c3_i32_141 : i32
      %c2_i32_142 = arith.constant 2 : i32
      %186 = arith.addi %185, %c2_i32_142 : i32
      %187 = arith.index_cast %186 : i32 to index
      %188 = memref.load %arg1[%187] : memref<48xi32, #tpu.memory_space<smem>>
      %189 = arith.index_cast %188 : i32 to index
      %c0_143 = arith.constant 0 : index
      %190 = vector.load %arg18[%189, %c0_143] : memref<16x128xf32, #tpu.memory_space<vmem>>, vector<1x128xf32>
      %191 = arith.addf %183, %190 : vector<1x128xf32>
      %192 = arith.maximumf %184, %190 : vector<1x128xf32>
      %193 = arith.mulf %191, %192 : vector<1x128xf32>
      %c5_i32 = arith.constant 5 : i32
      %194 = arith.addi %73, %c5_i32 : i32
      %c3_i32_144 = arith.constant 3 : i32
      %195 = arith.muli %194, %c3_i32_144 : i32
      %c0_i32_145 = arith.constant 0 : i32
      %196 = arith.addi %195, %c0_i32_145 : i32
      %197 = arith.index_cast %196 : i32 to index
      %198 = memref.load %arg1[%197] : memref<48xi32, #tpu.memory_space<smem>>
      %199 = arith.index_cast %198 : i32 to index
      %c0_146 = arith.constant 0 : index
      %200 = vector.load %arg18[%199, %c0_146] : memref<16x128xf32, #tpu.memory_space<vmem>>, vector<1x128xf32>
      %c3_i32_147 = arith.constant 3 : i32
      %201 = arith.muli %194, %c3_i32_147 : i32
      %c1_i32_148 = arith.constant 1 : i32
      %202 = arith.addi %201, %c1_i32_148 : i32
      %203 = arith.index_cast %202 : i32 to index
      %204 = memref.load %arg1[%203] : memref<48xi32, #tpu.memory_space<smem>>
      %205 = arith.index_cast %204 : i32 to index
      %c0_149 = arith.constant 0 : index
      %206 = vector.load %arg18[%205, %c0_149] : memref<16x128xf32, #tpu.memory_space<vmem>>, vector<1x128xf32>
      %207 = arith.addf %200, %206 : vector<1x128xf32>
      %208 = arith.maximumf %200, %206 : vector<1x128xf32>
      %c3_i32_150 = arith.constant 3 : i32
      %209 = arith.muli %194, %c3_i32_150 : i32
      %c2_i32_151 = arith.constant 2 : i32
      %210 = arith.addi %209, %c2_i32_151 : i32
      %211 = arith.index_cast %210 : i32 to index
      %212 = memref.load %arg1[%211] : memref<48xi32, #tpu.memory_space<smem>>
      %213 = arith.index_cast %212 : i32 to index
      %c0_152 = arith.constant 0 : index
      %214 = vector.load %arg18[%213, %c0_152] : memref<16x128xf32, #tpu.memory_space<vmem>>, vector<1x128xf32>
      %215 = arith.addf %207, %214 : vector<1x128xf32>
      %216 = arith.maximumf %208, %214 : vector<1x128xf32>
      %217 = arith.mulf %215, %216 : vector<1x128xf32>
      %c6_i32 = arith.constant 6 : i32
      %218 = arith.addi %73, %c6_i32 : i32
      %c3_i32_153 = arith.constant 3 : i32
      %219 = arith.muli %218, %c3_i32_153 : i32
      %c0_i32_154 = arith.constant 0 : i32
      %220 = arith.addi %219, %c0_i32_154 : i32
      %221 = arith.index_cast %220 : i32 to index
      %222 = memref.load %arg1[%221] : memref<48xi32, #tpu.memory_space<smem>>
      %223 = arith.index_cast %222 : i32 to index
      %c0_155 = arith.constant 0 : index
      %224 = vector.load %arg18[%223, %c0_155] : memref<16x128xf32, #tpu.memory_space<vmem>>, vector<1x128xf32>
      %c3_i32_156 = arith.constant 3 : i32
      %225 = arith.muli %218, %c3_i32_156 : i32
      %c1_i32_157 = arith.constant 1 : i32
      %226 = arith.addi %225, %c1_i32_157 : i32
      %227 = arith.index_cast %226 : i32 to index
      %228 = memref.load %arg1[%227] : memref<48xi32, #tpu.memory_space<smem>>
      %229 = arith.index_cast %228 : i32 to index
      %c0_158 = arith.constant 0 : index
      %230 = vector.load %arg18[%229, %c0_158] : memref<16x128xf32, #tpu.memory_space<vmem>>, vector<1x128xf32>
      %231 = arith.addf %224, %230 : vector<1x128xf32>
      %232 = arith.maximumf %224, %230 : vector<1x128xf32>
      %c3_i32_159 = arith.constant 3 : i32
      %233 = arith.muli %218, %c3_i32_159 : i32
      %c2_i32_160 = arith.constant 2 : i32
      %234 = arith.addi %233, %c2_i32_160 : i32
      %235 = arith.index_cast %234 : i32 to index
      %236 = memref.load %arg1[%235] : memref<48xi32, #tpu.memory_space<smem>>
      %237 = arith.index_cast %236 : i32 to index
      %c0_161 = arith.constant 0 : index
      %238 = vector.load %arg18[%237, %c0_161] : memref<16x128xf32, #tpu.memory_space<vmem>>, vector<1x128xf32>
      %239 = arith.addf %231, %238 : vector<1x128xf32>
      %240 = arith.maximumf %232, %238 : vector<1x128xf32>
      %241 = arith.mulf %239, %240 : vector<1x128xf32>
      %c7_i32 = arith.constant 7 : i32
      %242 = arith.addi %73, %c7_i32 : i32
      %c3_i32_162 = arith.constant 3 : i32
      %243 = arith.muli %242, %c3_i32_162 : i32
      %c0_i32_163 = arith.constant 0 : i32
      %244 = arith.addi %243, %c0_i32_163 : i32
      %245 = arith.index_cast %244 : i32 to index
      %246 = memref.load %arg1[%245] : memref<48xi32, #tpu.memory_space<smem>>
      %247 = arith.index_cast %246 : i32 to index
      %c0_164 = arith.constant 0 : index
      %248 = vector.load %arg18[%247, %c0_164] : memref<16x128xf32, #tpu.memory_space<vmem>>, vector<1x128xf32>
      %c3_i32_165 = arith.constant 3 : i32
      %249 = arith.muli %242, %c3_i32_165 : i32
      %c1_i32_166 = arith.constant 1 : i32
      %250 = arith.addi %249, %c1_i32_166 : i32
      %251 = arith.index_cast %250 : i32 to index
      %252 = memref.load %arg1[%251] : memref<48xi32, #tpu.memory_space<smem>>
      %253 = arith.index_cast %252 : i32 to index
      %c0_167 = arith.constant 0 : index
      %254 = vector.load %arg18[%253, %c0_167] : memref<16x128xf32, #tpu.memory_space<vmem>>, vector<1x128xf32>
      %255 = arith.addf %248, %254 : vector<1x128xf32>
      %256 = arith.maximumf %248, %254 : vector<1x128xf32>
      %c3_i32_168 = arith.constant 3 : i32
      %257 = arith.muli %242, %c3_i32_168 : i32
      %c2_i32_169 = arith.constant 2 : i32
      %258 = arith.addi %257, %c2_i32_169 : i32
      %259 = arith.index_cast %258 : i32 to index
      %260 = memref.load %arg1[%259] : memref<48xi32, #tpu.memory_space<smem>>
      %261 = arith.index_cast %260 : i32 to index
      %c0_170 = arith.constant 0 : index
      %262 = vector.load %arg18[%261, %c0_170] : memref<16x128xf32, #tpu.memory_space<vmem>>, vector<1x128xf32>
      %263 = arith.addf %255, %262 : vector<1x128xf32>
      %264 = arith.maximumf %256, %262 : vector<1x128xf32>
      %265 = arith.mulf %263, %264 : vector<1x128xf32>
      %266 = tpu.concatenate %97, %121, %145, %169, %193, %217, %241, %265 in 0 : vector<1x128xf32>, vector<1x128xf32>, vector<1x128xf32>, vector<1x128xf32>, vector<1x128xf32>, vector<1x128xf32>, vector<1x128xf32>, vector<1x128xf32> -> vector<8x128xf32>
      %267 = arith.index_cast %73 : i32 to index
      %c0_171 = arith.constant 0 : index
      %268 = vector.load %arg20[%267, %c0_171] : memref<16x128xf32, #tpu.memory_space<vmem>>, vector<8x128xf32>
      tpu.vector_store %arg20[%267, %c0_171], %266 {strides = array<i32>} : memref<16x128xf32, #tpu.memory_space<vmem>>, vector<8x128xf32>,
    }
    %c2_i32_47 = arith.constant 2 : i32
    %c0_48 = arith.constant 0 : index
    %c0_49 = arith.constant 0 : index
    %33 = vector.load %arg17[%c0_48, %c0_49] : memref<16x128xf32, #tpu.memory_space<vmem>>, vector<16x128xf32>
    %c0_50 = arith.constant 0 : index
    %c0_51 = arith.constant 0 : index
    %34 = vector.load %arg20[%c0_50, %c0_51] : memref<16x128xf32, #tpu.memory_space<vmem>>, vector<16x128xf32>
    %35 = arith.addf %33, %34 : vector<16x128xf32>
    %c0_52 = arith.constant 0 : index
    %c0_53 = arith.constant 0 : index
    %36 = vector.load %arg17[%c0_52, %c0_53] : memref<16x128xf32, #tpu.memory_space<vmem>>, vector<16x128xf32>
    tpu.vector_store %arg17[%c0_52, %c0_53], %35 {strides = array<i32>} : memref<16x128xf32, #tpu.memory_space<vmem>>, vector<16x128xf32>,
    %c0_i32_54 = arith.constant 0 : i32
    %c2_i32_55 = arith.constant 2 : i32
    %37 = arith.addi %c0_i32_54, %c2_i32_55 : i32
    %c1_i32_56 = arith.constant 1 : i32
    scf.for %arg21 = %c0_i32_54 to %37 step %c1_i32_56  : i32 {
      %c1_i32_94 = arith.constant 1 : i32
      %70 = arith.muli %arg21, %c1_i32_94 : i32
      %c0_i32_95 = arith.constant 0 : i32
      %71 = arith.addi %c0_i32_95, %70 : i32
      %c8_i32 = arith.constant 8 : i32
      %72 = arith.muli %71, %c8_i32 : i32
      %73 = tpu.assume_multiple %72, 8 : i32
      %c0_i32_96 = arith.constant 0 : i32
      %74 = arith.addi %73, %c0_i32_96 : i32
      %75 = arith.index_cast %74 : i32 to index
      %76 = memref.load %arg2[%75] : memref<16xi32, #tpu.memory_space<smem>>
      %77 = arith.index_cast %76 : i32 to index
      %c0_97 = arith.constant 0 : index
      %78 = vector.load %arg17[%77, %c0_97] : memref<16x128xf32, #tpu.memory_space<vmem>>, vector<1x128xf32>
      %79 = arith.index_cast %74 : i32 to index
      %80 = memref.load %arg3[%79] : memref<16xi32, #tpu.memory_space<smem>>
      %81 = arith.index_cast %80 : i32 to index
      %c0_98 = arith.constant 0 : index
      %82 = vector.load %arg18[%81, %c0_98] : memref<16x128xf32, #tpu.memory_space<vmem>>, vector<1x128xf32>
      %83 = arith.subf %78, %82 : vector<1x128xf32>
      %c1_i32_99 = arith.constant 1 : i32
      %84 = arith.addi %73, %c1_i32_99 : i32
      %85 = arith.index_cast %84 : i32 to index
      %86 = memref.load %arg2[%85] : memref<16xi32, #tpu.memory_space<smem>>
      %87 = arith.index_cast %86 : i32 to index
      %c0_100 = arith.constant 0 : index
      %88 = vector.load %arg17[%87, %c0_100] : memref<16x128xf32, #tpu.memory_space<vmem>>, vector<1x128xf32>
      %89 = arith.index_cast %84 : i32 to index
      %90 = memref.load %arg3[%89] : memref<16xi32, #tpu.memory_space<smem>>
      %91 = arith.index_cast %90 : i32 to index
      %c0_101 = arith.constant 0 : index
      %92 = vector.load %arg18[%91, %c0_101] : memref<16x128xf32, #tpu.memory_space<vmem>>, vector<1x128xf32>
      %93 = arith.subf %88, %92 : vector<1x128xf32>
      %c2_i32_102 = arith.constant 2 : i32
      %94 = arith.addi %73, %c2_i32_102 : i32
      %95 = arith.index_cast %94 : i32 to index
      %96 = memref.load %arg2[%95] : memref<16xi32, #tpu.memory_space<smem>>
      %97 = arith.index_cast %96 : i32 to index
      %c0_103 = arith.constant 0 : index
      %98 = vector.load %arg17[%97, %c0_103] : memref<16x128xf32, #tpu.memory_space<vmem>>, vector<1x128xf32>
      %99 = arith.index_cast %94 : i32 to index
      %100 = memref.load %arg3[%99] : memref<16xi32, #tpu.memory_space<smem>>
      %101 = arith.index_cast %100 : i32 to index
      %c0_104 = arith.constant 0 : index
      %102 = vector.load %arg18[%101, %c0_104] : memref<16x128xf32, #tpu.memory_space<vmem>>, vector<1x128xf32>
      %103 = arith.subf %98, %102 : vector<1x128xf32>
      %c3_i32 = arith.constant 3 : i32
      %104 = arith.addi %73, %c3_i32 : i32
      %105 = arith.index_cast %104 : i32 to index
      %106 = memref.load %arg2[%105] : memref<16xi32, #tpu.memory_space<smem>>
      %107 = arith.index_cast %106 : i32 to index
      %c0_105 = arith.constant 0 : index
      %108 = vector.load %arg17[%107, %c0_105] : memref<16x128xf32, #tpu.memory_space<vmem>>, vector<1x128xf32>
      %109 = arith.index_cast %104 : i32 to index
      %110 = memref.load %arg3[%109] : memref<16xi32, #tpu.memory_space<smem>>
      %111 = arith.index_cast %110 : i32 to index
      %c0_106 = arith.constant 0 : index
      %112 = vector.load %arg18[%111, %c0_106] : memref<16x128xf32, #tpu.memory_space<vmem>>, vector<1x128xf32>
      %113 = arith.subf %108, %112 : vector<1x128xf32>
      %c4_i32 = arith.constant 4 : i32
      %114 = arith.addi %73, %c4_i32 : i32
      %115 = arith.index_cast %114 : i32 to index
      %116 = memref.load %arg2[%115] : memref<16xi32, #tpu.memory_space<smem>>
      %117 = arith.index_cast %116 : i32 to index
      %c0_107 = arith.constant 0 : index
      %118 = vector.load %arg17[%117, %c0_107] : memref<16x128xf32, #tpu.memory_space<vmem>>, vector<1x128xf32>
      %119 = arith.index_cast %114 : i32 to index
      %120 = memref.load %arg3[%119] : memref<16xi32, #tpu.memory_space<smem>>
      %121 = arith.index_cast %120 : i32 to index
      %c0_108 = arith.constant 0 : index
      %122 = vector.load %arg18[%121, %c0_108] : memref<16x128xf32, #tpu.memory_space<vmem>>, vector<1x128xf32>
      %123 = arith.subf %118, %122 : vector<1x128xf32>
      %c5_i32 = arith.constant 5 : i32
      %124 = arith.addi %73, %c5_i32 : i32
      %125 = arith.index_cast %124 : i32 to index
      %126 = memref.load %arg2[%125] : memref<16xi32, #tpu.memory_space<smem>>
      %127 = arith.index_cast %126 : i32 to index
      %c0_109 = arith.constant 0 : index
      %128 = vector.load %arg17[%127, %c0_109] : memref<16x128xf32, #tpu.memory_space<vmem>>, vector<1x128xf32>
      %129 = arith.index_cast %124 : i32 to index
      %130 = memref.load %arg3[%129] : memref<16xi32, #tpu.memory_space<smem>>
      %131 = arith.index_cast %130 : i32 to index
      %c0_110 = arith.constant 0 : index
      %132 = vector.load %arg18[%131, %c0_110] : memref<16x128xf32, #tpu.memory_space<vmem>>, vector<1x128xf32>
      %133 = arith.subf %128, %132 : vector<1x128xf32>
      %c6_i32 = arith.constant 6 : i32
      %134 = arith.addi %73, %c6_i32 : i32
      %135 = arith.index_cast %134 : i32 to index
      %136 = memref.load %arg2[%135] : memref<16xi32, #tpu.memory_space<smem>>
      %137 = arith.index_cast %136 : i32 to index
      %c0_111 = arith.constant 0 : index
      %138 = vector.load %arg17[%137, %c0_111] : memref<16x128xf32, #tpu.memory_space<vmem>>, vector<1x128xf32>
      %139 = arith.index_cast %134 : i32 to index
      %140 = memref.load %arg3[%139] : memref<16xi32, #tpu.memory_space<smem>>
      %141 = arith.index_cast %140 : i32 to index
      %c0_112 = arith.constant 0 : index
      %142 = vector.load %arg18[%141, %c0_112] : memref<16x128xf32, #tpu.memory_space<vmem>>, vector<1x128xf32>
      %143 = arith.subf %138, %142 : vector<1x128xf32>
      %c7_i32 = arith.constant 7 : i32
      %144 = arith.addi %73, %c7_i32 : i32
      %145 = arith.index_cast %144 : i32 to index
      %146 = memref.load %arg2[%145] : memref<16xi32, #tpu.memory_space<smem>>
      %147 = arith.index_cast %146 : i32 to index
      %c0_113 = arith.constant 0 : index
      %148 = vector.load %arg17[%147, %c0_113] : memref<16x128xf32, #tpu.memory_space<vmem>>, vector<1x128xf32>
      %149 = arith.index_cast %144 : i32 to index
      %150 = memref.load %arg3[%149] : memref<16xi32, #tpu.memory_space<smem>>
      %151 = arith.index_cast %150 : i32 to index
      %c0_114 = arith.constant 0 : index
      %152 = vector.load %arg18[%151, %c0_114] : memref<16x128xf32, #tpu.memory_space<vmem>>, vector<1x128xf32>
      %153 = arith.subf %148, %152 : vector<1x128xf32>
      %154 = tpu.concatenate %83, %93, %103, %113, %123, %133, %143, %153 in 0 : vector<1x128xf32>, vector<1x128xf32>, vector<1x128xf32>, vector<1x128xf32>, vector<1x128xf32>, vector<1x128xf32>, vector<1x128xf32>, vector<1x128xf32> -> vector<8x128xf32>
      %155 = arith.index_cast %73 : i32 to index
      %c0_115 = arith.constant 0 : index
      %156 = vector.load %arg19[%155, %c0_115] : memref<16x128xf32, #tpu.memory_space<vmem>>, vector<8x128xf32>
      tpu.vector_store %arg19[%155, %c0_115], %154 {strides = array<i32>} : memref<16x128xf32, #tpu.memory_space<vmem>>, vector<8x128xf32>,
    }
    %c2_i32_57 = arith.constant 2 : i32
    %c0_58 = arith.constant 0 : index
    %c0_59 = arith.constant 0 : index
    %38 = vector.load %arg16[%c0_58, %c0_59] : memref<16x128xf32, #tpu.memory_space<vmem>>, vector<16x128xf32>
    %c0_60 = arith.constant 0 : index
    %c0_61 = arith.constant 0 : index
    %39 = vector.load %arg19[%c0_60, %c0_61] : memref<16x128xf32, #tpu.memory_space<vmem>>, vector<16x128xf32>
    %40 = arith.truncf %39 : vector<16x128xf32> to vector<16x128xbf16>
    %c1 = arith.constant 1 : index
    %c0_62 = arith.constant 0 : index
    %c0_63 = arith.constant 0 : index
    %41 = vector.load %arg8[%c1, %c0_62, %c0_63] : memref<2x128x128xbf16, #tpu.memory_space<vmem>>, vector<1x128x128xbf16>
    %42 = vector.shape_cast %41 : vector<1x128x128xbf16> to vector<128x128xbf16>
    %cst_64 = arith.constant dense<0.000000e+00> : vector<16x128xf32>
    %43 = tpu.matmul %40, %42, %cst_64 {dimension_numbers = #tpu.dot_dimension_numbers<[1], [0], [0], [1], [0, 0, 1, 1], [], []>} : vector<16x128xbf16>, vector<128x128xbf16>, vector<16x128xf32> -> vector<16x128xf32>
    %44 = arith.addf %38, %43 : vector<16x128xf32>
    %cst_65 = arith.constant 0.000000e+00 : f32
    %45 = vector.broadcast %cst_65 : f32 to vector<16x128xf32>
    %46 = arith.maximumf %44, %45 : vector<16x128xf32>
    %c0_66 = arith.constant 0 : index
    %c0_67 = arith.constant 0 : index
    %47 = vector.load %arg18[%c0_66, %c0_67] : memref<16x128xf32, #tpu.memory_space<vmem>>, vector<16x128xf32>
    tpu.vector_store %arg18[%c0_66, %c0_67], %46 {strides = array<i32>} : memref<16x128xf32, #tpu.memory_space<vmem>>, vector<16x128xf32>,
    %c0_i32_68 = arith.constant 0 : i32
    %c2_i32_69 = arith.constant 2 : i32
    %48 = arith.addi %c0_i32_68, %c2_i32_69 : i32
    %c1_i32_70 = arith.constant 1 : i32
    scf.for %arg21 = %c0_i32_68 to %48 step %c1_i32_70  : i32 {
      %c1_i32_94 = arith.constant 1 : i32
      %70 = arith.muli %arg21, %c1_i32_94 : i32
      %c0_i32_95 = arith.constant 0 : i32
      %71 = arith.addi %c0_i32_95, %70 : i32
      %c8_i32 = arith.constant 8 : i32
      %72 = arith.muli %71, %c8_i32 : i32
      %73 = tpu.assume_multiple %72, 8 : i32
      %c0_i32_96 = arith.constant 0 : i32
      %74 = arith.addi %73, %c0_i32_96 : i32
      %c3_i32 = arith.constant 3 : i32
      %75 = arith.muli %74, %c3_i32 : i32
      %c0_i32_97 = arith.constant 0 : i32
      %76 = arith.addi %75, %c0_i32_97 : i32
      %77 = arith.index_cast %76 : i32 to index
      %78 = memref.load %arg1[%77] : memref<48xi32, #tpu.memory_space<smem>>
      %79 = arith.index_cast %78 : i32 to index
      %c0_98 = arith.constant 0 : index
      %80 = vector.load %arg18[%79, %c0_98] : memref<16x128xf32, #tpu.memory_space<vmem>>, vector<1x128xf32>
      %c3_i32_99 = arith.constant 3 : i32
      %81 = arith.muli %74, %c3_i32_99 : i32
      %c1_i32_100 = arith.constant 1 : i32
      %82 = arith.addi %81, %c1_i32_100 : i32
      %83 = arith.index_cast %82 : i32 to index
      %84 = memref.load %arg1[%83] : memref<48xi32, #tpu.memory_space<smem>>
      %85 = arith.index_cast %84 : i32 to index
      %c0_101 = arith.constant 0 : index
      %86 = vector.load %arg18[%85, %c0_101] : memref<16x128xf32, #tpu.memory_space<vmem>>, vector<1x128xf32>
      %87 = arith.addf %80, %86 : vector<1x128xf32>
      %88 = arith.maximumf %80, %86 : vector<1x128xf32>
      %c3_i32_102 = arith.constant 3 : i32
      %89 = arith.muli %74, %c3_i32_102 : i32
      %c2_i32_103 = arith.constant 2 : i32
      %90 = arith.addi %89, %c2_i32_103 : i32
      %91 = arith.index_cast %90 : i32 to index
      %92 = memref.load %arg1[%91] : memref<48xi32, #tpu.memory_space<smem>>
      %93 = arith.index_cast %92 : i32 to index
      %c0_104 = arith.constant 0 : index
      %94 = vector.load %arg18[%93, %c0_104] : memref<16x128xf32, #tpu.memory_space<vmem>>, vector<1x128xf32>
      %95 = arith.addf %87, %94 : vector<1x128xf32>
      %96 = arith.maximumf %88, %94 : vector<1x128xf32>
      %97 = arith.mulf %95, %96 : vector<1x128xf32>
      %c1_i32_105 = arith.constant 1 : i32
      %98 = arith.addi %73, %c1_i32_105 : i32
      %c3_i32_106 = arith.constant 3 : i32
      %99 = arith.muli %98, %c3_i32_106 : i32
      %c0_i32_107 = arith.constant 0 : i32
      %100 = arith.addi %99, %c0_i32_107 : i32
      %101 = arith.index_cast %100 : i32 to index
      %102 = memref.load %arg1[%101] : memref<48xi32, #tpu.memory_space<smem>>
      %103 = arith.index_cast %102 : i32 to index
      %c0_108 = arith.constant 0 : index
      %104 = vector.load %arg18[%103, %c0_108] : memref<16x128xf32, #tpu.memory_space<vmem>>, vector<1x128xf32>
      %c3_i32_109 = arith.constant 3 : i32
      %105 = arith.muli %98, %c3_i32_109 : i32
      %c1_i32_110 = arith.constant 1 : i32
      %106 = arith.addi %105, %c1_i32_110 : i32
      %107 = arith.index_cast %106 : i32 to index
      %108 = memref.load %arg1[%107] : memref<48xi32, #tpu.memory_space<smem>>
      %109 = arith.index_cast %108 : i32 to index
      %c0_111 = arith.constant 0 : index
      %110 = vector.load %arg18[%109, %c0_111] : memref<16x128xf32, #tpu.memory_space<vmem>>, vector<1x128xf32>
      %111 = arith.addf %104, %110 : vector<1x128xf32>
      %112 = arith.maximumf %104, %110 : vector<1x128xf32>
      %c3_i32_112 = arith.constant 3 : i32
      %113 = arith.muli %98, %c3_i32_112 : i32
      %c2_i32_113 = arith.constant 2 : i32
      %114 = arith.addi %113, %c2_i32_113 : i32
      %115 = arith.index_cast %114 : i32 to index
      %116 = memref.load %arg1[%115] : memref<48xi32, #tpu.memory_space<smem>>
      %117 = arith.index_cast %116 : i32 to index
      %c0_114 = arith.constant 0 : index
      %118 = vector.load %arg18[%117, %c0_114] : memref<16x128xf32, #tpu.memory_space<vmem>>, vector<1x128xf32>
      %119 = arith.addf %111, %118 : vector<1x128xf32>
      %120 = arith.maximumf %112, %118 : vector<1x128xf32>
      %121 = arith.mulf %119, %120 : vector<1x128xf32>
      %c2_i32_115 = arith.constant 2 : i32
      %122 = arith.addi %73, %c2_i32_115 : i32
      %c3_i32_116 = arith.constant 3 : i32
      %123 = arith.muli %122, %c3_i32_116 : i32
      %c0_i32_117 = arith.constant 0 : i32
      %124 = arith.addi %123, %c0_i32_117 : i32
      %125 = arith.index_cast %124 : i32 to index
      %126 = memref.load %arg1[%125] : memref<48xi32, #tpu.memory_space<smem>>
      %127 = arith.index_cast %126 : i32 to index
      %c0_118 = arith.constant 0 : index
      %128 = vector.load %arg18[%127, %c0_118] : memref<16x128xf32, #tpu.memory_space<vmem>>, vector<1x128xf32>
      %c3_i32_119 = arith.constant 3 : i32
      %129 = arith.muli %122, %c3_i32_119 : i32
      %c1_i32_120 = arith.constant 1 : i32
      %130 = arith.addi %129, %c1_i32_120 : i32
      %131 = arith.index_cast %130 : i32 to index
      %132 = memref.load %arg1[%131] : memref<48xi32, #tpu.memory_space<smem>>
      %133 = arith.index_cast %132 : i32 to index
      %c0_121 = arith.constant 0 : index
      %134 = vector.load %arg18[%133, %c0_121] : memref<16x128xf32, #tpu.memory_space<vmem>>, vector<1x128xf32>
      %135 = arith.addf %128, %134 : vector<1x128xf32>
      %136 = arith.maximumf %128, %134 : vector<1x128xf32>
      %c3_i32_122 = arith.constant 3 : i32
      %137 = arith.muli %122, %c3_i32_122 : i32
      %c2_i32_123 = arith.constant 2 : i32
      %138 = arith.addi %137, %c2_i32_123 : i32
      %139 = arith.index_cast %138 : i32 to index
      %140 = memref.load %arg1[%139] : memref<48xi32, #tpu.memory_space<smem>>
      %141 = arith.index_cast %140 : i32 to index
      %c0_124 = arith.constant 0 : index
      %142 = vector.load %arg18[%141, %c0_124] : memref<16x128xf32, #tpu.memory_space<vmem>>, vector<1x128xf32>
      %143 = arith.addf %135, %142 : vector<1x128xf32>
      %144 = arith.maximumf %136, %142 : vector<1x128xf32>
      %145 = arith.mulf %143, %144 : vector<1x128xf32>
      %c3_i32_125 = arith.constant 3 : i32
      %146 = arith.addi %73, %c3_i32_125 : i32
      %c3_i32_126 = arith.constant 3 : i32
      %147 = arith.muli %146, %c3_i32_126 : i32
      %c0_i32_127 = arith.constant 0 : i32
      %148 = arith.addi %147, %c0_i32_127 : i32
      %149 = arith.index_cast %148 : i32 to index
      %150 = memref.load %arg1[%149] : memref<48xi32, #tpu.memory_space<smem>>
      %151 = arith.index_cast %150 : i32 to index
      %c0_128 = arith.constant 0 : index
      %152 = vector.load %arg18[%151, %c0_128] : memref<16x128xf32, #tpu.memory_space<vmem>>, vector<1x128xf32>
      %c3_i32_129 = arith.constant 3 : i32
      %153 = arith.muli %146, %c3_i32_129 : i32
      %c1_i32_130 = arith.constant 1 : i32
      %154 = arith.addi %153, %c1_i32_130 : i32
      %155 = arith.index_cast %154 : i32 to index
      %156 = memref.load %arg1[%155] : memref<48xi32, #tpu.memory_space<smem>>
      %157 = arith.index_cast %156 : i32 to index
      %c0_131 = arith.constant 0 : index
      %158 = vector.load %arg18[%157, %c0_131] : memref<16x128xf32, #tpu.memory_space<vmem>>, vector<1x128xf32>
      %159 = arith.addf %152, %158 : vector<1x128xf32>
      %160 = arith.maximumf %152, %158 : vector<1x128xf32>
      %c3_i32_132 = arith.constant 3 : i32
      %161 = arith.muli %146, %c3_i32_132 : i32
      %c2_i32_133 = arith.constant 2 : i32
      %162 = arith.addi %161, %c2_i32_133 : i32
      %163 = arith.index_cast %162 : i32 to index
      %164 = memref.load %arg1[%163] : memref<48xi32, #tpu.memory_space<smem>>
      %165 = arith.index_cast %164 : i32 to index
      %c0_134 = arith.constant 0 : index
      %166 = vector.load %arg18[%165, %c0_134] : memref<16x128xf32, #tpu.memory_space<vmem>>, vector<1x128xf32>
      %167 = arith.addf %159, %166 : vector<1x128xf32>
      %168 = arith.maximumf %160, %166 : vector<1x128xf32>
      %169 = arith.mulf %167, %168 : vector<1x128xf32>
      %c4_i32 = arith.constant 4 : i32
      %170 = arith.addi %73, %c4_i32 : i32
      %c3_i32_135 = arith.constant 3 : i32
      %171 = arith.muli %170, %c3_i32_135 : i32
      %c0_i32_136 = arith.constant 0 : i32
      %172 = arith.addi %171, %c0_i32_136 : i32
      %173 = arith.index_cast %172 : i32 to index
      %174 = memref.load %arg1[%173] : memref<48xi32, #tpu.memory_space<smem>>
      %175 = arith.index_cast %174 : i32 to index
      %c0_137 = arith.constant 0 : index
      %176 = vector.load %arg18[%175, %c0_137] : memref<16x128xf32, #tpu.memory_space<vmem>>, vector<1x128xf32>
      %c3_i32_138 = arith.constant 3 : i32
      %177 = arith.muli %170, %c3_i32_138 : i32
      %c1_i32_139 = arith.constant 1 : i32
      %178 = arith.addi %177, %c1_i32_139 : i32
      %179 = arith.index_cast %178 : i32 to index
      %180 = memref.load %arg1[%179] : memref<48xi32, #tpu.memory_space<smem>>
      %181 = arith.index_cast %180 : i32 to index
      %c0_140 = arith.constant 0 : index
      %182 = vector.load %arg18[%181, %c0_140] : memref<16x128xf32, #tpu.memory_space<vmem>>, vector<1x128xf32>
      %183 = arith.addf %176, %182 : vector<1x128xf32>
      %184 = arith.maximumf %176, %182 : vector<1x128xf32>
      %c3_i32_141 = arith.constant 3 : i32
      %185 = arith.muli %170, %c3_i32_141 : i32
      %c2_i32_142 = arith.constant 2 : i32
      %186 = arith.addi %185, %c2_i32_142 : i32
      %187 = arith.index_cast %186 : i32 to index
      %188 = memref.load %arg1[%187] : memref<48xi32, #tpu.memory_space<smem>>
      %189 = arith.index_cast %188 : i32 to index
      %c0_143 = arith.constant 0 : index
      %190 = vector.load %arg18[%189, %c0_143] : memref<16x128xf32, #tpu.memory_space<vmem>>, vector<1x128xf32>
      %191 = arith.addf %183, %190 : vector<1x128xf32>
      %192 = arith.maximumf %184, %190 : vector<1x128xf32>
      %193 = arith.mulf %191, %192 : vector<1x128xf32>
      %c5_i32 = arith.constant 5 : i32
      %194 = arith.addi %73, %c5_i32 : i32
      %c3_i32_144 = arith.constant 3 : i32
      %195 = arith.muli %194, %c3_i32_144 : i32
      %c0_i32_145 = arith.constant 0 : i32
      %196 = arith.addi %195, %c0_i32_145 : i32
      %197 = arith.index_cast %196 : i32 to index
      %198 = memref.load %arg1[%197] : memref<48xi32, #tpu.memory_space<smem>>
      %199 = arith.index_cast %198 : i32 to index
      %c0_146 = arith.constant 0 : index
      %200 = vector.load %arg18[%199, %c0_146] : memref<16x128xf32, #tpu.memory_space<vmem>>, vector<1x128xf32>
      %c3_i32_147 = arith.constant 3 : i32
      %201 = arith.muli %194, %c3_i32_147 : i32
      %c1_i32_148 = arith.constant 1 : i32
      %202 = arith.addi %201, %c1_i32_148 : i32
      %203 = arith.index_cast %202 : i32 to index
      %204 = memref.load %arg1[%203] : memref<48xi32, #tpu.memory_space<smem>>
      %205 = arith.index_cast %204 : i32 to index
      %c0_149 = arith.constant 0 : index
      %206 = vector.load %arg18[%205, %c0_149] : memref<16x128xf32, #tpu.memory_space<vmem>>, vector<1x128xf32>
      %207 = arith.addf %200, %206 : vector<1x128xf32>
      %208 = arith.maximumf %200, %206 : vector<1x128xf32>
      %c3_i32_150 = arith.constant 3 : i32
      %209 = arith.muli %194, %c3_i32_150 : i32
      %c2_i32_151 = arith.constant 2 : i32
      %210 = arith.addi %209, %c2_i32_151 : i32
      %211 = arith.index_cast %210 : i32 to index
      %212 = memref.load %arg1[%211] : memref<48xi32, #tpu.memory_space<smem>>
      %213 = arith.index_cast %212 : i32 to index
      %c0_152 = arith.constant 0 : index
      %214 = vector.load %arg18[%213, %c0_152] : memref<16x128xf32, #tpu.memory_space<vmem>>, vector<1x128xf32>
      %215 = arith.addf %207, %214 : vector<1x128xf32>
      %216 = arith.maximumf %208, %214 : vector<1x128xf32>
      %217 = arith.mulf %215, %216 : vector<1x128xf32>
      %c6_i32 = arith.constant 6 : i32
      %218 = arith.addi %73, %c6_i32 : i32
      %c3_i32_153 = arith.constant 3 : i32
      %219 = arith.muli %218, %c3_i32_153 : i32
      %c0_i32_154 = arith.constant 0 : i32
      %220 = arith.addi %219, %c0_i32_154 : i32
      %221 = arith.index_cast %220 : i32 to index
      %222 = memref.load %arg1[%221] : memref<48xi32, #tpu.memory_space<smem>>
      %223 = arith.index_cast %222 : i32 to index
      %c0_155 = arith.constant 0 : index
      %224 = vector.load %arg18[%223, %c0_155] : memref<16x128xf32, #tpu.memory_space<vmem>>, vector<1x128xf32>
      %c3_i32_156 = arith.constant 3 : i32
      %225 = arith.muli %218, %c3_i32_156 : i32
      %c1_i32_157 = arith.constant 1 : i32
      %226 = arith.addi %225, %c1_i32_157 : i32
      %227 = arith.index_cast %226 : i32 to index
      %228 = memref.load %arg1[%227] : memref<48xi32, #tpu.memory_space<smem>>
      %229 = arith.index_cast %228 : i32 to index
      %c0_158 = arith.constant 0 : index
      %230 = vector.load %arg18[%229, %c0_158] : memref<16x128xf32, #tpu.memory_space<vmem>>, vector<1x128xf32>
      %231 = arith.addf %224, %230 : vector<1x128xf32>
      %232 = arith.maximumf %224, %230 : vector<1x128xf32>
      %c3_i32_159 = arith.constant 3 : i32
      %233 = arith.muli %218, %c3_i32_159 : i32
      %c2_i32_160 = arith.constant 2 : i32
      %234 = arith.addi %233, %c2_i32_160 : i32
      %235 = arith.index_cast %234 : i32 to index
      %236 = memref.load %arg1[%235] : memref<48xi32, #tpu.memory_space<smem>>
      %237 = arith.index_cast %236 : i32 to index
      %c0_161 = arith.constant 0 : index
      %238 = vector.load %arg18[%237, %c0_161] : memref<16x128xf32, #tpu.memory_space<vmem>>, vector<1x128xf32>
      %239 = arith.addf %231, %238 : vector<1x128xf32>
      %240 = arith.maximumf %232, %238 : vector<1x128xf32>
      %241 = arith.mulf %239, %240 : vector<1x128xf32>
      %c7_i32 = arith.constant 7 : i32
      %242 = arith.addi %73, %c7_i32 : i32
      %c3_i32_162 = arith.constant 3 : i32
      %243 = arith.muli %242, %c3_i32_162 : i32
      %c0_i32_163 = arith.constant 0 : i32
      %244 = arith.addi %243, %c0_i32_163 : i32
      %245 = arith.index_cast %244 : i32 to index
      %246 = memref.load %arg1[%245] : memref<48xi32, #tpu.memory_space<smem>>
      %247 = arith.index_cast %246 : i32 to index
      %c0_164 = arith.constant 0 : index
      %248 = vector.load %arg18[%247, %c0_164] : memref<16x128xf32, #tpu.memory_space<vmem>>, vector<1x128xf32>
      %c3_i32_165 = arith.constant 3 : i32
      %249 = arith.muli %242, %c3_i32_165 : i32
      %c1_i32_166 = arith.constant 1 : i32
      %250 = arith.addi %249, %c1_i32_166 : i32
      %251 = arith.index_cast %250 : i32 to index
      %252 = memref.load %arg1[%251] : memref<48xi32, #tpu.memory_space<smem>>
      %253 = arith.index_cast %252 : i32 to index
      %c0_167 = arith.constant 0 : index
      %254 = vector.load %arg18[%253, %c0_167] : memref<16x128xf32, #tpu.memory_space<vmem>>, vector<1x128xf32>
      %255 = arith.addf %248, %254 : vector<1x128xf32>
      %256 = arith.maximumf %248, %254 : vector<1x128xf32>
      %c3_i32_168 = arith.constant 3 : i32
      %257 = arith.muli %242, %c3_i32_168 : i32
      %c2_i32_169 = arith.constant 2 : i32
      %258 = arith.addi %257, %c2_i32_169 : i32
      %259 = arith.index_cast %258 : i32 to index
      %260 = memref.load %arg1[%259] : memref<48xi32, #tpu.memory_space<smem>>
      %261 = arith.index_cast %260 : i32 to index
      %c0_170 = arith.constant 0 : index
      %262 = vector.load %arg18[%261, %c0_170] : memref<16x128xf32, #tpu.memory_space<vmem>>, vector<1x128xf32>
      %263 = arith.addf %255, %262 : vector<1x128xf32>
      %264 = arith.maximumf %256, %262 : vector<1x128xf32>
      %265 = arith.mulf %263, %264 : vector<1x128xf32>
      %266 = tpu.concatenate %97, %121, %145, %169, %193, %217, %241, %265 in 0 : vector<1x128xf32>, vector<1x128xf32>, vector<1x128xf32>, vector<1x128xf32>, vector<1x128xf32>, vector<1x128xf32>, vector<1x128xf32>, vector<1x128xf32> -> vector<8x128xf32>
      %267 = arith.index_cast %73 : i32 to index
      %c0_171 = arith.constant 0 : index
      %268 = vector.load %arg20[%267, %c0_171] : memref<16x128xf32, #tpu.memory_space<vmem>>, vector<8x128xf32>
      tpu.vector_store %arg20[%267, %c0_171], %266 {strides = array<i32>} : memref<16x128xf32, #tpu.memory_space<vmem>>, vector<8x128xf32>,
    }
    %c2_i32_71 = arith.constant 2 : i32
    %c0_72 = arith.constant 0 : index
    %c0_73 = arith.constant 0 : index
    %49 = vector.load %arg20[%c0_72, %c0_73] : memref<16x128xf32, #tpu.memory_space<vmem>>, vector<16x128xf32>
    %50 = arith.truncf %49 : vector<16x128xf32> to vector<16x128xbf16>
    %c0_74 = arith.constant 0 : index
    %c0_75 = arith.constant 0 : index
    %51 = vector.load %arg9[%c0_74, %c0_75] : memref<128x128xbf16, #tpu.memory_space<vmem>>, vector<128x128xbf16>
    %cst_76 = arith.constant dense<0.000000e+00> : vector<16x128xf32>
    %52 = tpu.matmul %50, %51, %cst_76 {dimension_numbers = #tpu.dot_dimension_numbers<[1], [0], [0], [1], [0, 0, 1, 1], [], []>} : vector<16x128xbf16>, vector<128x128xbf16>, vector<16x128xf32> -> vector<16x128xf32>
    %c0_77 = arith.constant 0 : index
    %c0_78 = arith.constant 0 : index
    %53 = vector.load %arg17[%c0_77, %c0_78] : memref<16x128xf32, #tpu.memory_space<vmem>>, vector<16x128xf32>
    %54 = arith.truncf %53 : vector<16x128xf32> to vector<16x128xbf16>
    %c0_79 = arith.constant 0 : index
    %c0_80 = arith.constant 0 : index
    %55 = vector.load %arg10[%c0_79, %c0_80] : memref<128x128xbf16, #tpu.memory_space<vmem>>, vector<128x128xbf16>
    %cst_81 = arith.constant dense<0.000000e+00> : vector<16x128xf32>
    %56 = tpu.matmul %54, %55, %cst_81 {dimension_numbers = #tpu.dot_dimension_numbers<[1], [0], [0], [1], [0, 0, 1, 1], [], []>} : vector<16x128xbf16>, vector<128x128xbf16>, vector<16x128xf32> -> vector<16x128xf32>
    %57 = arith.addf %52, %56 : vector<16x128xf32>
    %c0_82 = arith.constant 0 : index
    %c0_83 = arith.constant 0 : index
    %58 = vector.load %arg15[%c0_82, %c0_83] : memref<16x128xf32, #tpu.memory_space<vmem>>, vector<16x128xf32>
    %59 = arith.truncf %58 : vector<16x128xf32> to vector<16x128xbf16>
    %c0_84 = arith.constant 0 : index
    %c0_85 = arith.constant 0 : index
    %60 = vector.load %arg11[%c0_84, %c0_85] : memref<128x128xbf16, #tpu.memory_space<vmem>>, vector<128x128xbf16>
    %cst_86 = arith.constant dense<0.000000e+00> : vector<16x128xf32>
    %61 = tpu.matmul %59, %60, %cst_86 {dimension_numbers = #tpu.dot_dimension_numbers<[1], [0], [0], [1], [0, 0, 1, 1], [], []>} : vector<16x128xbf16>, vector<128x128xbf16>, vector<16x128xf32> -> vector<16x128xf32>
    %62 = arith.addf %57, %61 : vector<16x128xf32>
    %c0_87 = arith.constant 0 : index
    %c0_88 = arith.constant 0 : index
    %63 = vector.load %arg13[%c0_87, %c0_88] : memref<16x128xf32, #tpu.memory_space<vmem>>, vector<16x128xf32>
    tpu.vector_store %arg13[%c0_87, %c0_88], %62 {strides = array<i32>} : memref<16x128xf32, #tpu.memory_space<vmem>>, vector<16x128xf32>,
    %c0_89 = arith.constant 0 : index
    %c0_90 = arith.constant 0 : index
    %64 = vector.load %arg12[%c0_89, %c0_90] : memref<1x128xf32, #tpu.memory_space<vmem>>, vector<1x128xf32>
    %65 = vector.broadcast %64 : vector<1x128xf32> to vector<16x128xf32>
    %66 = arith.addf %62, %65 : vector<16x128xf32>
    %cst_91 = arith.constant 0.000000e+00 : f32
    %67 = vector.broadcast %cst_91 : f32 to vector<16x128xf32>
    %68 = arith.maximumf %66, %67 : vector<16x128xf32>
    %c0_92 = arith.constant 0 : index
    %c0_93 = arith.constant 0 : index
    %69 = vector.load %arg14[%c0_92, %c0_93] : memref<16x128xf32, #tpu.memory_space<vmem>>, vector<16x128xf32>
    tpu.vector_store %arg14[%c0_92, %c0_93], %68 {strides = array<i32>} : memref<16x128xf32, #tpu.memory_space<vmem>>, vector<16x128xf32>,
    return
  }
  func.func @transform_0(%arg0: i32, %arg1: memref<48xi32, #tpu.memory_space<smem>>, %arg2: memref<16xi32, #tpu.memory_space<smem>>, %arg3: memref<16xi32, #tpu.memory_space<smem>>) -> (i32, i32) {
    %c0_i32 = arith.constant 0 : i32
    %c0_i32_0 = arith.constant 0 : i32
    %c0_i32_1 = arith.constant 0 : i32
    return %c0_i32, %c0_i32_0 : i32, i32
  }
  func.func @transform_1(%arg0: i32, %arg1: memref<48xi32, #tpu.memory_space<smem>>, %arg2: memref<16xi32, #tpu.memory_space<smem>>, %arg3: memref<16xi32, #tpu.memory_space<smem>>) -> (i32, i32) {
    %c0_i32 = arith.constant 0 : i32
    %c0_i32_0 = arith.constant 0 : i32
    %c0_i32_1 = arith.constant 0 : i32
    return %c0_i32, %c0_i32_0 : i32, i32
  }
  func.func @transform_2(%arg0: i32, %arg1: memref<48xi32, #tpu.memory_space<smem>>, %arg2: memref<16xi32, #tpu.memory_space<smem>>, %arg3: memref<16xi32, #tpu.memory_space<smem>>) -> (i32, i32) {
    %c0_i32 = arith.constant 0 : i32
    %c0_i32_0 = arith.constant 0 : i32
    %c0_i32_1 = arith.constant 0 : i32
    return %c0_i32, %c0_i32_0 : i32, i32
  }
  func.func @transform_3(%arg0: i32, %arg1: memref<48xi32, #tpu.memory_space<smem>>, %arg2: memref<16xi32, #tpu.memory_space<smem>>, %arg3: memref<16xi32, #tpu.memory_space<smem>>) -> (i32, i32) {
    %c0_i32 = arith.constant 0 : i32
    %c0_i32_0 = arith.constant 0 : i32
    %c0_i32_1 = arith.constant 0 : i32
    return %c0_i32, %c0_i32_0 : i32, i32
  }
  func.func @transform_4(%arg0: i32, %arg1: memref<48xi32, #tpu.memory_space<smem>>, %arg2: memref<16xi32, #tpu.memory_space<smem>>, %arg3: memref<16xi32, #tpu.memory_space<smem>>) -> (i32, i32, i32) {
    %c0_i32 = arith.constant 0 : i32
    %c0_i32_0 = arith.constant 0 : i32
    %c0_i32_1 = arith.constant 0 : i32
    %c0_i32_2 = arith.constant 0 : i32
    return %c0_i32, %c0_i32_0, %c0_i32_1 : i32, i32, i32
  }
  func.func @transform_5(%arg0: i32, %arg1: memref<48xi32, #tpu.memory_space<smem>>, %arg2: memref<16xi32, #tpu.memory_space<smem>>, %arg3: memref<16xi32, #tpu.memory_space<smem>>) -> (i32, i32) {
    %c0_i32 = arith.constant 0 : i32
    %c0_i32_0 = arith.constant 0 : i32
    %c0_i32_1 = arith.constant 0 : i32
    return %c0_i32, %c0_i32_0 : i32, i32
  }
  func.func @transform_6(%arg0: i32, %arg1: memref<48xi32, #tpu.memory_space<smem>>, %arg2: memref<16xi32, #tpu.memory_space<smem>>, %arg3: memref<16xi32, #tpu.memory_space<smem>>) -> (i32, i32) {
    %c0_i32 = arith.constant 0 : i32
    %c0_i32_0 = arith.constant 0 : i32
    %c0_i32_1 = arith.constant 0 : i32
    return %c0_i32, %c0_i32_0 : i32, i32
  }
  func.func @transform_7(%arg0: i32, %arg1: memref<48xi32, #tpu.memory_space<smem>>, %arg2: memref<16xi32, #tpu.memory_space<smem>>, %arg3: memref<16xi32, #tpu.memory_space<smem>>) -> (i32, i32) {
    %c0_i32 = arith.constant 0 : i32
    %c0_i32_0 = arith.constant 0 : i32
    %c0_i32_1 = arith.constant 0 : i32
    return %c0_i32, %c0_i32_0 : i32, i32
  }
  func.func @transform_8(%arg0: i32, %arg1: memref<48xi32, #tpu.memory_space<smem>>, %arg2: memref<16xi32, #tpu.memory_space<smem>>, %arg3: memref<16xi32, #tpu.memory_space<smem>>) -> (i32, i32) {
    %c0_i32 = arith.constant 0 : i32
    %c0_i32_0 = arith.constant 0 : i32
    %c0_i32_1 = arith.constant 0 : i32
    return %c0_i32, %c0_i32_0 : i32, i32
  }
  func.func @transform_9(%arg0: i32, %arg1: memref<48xi32, #tpu.memory_space<smem>>, %arg2: memref<16xi32, #tpu.memory_space<smem>>, %arg3: memref<16xi32, #tpu.memory_space<smem>>) -> (i32, i32) {
    %c0_i32 = arith.constant 0 : i32
    %c0_i32_0 = arith.constant 0 : i32
    %c0_i32_1 = arith.constant 0 : i32
    return %c0_i32, %c0_i32_0 : i32, i32
  }
  func.func @transform_10(%arg0: i32, %arg1: memref<48xi32, #tpu.memory_space<smem>>, %arg2: memref<16xi32, #tpu.memory_space<smem>>, %arg3: memref<16xi32, #tpu.memory_space<smem>>) -> (i32, i32) {
    %c0_i32 = arith.constant 0 : i32
    %c0_i32_0 = arith.constant 0 : i32
    %c0_i32_1 = arith.constant 0 : i32
    return %c0_i32, %c0_i32_0 : i32, i32
  }
}

module attributes {stable_mosaic.version = 11 : i64} {
  func.func @_bigru_kernel(%arg0: i32, %arg1: memref<40x128xbf16, #tpu.memory_space<vmem>>, %arg2: memref<40x128xbf16, #tpu.memory_space<vmem>>, %arg3: memref<8x128xf32, #tpu.memory_space<vmem>>, %arg4: memref<128x384xbf16, #tpu.memory_space<vmem>>, %arg5: memref<128x384xbf16, #tpu.memory_space<vmem>>, %arg6: memref<1x384xf32, #tpu.memory_space<vmem>>, %arg7: memref<1x384xf32, #tpu.memory_space<vmem>>, %arg8: memref<128x384xbf16, #tpu.memory_space<vmem>>, %arg9: memref<128x384xbf16, #tpu.memory_space<vmem>>, %arg10: memref<1x384xf32, #tpu.memory_space<vmem>>, %arg11: memref<1x384xf32, #tpu.memory_space<vmem>>, %arg12: memref<40x128xf32, #tpu.memory_space<vmem>>, %arg13: memref<40x128xf32, #tpu.memory_space<vmem>>, %arg14: memref<40x384xf32, #tpu.memory_space<vmem>>, %arg15: memref<40x384xf32, #tpu.memory_space<vmem>>) attributes {dimension_semantics = [#tpu.dimension_semantics<arbitrary>], iteration_bounds = array<i64: 1>, scalar_prefetch = 0 : i64, scratch_operands = 2 : i64, tpu.core_type = #tpu.core_type<tc>, window_params = [{pipeline_mode = #tpu.pipeline_mode<synchronous>, transform_indices = @transform_0, window_bounds = array<i64: 40, 128>}, {pipeline_mode = #tpu.pipeline_mode<synchronous>, transform_indices = @transform_1, window_bounds = array<i64: 40, 128>}, {pipeline_mode = #tpu.pipeline_mode<synchronous>, transform_indices = @transform_2, window_bounds = array<i64: 8, 128>}, {pipeline_mode = #tpu.pipeline_mode<synchronous>, transform_indices = @transform_3, window_bounds = array<i64: 128, 384>}, {pipeline_mode = #tpu.pipeline_mode<synchronous>, transform_indices = @transform_4, window_bounds = array<i64: 128, 384>}, {pipeline_mode = #tpu.pipeline_mode<synchronous>, transform_indices = @transform_5, window_bounds = array<i64: 1, 384>}, {pipeline_mode = #tpu.pipeline_mode<synchronous>, transform_indices = @transform_6, window_bounds = array<i64: 1, 384>}, {pipeline_mode = #tpu.pipeline_mode<synchronous>, transform_indices = @transform_7, window_bounds = array<i64: 128, 384>}, {pipeline_mode = #tpu.pipeline_mode<synchronous>, transform_indices = @transform_8, window_bounds = array<i64: 128, 384>}, {pipeline_mode = #tpu.pipeline_mode<synchronous>, transform_indices = @transform_9, window_bounds = array<i64: 1, 384>}, {pipeline_mode = #tpu.pipeline_mode<synchronous>, transform_indices = @transform_10, window_bounds = array<i64: 1, 384>}, {pipeline_mode = #tpu.pipeline_mode<synchronous>, transform_indices = @transform_11, window_bounds = array<i64: 40, 128>}, {pipeline_mode = #tpu.pipeline_mode<synchronous>, transform_indices = @transform_12, window_bounds = array<i64: 40, 128>}]} {
    %c0 = arith.constant 0 : index
    %c0_0 = arith.constant 0 : index
    %0 = vector.load %arg1[%c0, %c0_0] : memref<40x128xbf16, #tpu.memory_space<vmem>>, vector<40x128xbf16>
    %c0_1 = arith.constant 0 : index
    %c0_2 = arith.constant 0 : index
    %1 = vector.load %arg4[%c0_1, %c0_2] : memref<128x384xbf16, #tpu.memory_space<vmem>>, vector<128x384xbf16>
    %cst = arith.constant dense<0.000000e+00> : vector<40x384xf32>
    %2 = tpu.matmul %0, %1, %cst {dimension_numbers = #tpu.dot_dimension_numbers<[1], [0], [0], [1], [0, 0, 1, 1], [], []>} : vector<40x128xbf16>, vector<128x384xbf16>, vector<40x384xf32> -> vector<40x384xf32>
    %c0_3 = arith.constant 0 : index
    %c0_4 = arith.constant 0 : index
    %3 = vector.load %arg6[%c0_3, %c0_4] : memref<1x384xf32, #tpu.memory_space<vmem>>, vector<1x384xf32>
    %4 = vector.broadcast %3 : vector<1x384xf32> to vector<40x384xf32>
    %5 = arith.addf %2, %4 : vector<40x384xf32>
    %c0_5 = arith.constant 0 : index
    %c0_6 = arith.constant 0 : index
    %6 = vector.load %arg14[%c0_5, %c0_6] : memref<40x384xf32, #tpu.memory_space<vmem>>, vector<40x384xf32>
    tpu.vector_store %arg14[%c0_5, %c0_6], %5 {strides = array<i32>} : memref<40x384xf32, #tpu.memory_space<vmem>>, vector<40x384xf32>,
    %c0_7 = arith.constant 0 : index
    %c0_8 = arith.constant 0 : index
    %7 = vector.load %arg2[%c0_7, %c0_8] : memref<40x128xbf16, #tpu.memory_space<vmem>>, vector<40x128xbf16>
    %c0_9 = arith.constant 0 : index
    %c0_10 = arith.constant 0 : index
    %8 = vector.load %arg5[%c0_9, %c0_10] : memref<128x384xbf16, #tpu.memory_space<vmem>>, vector<128x384xbf16>
    %cst_11 = arith.constant dense<0.000000e+00> : vector<40x384xf32>
    %9 = tpu.matmul %7, %8, %cst_11 {dimension_numbers = #tpu.dot_dimension_numbers<[1], [0], [0], [1], [0, 0, 1, 1], [], []>} : vector<40x128xbf16>, vector<128x384xbf16>, vector<40x384xf32> -> vector<40x384xf32>
    %c0_12 = arith.constant 0 : index
    %c0_13 = arith.constant 0 : index
    %10 = vector.load %arg7[%c0_12, %c0_13] : memref<1x384xf32, #tpu.memory_space<vmem>>, vector<1x384xf32>
    %11 = vector.broadcast %10 : vector<1x384xf32> to vector<40x384xf32>
    %12 = arith.addf %9, %11 : vector<40x384xf32>
    %c0_14 = arith.constant 0 : index
    %c0_15 = arith.constant 0 : index
    %13 = vector.load %arg15[%c0_14, %c0_15] : memref<40x384xf32, #tpu.memory_space<vmem>>, vector<40x384xf32>
    tpu.vector_store %arg15[%c0_14, %c0_15], %12 {strides = array<i32>} : memref<40x384xf32, #tpu.memory_space<vmem>>, vector<40x384xf32>,
    %c0_16 = arith.constant 0 : index
    %c0_17 = arith.constant 0 : index
    %14 = vector.load %arg8[%c0_16, %c0_17] : memref<128x384xbf16, #tpu.memory_space<vmem>>, vector<128x384xbf16>
    %c0_18 = arith.constant 0 : index
    %c0_19 = arith.constant 0 : index
    %15 = vector.load %arg9[%c0_18, %c0_19] : memref<128x384xbf16, #tpu.memory_space<vmem>>, vector<128x384xbf16>
    %c0_20 = arith.constant 0 : index
    %c0_21 = arith.constant 0 : index
    %16 = vector.load %arg10[%c0_20, %c0_21] : memref<1x384xf32, #tpu.memory_space<vmem>>, vector<1x384xf32>
    %c0_22 = arith.constant 0 : index
    %c0_23 = arith.constant 0 : index
    %17 = vector.load %arg11[%c0_22, %c0_23] : memref<1x384xf32, #tpu.memory_space<vmem>>, vector<1x384xf32>
    %c0_24 = arith.constant 0 : index
    %c0_25 = arith.constant 0 : index
    %18 = vector.load %arg3[%c0_24, %c0_25] : memref<8x128xf32, #tpu.memory_space<vmem>>, vector<8x128xf32>
    %c0_i32 = arith.constant 0 : i32
    %c8_i32 = arith.constant 8 : i32
    %19 = arith.muli %c0_i32, %c8_i32 : i32
    %20 = tpu.assume_multiple %19, 8 : i32
    %21 = arith.truncf %18 : vector<8x128xf32> to vector<8x128xbf16>
    %cst_26 = arith.constant dense<0.000000e+00> : vector<8x384xf32>
    %22 = tpu.matmul %21, %14, %cst_26 {dimension_numbers = #tpu.dot_dimension_numbers<[1], [0], [0], [1], [0, 0, 1, 1], [], []>} : vector<8x128xbf16>, vector<128x384xbf16>, vector<8x384xf32> -> vector<8x384xf32>
    %23 = vector.broadcast %16 : vector<1x384xf32> to vector<8x384xf32>
    %24 = arith.addf %22, %23 : vector<8x384xf32>
    %25 = arith.truncf %18 : vector<8x128xf32> to vector<8x128xbf16>
    %cst_27 = arith.constant dense<0.000000e+00> : vector<8x384xf32>
    %26 = tpu.matmul %25, %15, %cst_27 {dimension_numbers = #tpu.dot_dimension_numbers<[1], [0], [0], [1], [0, 0, 1, 1], [], []>} : vector<8x128xbf16>, vector<128x384xbf16>, vector<8x384xf32> -> vector<8x384xf32>
    %27 = vector.broadcast %17 : vector<1x384xf32> to vector<8x384xf32>
    %28 = arith.addf %26, %27 : vector<8x384xf32>
    %29 = arith.index_cast %20 : i32 to index
    %c0_28 = arith.constant 0 : index
    %30 = vector.load %arg14[%29, %c0_28] : memref<40x384xf32, #tpu.memory_space<vmem>>, vector<8x384xf32>
    %31 = vector.extract_strided_slice %30 {offsets = [0, 0], sizes = [8, 128], strides = [1, 1]} : vector<8x384xf32> to vector<8x128xf32>
    %32 = vector.extract_strided_slice %24 {offsets = [0, 0], sizes = [8, 128], strides = [1, 1]} : vector<8x384xf32> to vector<8x128xf32>
    %33 = arith.addf %31, %32 : vector<8x128xf32>
    %34 = arith.negf %33 : vector<8x128xf32>
    %35 = math.exp %34 : vector<8x128xf32>
    %cst_29 = arith.constant 1.000000e+00 : f32
    %36 = vector.broadcast %cst_29 : f32 to vector<8x128xf32>
    %37 = arith.addf %36, %35 : vector<8x128xf32>
    %38 = arith.divf %36, %37 : vector<8x128xf32>
    %39 = vector.extract_strided_slice %30 {offsets = [0, 128], sizes = [8, 128], strides = [1, 1]} : vector<8x384xf32> to vector<8x128xf32>
    %40 = vector.extract_strided_slice %24 {offsets = [0, 128], sizes = [8, 128], strides = [1, 1]} : vector<8x384xf32> to vector<8x128xf32>
    %41 = arith.addf %39, %40 : vector<8x128xf32>
    %42 = arith.negf %41 : vector<8x128xf32>
    %43 = math.exp %42 : vector<8x128xf32>
    %cst_30 = arith.constant 1.000000e+00 : f32
    %44 = vector.broadcast %cst_30 : f32 to vector<8x128xf32>
    %45 = arith.addf %44, %43 : vector<8x128xf32>
    %46 = arith.divf %44, %45 : vector<8x128xf32>
    %47 = vector.extract_strided_slice %30 {offsets = [0, 256], sizes = [8, 128], strides = [1, 1]} : vector<8x384xf32> to vector<8x128xf32>
    %48 = vector.extract_strided_slice %24 {offsets = [0, 256], sizes = [8, 128], strides = [1, 1]} : vector<8x384xf32> to vector<8x128xf32>
    %49 = arith.mulf %38, %48 : vector<8x128xf32>
    %50 = arith.addf %47, %49 : vector<8x128xf32>
    %51 = math.tanh %50 : vector<8x128xf32>
    %cst_31 = arith.constant 1.000000e+00 : f32
    %52 = vector.broadcast %cst_31 : f32 to vector<8x128xf32>
    %53 = arith.subf %52, %46 : vector<8x128xf32>
    %54 = arith.mulf %53, %51 : vector<8x128xf32>
    %55 = arith.mulf %46, %18 : vector<8x128xf32>
    %56 = arith.addf %54, %55 : vector<8x128xf32>
    %57 = arith.index_cast %20 : i32 to index
    %c0_32 = arith.constant 0 : index
    %58 = vector.load %arg15[%57, %c0_32] : memref<40x384xf32, #tpu.memory_space<vmem>>, vector<8x384xf32>
    %59 = vector.extract_strided_slice %58 {offsets = [0, 0], sizes = [8, 128], strides = [1, 1]} : vector<8x384xf32> to vector<8x128xf32>
    %60 = vector.extract_strided_slice %28 {offsets = [0, 0], sizes = [8, 128], strides = [1, 1]} : vector<8x384xf32> to vector<8x128xf32>
    %61 = arith.addf %59, %60 : vector<8x128xf32>
    %62 = arith.negf %61 : vector<8x128xf32>
    %63 = math.exp %62 : vector<8x128xf32>
    %cst_33 = arith.constant 1.000000e+00 : f32
    %64 = vector.broadcast %cst_33 : f32 to vector<8x128xf32>
    %65 = arith.addf %64, %63 : vector<8x128xf32>
    %66 = arith.divf %64, %65 : vector<8x128xf32>
    %67 = vector.extract_strided_slice %58 {offsets = [0, 128], sizes = [8, 128], strides = [1, 1]} : vector<8x384xf32> to vector<8x128xf32>
    %68 = vector.extract_strided_slice %28 {offsets = [0, 128], sizes = [8, 128], strides = [1, 1]} : vector<8x384xf32> to vector<8x128xf32>
    %69 = arith.addf %67, %68 : vector<8x128xf32>
    %70 = arith.negf %69 : vector<8x128xf32>
    %71 = math.exp %70 : vector<8x128xf32>
    %cst_34 = arith.constant 1.000000e+00 : f32
    %72 = vector.broadcast %cst_34 : f32 to vector<8x128xf32>
    %73 = arith.addf %72, %71 : vector<8x128xf32>
    %74 = arith.divf %72, %73 : vector<8x128xf32>
    %75 = vector.extract_strided_slice %58 {offsets = [0, 256], sizes = [8, 128], strides = [1, 1]} : vector<8x384xf32> to vector<8x128xf32>
    %76 = vector.extract_strided_slice %28 {offsets = [0, 256], sizes = [8, 128], strides = [1, 1]} : vector<8x384xf32> to vector<8x128xf32>
    %77 = arith.mulf %66, %76 : vector<8x128xf32>
    %78 = arith.addf %75, %77 : vector<8x128xf32>
    %79 = math.tanh %78 : vector<8x128xf32>
    %cst_35 = arith.constant 1.000000e+00 : f32
    %80 = vector.broadcast %cst_35 : f32 to vector<8x128xf32>
    %81 = arith.subf %80, %74 : vector<8x128xf32>
    %82 = arith.mulf %81, %79 : vector<8x128xf32>
    %83 = arith.mulf %74, %18 : vector<8x128xf32>
    %84 = arith.addf %82, %83 : vector<8x128xf32>
    %85 = arith.index_cast %20 : i32 to index
    %c0_36 = arith.constant 0 : index
    %86 = vector.load %arg12[%85, %c0_36] : memref<40x128xf32, #tpu.memory_space<vmem>>, vector<8x128xf32>
    tpu.vector_store %arg12[%85, %c0_36], %56 {strides = array<i32>} : memref<40x128xf32, #tpu.memory_space<vmem>>, vector<8x128xf32>,
    %87 = arith.index_cast %20 : i32 to index
    %c0_37 = arith.constant 0 : index
    %88 = vector.load %arg13[%87, %c0_37] : memref<40x128xf32, #tpu.memory_space<vmem>>, vector<8x128xf32>
    tpu.vector_store %arg13[%87, %c0_37], %84 {strides = array<i32>} : memref<40x128xf32, #tpu.memory_space<vmem>>, vector<8x128xf32>,
    %c1_i32 = arith.constant 1 : i32
    %c8_i32_38 = arith.constant 8 : i32
    %89 = arith.muli %c1_i32, %c8_i32_38 : i32
    %90 = tpu.assume_multiple %89, 8 : i32
    %91 = arith.truncf %56 : vector<8x128xf32> to vector<8x128xbf16>
    %cst_39 = arith.constant dense<0.000000e+00> : vector<8x384xf32>
    %92 = tpu.matmul %91, %14, %cst_39 {dimension_numbers = #tpu.dot_dimension_numbers<[1], [0], [0], [1], [0, 0, 1, 1], [], []>} : vector<8x128xbf16>, vector<128x384xbf16>, vector<8x384xf32> -> vector<8x384xf32>
    %93 = vector.broadcast %16 : vector<1x384xf32> to vector<8x384xf32>
    %94 = arith.addf %92, %93 : vector<8x384xf32>
    %95 = arith.truncf %84 : vector<8x128xf32> to vector<8x128xbf16>
    %cst_40 = arith.constant dense<0.000000e+00> : vector<8x384xf32>
    %96 = tpu.matmul %95, %15, %cst_40 {dimension_numbers = #tpu.dot_dimension_numbers<[1], [0], [0], [1], [0, 0, 1, 1], [], []>} : vector<8x128xbf16>, vector<128x384xbf16>, vector<8x384xf32> -> vector<8x384xf32>
    %97 = vector.broadcast %17 : vector<1x384xf32> to vector<8x384xf32>
    %98 = arith.addf %96, %97 : vector<8x384xf32>
    %99 = arith.index_cast %90 : i32 to index
    %c0_41 = arith.constant 0 : index
    %100 = vector.load %arg14[%99, %c0_41] : memref<40x384xf32, #tpu.memory_space<vmem>>, vector<8x384xf32>
    %101 = vector.extract_strided_slice %100 {offsets = [0, 0], sizes = [8, 128], strides = [1, 1]} : vector<8x384xf32> to vector<8x128xf32>
    %102 = vector.extract_strided_slice %94 {offsets = [0, 0], sizes = [8, 128], strides = [1, 1]} : vector<8x384xf32> to vector<8x128xf32>
    %103 = arith.addf %101, %102 : vector<8x128xf32>
    %104 = arith.negf %103 : vector<8x128xf32>
    %105 = math.exp %104 : vector<8x128xf32>
    %cst_42 = arith.constant 1.000000e+00 : f32
    %106 = vector.broadcast %cst_42 : f32 to vector<8x128xf32>
    %107 = arith.addf %106, %105 : vector<8x128xf32>
    %108 = arith.divf %106, %107 : vector<8x128xf32>
    %109 = vector.extract_strided_slice %100 {offsets = [0, 128], sizes = [8, 128], strides = [1, 1]} : vector<8x384xf32> to vector<8x128xf32>
    %110 = vector.extract_strided_slice %94 {offsets = [0, 128], sizes = [8, 128], strides = [1, 1]} : vector<8x384xf32> to vector<8x128xf32>
    %111 = arith.addf %109, %110 : vector<8x128xf32>
    %112 = arith.negf %111 : vector<8x128xf32>
    %113 = math.exp %112 : vector<8x128xf32>
    %cst_43 = arith.constant 1.000000e+00 : f32
    %114 = vector.broadcast %cst_43 : f32 to vector<8x128xf32>
    %115 = arith.addf %114, %113 : vector<8x128xf32>
    %116 = arith.divf %114, %115 : vector<8x128xf32>
    %117 = vector.extract_strided_slice %100 {offsets = [0, 256], sizes = [8, 128], strides = [1, 1]} : vector<8x384xf32> to vector<8x128xf32>
    %118 = vector.extract_strided_slice %94 {offsets = [0, 256], sizes = [8, 128], strides = [1, 1]} : vector<8x384xf32> to vector<8x128xf32>
    %119 = arith.mulf %108, %118 : vector<8x128xf32>
    %120 = arith.addf %117, %119 : vector<8x128xf32>
    %121 = math.tanh %120 : vector<8x128xf32>
    %cst_44 = arith.constant 1.000000e+00 : f32
    %122 = vector.broadcast %cst_44 : f32 to vector<8x128xf32>
    %123 = arith.subf %122, %116 : vector<8x128xf32>
    %124 = arith.mulf %123, %121 : vector<8x128xf32>
    %125 = arith.mulf %116, %56 : vector<8x128xf32>
    %126 = arith.addf %124, %125 : vector<8x128xf32>
    %127 = arith.index_cast %90 : i32 to index
    %c0_45 = arith.constant 0 : index
    %128 = vector.load %arg15[%127, %c0_45] : memref<40x384xf32, #tpu.memory_space<vmem>>, vector<8x384xf32>
    %129 = vector.extract_strided_slice %128 {offsets = [0, 0], sizes = [8, 128], strides = [1, 1]} : vector<8x384xf32> to vector<8x128xf32>
    %130 = vector.extract_strided_slice %98 {offsets = [0, 0], sizes = [8, 128], strides = [1, 1]} : vector<8x384xf32> to vector<8x128xf32>
    %131 = arith.addf %129, %130 : vector<8x128xf32>
    %132 = arith.negf %131 : vector<8x128xf32>
    %133 = math.exp %132 : vector<8x128xf32>
    %cst_46 = arith.constant 1.000000e+00 : f32
    %134 = vector.broadcast %cst_46 : f32 to vector<8x128xf32>
    %135 = arith.addf %134, %133 : vector<8x128xf32>
    %136 = arith.divf %134, %135 : vector<8x128xf32>
    %137 = vector.extract_strided_slice %128 {offsets = [0, 128], sizes = [8, 128], strides = [1, 1]} : vector<8x384xf32> to vector<8x128xf32>
    %138 = vector.extract_strided_slice %98 {offsets = [0, 128], sizes = [8, 128], strides = [1, 1]} : vector<8x384xf32> to vector<8x128xf32>
    %139 = arith.addf %137, %138 : vector<8x128xf32>
    %140 = arith.negf %139 : vector<8x128xf32>
    %141 = math.exp %140 : vector<8x128xf32>
    %cst_47 = arith.constant 1.000000e+00 : f32
    %142 = vector.broadcast %cst_47 : f32 to vector<8x128xf32>
    %143 = arith.addf %142, %141 : vector<8x128xf32>
    %144 = arith.divf %142, %143 : vector<8x128xf32>
    %145 = vector.extract_strided_slice %128 {offsets = [0, 256], sizes = [8, 128], strides = [1, 1]} : vector<8x384xf32> to vector<8x128xf32>
    %146 = vector.extract_strided_slice %98 {offsets = [0, 256], sizes = [8, 128], strides = [1, 1]} : vector<8x384xf32> to vector<8x128xf32>
    %147 = arith.mulf %136, %146 : vector<8x128xf32>
    %148 = arith.addf %145, %147 : vector<8x128xf32>
    %149 = math.tanh %148 : vector<8x128xf32>
    %cst_48 = arith.constant 1.000000e+00 : f32
    %150 = vector.broadcast %cst_48 : f32 to vector<8x128xf32>
    %151 = arith.subf %150, %144 : vector<8x128xf32>
    %152 = arith.mulf %151, %149 : vector<8x128xf32>
    %153 = arith.mulf %144, %84 : vector<8x128xf32>
    %154 = arith.addf %152, %153 : vector<8x128xf32>
    %155 = arith.index_cast %90 : i32 to index
    %c0_49 = arith.constant 0 : index
    %156 = vector.load %arg12[%155, %c0_49] : memref<40x128xf32, #tpu.memory_space<vmem>>, vector<8x128xf32>
    tpu.vector_store %arg12[%155, %c0_49], %126 {strides = array<i32>} : memref<40x128xf32, #tpu.memory_space<vmem>>, vector<8x128xf32>,
    %157 = arith.index_cast %90 : i32 to index
    %c0_50 = arith.constant 0 : index
    %158 = vector.load %arg13[%157, %c0_50] : memref<40x128xf32, #tpu.memory_space<vmem>>, vector<8x128xf32>
    tpu.vector_store %arg13[%157, %c0_50], %154 {strides = array<i32>} : memref<40x128xf32, #tpu.memory_space<vmem>>, vector<8x128xf32>,
    %c2_i32 = arith.constant 2 : i32
    %c8_i32_51 = arith.constant 8 : i32
    %159 = arith.muli %c2_i32, %c8_i32_51 : i32
    %160 = tpu.assume_multiple %159, 8 : i32
    %161 = arith.truncf %126 : vector<8x128xf32> to vector<8x128xbf16>
    %cst_52 = arith.constant dense<0.000000e+00> : vector<8x384xf32>
    %162 = tpu.matmul %161, %14, %cst_52 {dimension_numbers = #tpu.dot_dimension_numbers<[1], [0], [0], [1], [0, 0, 1, 1], [], []>} : vector<8x128xbf16>, vector<128x384xbf16>, vector<8x384xf32> -> vector<8x384xf32>
    %163 = vector.broadcast %16 : vector<1x384xf32> to vector<8x384xf32>
    %164 = arith.addf %162, %163 : vector<8x384xf32>
    %165 = arith.truncf %154 : vector<8x128xf32> to vector<8x128xbf16>
    %cst_53 = arith.constant dense<0.000000e+00> : vector<8x384xf32>
    %166 = tpu.matmul %165, %15, %cst_53 {dimension_numbers = #tpu.dot_dimension_numbers<[1], [0], [0], [1], [0, 0, 1, 1], [], []>} : vector<8x128xbf16>, vector<128x384xbf16>, vector<8x384xf32> -> vector<8x384xf32>
    %167 = vector.broadcast %17 : vector<1x384xf32> to vector<8x384xf32>
    %168 = arith.addf %166, %167 : vector<8x384xf32>
    %169 = arith.index_cast %160 : i32 to index
    %c0_54 = arith.constant 0 : index
    %170 = vector.load %arg14[%169, %c0_54] : memref<40x384xf32, #tpu.memory_space<vmem>>, vector<8x384xf32>
    %171 = vector.extract_strided_slice %170 {offsets = [0, 0], sizes = [8, 128], strides = [1, 1]} : vector<8x384xf32> to vector<8x128xf32>
    %172 = vector.extract_strided_slice %164 {offsets = [0, 0], sizes = [8, 128], strides = [1, 1]} : vector<8x384xf32> to vector<8x128xf32>
    %173 = arith.addf %171, %172 : vector<8x128xf32>
    %174 = arith.negf %173 : vector<8x128xf32>
    %175 = math.exp %174 : vector<8x128xf32>
    %cst_55 = arith.constant 1.000000e+00 : f32
    %176 = vector.broadcast %cst_55 : f32 to vector<8x128xf32>
    %177 = arith.addf %176, %175 : vector<8x128xf32>
    %178 = arith.divf %176, %177 : vector<8x128xf32>
    %179 = vector.extract_strided_slice %170 {offsets = [0, 128], sizes = [8, 128], strides = [1, 1]} : vector<8x384xf32> to vector<8x128xf32>
    %180 = vector.extract_strided_slice %164 {offsets = [0, 128], sizes = [8, 128], strides = [1, 1]} : vector<8x384xf32> to vector<8x128xf32>
    %181 = arith.addf %179, %180 : vector<8x128xf32>
    %182 = arith.negf %181 : vector<8x128xf32>
    %183 = math.exp %182 : vector<8x128xf32>
    %cst_56 = arith.constant 1.000000e+00 : f32
    %184 = vector.broadcast %cst_56 : f32 to vector<8x128xf32>
    %185 = arith.addf %184, %183 : vector<8x128xf32>
    %186 = arith.divf %184, %185 : vector<8x128xf32>
    %187 = vector.extract_strided_slice %170 {offsets = [0, 256], sizes = [8, 128], strides = [1, 1]} : vector<8x384xf32> to vector<8x128xf32>
    %188 = vector.extract_strided_slice %164 {offsets = [0, 256], sizes = [8, 128], strides = [1, 1]} : vector<8x384xf32> to vector<8x128xf32>
    %189 = arith.mulf %178, %188 : vector<8x128xf32>
    %190 = arith.addf %187, %189 : vector<8x128xf32>
    %191 = math.tanh %190 : vector<8x128xf32>
    %cst_57 = arith.constant 1.000000e+00 : f32
    %192 = vector.broadcast %cst_57 : f32 to vector<8x128xf32>
    %193 = arith.subf %192, %186 : vector<8x128xf32>
    %194 = arith.mulf %193, %191 : vector<8x128xf32>
    %195 = arith.mulf %186, %126 : vector<8x128xf32>
    %196 = arith.addf %194, %195 : vector<8x128xf32>
    %197 = arith.index_cast %160 : i32 to index
    %c0_58 = arith.constant 0 : index
    %198 = vector.load %arg15[%197, %c0_58] : memref<40x384xf32, #tpu.memory_space<vmem>>, vector<8x384xf32>
    %199 = vector.extract_strided_slice %198 {offsets = [0, 0], sizes = [8, 128], strides = [1, 1]} : vector<8x384xf32> to vector<8x128xf32>
    %200 = vector.extract_strided_slice %168 {offsets = [0, 0], sizes = [8, 128], strides = [1, 1]} : vector<8x384xf32> to vector<8x128xf32>
    %201 = arith.addf %199, %200 : vector<8x128xf32>
    %202 = arith.negf %201 : vector<8x128xf32>
    %203 = math.exp %202 : vector<8x128xf32>
    %cst_59 = arith.constant 1.000000e+00 : f32
    %204 = vector.broadcast %cst_59 : f32 to vector<8x128xf32>
    %205 = arith.addf %204, %203 : vector<8x128xf32>
    %206 = arith.divf %204, %205 : vector<8x128xf32>
    %207 = vector.extract_strided_slice %198 {offsets = [0, 128], sizes = [8, 128], strides = [1, 1]} : vector<8x384xf32> to vector<8x128xf32>
    %208 = vector.extract_strided_slice %168 {offsets = [0, 128], sizes = [8, 128], strides = [1, 1]} : vector<8x384xf32> to vector<8x128xf32>
    %209 = arith.addf %207, %208 : vector<8x128xf32>
    %210 = arith.negf %209 : vector<8x128xf32>
    %211 = math.exp %210 : vector<8x128xf32>
    %cst_60 = arith.constant 1.000000e+00 : f32
    %212 = vector.broadcast %cst_60 : f32 to vector<8x128xf32>
    %213 = arith.addf %212, %211 : vector<8x128xf32>
    %214 = arith.divf %212, %213 : vector<8x128xf32>
    %215 = vector.extract_strided_slice %198 {offsets = [0, 256], sizes = [8, 128], strides = [1, 1]} : vector<8x384xf32> to vector<8x128xf32>
    %216 = vector.extract_strided_slice %168 {offsets = [0, 256], sizes = [8, 128], strides = [1, 1]} : vector<8x384xf32> to vector<8x128xf32>
    %217 = arith.mulf %206, %216 : vector<8x128xf32>
    %218 = arith.addf %215, %217 : vector<8x128xf32>
    %219 = math.tanh %218 : vector<8x128xf32>
    %cst_61 = arith.constant 1.000000e+00 : f32
    %220 = vector.broadcast %cst_61 : f32 to vector<8x128xf32>
    %221 = arith.subf %220, %214 : vector<8x128xf32>
    %222 = arith.mulf %221, %219 : vector<8x128xf32>
    %223 = arith.mulf %214, %154 : vector<8x128xf32>
    %224 = arith.addf %222, %223 : vector<8x128xf32>
    %225 = arith.index_cast %160 : i32 to index
    %c0_62 = arith.constant 0 : index
    %226 = vector.load %arg12[%225, %c0_62] : memref<40x128xf32, #tpu.memory_space<vmem>>, vector<8x128xf32>
    tpu.vector_store %arg12[%225, %c0_62], %196 {strides = array<i32>} : memref<40x128xf32, #tpu.memory_space<vmem>>, vector<8x128xf32>,
    %227 = arith.index_cast %160 : i32 to index
    %c0_63 = arith.constant 0 : index
    %228 = vector.load %arg13[%227, %c0_63] : memref<40x128xf32, #tpu.memory_space<vmem>>, vector<8x128xf32>
    tpu.vector_store %arg13[%227, %c0_63], %224 {strides = array<i32>} : memref<40x128xf32, #tpu.memory_space<vmem>>, vector<8x128xf32>,
    %c3_i32 = arith.constant 3 : i32
    %c8_i32_64 = arith.constant 8 : i32
    %229 = arith.muli %c3_i32, %c8_i32_64 : i32
    %230 = tpu.assume_multiple %229, 8 : i32
    %231 = arith.truncf %196 : vector<8x128xf32> to vector<8x128xbf16>
    %cst_65 = arith.constant dense<0.000000e+00> : vector<8x384xf32>
    %232 = tpu.matmul %231, %14, %cst_65 {dimension_numbers = #tpu.dot_dimension_numbers<[1], [0], [0], [1], [0, 0, 1, 1], [], []>} : vector<8x128xbf16>, vector<128x384xbf16>, vector<8x384xf32> -> vector<8x384xf32>
    %233 = vector.broadcast %16 : vector<1x384xf32> to vector<8x384xf32>
    %234 = arith.addf %232, %233 : vector<8x384xf32>
    %235 = arith.truncf %224 : vector<8x128xf32> to vector<8x128xbf16>
    %cst_66 = arith.constant dense<0.000000e+00> : vector<8x384xf32>
    %236 = tpu.matmul %235, %15, %cst_66 {dimension_numbers = #tpu.dot_dimension_numbers<[1], [0], [0], [1], [0, 0, 1, 1], [], []>} : vector<8x128xbf16>, vector<128x384xbf16>, vector<8x384xf32> -> vector<8x384xf32>
    %237 = vector.broadcast %17 : vector<1x384xf32> to vector<8x384xf32>
    %238 = arith.addf %236, %237 : vector<8x384xf32>
    %239 = arith.index_cast %230 : i32 to index
    %c0_67 = arith.constant 0 : index
    %240 = vector.load %arg14[%239, %c0_67] : memref<40x384xf32, #tpu.memory_space<vmem>>, vector<8x384xf32>
    %241 = vector.extract_strided_slice %240 {offsets = [0, 0], sizes = [8, 128], strides = [1, 1]} : vector<8x384xf32> to vector<8x128xf32>
    %242 = vector.extract_strided_slice %234 {offsets = [0, 0], sizes = [8, 128], strides = [1, 1]} : vector<8x384xf32> to vector<8x128xf32>
    %243 = arith.addf %241, %242 : vector<8x128xf32>
    %244 = arith.negf %243 : vector<8x128xf32>
    %245 = math.exp %244 : vector<8x128xf32>
    %cst_68 = arith.constant 1.000000e+00 : f32
    %246 = vector.broadcast %cst_68 : f32 to vector<8x128xf32>
    %247 = arith.addf %246, %245 : vector<8x128xf32>
    %248 = arith.divf %246, %247 : vector<8x128xf32>
    %249 = vector.extract_strided_slice %240 {offsets = [0, 128], sizes = [8, 128], strides = [1, 1]} : vector<8x384xf32> to vector<8x128xf32>
    %250 = vector.extract_strided_slice %234 {offsets = [0, 128], sizes = [8, 128], strides = [1, 1]} : vector<8x384xf32> to vector<8x128xf32>
    %251 = arith.addf %249, %250 : vector<8x128xf32>
    %252 = arith.negf %251 : vector<8x128xf32>
    %253 = math.exp %252 : vector<8x128xf32>
    %cst_69 = arith.constant 1.000000e+00 : f32
    %254 = vector.broadcast %cst_69 : f32 to vector<8x128xf32>
    %255 = arith.addf %254, %253 : vector<8x128xf32>
    %256 = arith.divf %254, %255 : vector<8x128xf32>
    %257 = vector.extract_strided_slice %240 {offsets = [0, 256], sizes = [8, 128], strides = [1, 1]} : vector<8x384xf32> to vector<8x128xf32>
    %258 = vector.extract_strided_slice %234 {offsets = [0, 256], sizes = [8, 128], strides = [1, 1]} : vector<8x384xf32> to vector<8x128xf32>
    %259 = arith.mulf %248, %258 : vector<8x128xf32>
    %260 = arith.addf %257, %259 : vector<8x128xf32>
    %261 = math.tanh %260 : vector<8x128xf32>
    %cst_70 = arith.constant 1.000000e+00 : f32
    %262 = vector.broadcast %cst_70 : f32 to vector<8x128xf32>
    %263 = arith.subf %262, %256 : vector<8x128xf32>
    %264 = arith.mulf %263, %261 : vector<8x128xf32>
    %265 = arith.mulf %256, %196 : vector<8x128xf32>
    %266 = arith.addf %264, %265 : vector<8x128xf32>
    %267 = arith.index_cast %230 : i32 to index
    %c0_71 = arith.constant 0 : index
    %268 = vector.load %arg15[%267, %c0_71] : memref<40x384xf32, #tpu.memory_space<vmem>>, vector<8x384xf32>
    %269 = vector.extract_strided_slice %268 {offsets = [0, 0], sizes = [8, 128], strides = [1, 1]} : vector<8x384xf32> to vector<8x128xf32>
    %270 = vector.extract_strided_slice %238 {offsets = [0, 0], sizes = [8, 128], strides = [1, 1]} : vector<8x384xf32> to vector<8x128xf32>
    %271 = arith.addf %269, %270 : vector<8x128xf32>
    %272 = arith.negf %271 : vector<8x128xf32>
    %273 = math.exp %272 : vector<8x128xf32>
    %cst_72 = arith.constant 1.000000e+00 : f32
    %274 = vector.broadcast %cst_72 : f32 to vector<8x128xf32>
    %275 = arith.addf %274, %273 : vector<8x128xf32>
    %276 = arith.divf %274, %275 : vector<8x128xf32>
    %277 = vector.extract_strided_slice %268 {offsets = [0, 128], sizes = [8, 128], strides = [1, 1]} : vector<8x384xf32> to vector<8x128xf32>
    %278 = vector.extract_strided_slice %238 {offsets = [0, 128], sizes = [8, 128], strides = [1, 1]} : vector<8x384xf32> to vector<8x128xf32>
    %279 = arith.addf %277, %278 : vector<8x128xf32>
    %280 = arith.negf %279 : vector<8x128xf32>
    %281 = math.exp %280 : vector<8x128xf32>
    %cst_73 = arith.constant 1.000000e+00 : f32
    %282 = vector.broadcast %cst_73 : f32 to vector<8x128xf32>
    %283 = arith.addf %282, %281 : vector<8x128xf32>
    %284 = arith.divf %282, %283 : vector<8x128xf32>
    %285 = vector.extract_strided_slice %268 {offsets = [0, 256], sizes = [8, 128], strides = [1, 1]} : vector<8x384xf32> to vector<8x128xf32>
    %286 = vector.extract_strided_slice %238 {offsets = [0, 256], sizes = [8, 128], strides = [1, 1]} : vector<8x384xf32> to vector<8x128xf32>
    %287 = arith.mulf %276, %286 : vector<8x128xf32>
    %288 = arith.addf %285, %287 : vector<8x128xf32>
    %289 = math.tanh %288 : vector<8x128xf32>
    %cst_74 = arith.constant 1.000000e+00 : f32
    %290 = vector.broadcast %cst_74 : f32 to vector<8x128xf32>
    %291 = arith.subf %290, %284 : vector<8x128xf32>
    %292 = arith.mulf %291, %289 : vector<8x128xf32>
    %293 = arith.mulf %284, %224 : vector<8x128xf32>
    %294 = arith.addf %292, %293 : vector<8x128xf32>
    %295 = arith.index_cast %230 : i32 to index
    %c0_75 = arith.constant 0 : index
    %296 = vector.load %arg12[%295, %c0_75] : memref<40x128xf32, #tpu.memory_space<vmem>>, vector<8x128xf32>
    tpu.vector_store %arg12[%295, %c0_75], %266 {strides = array<i32>} : memref<40x128xf32, #tpu.memory_space<vmem>>, vector<8x128xf32>,
    %297 = arith.index_cast %230 : i32 to index
    %c0_76 = arith.constant 0 : index
    %298 = vector.load %arg13[%297, %c0_76] : memref<40x128xf32, #tpu.memory_space<vmem>>, vector<8x128xf32>
    tpu.vector_store %arg13[%297, %c0_76], %294 {strides = array<i32>} : memref<40x128xf32, #tpu.memory_space<vmem>>, vector<8x128xf32>,
    %c4_i32 = arith.constant 4 : i32
    %c8_i32_77 = arith.constant 8 : i32
    %299 = arith.muli %c4_i32, %c8_i32_77 : i32
    %300 = tpu.assume_multiple %299, 8 : i32
    %301 = arith.truncf %266 : vector<8x128xf32> to vector<8x128xbf16>
    %cst_78 = arith.constant dense<0.000000e+00> : vector<8x384xf32>
    %302 = tpu.matmul %301, %14, %cst_78 {dimension_numbers = #tpu.dot_dimension_numbers<[1], [0], [0], [1], [0, 0, 1, 1], [], []>} : vector<8x128xbf16>, vector<128x384xbf16>, vector<8x384xf32> -> vector<8x384xf32>
    %303 = vector.broadcast %16 : vector<1x384xf32> to vector<8x384xf32>
    %304 = arith.addf %302, %303 : vector<8x384xf32>
    %305 = arith.truncf %294 : vector<8x128xf32> to vector<8x128xbf16>
    %cst_79 = arith.constant dense<0.000000e+00> : vector<8x384xf32>
    %306 = tpu.matmul %305, %15, %cst_79 {dimension_numbers = #tpu.dot_dimension_numbers<[1], [0], [0], [1], [0, 0, 1, 1], [], []>} : vector<8x128xbf16>, vector<128x384xbf16>, vector<8x384xf32> -> vector<8x384xf32>
    %307 = vector.broadcast %17 : vector<1x384xf32> to vector<8x384xf32>
    %308 = arith.addf %306, %307 : vector<8x384xf32>
    %309 = arith.index_cast %300 : i32 to index
    %c0_80 = arith.constant 0 : index
    %310 = vector.load %arg14[%309, %c0_80] : memref<40x384xf32, #tpu.memory_space<vmem>>, vector<8x384xf32>
    %311 = vector.extract_strided_slice %310 {offsets = [0, 0], sizes = [8, 128], strides = [1, 1]} : vector<8x384xf32> to vector<8x128xf32>
    %312 = vector.extract_strided_slice %304 {offsets = [0, 0], sizes = [8, 128], strides = [1, 1]} : vector<8x384xf32> to vector<8x128xf32>
    %313 = arith.addf %311, %312 : vector<8x128xf32>
    %314 = arith.negf %313 : vector<8x128xf32>
    %315 = math.exp %314 : vector<8x128xf32>
    %cst_81 = arith.constant 1.000000e+00 : f32
    %316 = vector.broadcast %cst_81 : f32 to vector<8x128xf32>
    %317 = arith.addf %316, %315 : vector<8x128xf32>
    %318 = arith.divf %316, %317 : vector<8x128xf32>
    %319 = vector.extract_strided_slice %310 {offsets = [0, 128], sizes = [8, 128], strides = [1, 1]} : vector<8x384xf32> to vector<8x128xf32>
    %320 = vector.extract_strided_slice %304 {offsets = [0, 128], sizes = [8, 128], strides = [1, 1]} : vector<8x384xf32> to vector<8x128xf32>
    %321 = arith.addf %319, %320 : vector<8x128xf32>
    %322 = arith.negf %321 : vector<8x128xf32>
    %323 = math.exp %322 : vector<8x128xf32>
    %cst_82 = arith.constant 1.000000e+00 : f32
    %324 = vector.broadcast %cst_82 : f32 to vector<8x128xf32>
    %325 = arith.addf %324, %323 : vector<8x128xf32>
    %326 = arith.divf %324, %325 : vector<8x128xf32>
    %327 = vector.extract_strided_slice %310 {offsets = [0, 256], sizes = [8, 128], strides = [1, 1]} : vector<8x384xf32> to vector<8x128xf32>
    %328 = vector.extract_strided_slice %304 {offsets = [0, 256], sizes = [8, 128], strides = [1, 1]} : vector<8x384xf32> to vector<8x128xf32>
    %329 = arith.mulf %318, %328 : vector<8x128xf32>
    %330 = arith.addf %327, %329 : vector<8x128xf32>
    %331 = math.tanh %330 : vector<8x128xf32>
    %cst_83 = arith.constant 1.000000e+00 : f32
    %332 = vector.broadcast %cst_83 : f32 to vector<8x128xf32>
    %333 = arith.subf %332, %326 : vector<8x128xf32>
    %334 = arith.mulf %333, %331 : vector<8x128xf32>
    %335 = arith.mulf %326, %266 : vector<8x128xf32>
    %336 = arith.addf %334, %335 : vector<8x128xf32>
    %337 = arith.index_cast %300 : i32 to index
    %c0_84 = arith.constant 0 : index
    %338 = vector.load %arg15[%337, %c0_84] : memref<40x384xf32, #tpu.memory_space<vmem>>, vector<8x384xf32>
    %339 = vector.extract_strided_slice %338 {offsets = [0, 0], sizes = [8, 128], strides = [1, 1]} : vector<8x384xf32> to vector<8x128xf32>
    %340 = vector.extract_strided_slice %308 {offsets = [0, 0], sizes = [8, 128], strides = [1, 1]} : vector<8x384xf32> to vector<8x128xf32>
    %341 = arith.addf %339, %340 : vector<8x128xf32>
    %342 = arith.negf %341 : vector<8x128xf32>
    %343 = math.exp %342 : vector<8x128xf32>
    %cst_85 = arith.constant 1.000000e+00 : f32
    %344 = vector.broadcast %cst_85 : f32 to vector<8x128xf32>
    %345 = arith.addf %344, %343 : vector<8x128xf32>
    %346 = arith.divf %344, %345 : vector<8x128xf32>
    %347 = vector.extract_strided_slice %338 {offsets = [0, 128], sizes = [8, 128], strides = [1, 1]} : vector<8x384xf32> to vector<8x128xf32>
    %348 = vector.extract_strided_slice %308 {offsets = [0, 128], sizes = [8, 128], strides = [1, 1]} : vector<8x384xf32> to vector<8x128xf32>
    %349 = arith.addf %347, %348 : vector<8x128xf32>
    %350 = arith.negf %349 : vector<8x128xf32>
    %351 = math.exp %350 : vector<8x128xf32>
    %cst_86 = arith.constant 1.000000e+00 : f32
    %352 = vector.broadcast %cst_86 : f32 to vector<8x128xf32>
    %353 = arith.addf %352, %351 : vector<8x128xf32>
    %354 = arith.divf %352, %353 : vector<8x128xf32>
    %355 = vector.extract_strided_slice %338 {offsets = [0, 256], sizes = [8, 128], strides = [1, 1]} : vector<8x384xf32> to vector<8x128xf32>
    %356 = vector.extract_strided_slice %308 {offsets = [0, 256], sizes = [8, 128], strides = [1, 1]} : vector<8x384xf32> to vector<8x128xf32>
    %357 = arith.mulf %346, %356 : vector<8x128xf32>
    %358 = arith.addf %355, %357 : vector<8x128xf32>
    %359 = math.tanh %358 : vector<8x128xf32>
    %cst_87 = arith.constant 1.000000e+00 : f32
    %360 = vector.broadcast %cst_87 : f32 to vector<8x128xf32>
    %361 = arith.subf %360, %354 : vector<8x128xf32>
    %362 = arith.mulf %361, %359 : vector<8x128xf32>
    %363 = arith.mulf %354, %294 : vector<8x128xf32>
    %364 = arith.addf %362, %363 : vector<8x128xf32>
    %365 = arith.index_cast %300 : i32 to index
    %c0_88 = arith.constant 0 : index
    %366 = vector.load %arg12[%365, %c0_88] : memref<40x128xf32, #tpu.memory_space<vmem>>, vector<8x128xf32>
    tpu.vector_store %arg12[%365, %c0_88], %336 {strides = array<i32>} : memref<40x128xf32, #tpu.memory_space<vmem>>, vector<8x128xf32>,
    %367 = arith.index_cast %300 : i32 to index
    %c0_89 = arith.constant 0 : index
    %368 = vector.load %arg13[%367, %c0_89] : memref<40x128xf32, #tpu.memory_space<vmem>>, vector<8x128xf32>
    tpu.vector_store %arg13[%367, %c0_89], %364 {strides = array<i32>} : memref<40x128xf32, #tpu.memory_space<vmem>>, vector<8x128xf32>,
    %c5_i32 = arith.constant 5 : i32
    return
  }
  func.func @transform_0(%arg0: i32) -> (i32, i32) {
    %c0_i32 = arith.constant 0 : i32
    %c0_i32_0 = arith.constant 0 : i32
    %c0_i32_1 = arith.constant 0 : i32
    return %c0_i32, %c0_i32_0 : i32, i32
  }
  func.func @transform_1(%arg0: i32) -> (i32, i32) {
    %c0_i32 = arith.constant 0 : i32
    %c0_i32_0 = arith.constant 0 : i32
    %c0_i32_1 = arith.constant 0 : i32
    return %c0_i32, %c0_i32_0 : i32, i32
  }
  func.func @transform_2(%arg0: i32) -> (i32, i32) {
    %c0_i32 = arith.constant 0 : i32
    %c0_i32_0 = arith.constant 0 : i32
    %c0_i32_1 = arith.constant 0 : i32
    return %c0_i32, %c0_i32_0 : i32, i32
  }
  func.func @transform_3(%arg0: i32) -> (i32, i32) {
    %c0_i32 = arith.constant 0 : i32
    %c0_i32_0 = arith.constant 0 : i32
    %c0_i32_1 = arith.constant 0 : i32
    return %c0_i32, %c0_i32_0 : i32, i32
  }
  func.func @transform_4(%arg0: i32) -> (i32, i32) {
    %c0_i32 = arith.constant 0 : i32
    %c0_i32_0 = arith.constant 0 : i32
    %c0_i32_1 = arith.constant 0 : i32
    return %c0_i32, %c0_i32_0 : i32, i32
  }
  func.func @transform_5(%arg0: i32) -> (i32, i32) {
    %c0_i32 = arith.constant 0 : i32
    %c0_i32_0 = arith.constant 0 : i32
    %c0_i32_1 = arith.constant 0 : i32
    return %c0_i32, %c0_i32_0 : i32, i32
  }
  func.func @transform_6(%arg0: i32) -> (i32, i32) {
    %c0_i32 = arith.constant 0 : i32
    %c0_i32_0 = arith.constant 0 : i32
    %c0_i32_1 = arith.constant 0 : i32
    return %c0_i32, %c0_i32_0 : i32, i32
  }
  func.func @transform_7(%arg0: i32) -> (i32, i32) {
    %c0_i32 = arith.constant 0 : i32
    %c0_i32_0 = arith.constant 0 : i32
    %c0_i32_1 = arith.constant 0 : i32
    return %c0_i32, %c0_i32_0 : i32, i32
  }
  func.func @transform_8(%arg0: i32) -> (i32, i32) {
    %c0_i32 = arith.constant 0 : i32
    %c0_i32_0 = arith.constant 0 : i32
    %c0_i32_1 = arith.constant 0 : i32
    return %c0_i32, %c0_i32_0 : i32, i32
  }
  func.func @transform_9(%arg0: i32) -> (i32, i32) {
    %c0_i32 = arith.constant 0 : i32
    %c0_i32_0 = arith.constant 0 : i32
    %c0_i32_1 = arith.constant 0 : i32
    return %c0_i32, %c0_i32_0 : i32, i32
  }
  func.func @transform_10(%arg0: i32) -> (i32, i32) {
    %c0_i32 = arith.constant 0 : i32
    %c0_i32_0 = arith.constant 0 : i32
    %c0_i32_1 = arith.constant 0 : i32
    return %c0_i32, %c0_i32_0 : i32, i32
  }
  func.func @transform_11(%arg0: i32) -> (i32, i32) {
    %c0_i32 = arith.constant 0 : i32
    %c0_i32_0 = arith.constant 0 : i32
    %c0_i32_1 = arith.constant 0 : i32
    return %c0_i32, %c0_i32_0 : i32, i32
  }
  func.func @transform_12(%arg0: i32) -> (i32, i32) {
    %c0_i32 = arith.constant 0 : i32
    %c0_i32_0 = arith.constant 0 : i32
    %c0_i32_1 = arith.constant 0 : i32
    return %c0_i32, %c0_i32_0 : i32, i32
  }
}

module attributes {stable_mosaic.version = 11 : i64} {
  func.func @_readout_kernel(%arg0: i32, %arg1: memref<16x256xbf16, #tpu.memory_space<vmem>>, %arg2: memref<256x128xbf16, #tpu.memory_space<vmem>>, %arg3: memref<1x128xf32, #tpu.memory_space<vmem>>, %arg4: memref<8x16xf32, #tpu.memory_space<vmem>>, %arg5: memref<8x128xf32, #tpu.memory_space<vmem>>) attributes {dimension_semantics = [#tpu.dimension_semantics<arbitrary>], iteration_bounds = array<i64: 1>, scalar_prefetch = 0 : i64, scratch_operands = 0 : i64, tpu.core_type = #tpu.core_type<tc>, window_params = [{transform_indices = @transform_0, window_bounds = array<i64: 16, 256>}, {pipeline_mode = #tpu.pipeline_mode<synchronous>, transform_indices = @transform_1, window_bounds = array<i64: 256, 128>}, {pipeline_mode = #tpu.pipeline_mode<synchronous>, transform_indices = @transform_2, window_bounds = array<i64: 1, 128>}, {transform_indices = @transform_3, window_bounds = array<i64: 8, 16>}, {pipeline_mode = #tpu.pipeline_mode<synchronous>, transform_indices = @transform_4, window_bounds = array<i64: 8, 128>}]} {
    %c0_i32 = arith.constant 0 : i32
    %0 = arith.cmpi eq, %arg0, %c0_i32 : i32
    %1 = arith.extui %0 : i1 to i32
    %c0_i32_0 = arith.constant 0 : i32
    %2 = arith.cmpi ne, %1, %c0_i32_0 : i32
    scf.if %2 {
      %cst_14 = arith.constant 0.000000e+00 : f32
      %16 = vector.broadcast %cst_14 : f32 to vector<8x128xf32>
      %c0_15 = arith.constant 0 : index
      %c0_16 = arith.constant 0 : index
      %17 = vector.load %arg5[%c0_15, %c0_16] : memref<8x128xf32, #tpu.memory_space<vmem>>, vector<8x128xf32>
      tpu.vector_store %arg5[%c0_15, %c0_16], %16 {strides = array<i32>} : memref<8x128xf32, #tpu.memory_space<vmem>>, vector<8x128xf32>,
    } else {
    }
    %c0 = arith.constant 0 : index
    %c0_1 = arith.constant 0 : index
    %3 = vector.load %arg1[%c0, %c0_1] : memref<16x256xbf16, #tpu.memory_space<vmem>>, vector<16x256xbf16>
    %c0_2 = arith.constant 0 : index
    %c0_3 = arith.constant 0 : index
    %4 = vector.load %arg2[%c0_2, %c0_3] : memref<256x128xbf16, #tpu.memory_space<vmem>>, vector<256x128xbf16>
    %cst = arith.constant dense<0.000000e+00> : vector<16x128xf32>
    %5 = tpu.matmul %3, %4, %cst {dimension_numbers = #tpu.dot_dimension_numbers<[1], [0], [0], [1], [0, 0, 1, 1], [], []>} : vector<16x256xbf16>, vector<256x128xbf16>, vector<16x128xf32> -> vector<16x128xf32>
    %c0_4 = arith.constant 0 : index
    %c0_5 = arith.constant 0 : index
    %6 = vector.load %arg3[%c0_4, %c0_5] : memref<1x128xf32, #tpu.memory_space<vmem>>, vector<1x128xf32>
    %7 = vector.broadcast %6 : vector<1x128xf32> to vector<16x128xf32>
    %8 = arith.addf %5, %7 : vector<16x128xf32>
    %cst_6 = arith.constant 0.000000e+00 : f32
    %9 = vector.broadcast %cst_6 : f32 to vector<16x128xf32>
    %10 = arith.maximumf %8, %9 : vector<16x128xf32>
    %c0_7 = arith.constant 0 : index
    %c0_8 = arith.constant 0 : index
    %11 = vector.load %arg5[%c0_7, %c0_8] : memref<8x128xf32, #tpu.memory_space<vmem>>, vector<8x128xf32>
    %c0_9 = arith.constant 0 : index
    %c0_10 = arith.constant 0 : index
    %12 = vector.load %arg4[%c0_9, %c0_10] : memref<8x16xf32, #tpu.memory_space<vmem>>, vector<8x16xf32>
    %cst_11 = arith.constant dense<0.000000e+00> : vector<8x128xf32>
    %13 = tpu.matmul %12, %10, %cst_11 {dimension_numbers = #tpu.dot_dimension_numbers<[1], [0], [0], [1], [0, 0, 1, 1], [], []>} : vector<8x16xf32>, vector<16x128xf32>, vector<8x128xf32> -> vector<8x128xf32>
    %14 = arith.addf %11, %13 : vector<8x128xf32>
    %c0_12 = arith.constant 0 : index
    %c0_13 = arith.constant 0 : index
    %15 = vector.load %arg5[%c0_12, %c0_13] : memref<8x128xf32, #tpu.memory_space<vmem>>, vector<8x128xf32>
    tpu.vector_store %arg5[%c0_12, %c0_13], %14 {strides = array<i32>} : memref<8x128xf32, #tpu.memory_space<vmem>>, vector<8x128xf32>,
    return
  }
  func.func @transform_0(%arg0: i32) -> (i32, i32) {
    %c0_i32 = arith.constant 0 : i32
    %c0_i32_0 = arith.constant 0 : i32
    return %arg0, %c0_i32 : i32, i32
  }
  func.func @transform_1(%arg0: i32) -> (i32, i32) {
    %c0_i32 = arith.constant 0 : i32
    %c0_i32_0 = arith.constant 0 : i32
    %c0_i32_1 = arith.constant 0 : i32
    return %c0_i32, %c0_i32_0 : i32, i32
  }
  func.func @transform_2(%arg0: i32) -> (i32, i32) {
    %c0_i32 = arith.constant 0 : i32
    %c0_i32_0 = arith.constant 0 : i32
    %c0_i32_1 = arith.constant 0 : i32
    return %c0_i32, %c0_i32_0 : i32, i32
  }
  func.func @transform_3(%arg0: i32) -> (i32, i32) {
    %c0_i32 = arith.constant 0 : i32
    %c0_i32_0 = arith.constant 0 : i32
    return %c0_i32, %arg0 : i32, i32
  }
  func.func @transform_4(%arg0: i32) -> (i32, i32) {
    %c0_i32 = arith.constant 0 : i32
    %c0_i32_0 = arith.constant 0 : i32
    %c0_i32_1 = arith.constant 0 : i32
    return %c0_i32, %c0_i32_0 : i32, i32
  }
}

</mosaic_0001>

<llo_original>
// kernel: _mpn_forward.5
$region0: #{_mpn_forward.5}
  #allocation0 [shape = 'u32[]', space=smem, size = 0x4, offset = 0x4, fixed_abs, tag = 'smem constant byte address 0x4 - core index']
  #allocation1 [shape = 'u32[144,128]{1,0:T(1,128)}', space=vmem, size = 0x12000, scoped, tag = 'internal scratch']
  %s0 = inlined_call_operand.hbm [shape: bf16[16,256], index: 0, kind: input, shape index: {}]
  %s1 = inlined_call_operand.hbm [shape: bf16[256,128], index: 1, kind: input, shape index: {}]
  %s2 = inlined_call_operand.hbm [shape: f32[1,128], index: 2, kind: input, shape index: {}]
  %s3 = inlined_call_operand.hbm [shape: f32[8,16], index: 3, kind: input, shape index: {}]
  %s4 = inlined_call_operand.hbm [shape: f32[8,128], index: 4, kind: output, shape index: {}]
  %s5 = sld [smem:[#allocation0]]
  $region46: #{_mpn_forward.5} parent=0
    _
  %s7 = ssub.s32 1, %s5
  %s8 = scalar_select 0, %s7, %s5
  $region1: #{_mpn_forward.5} parent=0
    #allocation2 [shape = 'u8[8192]{0}', space=vmem, size = 0x2000, scoped, tag = 'input window, operand 0, single buffered']
    #allocation3 [shape = 's32[1]{0}', space=sflag, size = 0x4, scoped, tag = 'scoped memory for _mpn_forward.5']
    #allocation4 [shape = 's32[1]{0}', space=sflag, size = 0x4, scoped, tag = 'scoped memory for _mpn_forward.5']
    #allocation5 [shape = 'u8[65536]{0}', space=vmem, size = 0x10000, scoped, tag = 'input window, operand 1, single buffered']
    #allocation6 [shape = 's32[1]{0}', space=sflag, size = 0x4, scoped, tag = 'scoped memory for _mpn_forward.5']
    #allocation7 [shape = 'u8[512]{0}', space=vmem, size = 0x400, scoped, tag = 'input window, operand 2, single buffered']
    #allocation8 [shape = 'u8[4096]{0}', space=vmem, size = 0x1000, scoped, tag = 'input window, operand 3, single buffered']
    #allocation9 [shape = 's32[1]{0}', space=sflag, size = 0x4, scoped, tag = 'scoped memory for _mpn_forward.5']
    #allocation10 [shape = 'u8[4096]{0}', space=vmem, size = 0x1000, scoped, tag = 'output window, operand 0, single buffered']
    %9 = vsyncpa [#allocation3], 0
    %10 = vsyncpa [#allocation6], 0
    %11 = vsyncpa [#allocation9], 0
    %12 = vsyncpa [#allocation4], 0
    // Predicated region
    $region2: #{_mpn_forward.5} parent=1 // pred_check
      _
    $region3: #{_mpn_forward.5} parent=1 // pred_check_branch
      %14 = sbr.rel (0) target = $region5
    $region4: #{_mpn_forward.5} parent=1 // pred_region
      %s16 = ssub.s32 256, 256
      %17 = vsyncadd [#allocation3], %s16
      %s18 = sshll.u32 [#allocation2], 4
      %s19 = int_to_ptr.vmem [resolvable:$true] %s18
      %24 = dma.hbm_to_vmem [thread:$0]  %s0, 256, %s19, [#allocation3], 128, 128, 8
    $region5: #{_mpn_forward.5} parent=1 // pred_fallthru
      _
    // Predicated region
    $region6: #{_mpn_forward.5} parent=1 // pred_check
      _
    $region7: #{_mpn_forward.5} parent=1 // pred_check_branch
      %26 = sbr.rel (0) target = $region9
    $region8: #{_mpn_forward.5} parent=1 // pred_region
      %s28 = ssub.s32 2048, 2048
      %29 = vsyncadd [#allocation6], %s28
      %s30 = sshll.u32 [#allocation5], 4
      %s31 = int_to_ptr.vmem [resolvable:$true] %s30
      %36 = dma.hbm_to_vmem [thread:$0]  %s1, 2048, %s31, [#allocation6], 64, 64, 4
    $region9: #{_mpn_forward.5} parent=1 // pred_fallthru
      _
    // Predicated region
    $region10: #{_mpn_forward.5} parent=1 // pred_check
      _
    $region11: #{_mpn_forward.5} parent=1 // pred_check_branch
      %38 = sbr.rel (0) target = $region13
    $region12: #{_mpn_forward.5} parent=1 // pred_region
      %s40 = ssub.s32 16, 16
      %41 = vsyncadd [#allocation6], %s40
      %s43 = sshll.u32 [#allocation7], 4
      %s44 = int_to_ptr.vmem [resolvable:$true] %s43
      %46 = dma.hbm_to_vmem [thread:$0]  %s2, 16, %s44, [#allocation6]
    $region13: #{_mpn_forward.5} parent=1 // pred_fallthru
      _
    // Predicated region
    $region14: #{_mpn_forward.5} parent=1 // pred_check
      _
    $region15: #{_mpn_forward.5} parent=1 // pred_check_branch
      %48 = sbr.rel (0) target = $region17
    $region16: #{_mpn_forward.5} parent=1 // pred_region
      %s50 = ssub.s32 128, 128
      %51 = vsyncadd [#allocation9], %s50
      %s53 = sshll.u32 [#allocation8], 4
      %s54 = int_to_ptr.vmem [resolvable:$true] %s53
      %56 = dma.hbm_to_vmem [thread:$0]  %s3, 128, %s54, [#allocation9]
    $region17: #{_mpn_forward.5} parent=1 // pred_fallthru
      _
    // Predicated region
    $region18: #{_mpn_forward.5} parent=1 // pred_check
      _
    $region19: #{_mpn_forward.5} parent=1 // pred_check_branch
      %58 = sbr.rel (0) target = $region21
    $region20: #{_mpn_forward.5} parent=1 // pred_region
      %59 = dma.done [#allocation3], 256
    $region21: #{_mpn_forward.5} parent=1 // pred_fallthru
      _
    // Predicated region
    $region22: #{_mpn_forward.5} parent=1 // pred_check
      _
    $region23: #{_mpn_forward.5} parent=1 // pred_check_branch
      %61 = sbr.rel (0) target = $region25
    $region24: #{_mpn_forward.5} parent=1 // pred_region
      %62 = dma.done [#allocation6], 2048
    $region25: #{_mpn_forward.5} parent=1 // pred_fallthru
      _
    // Predicated region
    $region26: #{_mpn_forward.5} parent=1 // pred_check
      _
    $region27: #{_mpn_forward.5} parent=1 // pred_check_branch
      %64 = sbr.rel (0) target = $region29
    $region28: #{_mpn_forward.5} parent=1 // pred_region
      %65 = dma.done [#allocation6], 16
    $region29: #{_mpn_forward.5} parent=1 // pred_fallthru
      _
    // Predicated region
    $region30: #{_mpn_forward.5} parent=1 // pred_check
      _
    $region31: #{_mpn_forward.5} parent=1 // pred_check_branch
      %67 = sbr.rel (0) target = $region33
    $region32: #{_mpn_forward.5} parent=1 // pred_region
      %68 = dma.done [#allocation9], 128
    $region33: #{_mpn_forward.5} parent=1 // pred_fallthru
      _
    %p70 = scmp.eq.s32.totalorder 0, 0
    // Predicated region
    $region34: #{_mpn_forward.5} parent=1 // pred_check
      %p71 = pneg %p70
    $region35: #{_mpn_forward.5} parent=1 // pred_check_branch
      %73 = sbr.rel (%p71) target = $region37
    $region36: #{_mpn_forward.5} parent=1 // pred_region
      %74 = vst [vmem:[#allocation10] sm:$0xff] 0.0
    $region37: #{_mpn_forward.5} parent=1 // pred_fallthru
      _
    %v75 = vld [vmem:[#allocation2] sm:$0xff]
    %v76 = vld [vmem:[#allocation2 + $0x8] sm:$0xff]
    %v77 = vld [vmem:[#allocation5] sm:$0xf]
    %v78 = vld [vmem:[#allocation5 + $0x4] sm:$0xf]
    %v79 = vld [vmem:[#allocation5 + $0x8] sm:$0xf]
    %v80 = vld [vmem:[#allocation5 + $0xc] sm:$0xf]
    %v81 = vld [vmem:[#allocation5 + $0x10] sm:$0xf]
    %v82 = vld [vmem:[#allocation5 + $0x14] sm:$0xf]
    %v83 = vld [vmem:[#allocation5 + $0x18] sm:$0xf]
    %v84 = vld [vmem:[#allocation5 + $0x1c] sm:$0xf]
    %v85 = vld [vmem:[#allocation5 + $0x20] sm:$0xf]
    %v86 = vld [vmem:[#allocation5 + $0x24] sm:$0xf]
    %v87 = vld [vmem:[#allocation5 + $0x28] sm:$0xf]
    %v88 = vld [vmem:[#allocation5 + $0x2c] sm:$0xf]
    %v89 = vld [vmem:[#allocation5 + $0x30] sm:$0xf]
    %v90 = vld [vmem:[#allocation5 + $0x34] sm:$0xf]
    %v91 = vld [vmem:[#allocation5 + $0x38] sm:$0xf]
    %v92 = vld [vmem:[#allocation5 + $0x3c] sm:$0xf]
    %v93 = vld [vmem:[#allocation5 + $0x40] sm:$0xf]
    %v94 = vld [vmem:[#allocation5 + $0x44] sm:$0xf]
    %v95 = vld [vmem:[#allocation5 + $0x48] sm:$0xf]
    %v96 = vld [vmem:[#allocation5 + $0x4c] sm:$0xf]
    %v97 = vld [vmem:[#allocation5 + $0x50] sm:$0xf]
    %v98 = vld [vmem:[#allocation5 + $0x54] sm:$0xf]
    %v99 = vld [vmem:[#allocation5 + $0x58] sm:$0xf]
    %v100 = vld [vmem:[#allocation5 + $0x5c] sm:$0xf]
    %v101 = vld [vmem:[#allocation5 + $0x60] sm:$0xf]
    %v102 = vld [vmem:[#allocation5 + $0x64] sm:$0xf]
    %v103 = vld [vmem:[#allocation5 + $0x68] sm:$0xf]
    %v104 = vld [vmem:[#allocation5 + $0x6c] sm:$0xf]
    %v105 = vld [vmem:[#allocation5 + $0x70] sm:$0xf]
    %v106 = vld [vmem:[#allocation5 + $0x74] sm:$0xf]
    %v107 = vld [vmem:[#allocation5 + $0x78] sm:$0xf]
    %v108 = vld [vmem:[#allocation5 + $0x7c] sm:$0xf]
    %v109 = vld [vmem:[#allocation7] sm:$0x1]
    %v111 = vlaneseq
    %v112 = vshrl.u32 %v111, 7
    %v113 = vsub.s32 0, %v112
    %v114 = vrot.slane %v109, %v113
    %v118 = vunpack.c.l.b16 %v75
    %v119 = vunpack.c.h.b16 %v75
    %v120 = vunpack.c.l.b16 %v76
    %v121 = vunpack.c.h.b16 %v76
    %v122 = vpack.c.b16 %v120, %v118
    %v123 = vpack.c.b16 %v121, %v119
    %v158 = vunpack.c.l.b16 %v77
    %v159 = vunpack.c.l.b16 %v78
    %v160 = vunpack.c.l.b16 %v79
    %v161 = vunpack.c.l.b16 %v80
    %v162 = vunpack.c.l.b16 %v81
    %v163 = vunpack.c.l.b16 %v82
    %v164 = vunpack.c.l.b16 %v83
    %v165 = vunpack.c.l.b16 %v84
    %v166 = vunpack.c.l.b16 %v85
    %v167 = vunpack.c.l.b16 %v86
    %v168 = vunpack.c.l.b16 %v87
    %v169 = vunpack.c.l.b16 %v88
    %v170 = vunpack.c.l.b16 %v89
    %v171 = vunpack.c.l.b16 %v90
    %v172 = vunpack.c.l.b16 %v91
    %v173 = vunpack.c.l.b16 %v92
    %v174 = vunpack.c.l.b16 %v93
    %v175 = vunpack.c.l.b16 %v94
    %v176 = vunpack.c.l.b16 %v95
    %v177 = vunpack.c.l.b16 %v96
    %v178 = vunpack.c.l.b16 %v97
    %v179 = vunpack.c.l.b16 %v98
    %v180 = vunpack.c.l.b16 %v99
    %v181 = vunpack.c.l.b16 %v100
    %v182 = vunpack.c.l.b16 %v101
    %v183 = vunpack.c.l.b16 %v102
    %v184 = vunpack.c.l.b16 %v103
    %v185 = vunpack.c.l.b16 %v104
    %v186 = vunpack.c.l.b16 %v105
    %v187 = vunpack.c.l.b16 %v106
    %v188 = vunpack.c.l.b16 %v107
    %v189 = vunpack.c.l.b16 %v108
    %v190 = vpack.c.b16 %v159, %v158
    %v191 = vpack.c.b16 %v161, %v160
    %v192 = vpack.c.b16 %v163, %v162
    %v193 = vpack.c.b16 %v165, %v164
    %v194 = vpack.c.b16 %v167, %v166
    %v195 = vpack.c.b16 %v169, %v168
    %v196 = vpack.c.b16 %v171, %v170
    %v197 = vpack.c.b16 %v173, %v172
    %v198 = vpack.c.b16 %v175, %v174
    %v199 = vpack.c.b16 %v177, %v176
    %v200 = vpack.c.b16 %v179, %v178
    %v201 = vpack.c.b16 %v181, %v180
    %v202 = vpack.c.b16 %v183, %v182
    %v203 = vpack.c.b16 %v185, %v184
    %v204 = vpack.c.b16 %v187, %v186
    %v205 = vpack.c.b16 %v189, %v188
    %222 = vmatprep.subr.bf16.mxu0 0
    %223 = vmatpush1.bf16.msra.mxu0 %v190
    %224 = vmatprep.subr.bf16.mxu0 0
    %225 = vmatpush1.bf16.msra.mxu0 %v191
    %226 = vmatprep.subr.bf16.mxu0 0
    %227 = vmatpush1.bf16.msra.mxu0 %v192
    %228 = vmatprep.subr.bf16.mxu0 0
    %229 = vmatpush1.bf16.msra.mxu0 %v193
    %230 = vmatprep.subr.bf16.mxu0 0
    %231 = vmatpush1.bf16.msra.mxu0 %v194
    %232 = vmatprep.subr.bf16.mxu0 0
    %233 = vmatpush1.bf16.msra.mxu0 %v195
    %234 = vmatprep.subr.bf16.mxu0 0
    %235 = vmatpush1.bf16.msra.mxu0 %v196
    %236 = vmatprep.subr.bf16.mxu0 0
    %237 = vmatpush1.bf16.msra.mxu0 %v197
    %238 = vmatprep.subr.bf16.mxu0 0
    %239 = vmatpush1.bf16.msra.mxu0 %v198
    %240 = vmatprep.subr.bf16.mxu0 0
    %241 = vmatpush1.bf16.msra.mxu0 %v199
    %242 = vmatprep.subr.bf16.mxu0 0
    %243 = vmatpush1.bf16.msra.mxu0 %v200
    %244 = vmatprep.subr.bf16.mxu0 0
    %245 = vmatpush1.bf16.msra.mxu0 %v201
    %246 = vmatprep.subr.bf16.mxu0 0
    %247 = vmatpush1.bf16.msra.mxu0 %v202
    %248 = vmatprep.subr.bf16.mxu0 0
    %249 = vmatpush1.bf16.msra.mxu0 %v203
    %250 = vmatprep.subr.bf16.mxu0 0
    %251 = vmatpush1.bf16.msra.mxu0 %v204
    %252 = vmatprep.subr.bf16.mxu0 0
    %253 = vmatpush1.bf16.msra.mxu0 %v205
    %254 = vmatprep.mubr.bf16.mxu0 %v123
    %255 = vmatmul.mubr.bf16.gmra.mrb[0].mxu0 %v122
    %v256 = vpop.f32.mrb[0].mxu0
    %v257 = vadd.f32 %v114, %v256
    %v258 = vpop.f32.mrb[0].mxu0
    %v259 = vpop.f32.mrb[0].mxu0
    %v260 = vadd.f32 %v114, %v259
    %v261 = vpop.f32.mrb[0].mxu0
    %262 = vdwg.mxu0
    %v263 = vmax.f32 %v257, 0.0
    %v264 = vmax.f32 %v260, 0.0
    %v265 = vld [vmem:[#allocation10] sm:$0xff]
    %v266 = vld [vmem:[#allocation8] sm:$0xff]
    %vm267 = vcmask 130048
    %v269 = vsel %vm267, %v266, 0
    %271 = vmatprep.subr.mxu0 0.0
    %272 = vmatpush1.msra.mxu0 %v263
    %273 = vmatprep.subr.mxu0 0.0
    %274 = vmatpush1.msra.mxu0 %v264
    %275 = vmatprep.subr.mxu0 0.0
    %276 = vmatpush1.msra.mxu0 0.0
    %277 = vmatprep.subr.mxu0 0.0
    %278 = vmatpush1.msra.mxu0 0.0
    %279 = vmatprep.subr.mxu0 0.0
    %280 = vmatpush1.msra.mxu0 0.0
    %281 = vmatprep.subr.mxu0 0.0
    %282 = vmatpush1.msra.mxu0 0.0
    %283 = vmatprep.subr.mxu0 0.0
    %284 = vmatpush1.msra.mxu0 0.0
    %285 = vmatprep.subr.mxu0 0.0
    %286 = vmatpush1.msra.mxu0 0.0
    %287 = vmatprep.subr.mxu0 0.0
    %288 = vmatpush1.msra.mxu0 0.0
    %289 = vmatprep.subr.mxu0 0.0
    %290 = vmatpush1.msra.mxu0 0.0
    %291 = vmatprep.subr.mxu0 0.0
    %292 = vmatpush1.msra.mxu0 0.0
    %293 = vmatprep.subr.mxu0 0.0
    %294 = vmatpush1.msra.mxu0 0.0
    %295 = vmatprep.subr.mxu0 0.0
    %296 = vmatpush1.msra.mxu0 0.0
    %297 = vmatprep.subr.mxu0 0.0
    %298 = vmatpush1.msra.mxu0 0.0
    %299 = vmatprep.subr.mxu0 0.0
    %300 = vmatpush1.msra.mxu0 0.0
    %301 = vmatprep.subr.mxu0 0.0
    %302 = vmatpush1.msra.mxu0 0.0
    %303 = vmatprep.subr.mxu0 0.0
    %304 = vmatpush1.msra.mxu0 0.0
    %305 = vmatprep.subr.mxu0 0.0
    %306 = vmatpush1.msra.mxu0 0.0
    %307 = vmatprep.subr.mxu0 0.0
    %308 = vmatpush1.msra.mxu0 0.0
    %309 = vmatprep.subr.mxu0 0.0
    %310 = vmatpush1.msra.mxu0 0.0
    %311 = vmatprep.subr.mxu0 0.0
    %312 = vmatpush1.msra.mxu0 0.0
    %313 = vmatprep.subr.mxu0 0.0
    %314 = vmatpush1.msra.mxu0 0.0
    %315 = vmatprep.subr.mxu0 0.0
    %316 = vmatpush1.msra.mxu0 0.0
    %317 = vmatprep.subr.mxu0 0.0
    %318 = vmatpush1.msra.mxu0 0.0
    %319 = vmatprep.subr.mxu0 0.0
    %320 = vmatpush1.msra.mxu0 0.0
    %321 = vmatprep.subr.mxu0 0.0
    %322 = vmatpush1.msra.mxu0 0.0
    %323 = vmatprep.subr.mxu0 0.0
    %324 = vmatpush1.msra.mxu0 0.0
    %325 = vmatprep.subr.mxu0 0.0
    %326 = vmatpush1.msra.mxu0 0.0
    %327 = vmatprep.subr.mxu0 0.0
    %328 = vmatpush1.msra.mxu0 0.0
    %329 = vmatprep.subr.mxu0 0.0
    %330 = vmatpush1.msra.mxu0 0.0
    %331 = vmatprep.subr.mxu0 0.0
    %332 = vmatpush1.msra.mxu0 0.0
    %333 = vmatprep.subr.mxu0 0.0
    %334 = vmatpush1.msra.mxu0 0.0
    %335 = vmatprep.mubr.f32.mxu0 0.0
    %336 = vmatmul.mubr.f32.gmra.mrb[0].mxu0 %v269
    %v337 = vpop.f32.mrb[0].mxu0
    %v338 = vadd.f32 0.0, %v337
    %v339 = vpop.f32.mrb[0].mxu0
    %340 = vdwg.mxu0
    %v341 = vadd.f32 %v265, %v338
    %342 = vst [vmem:[#allocation10] sm:$0xff] %v341
    // Predicated region
    $region38: #{_mpn_forward.5} parent=1 // pred_check
      _
    $region39: #{_mpn_forward.5} parent=1 // pred_check_branch
      %344 = sbr.rel (0) target = $region41
    $region40: #{_mpn_forward.5} parent=1 // pred_region
      %s346 = ssub.s32 128, 128
      %347 = vsyncadd [#allocation4], %s346
      %s349 = sshll.u32 [#allocation10], 4
      %s350 = int_to_ptr.vmem [resolvable:$true] %s349
      %352 = dma.vmem_to_hbm [thread:$0]  %s350, 128, %s4, [#allocation4]
    $region41: #{_mpn_forward.5} parent=1 // pred_fallthru
      _
    // Predicated region
    $region42: #{_mpn_forward.5} parent=1 // pred_check
      _
    $region43: #{_mpn_forward.5} parent=1 // pred_check_branch
      %354 = sbr.rel (0) target = $region45
    $region44: #{_mpn_forward.5} parent=1 // pred_region
      %355 = dma.done [#allocation4], 128
    $region45: #{_mpn_forward.5} parent=1 // pred_fallthru
      _
    %356 = vsyncpa [#allocation3], 1
    %357 = vsyncpa [#allocation6], 1
    %358 = vsyncpa [#allocation9], 1
    %359 = vsyncpa [#allocation4], 1

// kernel: _mpn_forward.3
$region0: #{_mpn_forward.3}
  #allocation0 [shape = 'u32[]', space=smem, size = 0x4, offset = 0x4, fixed_abs, tag = 'smem constant byte address 0x4 - core index']
  #allocation1 [shape = 'u32[144,128]{1,0:T(1,128)}', space=vmem, size = 0x12000, scoped, tag = 'internal scratch']
  #allocation2 [shape = 'f32[16,128]{1,0:T(8,128)}', space=vmem, size = 0x2000, scoped, tag = 'scratch operand']
  #allocation3 [shape = 'f32[16,128]{1,0:T(8,128)}', space=vmem, size = 0x2000, scoped, tag = 'scratch operand']
  #allocation4 [shape = 'f32[16,128]{1,0:T(8,128)}', space=vmem, size = 0x2000, scoped, tag = 'scratch operand']
  #allocation5 [shape = 'f32[16,128]{1,0:T(8,128)}', space=vmem, size = 0x2000, scoped, tag = 'scratch operand']
  #allocation6 [shape = 'f32[16,128]{1,0:T(8,128)}', space=vmem, size = 0x2000, scoped, tag = 'scratch operand']
  #allocation7 [shape = 'f32[16,128]{1,0:T(8,128)}', space=vmem, size = 0x2000, scoped, tag = 'scratch operand']
  #allocation8 [shape = 's32[1]{0}', space=sflag, size = 0x4, scoped, tag = 'scoped memory for _mpn_forward.3']
  #allocation9 [shape = 'u8[512]{0}', space=smem, size = 0x200, scoped, tag = 'prefetched SMEM operand 0']
  #allocation10 [shape = 'u8[512]{0}', space=smem, size = 0x200, scoped, tag = 'prefetched SMEM operand 1']
  #allocation11 [shape = 'u8[512]{0}', space=smem, size = 0x200, scoped, tag = 'prefetched SMEM operand 2']
  %s0 = inlined_call_operand.hbm [shape: s32[48], index: 0, kind: input, shape index: {}]
  %s1 = inlined_call_operand.hbm [shape: s32[16], index: 1, kind: input, shape index: {}]
  %s2 = inlined_call_operand.hbm [shape: s32[16], index: 2, kind: input, shape index: {}]
  %s3 = inlined_call_operand.hbm [shape: bf16[16,128], index: 3, kind: input, shape index: {}]
  %s4 = inlined_call_operand.hbm [shape: bf16[16,128], index: 4, kind: input, shape index: {}]
  %s5 = inlined_call_operand.hbm [shape: bf16[128,128], index: 5, kind: input, shape index: {}]
  %s6 = inlined_call_operand.hbm [shape: bf16[128,128], index: 6, kind: input, shape index: {}]
  %s7 = inlined_call_operand.hbm [shape: bf16[2,128,128], index: 7, kind: input, shape index: {}]
  %s8 = inlined_call_operand.hbm [shape: bf16[128,128], index: 8, kind: input, shape index: {}]
  %s9 = inlined_call_operand.hbm [shape: bf16[128,128], index: 9, kind: input, shape index: {}]
  %s10 = inlined_call_operand.hbm [shape: bf16[128,128], index: 10, kind: input, shape index: {}]
  %s11 = inlined_call_operand.hbm [shape: f32[1,128], index: 11, kind: input, shape index: {}]
  %s12 = inlined_call_operand.hbm [shape: f32[16,128], index: 12, kind: output, shape index: {0}]
  %s13 = inlined_call_operand.hbm [shape: f32[16,128], index: 13, kind: output, shape index: {1}]
  %14 = xla_tuple %s12, %s13
  %s15 = sld [smem:[#allocation0]]
  $region125: #{_mpn_forward.3} parent=0
    _
  %s17 = ssub.s32 1, %s15
  %s18 = scalar_select 0, %s17, %s15
  %20 = dma.hbm_to_smem %s0, 16, [#allocation9], [#allocation8]
  %22 = dma.hbm_to_smem %s1, 16, [#allocation10], [#allocation8]
  %24 = dma.hbm_to_smem %s2, 16, [#allocation11], [#allocation8]
  %25 = dma.done [#allocation8], 48
  %26 = sfence
  $region1: #{_mpn_forward.3} parent=0
    #allocation12 [shape = 'u8[4096]{0}', space=vmem, size = 0x1000, scoped, tag = 'input window, operand 3, single buffered']
    #allocation13 [shape = 's32[1]{0}', space=sflag, size = 0x4, scoped, tag = 'scoped memory for _mpn_forward.3']
    #allocation14 [shape = 's32[1]{0}', space=sflag, size = 0x4, scoped, tag = 'scoped memory for _mpn_forward.3']
    #allocation15 [shape = 'u8[4096]{0}', space=vmem, size = 0x1000, scoped, tag = 'input window, operand 4, single buffered']
    #allocation16 [shape = 's32[1]{0}', space=sflag, size = 0x4, scoped, tag = 'scoped memory for _mpn_forward.3']
    #allocation17 [shape = 'u8[32768]{0}', space=vmem, size = 0x8000, scoped, tag = 'input window, operand 5, single buffered']
    #allocation18 [shape = 'u8[32768]{0}', space=vmem, size = 0x8000, scoped, tag = 'input window, operand 6, single buffered']
    #allocation19 [shape = 's32[1]{0}', space=sflag, size = 0x4, scoped, tag = 'scoped memory for _mpn_forward.3']
    #allocation20 [shape = 'u8[65536]{0}', space=vmem, size = 0x10000, scoped, tag = 'input window, operand 7, single buffered']
    #allocation21 [shape = 'u8[32768]{0}', space=vmem, size = 0x8000, scoped, tag = 'input window, operand 8, single buffered']
    #allocation22 [shape = 's32[1]{0}', space=sflag, size = 0x4, scoped, tag = 'scoped memory for _mpn_forward.3']
    #allocation23 [shape = 'u8[32768]{0}', space=vmem, size = 0x8000, scoped, tag = 'input window, operand 9, single buffered']
    #allocation24 [shape = 'u8[32768]{0}', space=vmem, size = 0x8000, scoped, tag = 'input window, operand 10, single buffered']
    #allocation25 [shape = 's32[1]{0}', space=sflag, size = 0x4, scoped, tag = 'scoped memory for _mpn_forward.3']
    #allocation26 [shape = 'u8[512]{0}', space=vmem, size = 0x400, scoped, tag = 'input window, operand 11, single buffered']
    #allocation27 [shape = 'u8[8192]{0}', space=vmem, size = 0x2000, scoped, tag = 'output window, operand 0, single buffered']
    #allocation28 [shape = 'u8[8192]{0}', space=vmem, size = 0x2000, scoped, tag = 'output window, operand 1, single buffered']
    #allocation29 [shape = 's32[1]{0}', space=sflag, size = 0x4, scoped, tag = 'scoped memory for _mpn_forward.3']
    %27 = vsyncpa [#allocation13], 0
    %28 = vsyncpa [#allocation16], 0
    %29 = vsyncpa [#allocation19], 0
    %30 = vsyncpa [#allocation22], 0
    %31 = vsyncpa [#allocation25], 0
    %32 = vsyncpa [#allocation14], 0
    %33 = vsyncpa [#allocation29], 0
    // Predicated region
    $region2: #{_mpn_forward.3} parent=1 // pred_check
      _
    $region3: #{_mpn_forward.3} parent=1 // pred_check_branch
      %35 = sbr.rel (0) target = $region5
    $region4: #{_mpn_forward.3} parent=1 // pred_region
      %s37 = ssub.s32 128, 128
      %38 = vsyncadd [#allocation13], %s37
      %s39 = sshll.u32 [#allocation12], 4
      %s40 = int_to_ptr.vmem [resolvable:$true] %s39
      %45 = dma.hbm_to_vmem [thread:$0]  %s3, 128, %s40, [#allocation13], 64, 64, 4
    $region5: #{_mpn_forward.3} parent=1 // pred_fallthru
      _
    // Predicated region
    $region6: #{_mpn_forward.3} parent=1 // pred_check
      _
    $region7: #{_mpn_forward.3} parent=1 // pred_check_branch
      %47 = sbr.rel (0) target = $region9
    $region8: #{_mpn_forward.3} parent=1 // pred_region
      %s49 = ssub.s32 128, 128
      %50 = vsyncadd [#allocation16], %s49
      %s51 = sshll.u32 [#allocation15], 4
      %s52 = int_to_ptr.vmem [resolvable:$true] %s51
      %57 = dma.hbm_to_vmem [thread:$0]  %s4, 128, %s52, [#allocation16], 64, 64, 4
    $region9: #{_mpn_forward.3} parent=1 // pred_fallthru
      _
    // Predicated region
    $region10: #{_mpn_forward.3} parent=1 // pred_check
      _
    $region11: #{_mpn_forward.3} parent=1 // pred_check_branch
      %59 = sbr.rel (0) target = $region13
    $region12: #{_mpn_forward.3} parent=1 // pred_region
      %s61 = ssub.s32 1024, 1024
      %62 = vsyncadd [#allocation16], %s61
      %s63 = sshll.u32 [#allocation17], 4
      %s64 = int_to_ptr.vmem [resolvable:$true] %s63
      %69 = dma.hbm_to_vmem [thread:$0]  %s5, 1024, %s64, [#allocation16], 64, 64, 4
    $region13: #{_mpn_forward.3} parent=1 // pred_fallthru
      _
    // Predicated region
    $region14: #{_mpn_forward.3} parent=1 // pred_check
      _
    $region15: #{_mpn_forward.3} parent=1 // pred_check_branch
      %71 = sbr.rel (0) target = $region17
    $region16: #{_mpn_forward.3} parent=1 // pred_region
      %s73 = ssub.s32 1024, 1024
      %74 = vsyncadd [#allocation19], %s73
      %s75 = sshll.u32 [#allocation18], 4
      %s76 = int_to_ptr.vmem [resolvable:$true] %s75
      %81 = dma.hbm_to_vmem [thread:$0]  %s6, 1024, %s76, [#allocation19], 64, 64, 4
    $region17: #{_mpn_forward.3} parent=1 // pred_fallthru
      _
    // Predicated region
    $region18: #{_mpn_forward.3} parent=1 // pred_check
      _
    $region19: #{_mpn_forward.3} parent=1 // pred_check_branch
      %83 = sbr.rel (0) target = $region21
    $region20: #{_mpn_forward.3} parent=1 // pred_region
      %s85 = ssub.s32 2048, 2048
      %86 = vsyncadd [#allocation19], %s85
      %s87 = sshll.u32 [#allocation20], 4
      %s88 = int_to_ptr.vmem [resolvable:$true] %s87
      %93 = dma.hbm_to_vmem [thread:$0]  %s7, 2048, %s88, [#allocation19], 64, 64, 4
    $region21: #{_mpn_forward.3} parent=1 // pred_fallthru
      _
    // Predicated region
    $region22: #{_mpn_forward.3} parent=1 // pred_check
      _
    $region23: #{_mpn_forward.3} parent=1 // pred_check_branch
      %95 = sbr.rel (0) target = $region25
    $region24: #{_mpn_forward.3} parent=1 // pred_region
      %s97 = ssub.s32 1024, 1024
      %98 = vsyncadd [#allocation22], %s97
      %s99 = sshll.u32 [#allocation21], 4
      %s100 = int_to_ptr.vmem [resolvable:$true] %s99
      %105 = dma.hbm_to_vmem [thread:$0]  %s8, 1024, %s100, [#allocation22], 64, 64, 4
    $region25: #{_mpn_forward.3} parent=1 // pred_fallthru
      _
    // Predicated region
    $region26: #{_mpn_forward.3} parent=1 // pred_check
      _
    $region27: #{_mpn_forward.3} parent=1 // pred_check_branch
      %107 = sbr.rel (0) target = $region29
    $region28: #{_mpn_forward.3} parent=1 // pred_region
      %s109 = ssub.s32 1024, 1024
      %110 = vsyncadd [#allocation22], %s109
      %s111 = sshll.u32 [#allocation23], 4
      %s112 = int_to_ptr.vmem [resolvable:$true] %s111
      %117 = dma.hbm_to_vmem [thread:$0]  %s9, 1024, %s112, [#allocation22], 64, 64, 4
    $region29: #{_mpn_forward.3} parent=1 // pred_fallthru
      _
    // Predicated region
    $region30: #{_mpn_forward.3} parent=1 // pred_check
      _
    $region31: #{_mpn_forward.3} parent=1 // pred_check_branch
      %119 = sbr.rel (0) target = $region33
    $region32: #{_mpn_forward.3} parent=1 // pred_region
      %s121 = ssub.s32 1024, 1024
      %122 = vsyncadd [#allocation25], %s121
      %s123 = sshll.u32 [#allocation24], 4
      %s124 = int_to_ptr.vmem [resolvable:$true] %s123
      %129 = dma.hbm_to_vmem [thread:$0]  %s10, 1024, %s124, [#allocation25], 64, 64, 4
    $region33: #{_mpn_forward.3} parent=1 // pred_fallthru
      _
    // Predicated region
    $region34: #{_mpn_forward.3} parent=1 // pred_check
      _
    $region35: #{_mpn_forward.3} parent=1 // pred_check_branch
      %131 = sbr.rel (0) target = $region37
    $region36: #{_mpn_forward.3} parent=1 // pred_region
      %s133 = ssub.s32 16, 16
      %134 = vsyncadd [#allocation25], %s133
      %s136 = sshll.u32 [#allocation26], 4
      %s137 = int_to_ptr.vmem [resolvable:$true] %s136
      %139 = dma.hbm_to_vmem [thread:$0]  %s11, 16, %s137, [#allocation25]
    $region37: #{_mpn_forward.3} parent=1 // pred_fallthru
      _
    // Predicated region
    $region38: #{_mpn_forward.3} parent=1 // pred_check
      _
    $region39: #{_mpn_forward.3} parent=1 // pred_check_branch
      %141 = sbr.rel (0) target = $region41
    $region40: #{_mpn_forward.3} parent=1 // pred_region
      %142 = dma.done [#allocation13], 128
    $region41: #{_mpn_forward.3} parent=1 // pred_fallthru
      _
    // Predicated region
    $region42: #{_mpn_forward.3} parent=1 // pred_check
      _
    $region43: #{_mpn_forward.3} parent=1 // pred_check_branch
      %144 = sbr.rel (0) target = $region45
    $region44: #{_mpn_forward.3} parent=1 // pred_region
      %145 = dma.done [#allocation16], 128
    $region45: #{_mpn_forward.3} parent=1 // pred_fallthru
      _
    // Predicated region
    $region46: #{_mpn_forward.3} parent=1 // pred_check
      _
    $region47: #{_mpn_forward.3} parent=1 // pred_check_branch
      %147 = sbr.rel (0) target = $region49
    $region48: #{_mpn_forward.3} parent=1 // pred_region
      %148 = dma.done [#allocation16], 1024
    $region49: #{_mpn_forward.3} parent=1 // pred_fallthru
      _
    // Predicated region
    $region50: #{_mpn_forward.3} parent=1 // pred_check
      _
    $region51: #{_mpn_forward.3} parent=1 // pred_check_branch
      %150 = sbr.rel (0) target = $region53
    $region52: #{_mpn_forward.3} parent=1 // pred_region
      %151 = dma.done [#allocation19], 1024
    $region53: #{_mpn_forward.3} parent=1 // pred_fallthru
      _
    // Predicated region
    $region54: #{_mpn_forward.3} parent=1 // pred_check
      _
    $region55: #{_mpn_forward.3} parent=1 // pred_check_branch
      %153 = sbr.rel (0) target = $region57
    $region56: #{_mpn_forward.3} parent=1 // pred_region
      %154 = dma.done [#allocation19], 2048
    $region57: #{_mpn_forward.3} parent=1 // pred_fallthru
      _
    // Predicated region
    $region58: #{_mpn_forward.3} parent=1 // pred_check
      _
    $region59: #{_mpn_forward.3} parent=1 // pred_check_branch
      %156 = sbr.rel (0) target = $region61
    $region60: #{_mpn_forward.3} parent=1 // pred_region
      %157 = dma.done [#allocation22], 1024
    $region61: #{_mpn_forward.3} parent=1 // pred_fallthru
      _
    // Predicated region
    $region62: #{_mpn_forward.3} parent=1 // pred_check
      _
    $region63: #{_mpn_forward.3} parent=1 // pred_check_branch
      %159 = sbr.rel (0) target = $region65
    $region64: #{_mpn_forward.3} parent=1 // pred_region
      %160 = dma.done [#allocation22], 1024
    $region65: #{_mpn_forward.3} parent=1 // pred_fallthru
      _
    // Predicated region
    $region66: #{_mpn_forward.3} parent=1 // pred_check
      _
    $region67: #{_mpn_forward.3} parent=1 // pred_check_branch
      %162 = sbr.rel (0) target = $region69
    $region68: #{_mpn_forward.3} parent=1 // pred_region
      %163 = dma.done [#allocation25], 1024
    $region69: #{_mpn_forward.3} parent=1 // pred_fallthru
      _
    // Predicated region
    $region70: #{_mpn_forward.3} parent=1 // pred_check
      _
    $region71: #{_mpn_forward.3} parent=1 // pred_check_branch
      %165 = sbr.rel (0) target = $region73
    $region72: #{_mpn_forward.3} parent=1 // pred_region
      %166 = dma.done [#allocation25], 16
    $region73: #{_mpn_forward.3} parent=1 // pred_fallthru
      _
    %v168 = vld [vmem:[#allocation12] sm:$0xf]
    %v169 = vld [vmem:[#allocation12 + $0x4] sm:$0xf]
    %v170 = vld [vmem:[#allocation17] sm:$0xf]
    %v171 = vld [vmem:[#allocation17 + $0x4] sm:$0xf]
    %v172 = vld [vmem:[#allocation17 + $0x8] sm:$0xf]
    %v173 = vld [vmem:[#allocation17 + $0xc] sm:$0xf]
    %v174 = vld [vmem:[#allocation17 + $0x10] sm:$0xf]
    %v175 = vld [vmem:[#allocation17 + $0x14] sm:$0xf]
    %v176 = vld [vmem:[#allocation17 + $0x18] sm:$0xf]
    %v177 = vld [vmem:[#allocation17 + $0x1c] sm:$0xf]
    %v178 = vld [vmem:[#allocation17 + $0x20] sm:$0xf]
    %v179 = vld [vmem:[#allocation17 + $0x24] sm:$0xf]
    %v180 = vld [vmem:[#allocation17 + $0x28] sm:$0xf]
    %v181 = vld [vmem:[#allocation17 + $0x2c] sm:$0xf]
    %v182 = vld [vmem:[#allocation17 + $0x30] sm:$0xf]
    %v183 = vld [vmem:[#allocation17 + $0x34] sm:$0xf]
    %v184 = vld [vmem:[#allocation17 + $0x38] sm:$0xf]
    %v185 = vld [vmem:[#allocation17 + $0x3c] sm:$0xf]
    %v188 = vunpack.c.l.b16 %v168
    %v189 = vunpack.c.l.b16 %v169
    %v190 = vpack.c.b16 %v189, %v188
    %v208 = vunpack.c.l.b16 %v170
    %v209 = vunpack.c.l.b16 %v171
    %v210 = vunpack.c.l.b16 %v172
    %v211 = vunpack.c.l.b16 %v173
    %v212 = vunpack.c.l.b16 %v174
    %v213 = vunpack.c.l.b16 %v175
    %v214 = vunpack.c.l.b16 %v176
    %v215 = vunpack.c.l.b16 %v177
    %v216 = vunpack.c.l.b16 %v178
    %v217 = vunpack.c.l.b16 %v179
    %v218 = vunpack.c.l.b16 %v180
    %v219 = vunpack.c.l.b16 %v181
    %v220 = vunpack.c.l.b16 %v182
    %v221 = vunpack.c.l.b16 %v183
    %v222 = vunpack.c.l.b16 %v184
    %v223 = vunpack.c.l.b16 %v185
    %v224 = vpack.c.b16 %v209, %v208
    %v225 = vpack.c.b16 %v211, %v210
    %v226 = vpack.c.b16 %v213, %v212
    %v227 = vpack.c.b16 %v215, %v214
    %v228 = vpack.c.b16 %v217, %v216
    %v229 = vpack.c.b16 %v219, %v218
    %v230 = vpack.c.b16 %v221, %v220
    %v231 = vpack.c.b16 %v223, %v222
    %240 = vmatprep.subr.bf16.mxu0 0
    %241 = vmatpush1.bf16.msra.mxu0 %v224
    %242 = vmatprep.subr.bf16.mxu0 0
    %243 = vmatpush1.bf16.msra.mxu0 %v225
    %244 = vmatprep.subr.bf16.mxu0 0
    %245 = vmatpush1.bf16.msra.mxu0 %v226
    %246 = vmatprep.subr.bf16.mxu0 0
    %247 = vmatpush1.bf16.msra.mxu0 %v227
    %248 = vmatprep.subr.bf16.mxu0 0
    %249 = vmatpush1.bf16.msra.mxu0 %v228
    %250 = vmatprep.subr.bf16.mxu0 0
    %251 = vmatpush1.bf16.msra.mxu0 %v229
    %252 = vmatprep.subr.bf16.mxu0 0
    %253 = vmatpush1.bf16.msra.mxu0 %v230
    %254 = vmatprep.subr.bf16.mxu0 0
    %255 = vmatpush1.bf16.msra.mxu0 %v231
    %256 = vmatprep.subr.bf16.mxu0 0
    %257 = vmatpush1.bf16.msra.mxu0 0
    %258 = vmatprep.subr.bf16.mxu0 0
    %259 = vmatpush1.bf16.msra.mxu0 0
    %260 = vmatprep.subr.bf16.mxu0 0
    %261 = vmatpush1.bf16.msra.mxu0 0
    %262 = vmatprep.subr.bf16.mxu0 0
    %263 = vmatpush1.bf16.msra.mxu0 0
    %264 = vmatprep.subr.bf16.mxu0 0
    %265 = vmatpush1.bf16.msra.mxu0 0
    %266 = vmatprep.subr.bf16.mxu0 0
    %267 = vmatpush1.bf16.msra.mxu0 0
    %268 = vmatprep.subr.bf16.mxu0 0
    %269 = vmatpush1.bf16.msra.mxu0 0
    %270 = vmatprep.subr.bf16.mxu0 0
    %271 = vmatpush1.bf16.msra.mxu0 0
    %272 = vmatprep.mubr.bf16.mxu0 0
    %273 = vmatmul.mubr.bf16.gmra.mrb[0].mxu0 %v190
    %v274 = vpop.f32.mrb[0].mxu0
    %v275 = vadd.f32 0.0, %v274
    %v276 = vpop.f32.mrb[0].mxu0
    %v277 = vpop.f32.mrb[0].mxu0
    %v278 = vadd.f32 0.0, %v277
    %v279 = vpop.f32.mrb[0].mxu0
    %280 = vdwg.mxu0
    %v281 = vmax.f32 %v275, 0.0
    %v282 = vmax.f32 %v278, 0.0
    %283 = vst [vmem:[#allocation2] sm:$0xff] %v281
    %284 = vst [vmem:[#allocation2 + $0x8] sm:$0xff] %v282
    %v285 = vld [vmem:[#allocation15] sm:$0xf]
    %v286 = vld [vmem:[#allocation15 + $0x4] sm:$0xf]
    %v287 = vld [vmem:[#allocation18] sm:$0xf]
    %v288 = vld [vmem:[#allocation18 + $0x4] sm:$0xf]
    %v289 = vld [vmem:[#allocation18 + $0x8] sm:$0xf]
    %v290 = vld [vmem:[#allocation18 + $0xc] sm:$0xf]
    %v291 = vld [vmem:[#allocation18 + $0x10] sm:$0xf]
    %v292 = vld [vmem:[#allocation18 + $0x14] sm:$0xf]
    %v293 = vld [vmem:[#allocation18 + $0x18] sm:$0xf]
    %v294 = vld [vmem:[#allocation18 + $0x1c] sm:$0xf]
    %v295 = vld [vmem:[#allocation18 + $0x20] sm:$0xf]
    %v296 = vld [vmem:[#allocation18 + $0x24] sm:$0xf]
    %v297 = vld [vmem:[#allocation18 + $0x28] sm:$0xf]
    %v298 = vld [vmem:[#allocation18 + $0x2c] sm:$0xf]
    %v299 = vld [vmem:[#allocation18 + $0x30] sm:$0xf]
    %v300 = vld [vmem:[#allocation18 + $0x34] sm:$0xf]
    %v301 = vld [vmem:[#allocation18 + $0x38] sm:$0xf]
    %v302 = vld [vmem:[#allocation18 + $0x3c] sm:$0xf]
    %v305 = vunpack.c.l.b16 %v285
    %v306 = vunpack.c.l.b16 %v286
    %v307 = vpack.c.b16 %v306, %v305
    %v325 = vunpack.c.l.b16 %v287
    %v326 = vunpack.c.l.b16 %v288
    %v327 = vunpack.c.l.b16 %v289
    %v328 = vunpack.c.l.b16 %v290
    %v329 = vunpack.c.l.b16 %v291
    %v330 = vunpack.c.l.b16 %v292
    %v331 = vunpack.c.l.b16 %v293
    %v332 = vunpack.c.l.b16 %v294
    %v333 = vunpack.c.l.b16 %v295
    %v334 = vunpack.c.l.b16 %v296
    %v335 = vunpack.c.l.b16 %v297
    %v336 = vunpack.c.l.b16 %v298
    %v337 = vunpack.c.l.b16 %v299
    %v338 = vunpack.c.l.b16 %v300
    %v339 = vunpack.c.l.b16 %v301
    %v340 = vunpack.c.l.b16 %v302
    %v341 = vpack.c.b16 %v326, %v325
    %v342 = vpack.c.b16 %v328, %v327
    %v343 = vpack.c.b16 %v330, %v329
    %v344 = vpack.c.b16 %v332, %v331
    %v345 = vpack.c.b16 %v334, %v333
    %v346 = vpack.c.b16 %v336, %v335
    %v347 = vpack.c.b16 %v338, %v337
    %v348 = vpack.c.b16 %v340, %v339
    %357 = vmatprep.subr.bf16.mxu0 0
    %358 = vmatpush1.bf16.msra.mxu0 %v341
    %359 = vmatprep.subr.bf16.mxu0 0
    %360 = vmatpush1.bf16.msra.mxu0 %v342
    %361 = vmatprep.subr.bf16.mxu0 0
    %362 = vmatpush1.bf16.msra.mxu0 %v343
    %363 = vmatprep.subr.bf16.mxu0 0
    %364 = vmatpush1.bf16.msra.mxu0 %v344
    %365 = vmatprep.subr.bf16.mxu0 0
    %366 = vmatpush1.bf16.msra.mxu0 %v345
    %367 = vmatprep.subr.bf16.mxu0 0
    %368 = vmatpush1.bf16.msra.mxu0 %v346
    %369 = vmatprep.subr.bf16.mxu0 0
    %370 = vmatpush1.bf16.msra.mxu0 %v347
    %371 = vmatprep.subr.bf16.mxu0 0
    %372 = vmatpush1.bf16.msra.mxu0 %v348
    %373 = vmatprep.subr.bf16.mxu0 0
    %374 = vmatpush1.bf16.msra.mxu0 0
    %375 = vmatprep.subr.bf16.mxu0 0
    %376 = vmatpush1.bf16.msra.mxu0 0
    %377 = vmatprep.subr.bf16.mxu0 0
    %378 = vmatpush1.bf16.msra.mxu0 0
    %379 = vmatprep.subr.bf16.mxu0 0
    %380 = vmatpush1.bf16.msra.mxu0 0
    %381 = vmatprep.subr.bf16.mxu0 0
    %382 = vmatpush1.bf16.msra.mxu0 0
    %383 = vmatprep.subr.bf16.mxu0 0
    %384 = vmatpush1.bf16.msra.mxu0 0
    %385 = vmatprep.subr.bf16.mxu0 0
    %386 = vmatpush1.bf16.msra.mxu0 0
    %387 = vmatprep.subr.bf16.mxu0 0
    %388 = vmatpush1.bf16.msra.mxu0 0
    %389 = vmatprep.mubr.bf16.mxu0 0
    %390 = vmatmul.mubr.bf16.gmra.mrb[0].mxu0 %v307
    %v391 = vpop.f32.mrb[0].mxu0
    %v392 = vadd.f32 0.0, %v391
    %v393 = vpop.f32.mrb[0].mxu0
    %v394 = vpop.f32.mrb[0].mxu0
    %v395 = vadd.f32 0.0, %v394
    %v396 = vpop.f32.mrb[0].mxu0
    %397 = vdwg.mxu0
    %v398 = vmax.f32 %v392, 0.0
    %v399 = vmax.f32 %v395, 0.0
    %400 = vst [vmem:[#allocation3] sm:$0xff] %v398
    %401 = vst [vmem:[#allocation3 + $0x8] sm:$0xff] %v399
    %v402 = vld [vmem:[#allocation2] sm:$0xff]
    %v403 = vld [vmem:[#allocation2 + $0x8] sm:$0xff]
    %404 = vst [vmem:[#allocation4] sm:$0xff] %v402
    %405 = vst [vmem:[#allocation4 + $0x8] sm:$0xff] %v403
    %v406 = vld [vmem:[#allocation3] sm:$0xff]
    %v407 = vld [vmem:[#allocation3 + $0x8] sm:$0xff]
    %408 = vst [vmem:[#allocation5] sm:$0xff] %v406
    %409 = vst [vmem:[#allocation5 + $0x8] sm:$0xff] %v407
    loop: start=0, step=1, limit=2
    $region74: #{_mpn_forward.3} parent=1 // loop_pre_header
      _
    $region75: #{_mpn_forward.3} parent=1 // loop_header
      %s411 = sphi 0, %s415
      %p412 = scmp.ge.s32.totalorder %s411, 2
    $region76: #{_mpn_forward.3} parent=1 // loop_header_branch
      %414 = sbr.rel (%p412) target = $region80
    $region77: #{_mpn_forward.3} parent=1 // loop_body
      %s416 = smul.u32 %s411, 8
      %s417 = smul.u32 %s416, 3
      %s418 = sld [smem:[#allocation9 + %s417]]
      %s419 = scalar_lea.vmem [#allocation5], %s418
      %v420 = vld [vmem:[%s419] sm:$0x1]
      %s421 = sadd.s32 %s417, 1
      %s422 = sld [smem:[#allocation9 + %s421]]
      %s423 = scalar_lea.vmem [#allocation5], %s422
      %v424 = vld [vmem:[%s423] sm:$0x1]
      %v425 = vadd.f32 %v420, %v424
      %v426 = vmax.f32 %v420, %v424
      %s427 = sadd.s32 %s417, 2
      %s428 = sld [smem:[#allocation9 + %s427]]
      %s429 = scalar_lea.vmem [#allocation5], %s428
      %v430 = vld [vmem:[%s429] sm:$0x1]
      %v431 = vadd.f32 %v425, %v430
      %v432 = vmax.f32 %v426, %v430
      %v433 = vmul.f32 %v431, %v432
      %s434 = sadd.s32 %s416, 1
      %s435 = smul.u32 %s434, 3
      %s436 = sld [smem:[#allocation9 + %s435]]
      %s437 = scalar_lea.vmem [#allocation5], %s436
      %v438 = vld [vmem:[%s437] sm:$0x1]
      %s439 = sadd.s32 %s435, 1
      %s440 = sld [smem:[#allocation9 + %s439]]
      %s441 = scalar_lea.vmem [#allocation5], %s440
      %v442 = vld [vmem:[%s441] sm:$0x1]
      %v443 = vadd.f32 %v438, %v442
      %v444 = vmax.f32 %v438, %v442
      %s445 = sadd.s32 %s435, 2
      %s446 = sld [smem:[#allocation9 + %s445]]
      %s447 = scalar_lea.vmem [#allocation5], %s446
      %v448 = vld [vmem:[%s447] sm:$0x1]
      %v449 = vadd.f32 %v443, %v448
      %v450 = vmax.f32 %v444, %v448
      %v451 = vmul.f32 %v449, %v450
      %s452 = sadd.s32 %s416, 2
      %s453 = smul.u32 %s452, 3
      %s454 = sld [smem:[#allocation9 + %s453]]
      %s455 = scalar_lea.vmem [#allocation5], %s454
      %v456 = vld [vmem:[%s455] sm:$0x1]
      %s457 = sadd.s32 %s453, 1
      %s458 = sld [smem:[#allocation9 + %s457]]
      %s459 = scalar_lea.vmem [#allocation5], %s458
      %v460 = vld [vmem:[%s459] sm:$0x1]
      %v461 = vadd.f32 %v456, %v460
      %v462 = vmax.f32 %v456, %v460
      %s463 = sadd.s32 %s453, 2
      %s464 = sld [smem:[#allocation9 + %s463]]
      %s465 = scalar_lea.vmem [#allocation5], %s464
      %v466 = vld [vmem:[%s465] sm:$0x1]
      %v467 = vadd.f32 %v461, %v466
      %v468 = vmax.f32 %v462, %v466
      %v469 = vmul.f32 %v467, %v468
      %s470 = sadd.s32 %s416, 3
      %s471 = smul.u32 %s470, 3
      %s472 = sld [smem:[#allocation9 + %s471]]
      %s473 = scalar_lea.vmem [#allocation5], %s472
      %v474 = vld [vmem:[%s473] sm:$0x1]
      %s475 = sadd.s32 %s471, 1
      %s476 = sld [smem:[#allocation9 + %s475]]
      %s477 = scalar_lea.vmem [#allocation5], %s476
      %v478 = vld [vmem:[%s477] sm:$0x1]
      %v479 = vadd.f32 %v474, %v478
      %v480 = vmax.f32 %v474, %v478
      %s481 = sadd.s32 %s471, 2
      %s482 = sld [smem:[#allocation9 + %s481]]
      %s483 = scalar_lea.vmem [#allocation5], %s482
      %v484 = vld [vmem:[%s483] sm:$0x1]
      %v485 = vadd.f32 %v479, %v484
      %v486 = vmax.f32 %v480, %v484
      %v487 = vmul.f32 %v485, %v486
      %s488 = sadd.s32 %s416, 4
      %s489 = smul.u32 %s488, 3
      %s490 = sld [smem:[#allocation9 + %s489]]
      %s491 = scalar_lea.vmem [#allocation5], %s490
      %v492 = vld [vmem:[%s491] sm:$0x1]
      %s493 = sadd.s32 %s489, 1
      %s494 = sld [smem:[#allocation9 + %s493]]
      %s495 = scalar_lea.vmem [#allocation5], %s494
      %v496 = vld [vmem:[%s495] sm:$0x1]
      %v497 = vadd.f32 %v492, %v496
      %v498 = vmax.f32 %v492, %v496
      %s499 = sadd.s32 %s489, 2
      %s500 = sld [smem:[#allocation9 + %s499]]
      %s501 = scalar_lea.vmem [#allocation5], %s500
      %v502 = vld [vmem:[%s501] sm:$0x1]
      %v503 = vadd.f32 %v497, %v502
      %v504 = vmax.f32 %v498, %v502
      %v505 = vmul.f32 %v503, %v504
      %s506 = sadd.s32 %s416, 5
      %s507 = smul.u32 %s506, 3
      %s508 = sld [smem:[#allocation9 + %s507]]
      %s509 = scalar_lea.vmem [#allocation5], %s508
      %v510 = vld [vmem:[%s509] sm:$0x1]
      %s511 = sadd.s32 %s507, 1
      %s512 = sld [smem:[#allocation9 + %s511]]
      %s513 = scalar_lea.vmem [#allocation5], %s512
      %v514 = vld [vmem:[%s513] sm:$0x1]
      %v515 = vadd.f32 %v510, %v514
      %v516 = vmax.f32 %v510, %v514
      %s517 = sadd.s32 %s507, 2
      %s518 = sld [smem:[#allocation9 + %s517]]
      %s519 = scalar_lea.vmem [#allocation5], %s518
      %v520 = vld [vmem:[%s519] sm:$0x1]
      %v521 = vadd.f32 %v515, %v520
      %v522 = vmax.f32 %v516, %v520
      %v523 = vmul.f32 %v521, %v522
      %s524 = sadd.s32 %s416, 6
      %s525 = smul.u32 %s524, 3
      %s526 = sld [smem:[#allocation9 + %s525]]
      %s527 = scalar_lea.vmem [#allocation5], %s526
      %v528 = vld [vmem:[%s527] sm:$0x1]
      %s529 = sadd.s32 %s525, 1
      %s530 = sld [smem:[#allocation9 + %s529]]
      %s531 = scalar_lea.vmem [#allocation5], %s530
      %v532 = vld [vmem:[%s531] sm:$0x1]
      %v533 = vadd.f32 %v528, %v532
      %v534 = vmax.f32 %v528, %v532
      %s535 = sadd.s32 %s525, 2
      %s536 = sld [smem:[#allocation9 + %s535]]
      %s537 = scalar_lea.vmem [#allocation5], %s536
      %v538 = vld [vmem:[%s537] sm:$0x1]
      %v539 = vadd.f32 %v533, %v538
      %v540 = vmax.f32 %v534, %v538
      %v541 = vmul.f32 %v539, %v540
      %s542 = sadd.s32 %s416, 7
      %s543 = smul.u32 %s542, 3
      %s544 = sld [smem:[#allocation9 + %s543]]
      %s545 = scalar_lea.vmem [#allocation5], %s544
      %v546 = vld [vmem:[%s545] sm:$0x1]
      %s547 = sadd.s32 %s543, 1
      %s548 = sld [smem:[#allocation9 + %s547]]
      %s549 = scalar_lea.vmem [#allocation5], %s548
      %v550 = vld [vmem:[%s549] sm:$0x1]
      %v551 = vadd.f32 %v546, %v550
      %v552 = vmax.f32 %v546, %v550
      %s553 = sadd.s32 %s543, 2
      %s554 = sld [smem:[#allocation9 + %s553]]
      %s555 = scalar_lea.vmem [#allocation5], %s554
      %v556 = vld [vmem:[%s555] sm:$0x1]
      %v557 = vadd.f32 %v551, %v556
      %v558 = vmax.f32 %v552, %v556
      %v559 = vmul.f32 %v557, %v558
      %v561 = vrot.slane %v451, 7
      %v564 = vrot.slane %v469, 6
      %v567 = vrot.slane %v487, 5
      %v570 = vrot.slane %v505, 4
      %v573 = vrot.slane %v523, 3
      %v576 = vrot.slane %v541, 2
      %v579 = vrot.slane %v559, 1
      %vm581 = vcmask 1040384
      %v582 = vsel %vm581, %v433, %v561
      %vm583 = vcmask 1041408
      %v584 = vsel %vm583, %v582, %v564
      %vm585 = vcmask 1042432
      %v586 = vsel %vm585, %v584, %v567
      %vm587 = vcmask 1043456
      %v588 = vsel %vm587, %v586, %v570
      %vm589 = vcmask 1044480
      %v590 = vsel %vm589, %v588, %v573
      %vm591 = vcmask 1045504
      %v592 = vsel %vm591, %v590, %v576
      %vm593 = vcmask 1046528
      %v594 = vsel %vm593, %v592, %v579
      %s595 = scalar_lea.vmem [#allocation7], %s416
      %596 = vst [vmem:[%s595] sm:$0xff] %v594
    $region78: #{_mpn_forward.3} parent=1 // loop_footer
      %s415 = sadd.s32 1, %s411
    $region79: #{_mpn_forward.3} parent=1 // loop_footer_branch
      %410 = sbr.rel target = $region75
    $region80: #{_mpn_forward.3} parent=1 // loop_exit
      _
    %v597 = vld [vmem:[#allocation4] sm:$0xff]
    %v598 = vld [vmem:[#allocation4 + $0x8] sm:$0xff]
    %v599 = vld [vmem:[#allocation7] sm:$0xff]
    %v600 = vld [vmem:[#allocation7 + $0x8] sm:$0xff]
    %v601 = vadd.f32 %v597, %v599
    %v602 = vadd.f32 %v598, %v600
    %603 = vst [vmem:[#allocation4] sm:$0xff] %v601
    %604 = vst [vmem:[#allocation4 + $0x8] sm:$0xff] %v602
    loop: start=0, step=1, limit=2
    $region81: #{_mpn_forward.3} parent=1 // loop_pre_header
      _
    $region82: #{_mpn_forward.3} parent=1 // loop_header
      %s606 = sphi 0, %s610
      %p607 = scmp.ge.s32.totalorder %s606, 2
    $region83: #{_mpn_forward.3} parent=1 // loop_header_branch
      %609 = sbr.rel (%p607) target = $region87
    $region84: #{_mpn_forward.3} parent=1 // loop_body
      %s611 = smul.u32 %s606, 8
      %s612 = sld [smem:[#allocation10 + %s611]]
      %s613 = scalar_lea.vmem [#allocation4], %s612
      %v614 = vld [vmem:[%s613] sm:$0x1]
      %s615 = sld [smem:[#allocation11 + %s611]]
      %s616 = scalar_lea.vmem [#allocation5], %s615
      %v617 = vld [vmem:[%s616] sm:$0x1]
      %v618 = vsub.f32 %v614, %v617
      %s619 = sadd.s32 %s611, 1
      %s620 = sld [smem:[#allocation10 + %s619]]
      %s621 = scalar_lea.vmem [#allocation4], %s620
      %v622 = vld [vmem:[%s621] sm:$0x1]
      %s623 = sld [smem:[#allocation11 + %s619]]
      %s624 = scalar_lea.vmem [#allocation5], %s623
      %v625 = vld [vmem:[%s624] sm:$0x1]
      %v626 = vsub.f32 %v622, %v625
      %s627 = sadd.s32 %s611, 2
      %s628 = sld [smem:[#allocation10 + %s627]]
      %s629 = scalar_lea.vmem [#allocation4], %s628
      %v630 = vld [vmem:[%s629] sm:$0x1]
      %s631 = sld [smem:[#allocation11 + %s627]]
      %s632 = scalar_lea.vmem [#allocation5], %s631
      %v633 = vld [vmem:[%s632] sm:$0x1]
      %v634 = vsub.f32 %v630, %v633
      %s635 = sadd.s32 %s611, 3
      %s636 = sld [smem:[#allocation10 + %s635]]
      %s637 = scalar_lea.vmem [#allocation4], %s636
      %v638 = vld [vmem:[%s637] sm:$0x1]
      %s639 = sld [smem:[#allocation11 + %s635]]
      %s640 = scalar_lea.vmem [#allocation5], %s639
      %v641 = vld [vmem:[%s640] sm:$0x1]
      %v642 = vsub.f32 %v638, %v641
      %s643 = sadd.s32 %s611, 4
      %s644 = sld [smem:[#allocation10 + %s643]]
      %s645 = scalar_lea.vmem [#allocation4], %s644
      %v646 = vld [vmem:[%s645] sm:$0x1]
      %s647 = sld [smem:[#allocation11 + %s643]]
      %s648 = scalar_lea.vmem [#allocation5], %s647
      %v649 = vld [vmem:[%s648] sm:$0x1]
      %v650 = vsub.f32 %v646, %v649
      %s651 = sadd.s32 %s611, 5
      %s652 = sld [smem:[#allocation10 + %s651]]
      %s653 = scalar_lea.vmem [#allocation4], %s652
      %v654 = vld [vmem:[%s653] sm:$0x1]
      %s655 = sld [smem:[#allocation11 + %s651]]
      %s656 = scalar_lea.vmem [#allocation5], %s655
      %v657 = vld [vmem:[%s656] sm:$0x1]
      %v658 = vsub.f32 %v654, %v657
      %s659 = sadd.s32 %s611, 6
      %s660 = sld [smem:[#allocation10 + %s659]]
      %s661 = scalar_lea.vmem [#allocation4], %s660
      %v662 = vld [vmem:[%s661] sm:$0x1]
      %s663 = sld [smem:[#allocation11 + %s659]]
      %s664 = scalar_lea.vmem [#allocation5], %s663
      %v665 = vld [vmem:[%s664] sm:$0x1]
      %v666 = vsub.f32 %v662, %v665
      %s667 = sadd.s32 %s611, 7
      %s668 = sld [smem:[#allocation10 + %s667]]
      %s669 = scalar_lea.vmem [#allocation4], %s668
      %v670 = vld [vmem:[%s669] sm:$0x1]
      %s671 = sld [smem:[#allocation11 + %s667]]
      %s672 = scalar_lea.vmem [#allocation5], %s671
      %v673 = vld [vmem:[%s672] sm:$0x1]
      %v674 = vsub.f32 %v670, %v673
      %v676 = vrot.slane %v626, 7
      %v679 = vrot.slane %v634, 6
      %v682 = vrot.slane %v642, 5
      %v685 = vrot.slane %v650, 4
      %v688 = vrot.slane %v658, 3
      %v691 = vrot.slane %v666, 2
      %v694 = vrot.slane %v674, 1
      %vm696 = vcmask 1040384
      %v697 = vsel %vm696, %v618, %v676
      %vm698 = vcmask 1041408
      %v699 = vsel %vm698, %v697, %v679
      %vm700 = vcmask 1042432
      %v701 = vsel %vm700, %v699, %v682
      %vm702 = vcmask 1043456
      %v703 = vsel %vm702, %v701, %v685
      %vm704 = vcmask 1044480
      %v705 = vsel %vm704, %v703, %v688
      %vm706 = vcmask 1045504
      %v707 = vsel %vm706, %v705, %v691
      %vm708 = vcmask 1046528
      %v709 = vsel %vm708, %v707, %v694
      %s710 = scalar_lea.vmem [#allocation6], %s611
      %711 = vst [vmem:[%s710] sm:$0xff] %v709
    $region85: #{_mpn_forward.3} parent=1 // loop_footer
      %s610 = sadd.s32 1, %s606
    $region86: #{_mpn_forward.3} parent=1 // loop_footer_branch
      %605 = sbr.rel target = $region82
    $region87: #{_mpn_forward.3} parent=1 // loop_exit
      _
    %v712 = vld [vmem:[#allocation3] sm:$0xff]
    %v713 = vld [vmem:[#allocation3 + $0x8] sm:$0xff]
    %v714 = vld [vmem:[#allocation6] sm:$0xff]
    %v715 = vld [vmem:[#allocation6 + $0x8] sm:$0xff]
    %v716 = vpack.c.bf16 %v715, %v714
    %v717 = vld [vmem:[#allocation20] sm:$0xf]
    %v718 = vld [vmem:[#allocation20 + $0x4] sm:$0xf]
    %v719 = vld [vmem:[#allocation20 + $0x8] sm:$0xf]
    %v720 = vld [vmem:[#allocation20 + $0xc] sm:$0xf]
    %v721 = vld [vmem:[#allocation20 + $0x10] sm:$0xf]
    %v722 = vld [vmem:[#allocation20 + $0x14] sm:$0xf]
    %v723 = vld [vmem:[#allocation20 + $0x18] sm:$0xf]
    %v724 = vld [vmem:[#allocation20 + $0x1c] sm:$0xf]
    %v725 = vld [vmem:[#allocation20 + $0x20] sm:$0xf]
    %v726 = vld [vmem:[#allocation20 + $0x24] sm:$0xf]
    %v727 = vld [vmem:[#allocation20 + $0x28] sm:$0xf]
    %v728 = vld [vmem:[#allocation20 + $0x2c] sm:$0xf]
    %v729 = vld [vmem:[#allocation20 + $0x30] sm:$0xf]
    %v730 = vld [vmem:[#allocation20 + $0x34] sm:$0xf]
    %v731 = vld [vmem:[#allocation20 + $0x38] sm:$0xf]
    %v732 = vld [vmem:[#allocation20 + $0x3c] sm:$0xf]
    %v749 = vunpack.c.l.b16 %v717
    %v750 = vunpack.c.l.b16 %v718
    %v751 = vunpack.c.l.b16 %v719
    %v752 = vunpack.c.l.b16 %v720
    %v753 = vunpack.c.l.b16 %v721
    %v754 = vunpack.c.l.b16 %v722
    %v755 = vunpack.c.l.b16 %v723
    %v756 = vunpack.c.l.b16 %v724
    %v757 = vunpack.c.l.b16 %v725
    %v758 = vunpack.c.l.b16 %v726
    %v759 = vunpack.c.l.b16 %v727
    %v760 = vunpack.c.l.b16 %v728
    %v761 = vunpack.c.l.b16 %v729
    %v762 = vunpack.c.l.b16 %v730
    %v763 = vunpack.c.l.b16 %v731
    %v764 = vunpack.c.l.b16 %v732
    %v765 = vpack.c.b16 %v750, %v749
    %v766 = vpack.c.b16 %v752, %v751
    %v767 = vpack.c.b16 %v754, %v753
    %v768 = vpack.c.b16 %v756, %v755
    %v769 = vpack.c.b16 %v758, %v757
    %v770 = vpack.c.b16 %v760, %v759
    %v771 = vpack.c.b16 %v762, %v761
    %v772 = vpack.c.b16 %v764, %v763
    %781 = vmatprep.subr.bf16.mxu0 0
    %782 = vmatpush1.bf16.msra.mxu0 %v765
    %783 = vmatprep.subr.bf16.mxu0 0
    %784 = vmatpush1.bf16.msra.mxu0 %v766
    %785 = vmatprep.subr.bf16.mxu0 0
    %786 = vmatpush1.bf16.msra.mxu0 %v767
    %787 = vmatprep.subr.bf16.mxu0 0
    %788 = vmatpush1.bf16.msra.mxu0 %v768
    %789 = vmatprep.subr.bf16.mxu0 0
    %790 = vmatpush1.bf16.msra.mxu0 %v769
    %791 = vmatprep.subr.bf16.mxu0 0
    %792 = vmatpush1.bf16.msra.mxu0 %v770
    %793 = vmatprep.subr.bf16.mxu0 0
    %794 = vmatpush1.bf16.msra.mxu0 %v771
    %795 = vmatprep.subr.bf16.mxu0 0
    %796 = vmatpush1.bf16.msra.mxu0 %v772
    %797 = vmatprep.subr.bf16.mxu0 0
    %798 = vmatpush1.bf16.msra.mxu0 0
    %799 = vmatprep.subr.bf16.mxu0 0
    %800 = vmatpush1.bf16.msra.mxu0 0
    %801 = vmatprep.subr.bf16.mxu0 0
    %802 = vmatpush1.bf16.msra.mxu0 0
    %803 = vmatprep.subr.bf16.mxu0 0
    %804 = vmatpush1.bf16.msra.mxu0 0
    %805 = vmatprep.subr.bf16.mxu0 0
    %806 = vmatpush1.bf16.msra.mxu0 0
    %807 = vmatprep.subr.bf16.mxu0 0
    %808 = vmatpush1.bf16.msra.mxu0 0
    %809 = vmatprep.subr.bf16.mxu0 0
    %810 = vmatpush1.bf16.msra.mxu0 0
    %811 = vmatprep.subr.bf16.mxu0 0
    %812 = vmatpush1.bf16.msra.mxu0 0
    %813 = vmatprep.mubr.bf16.mxu0 0
    %814 = vmatmul.mubr.bf16.gmra.mrb[0].mxu0 %v716
    %v815 = vpop.f32.mrb[0].mxu0
    %v816 = vadd.f32 0.0, %v815
    %v817 = vpop.f32.mrb[0].mxu0
    %v818 = vpop.f32.mrb[0].mxu0
    %v819 = vadd.f32 0.0, %v818
    %v820 = vpop.f32.mrb[0].mxu0
    %821 = vdwg.mxu0
    %v822 = vadd.f32 %v712, %v816
    %v823 = vadd.f32 %v713, %v819
    %v824 = vmax.f32 %v822, 0.0
    %v825 = vmax.f32 %v823, 0.0
    %826 = vst [vmem:[#allocation5] sm:$0xff] %v824
    %827 = vst [vmem:[#allocation5 + $0x8] sm:$0xff] %v825
    loop: start=0, step=1, limit=2
    $region88: #{_mpn_forward.3} parent=1 // loop_pre_header
      _
    $region89: #{_mpn_forward.3} parent=1 // loop_header
      %s829 = sphi 0, %s833
      %p830 = scmp.ge.s32.totalorder %s829, 2
    $region90: #{_mpn_forward.3} parent=1 // loop_header_branch
      %832 = sbr.rel (%p830) target = $region94
    $region91: #{_mpn_forward.3} parent=1 // loop_body
      %s834 = smul.u32 %s829, 8
      %s835 = smul.u32 %s834, 3
      %s836 = sld [smem:[#allocation9 + %s835]]
      %s837 = scalar_lea.vmem [#allocation5], %s836
      %v838 = vld [vmem:[%s837] sm:$0x1]
      %s839 = sadd.s32 %s835, 1
      %s840 = sld [smem:[#allocation9 + %s839]]
      %s841 = scalar_lea.vmem [#allocation5], %s840
      %v842 = vld [vmem:[%s841] sm:$0x1]
      %v843 = vadd.f32 %v838, %v842
      %v844 = vmax.f32 %v838, %v842
      %s845 = sadd.s32 %s835, 2
      %s846 = sld [smem:[#allocation9 + %s845]]
      %s847 = scalar_lea.vmem [#allocation5], %s846
      %v848 = vld [vmem:[%s847] sm:$0x1]
      %v849 = vadd.f32 %v843, %v848
      %v850 = vmax.f32 %v844, %v848
      %v851 = vmul.f32 %v849, %v850
      %s852 = sadd.s32 %s834, 1
      %s853 = smul.u32 %s852, 3
      %s854 = sld [smem:[#allocation9 + %s853]]
      %s855 = scalar_lea.vmem [#allocation5], %s854
      %v856 = vld [vmem:[%s855] sm:$0x1]
      %s857 = sadd.s32 %s853, 1
      %s858 = sld [smem:[#allocation9 + %s857]]
      %s859 = scalar_lea.vmem [#allocation5], %s858
      %v860 = vld [vmem:[%s859] sm:$0x1]
      %v861 = vadd.f32 %v856, %v860
      %v862 = vmax.f32 %v856, %v860
      %s863 = sadd.s32 %s853, 2
      %s864 = sld [smem:[#allocation9 + %s863]]
      %s865 = scalar_lea.vmem [#allocation5], %s864
      %v866 = vld [vmem:[%s865] sm:$0x1]
      %v867 = vadd.f32 %v861, %v866
      %v868 = vmax.f32 %v862, %v866
      %v869 = vmul.f32 %v867, %v868
      %s870 = sadd.s32 %s834, 2
      %s871 = smul.u32 %s870, 3
      %s872 = sld [smem:[#allocation9 + %s871]]
      %s873 = scalar_lea.vmem [#allocation5], %s872
      %v874 = vld [vmem:[%s873] sm:$0x1]
      %s875 = sadd.s32 %s871, 1
      %s876 = sld [smem:[#allocation9 + %s875]]
      %s877 = scalar_lea.vmem [#allocation5], %s876
      %v878 = vld [vmem:[%s877] sm:$0x1]
      %v879 = vadd.f32 %v874, %v878
      %v880 = vmax.f32 %v874, %v878
      %s881 = sadd.s32 %s871, 2
      %s882 = sld [smem:[#allocation9 + %s881]]
      %s883 = scalar_lea.vmem [#allocation5], %s882
      %v884 = vld [vmem:[%s883] sm:$0x1]
      %v885 = vadd.f32 %v879, %v884
      %v886 = vmax.f32 %v880, %v884
      %v887 = vmul.f32 %v885, %v886
      %s888 = sadd.s32 %s834, 3
      %s889 = smul.u32 %s888, 3
      %s890 = sld [smem:[#allocation9 + %s889]]
      %s891 = scalar_lea.vmem [#allocation5], %s890
      %v892 = vld [vmem:[%s891] sm:$0x1]
      %s893 = sadd.s32 %s889, 1
      %s894 = sld [smem:[#allocation9 + %s893]]
      %s895 = scalar_lea.vmem [#allocation5], %s894
      %v896 = vld [vmem:[%s895] sm:$0x1]
      %v897 = vadd.f32 %v892, %v896
      %v898 = vmax.f32 %v892, %v896
      %s899 = sadd.s32 %s889, 2
      %s900 = sld [smem:[#allocation9 + %s899]]
      %s901 = scalar_lea.vmem [#allocation5], %s900
      %v902 = vld [vmem:[%s901] sm:$0x1]
      %v903 = vadd.f32 %v897, %v902
      %v904 = vmax.f32 %v898, %v902
      %v905 = vmul.f32 %v903, %v904
      %s906 = sadd.s32 %s834, 4
      %s907 = smul.u32 %s906, 3
      %s908 = sld [smem:[#allocation9 + %s907]]
      %s909 = scalar_lea.vmem [#allocation5], %s908
      %v910 = vld [vmem:[%s909] sm:$0x1]
      %s911 = sadd.s32 %s907, 1
      %s912 = sld [smem:[#allocation9 + %s911]]
      %s913 = scalar_lea.vmem [#allocation5], %s912
      %v914 = vld [vmem:[%s913] sm:$0x1]
      %v915 = vadd.f32 %v910, %v914
      %v916 = vmax.f32 %v910, %v914
      %s917 = sadd.s32 %s907, 2
      %s918 = sld [smem:[#allocation9 + %s917]]
      %s919 = scalar_lea.vmem [#allocation5], %s918
      %v920 = vld [vmem:[%s919] sm:$0x1]
      %v921 = vadd.f32 %v915, %v920
      %v922 = vmax.f32 %v916, %v920
      %v923 = vmul.f32 %v921, %v922
      %s924 = sadd.s32 %s834, 5
      %s925 = smul.u32 %s924, 3
      %s926 = sld [smem:[#allocation9 + %s925]]
      %s927 = scalar_lea.vmem [#allocation5], %s926
      %v928 = vld [vmem:[%s927] sm:$0x1]
      %s929 = sadd.s32 %s925, 1
      %s930 = sld [smem:[#allocation9 + %s929]]
      %s931 = scalar_lea.vmem [#allocation5], %s930
      %v932 = vld [vmem:[%s931] sm:$0x1]
      %v933 = vadd.f32 %v928, %v932
      %v934 = vmax.f32 %v928, %v932
      %s935 = sadd.s32 %s925, 2
      %s936 = sld [smem:[#allocation9 + %s935]]
      %s937 = scalar_lea.vmem [#allocation5], %s936
      %v938 = vld [vmem:[%s937] sm:$0x1]
      %v939 = vadd.f32 %v933, %v938
      %v940 = vmax.f32 %v934, %v938
      %v941 = vmul.f32 %v939, %v940
      %s942 = sadd.s32 %s834, 6
      %s943 = smul.u32 %s942, 3
      %s944 = sld [smem:[#allocation9 + %s943]]
      %s945 = scalar_lea.vmem [#allocation5], %s944
      %v946 = vld [vmem:[%s945] sm:$0x1]
      %s947 = sadd.s32 %s943, 1
      %s948 = sld [smem:[#allocation9 + %s947]]
      %s949 = scalar_lea.vmem [#allocation5], %s948
      %v950 = vld [vmem:[%s949] sm:$0x1]
      %v951 = vadd.f32 %v946, %v950
      %v952 = vmax.f32 %v946, %v950
      %s953 = sadd.s32 %s943, 2
      %s954 = sld [smem:[#allocation9 + %s953]]
      %s955 = scalar_lea.vmem [#allocation5], %s954
      %v956 = vld [vmem:[%s955] sm:$0x1]
      %v957 = vadd.f32 %v951, %v956
      %v958 = vmax.f32 %v952, %v956
      %v959 = vmul.f32 %v957, %v958
      %s960 = sadd.s32 %s834, 7
      %s961 = smul.u32 %s960, 3
      %s962 = sld [smem:[#allocation9 + %s961]]
      %s963 = scalar_lea.vmem [#allocation5], %s962
      %v964 = vld [vmem:[%s963] sm:$0x1]
      %s965 = sadd.s32 %s961, 1
      %s966 = sld [smem:[#allocation9 + %s965]]
      %s967 = scalar_lea.vmem [#allocation5], %s966
      %v968 = vld [vmem:[%s967] sm:$0x1]
      %v969 = vadd.f32 %v964, %v968
      %v970 = vmax.f32 %v964, %v968
      %s971 = sadd.s32 %s961, 2
      %s972 = sld [smem:[#allocation9 + %s971]]
      %s973 = scalar_lea.vmem [#allocation5], %s972
      %v974 = vld [vmem:[%s973] sm:$0x1]
      %v975 = vadd.f32 %v969, %v974
      %v976 = vmax.f32 %v970, %v974
      %v977 = vmul.f32 %v975, %v976
      %v979 = vrot.slane %v869, 7
      %v982 = vrot.slane %v887, 6
      %v985 = vrot.slane %v905, 5
      %v988 = vrot.slane %v923, 4
      %v991 = vrot.slane %v941, 3
      %v994 = vrot.slane %v959, 2
      %v997 = vrot.slane %v977, 1
      %vm999 = vcmask 1040384
      %v1000 = vsel %vm999, %v851, %v979
      %vm1001 = vcmask 1041408
      %v1002 = vsel %vm1001, %v1000, %v982
      %vm1003 = vcmask 1042432
      %v1004 = vsel %vm1003, %v1002, %v985
      %vm1005 = vcmask 1043456
      %v1006 = vsel %vm1005, %v1004, %v988
      %vm1007 = vcmask 1044480
      %v1008 = vsel %vm1007, %v1006, %v991
      %vm1009 = vcmask 1045504
      %v1010 = vsel %vm1009, %v1008, %v994
      %vm1011 = vcmask 1046528
      %v1012 = vsel %vm1011, %v1010, %v997
      %s1013 = scalar_lea.vmem [#allocation7], %s834
      %1014 = vst [vmem:[%s1013] sm:$0xff] %v1012
    $region92: #{_mpn_forward.3} parent=1 // loop_footer
      %s833 = sadd.s32 1, %s829
    $region93: #{_mpn_forward.3} parent=1 // loop_footer_branch
      %828 = sbr.rel target = $region89
    $region94: #{_mpn_forward.3} parent=1 // loop_exit
      _
    %v1015 = vld [vmem:[#allocation4] sm:$0xff]
    %v1016 = vld [vmem:[#allocation4 + $0x8] sm:$0xff]
    %v1017 = vld [vmem:[#allocation7] sm:$0xff]
    %v1018 = vld [vmem:[#allocation7 + $0x8] sm:$0xff]
    %v1019 = vadd.f32 %v1015, %v1017
    %v1020 = vadd.f32 %v1016, %v1018
    %1021 = vst [vmem:[#allocation4] sm:$0xff] %v1019
    %1022 = vst [vmem:[#allocation4 + $0x8] sm:$0xff] %v1020
    loop: start=0, step=1, limit=2
    $region95: #{_mpn_forward.3} parent=1 // loop_pre_header
      _
    $region96: #{_mpn_forward.3} parent=1 // loop_header
      %s1024 = sphi 0, %s1028
      %p1025 = scmp.ge.s32.totalorder %s1024, 2
    $region97: #{_mpn_forward.3} parent=1 // loop_header_branch
      %1027 = sbr.rel (%p1025) target = $region101
    $region98: #{_mpn_forward.3} parent=1 // loop_body
      %s1029 = smul.u32 %s1024, 8
      %s1030 = sld [smem:[#allocation10 + %s1029]]
      %s1031 = scalar_lea.vmem [#allocation4], %s1030
      %v1032 = vld [vmem:[%s1031] sm:$0x1]
      %s1033 = sld [smem:[#allocation11 + %s1029]]
      %s1034 = scalar_lea.vmem [#allocation5], %s1033
      %v1035 = vld [vmem:[%s1034] sm:$0x1]
      %v1036 = vsub.f32 %v1032, %v1035
      %s1037 = sadd.s32 %s1029, 1
      %s1038 = sld [smem:[#allocation10 + %s1037]]
      %s1039 = scalar_lea.vmem [#allocation4], %s1038
      %v1040 = vld [vmem:[%s1039] sm:$0x1]
      %s1041 = sld [smem:[#allocation11 + %s1037]]
      %s1042 = scalar_lea.vmem [#allocation5], %s1041
      %v1043 = vld [vmem:[%s1042] sm:$0x1]
      %v1044 = vsub.f32 %v1040, %v1043
      %s1045 = sadd.s32 %s1029, 2
      %s1046 = sld [smem:[#allocation10 + %s1045]]
      %s1047 = scalar_lea.vmem [#allocation4], %s1046
      %v1048 = vld [vmem:[%s1047] sm:$0x1]
      %s1049 = sld [smem:[#allocation11 + %s1045]]
      %s1050 = scalar_lea.vmem [#allocation5], %s1049
      %v1051 = vld [vmem:[%s1050] sm:$0x1]
      %v1052 = vsub.f32 %v1048, %v1051
      %s1053 = sadd.s32 %s1029, 3
      %s1054 = sld [smem:[#allocation10 + %s1053]]
      %s1055 = scalar_lea.vmem [#allocation4], %s1054
      %v1056 = vld [vmem:[%s1055] sm:$0x1]
      %s1057 = sld [smem:[#allocation11 + %s1053]]
      %s1058 = scalar_lea.vmem [#allocation5], %s1057
      %v1059 = vld [vmem:[%s1058] sm:$0x1]
      %v1060 = vsub.f32 %v1056, %v1059
      %s1061 = sadd.s32 %s1029, 4
      %s1062 = sld [smem:[#allocation10 + %s1061]]
      %s1063 = scalar_lea.vmem [#allocation4], %s1062
      %v1064 = vld [vmem:[%s1063] sm:$0x1]
      %s1065 = sld [smem:[#allocation11 + %s1061]]
      %s1066 = scalar_lea.vmem [#allocation5], %s1065
      %v1067 = vld [vmem:[%s1066] sm:$0x1]
      %v1068 = vsub.f32 %v1064, %v1067
      %s1069 = sadd.s32 %s1029, 5
      %s1070 = sld [smem:[#allocation10 + %s1069]]
      %s1071 = scalar_lea.vmem [#allocation4], %s1070
      %v1072 = vld [vmem:[%s1071] sm:$0x1]
      %s1073 = sld [smem:[#allocation11 + %s1069]]
      %s1074 = scalar_lea.vmem [#allocation5], %s1073
      %v1075 = vld [vmem:[%s1074] sm:$0x1]
      %v1076 = vsub.f32 %v1072, %v1075
      %s1077 = sadd.s32 %s1029, 6
      %s1078 = sld [smem:[#allocation10 + %s1077]]
      %s1079 = scalar_lea.vmem [#allocation4], %s1078
      %v1080 = vld [vmem:[%s1079] sm:$0x1]
      %s1081 = sld [smem:[#allocation11 + %s1077]]
      %s1082 = scalar_lea.vmem [#allocation5], %s1081
      %v1083 = vld [vmem:[%s1082] sm:$0x1]
      %v1084 = vsub.f32 %v1080, %v1083
      %s1085 = sadd.s32 %s1029, 7
      %s1086 = sld [smem:[#allocation10 + %s1085]]
      %s1087 = scalar_lea.vmem [#allocation4], %s1086
      %v1088 = vld [vmem:[%s1087] sm:$0x1]
      %s1089 = sld [smem:[#allocation11 + %s1085]]
      %s1090 = scalar_lea.vmem [#allocation5], %s1089
      %v1091 = vld [vmem:[%s1090] sm:$0x1]
      %v1092 = vsub.f32 %v1088, %v1091
      %v1094 = vrot.slane %v1044, 7
      %v1097 = vrot.slane %v1052, 6
      %v1100 = vrot.slane %v1060, 5
      %v1103 = vrot.slane %v1068, 4
      %v1106 = vrot.slane %v1076, 3
      %v1109 = vrot.slane %v1084, 2
      %v1112 = vrot.slane %v1092, 1
      %vm1114 = vcmask 1040384
      %v1115 = vsel %vm1114, %v1036, %v1094
      %vm1116 = vcmask 1041408
      %v1117 = vsel %vm1116, %v1115, %v1097
      %vm1118 = vcmask 1042432
      %v1119 = vsel %vm1118, %v1117, %v1100
      %vm1120 = vcmask 1043456
      %v1121 = vsel %vm1120, %v1119, %v1103
      %vm1122 = vcmask 1044480
      %v1123 = vsel %vm1122, %v1121, %v1106
      %vm1124 = vcmask 1045504
      %v1125 = vsel %vm1124, %v1123, %v1109
      %vm1126 = vcmask 1046528
      %v1127 = vsel %vm1126, %v1125, %v1112
      %s1128 = scalar_lea.vmem [#allocation6], %s1029
      %1129 = vst [vmem:[%s1128] sm:$0xff] %v1127
    $region99: #{_mpn_forward.3} parent=1 // loop_footer
      %s1028 = sadd.s32 1, %s1024
    $region100: #{_mpn_forward.3} parent=1 // loop_footer_branch
      %1023 = sbr.rel target = $region96
    $region101: #{_mpn_forward.3} parent=1 // loop_exit
      _
    %v1130 = vld [vmem:[#allocation3] sm:$0xff]
    %v1131 = vld [vmem:[#allocation3 + $0x8] sm:$0xff]
    %v1132 = vld [vmem:[#allocation6] sm:$0xff]
    %v1133 = vld [vmem:[#allocation6 + $0x8] sm:$0xff]
    %v1134 = vpack.c.bf16 %v1133, %v1132
    %s1135 = scalar_lea.vmem [#allocation20], 64
    %v1136 = vld [vmem:[%s1135] sm:$0xf]
    %v1137 = vld [vmem:[%s1135 + $0x4] sm:$0xf]
    %v1138 = vld [vmem:[%s1135 + $0x8] sm:$0xf]
    %v1139 = vld [vmem:[%s1135 + $0xc] sm:$0xf]
    %v1140 = vld [vmem:[%s1135 + $0x10] sm:$0xf]
    %v1141 = vld [vmem:[%s1135 + $0x14] sm:$0xf]
    %v1142 = vld [vmem:[%s1135 + $0x18] sm:$0xf]
    %v1143 = vld [vmem:[%s1135 + $0x1c] sm:$0xf]
    %v1144 = vld [vmem:[%s1135 + $0x20] sm:$0xf]
    %v1145 = vld [vmem:[%s1135 + $0x24] sm:$0xf]
    %v1146 = vld [vmem:[%s1135 + $0x28] sm:$0xf]
    %v1147 = vld [vmem:[%s1135 + $0x2c] sm:$0xf]
    %v1148 = vld [vmem:[%s1135 + $0x30] sm:$0xf]
    %v1149 = vld [vmem:[%s1135 + $0x34] sm:$0xf]
    %v1150 = vld [vmem:[%s1135 + $0x38] sm:$0xf]
    %v1151 = vld [vmem:[%s1135 + $0x3c] sm:$0xf]
    %v1168 = vunpack.c.l.b16 %v1136
    %v1169 = vunpack.c.l.b16 %v1137
    %v1170 = vunpack.c.l.b16 %v1138
    %v1171 = vunpack.c.l.b16 %v1139
    %v1172 = vunpack.c.l.b16 %v1140
    %v1173 = vunpack.c.l.b16 %v1141
    %v1174 = vunpack.c.l.b16 %v1142
    %v1175 = vunpack.c.l.b16 %v1143
    %v1176 = vunpack.c.l.b16 %v1144
    %v1177 = vunpack.c.l.b16 %v1145
    %v1178 = vunpack.c.l.b16 %v1146
    %v1179 = vunpack.c.l.b16 %v1147
    %v1180 = vunpack.c.l.b16 %v1148
    %v1181 = vunpack.c.l.b16 %v1149
    %v1182 = vunpack.c.l.b16 %v1150
    %v1183 = vunpack.c.l.b16 %v1151
    %v1184 = vpack.c.b16 %v1169, %v1168
    %v1185 = vpack.c.b16 %v1171, %v1170
    %v1186 = vpack.c.b16 %v1173, %v1172
    %v1187 = vpack.c.b16 %v1175, %v1174
    %v1188 = vpack.c.b16 %v1177, %v1176
    %v1189 = vpack.c.b16 %v1179, %v1178
    %v1190 = vpack.c.b16 %v1181, %v1180
    %v1191 = vpack.c.b16 %v1183, %v1182
    %1200 = vmatprep.subr.bf16.mxu0 0
    %1201 = vmatpush1.bf16.msra.mxu0 %v1184
    %1202 = vmatprep.subr.bf16.mxu0 0
    %1203 = vmatpush1.bf16.msra.mxu0 %v1185
    %1204 = vmatprep.subr.bf16.mxu0 0
    %1205 = vmatpush1.bf16.msra.mxu0 %v1186
    %1206 = vmatprep.subr.bf16.mxu0 0
    %1207 = vmatpush1.bf16.msra.mxu0 %v1187
    %1208 = vmatprep.subr.bf16.mxu0 0
    %1209 = vmatpush1.bf16.msra.mxu0 %v1188
    %1210 = vmatprep.subr.bf16.mxu0 0
    %1211 = vmatpush1.bf16.msra.mxu0 %v1189
    %1212 = vmatprep.subr.bf16.mxu0 0
    %1213 = vmatpush1.bf16.msra.mxu0 %v1190
    %1214 = vmatprep.subr.bf16.mxu0 0
    %1215 = vmatpush1.bf16.msra.mxu0 %v1191
    %1216 = vmatprep.subr.bf16.mxu0 0
    %1217 = vmatpush1.bf16.msra.mxu0 0
    %1218 = vmatprep.subr.bf16.mxu0 0
    %1219 = vmatpush1.bf16.msra.mxu0 0
    %1220 = vmatprep.subr.bf16.mxu0 0
    %1221 = vmatpush1.bf16.msra.mxu0 0
    %1222 = vmatprep.subr.bf16.mxu0 0
    %1223 = vmatpush1.bf16.msra.mxu0 0
    %1224 = vmatprep.subr.bf16.mxu0 0
    %1225 = vmatpush1.bf16.msra.mxu0 0
    %1226 = vmatprep.subr.bf16.mxu0 0
    %1227 = vmatpush1.bf16.msra.mxu0 0
    %1228 = vmatprep.subr.bf16.mxu0 0
    %1229 = vmatpush1.bf16.msra.mxu0 0
    %1230 = vmatprep.subr.bf16.mxu0 0
    %1231 = vmatpush1.bf16.msra.mxu0 0
    %1232 = vmatprep.mubr.bf16.mxu0 0
    %1233 = vmatmul.mubr.bf16.gmra.mrb[0].mxu0 %v1134
    %v1234 = vpop.f32.mrb[0].mxu0
    %v1235 = vadd.f32 0.0, %v1234
    %v1236 = vpop.f32.mrb[0].mxu0
    %v1237 = vpop.f32.mrb[0].mxu0
    %v1238 = vadd.f32 0.0, %v1237
    %v1239 = vpop.f32.mrb[0].mxu0
    %1240 = vdwg.mxu0
    %v1241 = vadd.f32 %v1130, %v1235
    %v1242 = vadd.f32 %v1131, %v1238
    %v1243 = vmax.f32 %v1241, 0.0
    %v1244 = vmax.f32 %v1242, 0.0
    %1245 = vst [vmem:[#allocation5] sm:$0xff] %v1243
    %1246 = vst [vmem:[#allocation5 + $0x8] sm:$0xff] %v1244
    loop: start=0, step=1, limit=2
    $region102: #{_mpn_forward.3} parent=1 // loop_pre_header
      _
    $region103: #{_mpn_forward.3} parent=1 // loop_header
      %s1248 = sphi 0, %s1252
      %p1249 = scmp.ge.s32.totalorder %s1248, 2
    $region104: #{_mpn_forward.3} parent=1 // loop_header_branch
      %1251 = sbr.rel (%p1249) target = $region108
    $region105: #{_mpn_forward.3} parent=1 // loop_body
      %s1253 = smul.u32 %s1248, 8
      %s1254 = smul.u32 %s1253, 3
      %s1255 = sld [smem:[#allocation9 + %s1254]]
      %s1256 = scalar_lea.vmem [#allocation5], %s1255
      %v1257 = vld [vmem:[%s1256] sm:$0x1]
      %s1258 = sadd.s32 %s1254, 1
      %s1259 = sld [smem:[#allocation9 + %s1258]]
      %s1260 = scalar_lea.vmem [#allocation5], %s1259
      %v1261 = vld [vmem:[%s1260] sm:$0x1]
      %v1262 = vadd.f32 %v1257, %v1261
      %v1263 = vmax.f32 %v1257, %v1261
      %s1264 = sadd.s32 %s1254, 2
      %s1265 = sld [smem:[#allocation9 + %s1264]]
      %s1266 = scalar_lea.vmem [#allocation5], %s1265
      %v1267 = vld [vmem:[%s1266] sm:$0x1]
      %v1268 = vadd.f32 %v1262, %v1267
      %v1269 = vmax.f32 %v1263, %v1267
      %v1270 = vmul.f32 %v1268, %v1269
      %s1271 = sadd.s32 %s1253, 1
      %s1272 = smul.u32 %s1271, 3
      %s1273 = sld [smem:[#allocation9 + %s1272]]
      %s1274 = scalar_lea.vmem [#allocation5], %s1273
      %v1275 = vld [vmem:[%s1274] sm:$0x1]
      %s1276 = sadd.s32 %s1272, 1
      %s1277 = sld [smem:[#allocation9 + %s1276]]
      %s1278 = scalar_lea.vmem [#allocation5], %s1277
      %v1279 = vld [vmem:[%s1278] sm:$0x1]
      %v1280 = vadd.f32 %v1275, %v1279
      %v1281 = vmax.f32 %v1275, %v1279
      %s1282 = sadd.s32 %s1272, 2
      %s1283 = sld [smem:[#allocation9 + %s1282]]
      %s1284 = scalar_lea.vmem [#allocation5], %s1283
      %v1285 = vld [vmem:[%s1284] sm:$0x1]
      %v1286 = vadd.f32 %v1280, %v1285
      %v1287 = vmax.f32 %v1281, %v1285
      %v1288 = vmul.f32 %v1286, %v1287
      %s1289 = sadd.s32 %s1253, 2
      %s1290 = smul.u32 %s1289, 3
      %s1291 = sld [smem:[#allocation9 + %s1290]]
      %s1292 = scalar_lea.vmem [#allocation5], %s1291
      %v1293 = vld [vmem:[%s1292] sm:$0x1]
      %s1294 = sadd.s32 %s1290, 1
      %s1295 = sld [smem:[#allocation9 + %s1294]]
      %s1296 = scalar_lea.vmem [#allocation5], %s1295
      %v1297 = vld [vmem:[%s1296] sm:$0x1]
      %v1298 = vadd.f32 %v1293, %v1297
      %v1299 = vmax.f32 %v1293, %v1297
      %s1300 = sadd.s32 %s1290, 2
      %s1301 = sld [smem:[#allocation9 + %s1300]]
      %s1302 = scalar_lea.vmem [#allocation5], %s1301
      %v1303 = vld [vmem:[%s1302] sm:$0x1]
      %v1304 = vadd.f32 %v1298, %v1303
      %v1305 = vmax.f32 %v1299, %v1303
      %v1306 = vmul.f32 %v1304, %v1305
      %s1307 = sadd.s32 %s1253, 3
      %s1308 = smul.u32 %s1307, 3
      %s1309 = sld [smem:[#allocation9 + %s1308]]
      %s1310 = scalar_lea.vmem [#allocation5], %s1309
      %v1311 = vld [vmem:[%s1310] sm:$0x1]
      %s1312 = sadd.s32 %s1308, 1
      %s1313 = sld [smem:[#allocation9 + %s1312]]
      %s1314 = scalar_lea.vmem [#allocation5], %s1313
      %v1315 = vld [vmem:[%s1314] sm:$0x1]
      %v1316 = vadd.f32 %v1311, %v1315
      %v1317 = vmax.f32 %v1311, %v1315
      %s1318 = sadd.s32 %s1308, 2
      %s1319 = sld [smem:[#allocation9 + %s1318]]
      %s1320 = scalar_lea.vmem [#allocation5], %s1319
      %v1321 = vld [vmem:[%s1320] sm:$0x1]
      %v1322 = vadd.f32 %v1316, %v1321
      %v1323 = vmax.f32 %v1317, %v1321
      %v1324 = vmul.f32 %v1322, %v1323
      %s1325 = sadd.s32 %s1253, 4
      %s1326 = smul.u32 %s1325, 3
      %s1327 = sld [smem:[#allocation9 + %s1326]]
      %s1328 = scalar_lea.vmem [#allocation5], %s1327
      %v1329 = vld [vmem:[%s1328] sm:$0x1]
      %s1330 = sadd.s32 %s1326, 1
      %s1331 = sld [smem:[#allocation9 + %s1330]]
      %s1332 = scalar_lea.vmem [#allocation5], %s1331
      %v1333 = vld [vmem:[%s1332] sm:$0x1]
      %v1334 = vadd.f32 %v1329, %v1333
      %v1335 = vmax.f32 %v1329, %v1333
      %s1336 = sadd.s32 %s1326, 2
      %s1337 = sld [smem:[#allocation9 + %s1336]]
      %s1338 = scalar_lea.vmem [#allocation5], %s1337
      %v1339 = vld [vmem:[%s1338] sm:$0x1]
      %v1340 = vadd.f32 %v1334, %v1339
      %v1341 = vmax.f32 %v1335, %v1339
      %v1342 = vmul.f32 %v1340, %v1341
      %s1343 = sadd.s32 %s1253, 5
      %s1344 = smul.u32 %s1343, 3
      %s1345 = sld [smem:[#allocation9 + %s1344]]
      %s1346 = scalar_lea.vmem [#allocation5], %s1345
      %v1347 = vld [vmem:[%s1346] sm:$0x1]
      %s1348 = sadd.s32 %s1344, 1
      %s1349 = sld [smem:[#allocation9 + %s1348]]
      %s1350 = scalar_lea.vmem [#allocation5], %s1349
      %v1351 = vld [vmem:[%s1350] sm:$0x1]
      %v1352 = vadd.f32 %v1347, %v1351
      %v1353 = vmax.f32 %v1347, %v1351
      %s1354 = sadd.s32 %s1344, 2
      %s1355 = sld [smem:[#allocation9 + %s1354]]
      %s1356 = scalar_lea.vmem [#allocation5], %s1355
      %v1357 = vld [vmem:[%s1356] sm:$0x1]
      %v1358 = vadd.f32 %v1352, %v1357
      %v1359 = vmax.f32 %v1353, %v1357
      %v1360 = vmul.f32 %v1358, %v1359
      %s1361 = sadd.s32 %s1253, 6
      %s1362 = smul.u32 %s1361, 3
      %s1363 = sld [smem:[#allocation9 + %s1362]]
      %s1364 = scalar_lea.vmem [#allocation5], %s1363
      %v1365 = vld [vmem:[%s1364] sm:$0x1]
      %s1366 = sadd.s32 %s1362, 1
      %s1367 = sld [smem:[#allocation9 + %s1366]]
      %s1368 = scalar_lea.vmem [#allocation5], %s1367
      %v1369 = vld [vmem:[%s1368] sm:$0x1]
      %v1370 = vadd.f32 %v1365, %v1369
      %v1371 = vmax.f32 %v1365, %v1369
      %s1372 = sadd.s32 %s1362, 2
      %s1373 = sld [smem:[#allocation9 + %s1372]]
      %s1374 = scalar_lea.vmem [#allocation5], %s1373
      %v1375 = vld [vmem:[%s1374] sm:$0x1]
      %v1376 = vadd.f32 %v1370, %v1375
      %v1377 = vmax.f32 %v1371, %v1375
      %v1378 = vmul.f32 %v1376, %v1377
      %s1379 = sadd.s32 %s1253, 7
      %s1380 = smul.u32 %s1379, 3
      %s1381 = sld [smem:[#allocation9 + %s1380]]
      %s1382 = scalar_lea.vmem [#allocation5], %s1381
      %v1383 = vld [vmem:[%s1382] sm:$0x1]
      %s1384 = sadd.s32 %s1380, 1
      %s1385 = sld [smem:[#allocation9 + %s1384]]
      %s1386 = scalar_lea.vmem [#allocation5], %s1385
      %v1387 = vld [vmem:[%s1386] sm:$0x1]
      %v1388 = vadd.f32 %v1383, %v1387
      %v1389 = vmax.f32 %v1383, %v1387
      %s1390 = sadd.s32 %s1380, 2
      %s1391 = sld [smem:[#allocation9 + %s1390]]
      %s1392 = scalar_lea.vmem [#allocation5], %s1391
      %v1393 = vld [vmem:[%s1392] sm:$0x1]
      %v1394 = vadd.f32 %v1388, %v1393
      %v1395 = vmax.f32 %v1389, %v1393
      %v1396 = vmul.f32 %v1394, %v1395
      %v1398 = vrot.slane %v1288, 7
      %v1401 = vrot.slane %v1306, 6
      %v1404 = vrot.slane %v1324, 5
      %v1407 = vrot.slane %v1342, 4
      %v1410 = vrot.slane %v1360, 3
      %v1413 = vrot.slane %v1378, 2
      %v1416 = vrot.slane %v1396, 1
      %vm1418 = vcmask 1040384
      %v1419 = vsel %vm1418, %v1270, %v1398
      %vm1420 = vcmask 1041408
      %v1421 = vsel %vm1420, %v1419, %v1401
      %vm1422 = vcmask 1042432
      %v1423 = vsel %vm1422, %v1421, %v1404
      %vm1424 = vcmask 1043456
      %v1425 = vsel %vm1424, %v1423, %v1407
      %vm1426 = vcmask 1044480
      %v1427 = vsel %vm1426, %v1425, %v1410
      %vm1428 = vcmask 1045504
      %v1429 = vsel %vm1428, %v1427, %v1413
      %vm1430 = vcmask 1046528
      %v1431 = vsel %vm1430, %v1429, %v1416
      %s1432 = scalar_lea.vmem [#allocation7], %s1253
      %1433 = vst [vmem:[%s1432] sm:$0xff] %v1431
    $region106: #{_mpn_forward.3} parent=1 // loop_footer
      %s1252 = sadd.s32 1, %s1248
    $region107: #{_mpn_forward.3} parent=1 // loop_footer_branch
      %1247 = sbr.rel target = $region103
    $region108: #{_mpn_forward.3} parent=1 // loop_exit
      _
    %v1434 = vld [vmem:[#allocation7] sm:$0xff]
    %v1435 = vld [vmem:[#allocation7 + $0x8] sm:$0xff]
    %v1436 = vpack.c.bf16 %v1435, %v1434
    %v1437 = vld [vmem:[#allocation21] sm:$0xf]
    %v1438 = vld [vmem:[#allocation21 + $0x4] sm:$0xf]
    %v1439 = vld [vmem:[#allocation21 + $0x8] sm:$0xf]
    %v1440 = vld [vmem:[#allocation21 + $0xc] sm:$0xf]
    %v1441 = vld [vmem:[#allocation21 + $0x10] sm:$0xf]
    %v1442 = vld [vmem:[#allocation21 + $0x14] sm:$0xf]
    %v1443 = vld [vmem:[#allocation21 + $0x18] sm:$0xf]
    %v1444 = vld [vmem:[#allocation21 + $0x1c] sm:$0xf]
    %v1445 = vld [vmem:[#allocation21 + $0x20] sm:$0xf]
    %v1446 = vld [vmem:[#allocation21 + $0x24] sm:$0xf]
    %v1447 = vld [vmem:[#allocation21 + $0x28] sm:$0xf]
    %v1448 = vld [vmem:[#allocation21 + $0x2c] sm:$0xf]
    %v1449 = vld [vmem:[#allocation21 + $0x30] sm:$0xf]
    %v1450 = vld [vmem:[#allocation21 + $0x34] sm:$0xf]
    %v1451 = vld [vmem:[#allocation21 + $0x38] sm:$0xf]
    %v1452 = vld [vmem:[#allocation21 + $0x3c] sm:$0xf]
    %v1453 = vld [vmem:[#allocation4] sm:$0xff]
    %v1454 = vld [vmem:[#allocation4 + $0x8] sm:$0xff]
    %v1455 = vpack.c.bf16 %v1454, %v1453
    %v1456 = vld [vmem:[#allocation23] sm:$0xf]
    %v1457 = vld [vmem:[#allocation23 + $0x4] sm:$0xf]
    %v1458 = vld [vmem:[#allocation23 + $0x8] sm:$0xf]
    %v1459 = vld [vmem:[#allocation23 + $0xc] sm:$0xf]
    %v1460 = vld [vmem:[#allocation23 + $0x10] sm:$0xf]
    %v1461 = vld [vmem:[#allocation23 + $0x14] sm:$0xf]
    %v1462 = vld [vmem:[#allocation23 + $0x18] sm:$0xf]
    %v1463 = vld [vmem:[#allocation23 + $0x1c] sm:$0xf]
    %v1464 = vld [vmem:[#allocation23 + $0x20] sm:$0xf]
    %v1465 = vld [vmem:[#allocation23 + $0x24] sm:$0xf]
    %v1466 = vld [vmem:[#allocation23 + $0x28] sm:$0xf]
    %v1467 = vld [vmem:[#allocation23 + $0x2c] sm:$0xf]
    %v1468 = vld [vmem:[#allocation23 + $0x30] sm:$0xf]
    %v1469 = vld [vmem:[#allocation23 + $0x34] sm:$0xf]
    %v1470 = vld [vmem:[#allocation23 + $0x38] sm:$0xf]
    %v1471 = vld [vmem:[#allocation23 + $0x3c] sm:$0xf]
    %v1488 = vunpack.c.l.b16 %v1456
    %v1489 = vunpack.c.l.b16 %v1457
    %v1490 = vunpack.c.l.b16 %v1458
    %v1491 = vunpack.c.l.b16 %v1459
    %v1492 = vunpack.c.l.b16 %v1460
    %v1493 = vunpack.c.l.b16 %v1461
    %v1494 = vunpack.c.l.b16 %v1462
    %v1495 = vunpack.c.l.b16 %v1463
    %v1496 = vunpack.c.l.b16 %v1464
    %v1497 = vunpack.c.l.b16 %v1465
    %v1498 = vunpack.c.l.b16 %v1466
    %v1499 = vunpack.c.l.b16 %v1467
    %v1500 = vunpack.c.l.b16 %v1468
    %v1501 = vunpack.c.l.b16 %v1469
    %v1502 = vunpack.c.l.b16 %v1470
    %v1503 = vunpack.c.l.b16 %v1471
    %v1504 = vpack.c.b16 %v1489, %v1488
    %v1505 = vpack.c.b16 %v1491, %v1490
    %v1506 = vpack.c.b16 %v1493, %v1492
    %v1507 = vpack.c.b16 %v1495, %v1494
    %v1508 = vpack.c.b16 %v1497, %v1496
    %v1509 = vpack.c.b16 %v1499, %v1498
    %v1510 = vpack.c.b16 %v1501, %v1500
    %v1511 = vpack.c.b16 %v1503, %v1502
    %1520 = vmatprep.subr.bf16.mxu0 0
    %1521 = vmatpush1.bf16.msra.mxu0 %v1504
    %1522 = vmatprep.subr.bf16.mxu0 0
    %1523 = vmatpush1.bf16.msra.mxu0 %v1505
    %1524 = vmatprep.subr.bf16.mxu0 0
    %1525 = vmatpush1.bf16.msra.mxu0 %v1506
    %1526 = vmatprep.subr.bf16.mxu0 0
    %1527 = vmatpush1.bf16.msra.mxu0 %v1507
    %1528 = vmatprep.subr.bf16.mxu0 0
    %1529 = vmatpush1.bf16.msra.mxu0 %v1508
    %1530 = vmatprep.subr.bf16.mxu0 0
    %1531 = vmatpush1.bf16.msra.mxu0 %v1509
    %1532 = vmatprep.subr.bf16.mxu0 0
    %1533 = vmatpush1.bf16.msra.mxu0 %v1510
    %1534 = vmatprep.subr.bf16.mxu0 0
    %1535 = vmatpush1.bf16.msra.mxu0 %v1511
    %1536 = vmatprep.subr.bf16.mxu0 0
    %1537 = vmatpush1.bf16.msra.mxu0 0
    %1538 = vmatprep.subr.bf16.mxu0 0
    %1539 = vmatpush1.bf16.msra.mxu0 0
    %1540 = vmatprep.subr.bf16.mxu0 0
    %1541 = vmatpush1.bf16.msra.mxu0 0
    %1542 = vmatprep.subr.bf16.mxu0 0
    %1543 = vmatpush1.bf16.msra.mxu0 0
    %1544 = vmatprep.subr.bf16.mxu0 0
    %1545 = vmatpush1.bf16.msra.mxu0 0
    %1546 = vmatprep.subr.bf16.mxu0 0
    %1547 = vmatpush1.bf16.msra.mxu0 0
    %1548 = vmatprep.subr.bf16.mxu0 0
    %1549 = vmatpush1.bf16.msra.mxu0 0
    %1550 = vmatprep.subr.bf16.mxu0 0
    %1551 = vmatpush1.bf16.msra.mxu0 0
    %1552 = vmatprep.mubr.bf16.mxu0 0
    %1553 = vmatmul.mubr.bf16.gmra.mrb[0].mxu0 %v1455
    %v1554 = vpop.f32.mrb[0].mxu0
    %v1555 = vadd.f32 0.0, %v1554
    %v1556 = vpop.f32.mrb[0].mxu0
    %v1557 = vpop.f32.mrb[0].mxu0
    %v1558 = vadd.f32 0.0, %v1557
    %v1559 = vpop.f32.mrb[0].mxu0
    %1560 = vdwg.mxu0
    %v1577 = vunpack.c.l.b16 %v1437
    %v1578 = vunpack.c.l.b16 %v1438
    %v1579 = vunpack.c.l.b16 %v1439
    %v1580 = vunpack.c.l.b16 %v1440
    %v1581 = vunpack.c.l.b16 %v1441
    %v1582 = vunpack.c.l.b16 %v1442
    %v1583 = vunpack.c.l.b16 %v1443
    %v1584 = vunpack.c.l.b16 %v1444
    %v1585 = vunpack.c.l.b16 %v1445
    %v1586 = vunpack.c.l.b16 %v1446
    %v1587 = vunpack.c.l.b16 %v1447
    %v1588 = vunpack.c.l.b16 %v1448
    %v1589 = vunpack.c.l.b16 %v1449
    %v1590 = vunpack.c.l.b16 %v1450
    %v1591 = vunpack.c.l.b16 %v1451
    %v1592 = vunpack.c.l.b16 %v1452
    %v1593 = vpack.c.b16 %v1578, %v1577
    %v1594 = vpack.c.b16 %v1580, %v1579
    %v1595 = vpack.c.b16 %v1582, %v1581
    %v1596 = vpack.c.b16 %v1584, %v1583
    %v1597 = vpack.c.b16 %v1586, %v1585
    %v1598 = vpack.c.b16 %v1588, %v1587
    %v1599 = vpack.c.b16 %v1590, %v1589
    %v1600 = vpack.c.b16 %v1592, %v1591
    %1609 = vmatprep.subr.bf16.mxu0 0
    %1610 = vmatpush1.bf16.msra.mxu0 %v1593
    %1611 = vmatprep.subr.bf16.mxu0 0
    %1612 = vmatpush1.bf16.msra.mxu0 %v1594
    %1613 = vmatprep.subr.bf16.mxu0 0
    %1614 = vmatpush1.bf16.msra.mxu0 %v1595
    %1615 = vmatprep.subr.bf16.mxu0 0
    %1616 = vmatpush1.bf16.msra.mxu0 %v1596
    %1617 = vmatprep.subr.bf16.mxu0 0
    %1618 = vmatpush1.bf16.msra.mxu0 %v1597
    %1619 = vmatprep.subr.bf16.mxu0 0
    %1620 = vmatpush1.bf16.msra.mxu0 %v1598
    %1621 = vmatprep.subr.bf16.mxu0 0
    %1622 = vmatpush1.bf16.msra.mxu0 %v1599
    %1623 = vmatprep.subr.bf16.mxu0 0
    %1624 = vmatpush1.bf16.msra.mxu0 %v1600
    %1625 = vmatprep.subr.bf16.mxu0 0
    %1626 = vmatpush1.bf16.msra.mxu0 0
    %1627 = vmatprep.subr.bf16.mxu0 0
    %1628 = vmatpush1.bf16.msra.mxu0 0
    %1629 = vmatprep.subr.bf16.mxu0 0
    %1630 = vmatpush1.bf16.msra.mxu0 0
    %1631 = vmatprep.subr.bf16.mxu0 0
    %1632 = vmatpush1.bf16.msra.mxu0 0
    %1633 = vmatprep.subr.bf16.mxu0 0
    %1634 = vmatpush1.bf16.msra.mxu0 0
    %1635 = vmatprep.subr.bf16.mxu0 0
    %1636 = vmatpush1.bf16.msra.mxu0 0
    %1637 = vmatprep.subr.bf16.mxu0 0
    %1638 = vmatpush1.bf16.msra.mxu0 0
    %1639 = vmatprep.subr.bf16.mxu0 0
    %1640 = vmatpush1.bf16.msra.mxu0 0
    %1641 = vmatprep.mubr.bf16.mxu0 0
    %1642 = vmatmul.mubr.bf16.gmra.mrb[0].mxu0 %v1436
    %v1643 = vpop.f32.mrb[0].mxu0
    %v1644 = vadd.f32 %v1555, %v1643
    %v1645 = vpop.f32.mrb[0].mxu0
    %v1646 = vpop.f32.mrb[0].mxu0
    %v1647 = vadd.f32 %v1558, %v1646
    %v1648 = vpop.f32.mrb[0].mxu0
    %1649 = vdwg.mxu0
    %v1650 = vld [vmem:[#allocation2] sm:$0xff]
    %v1651 = vld [vmem:[#allocation2 + $0x8] sm:$0xff]
    %v1652 = vpack.c.bf16 %v1651, %v1650
    %v1653 = vld [vmem:[#allocation24] sm:$0xf]
    %v1654 = vld [vmem:[#allocation24 + $0x4] sm:$0xf]
    %v1655 = vld [vmem:[#allocation24 + $0x8] sm:$0xf]
    %v1656 = vld [vmem:[#allocation24 + $0xc] sm:$0xf]
    %v1657 = vld [vmem:[#allocation24 + $0x10] sm:$0xf]
    %v1658 = vld [vmem:[#allocation24 + $0x14] sm:$0xf]
    %v1659 = vld [vmem:[#allocation24 + $0x18] sm:$0xf]
    %v1660 = vld [vmem:[#allocation24 + $0x1c] sm:$0xf]
    %v1661 = vld [vmem:[#allocation24 + $0x20] sm:$0xf]
    %v1662 = vld [vmem:[#allocation24 + $0x24] sm:$0xf]
    %v1663 = vld [vmem:[#allocation24 + $0x28] sm:$0xf]
    %v1664 = vld [vmem:[#allocation24 + $0x2c] sm:$0xf]
    %v1665 = vld [vmem:[#allocation24 + $0x30] sm:$0xf]
    %v1666 = vld [vmem:[#allocation24 + $0x34] sm:$0xf]
    %v1667 = vld [vmem:[#allocation24 + $0x38] sm:$0xf]
    %v1668 = vld [vmem:[#allocation24 + $0x3c] sm:$0xf]
    %v1685 = vunpack.c.l.b16 %v1653
    %v1686 = vunpack.c.l.b16 %v1654
    %v1687 = vunpack.c.l.b16 %v1655
    %v1688 = vunpack.c.l.b16 %v1656
    %v1689 = vunpack.c.l.b16 %v1657
    %v1690 = vunpack.c.l.b16 %v1658
    %v1691 = vunpack.c.l.b16 %v1659
    %v1692 = vunpack.c.l.b16 %v1660
    %v1693 = vunpack.c.l.b16 %v1661
    %v1694 = vunpack.c.l.b16 %v1662
    %v1695 = vunpack.c.l.b16 %v1663
    %v1696 = vunpack.c.l.b16 %v1664
    %v1697 = vunpack.c.l.b16 %v1665
    %v1698 = vunpack.c.l.b16 %v1666
    %v1699 = vunpack.c.l.b16 %v1667
    %v1700 = vunpack.c.l.b16 %v1668
    %v1701 = vpack.c.b16 %v1686, %v1685
    %v1702 = vpack.c.b16 %v1688, %v1687
    %v1703 = vpack.c.b16 %v1690, %v1689
    %v1704 = vpack.c.b16 %v1692, %v1691
    %v1705 = vpack.c.b16 %v1694, %v1693
    %v1706 = vpack.c.b16 %v1696, %v1695
    %v1707 = vpack.c.b16 %v1698, %v1697
    %v1708 = vpack.c.b16 %v1700, %v1699
    %1717 = vmatprep.subr.bf16.mxu0 0
    %1718 = vmatpush1.bf16.msra.mxu0 %v1701
    %1719 = vmatprep.subr.bf16.mxu0 0
    %1720 = vmatpush1.bf16.msra.mxu0 %v1702
    %1721 = vmatprep.subr.bf16.mxu0 0
    %1722 = vmatpush1.bf16.msra.mxu0 %v1703
    %1723 = vmatprep.subr.bf16.mxu0 0
    %1724 = vmatpush1.bf16.msra.mxu0 %v1704
    %1725 = vmatprep.subr.bf16.mxu0 0
    %1726 = vmatpush1.bf16.msra.mxu0 %v1705
    %1727 = vmatprep.subr.bf16.mxu0 0
    %1728 = vmatpush1.bf16.msra.mxu0 %v1706
    %1729 = vmatprep.subr.bf16.mxu0 0
    %1730 = vmatpush1.bf16.msra.mxu0 %v1707
    %1731 = vmatprep.subr.bf16.mxu0 0
    %1732 = vmatpush1.bf16.msra.mxu0 %v1708
    %1733 = vmatprep.subr.bf16.mxu0 0
    %1734 = vmatpush1.bf16.msra.mxu0 0
    %1735 = vmatprep.subr.bf16.mxu0 0
    %1736 = vmatpush1.bf16.msra.mxu0 0
    %1737 = vmatprep.subr.bf16.mxu0 0
    %1738 = vmatpush1.bf16.msra.mxu0 0
    %1739 = vmatprep.subr.bf16.mxu0 0
    %1740 = vmatpush1.bf16.msra.mxu0 0
    %1741 = vmatprep.subr.bf16.mxu0 0
    %1742 = vmatpush1.bf16.msra.mxu0 0
    %1743 = vmatprep.subr.bf16.mxu0 0
    %1744 = vmatpush1.bf16.msra.mxu0 0
    %1745 = vmatprep.subr.bf16.mxu0 0
    %1746 = vmatpush1.bf16.msra.mxu0 0
    %1747 = vmatprep.subr.bf16.mxu0 0
    %1748 = vmatpush1.bf16.msra.mxu0 0
    %1749 = vmatprep.mubr.bf16.mxu0 0
    %1750 = vmatmul.mubr.bf16.gmra.mrb[0].mxu0 %v1652
    %v1751 = vpop.f32.mrb[0].mxu0
    %v1752 = vadd.f32 0.0, %v1751
    %v1753 = vpop.f32.mrb[0].mxu0
    %v1754 = vpop.f32.mrb[0].mxu0
    %v1755 = vadd.f32 0.0, %v1754
    %v1756 = vpop.f32.mrb[0].mxu0
    %1757 = vdwg.mxu0
    %v1758 = vadd.f32 %v1644, %v1752
    %v1759 = vadd.f32 %v1647, %v1755
    %1760 = vst [vmem:[#allocation27] sm:$0xff] %v1758
    %1761 = vst [vmem:[#allocation27 + $0x8] sm:$0xff] %v1759
    %v1762 = vld [vmem:[#allocation26] sm:$0x1]
    %v1764 = vlaneseq
    %v1765 = vshrl.u32 %v1764, 7
    %v1766 = vsub.s32 0, %v1765
    %v1767 = vrot.slane %v1762, %v1766
    %v1769 = vadd.f32 %v1758, %v1767
    %v1770 = vadd.f32 %v1759, %v1767
    %v1771 = vmax.f32 %v1769, 0.0
    %v1772 = vmax.f32 %v1770, 0.0
    %1773 = vst [vmem:[#allocation28] sm:$0xff] %v1771
    %1774 = vst [vmem:[#allocation28 + $0x8] sm:$0xff] %v1772
    // Predicated region
    $region109: #{_mpn_forward.3} parent=1 // pred_check
      _
    $region110: #{_mpn_forward.3} parent=1 // pred_check_branch
      %1776 = sbr.rel (0) target = $region112
    $region111: #{_mpn_forward.3} parent=1 // pred_region
      %s1778 = ssub.s32 256, 256
      %1779 = vsyncadd [#allocation14], %s1778
      %s1780 = sshll.u32 [#allocation27], 4
      %s1781 = int_to_ptr.vmem [resolvable:$true] %s1780
      %1786 = dma.vmem_to_hbm [thread:$0]  %s1781, 256, %s12, [#allocation14], 128, 128, 8
    $region112: #{_mpn_forward.3} parent=1 // pred_fallthru
      _
    // Predicated region
    $region113: #{_mpn_forward.3} parent=1 // pred_check
      _
    $region114: #{_mpn_forward.3} parent=1 // pred_check_branch
      %1788 = sbr.rel (0) target = $region116
    $region115: #{_mpn_forward.3} parent=1 // pred_region
      %s1790 = ssub.s32 256, 256
      %1791 = vsyncadd [#allocation29], %s1790
      %s1792 = sshll.u32 [#allocation28], 4
      %s1793 = int_to_ptr.vmem [resolvable:$true] %s1792
      %1798 = dma.vmem_to_hbm [thread:$0]  %s1793, 256, %s13, [#allocation29], 128, 128, 8
    $region116: #{_mpn_forward.3} parent=1 // pred_fallthru
      _
    // Predicated region
    $region117: #{_mpn_forward.3} parent=1 // pred_check
      _
    $region118: #{_mpn_forward.3} parent=1 // pred_check_branch
      %1800 = sbr.rel (0) target = $region120
    $region119: #{_mpn_forward.3} parent=1 // pred_region
      %1801 = dma.done [#allocation14], 256
    $region120: #{_mpn_forward.3} parent=1 // pred_fallthru
      _
    // Predicated region
    $region121: #{_mpn_forward.3} parent=1 // pred_check
      _
    $region122: #{_mpn_forward.3} parent=1 // pred_check_branch
      %1803 = sbr.rel (0) target = $region124
    $region123: #{_mpn_forward.3} parent=1 // pred_region
      %1804 = dma.done [#allocation29], 256
    $region124: #{_mpn_forward.3} parent=1 // pred_fallthru
      _
    %1805 = vsyncpa [#allocation13], 1
    %1806 = vsyncpa [#allocation16], 1
    %1807 = vsyncpa [#allocation19], 1
    %1808 = vsyncpa [#allocation22], 1
    %1809 = vsyncpa [#allocation25], 1
    %1810 = vsyncpa [#allocation14], 1
    %1811 = vsyncpa [#allocation29], 1

// kernel: _mpn_forward.4
$region0: #{_mpn_forward.4}
  #allocation0 [shape = 'u32[]', space=smem, size = 0x4, offset = 0x4, fixed_abs, tag = 'smem constant byte address 0x4 - core index']
  #allocation1 [shape = 'u32[144,128]{1,0:T(1,128)}', space=vmem, size = 0x12000, scoped, tag = 'internal scratch']
  #allocation2 [shape = 'f32[40,384]{1,0:T(8,128)}', space=vmem, size = 0xf000, scoped, tag = 'scratch operand']
  #allocation3 [shape = 'f32[40,384]{1,0:T(8,128)}', space=vmem, size = 0xf000, scoped, tag = 'scratch operand']
  %s0 = inlined_call_operand.hbm [shape: bf16[40,128], index: 0, kind: input, shape index: {}]
  %s1 = inlined_call_operand.hbm [shape: bf16[40,128], index: 1, kind: input, shape index: {}]
  %s2 = inlined_call_operand.hbm [shape: f32[8,128], index: 2, kind: input, shape index: {}]
  %s3 = inlined_call_operand.hbm [shape: bf16[128,384], index: 3, kind: input, shape index: {}]
  %s4 = inlined_call_operand.hbm [shape: bf16[128,384], index: 4, kind: input, shape index: {}]
  %s5 = inlined_call_operand.hbm [shape: f32[1,384], index: 5, kind: input, shape index: {}]
  %s6 = inlined_call_operand.hbm [shape: f32[1,384], index: 6, kind: input, shape index: {}]
  %s7 = inlined_call_operand.hbm [shape: bf16[128,384], index: 7, kind: input, shape index: {}]
  %s8 = inlined_call_operand.hbm [shape: bf16[128,384], index: 8, kind: input, shape index: {}]
  %s9 = inlined_call_operand.hbm [shape: f32[1,384], index: 9, kind: input, shape index: {}]
  %s10 = inlined_call_operand.hbm [shape: f32[1,384], index: 10, kind: input, shape index: {}]
  %s11 = inlined_call_operand.hbm [shape: f32[40,128], index: 11, kind: output, shape index: {0}]
  %s12 = inlined_call_operand.hbm [shape: f32[40,128], index: 12, kind: output, shape index: {1}]
  %13 = xla_tuple %s11, %s12
  %s14 = sld [smem:[#allocation0]]
  $region106: #{_mpn_forward.4} parent=0
    _
  %s16 = ssub.s32 1, %s14
  %s17 = scalar_select 0, %s16, %s14
  $region1: #{_mpn_forward.4} parent=0
    #allocation4 [shape = 'u8[10240]{0}', space=vmem, size = 0x2800, scoped, tag = 'input window, operand 0, single buffered']
    #allocation5 [shape = 's32[1]{0}', space=sflag, size = 0x4, scoped, tag = 'scoped memory for _mpn_forward.4']
    #allocation6 [shape = 's32[1]{0}', space=sflag, size = 0x4, scoped, tag = 'scoped memory for _mpn_forward.4']
    #allocation7 [shape = 'u8[10240]{0}', space=vmem, size = 0x2800, scoped, tag = 'input window, operand 1, single buffered']
    #allocation8 [shape = 's32[1]{0}', space=sflag, size = 0x4, scoped, tag = 'scoped memory for _mpn_forward.4']
    #allocation9 [shape = 'u8[4096]{0}', space=vmem, size = 0x1000, scoped, tag = 'input window, operand 2, single buffered']
    #allocation10 [shape = 'u8[98304]{0}', space=vmem, size = 0x18000, scoped, tag = 'input window, operand 3, single buffered']
    #allocation11 [shape = 's32[1]{0}', space=sflag, size = 0x4, scoped, tag = 'scoped memory for _mpn_forward.4']
    #allocation12 [shape = 'u8[98304]{0}', space=vmem, size = 0x18000, scoped, tag = 'input window, operand 4, single buffered']
    #allocation13 [shape = 'u8[1536]{0}', space=vmem, size = 0x800, scoped, tag = 'input window, operand 5, single buffered']
    #allocation14 [shape = 's32[1]{0}', space=sflag, size = 0x4, scoped, tag = 'scoped memory for _mpn_forward.4']
    #allocation15 [shape = 'u8[1536]{0}', space=vmem, size = 0x800, scoped, tag = 'input window, operand 6, single buffered']
    #allocation16 [shape = 'u8[98304]{0}', space=vmem, size = 0x18000, scoped, tag = 'input window, operand 7, single buffered']
    #allocation17 [shape = 's32[1]{0}', space=sflag, size = 0x4, scoped, tag = 'scoped memory for _mpn_forward.4']
    #allocation18 [shape = 'u8[98304]{0}', space=vmem, size = 0x18000, scoped, tag = 'input window, operand 8, single buffered']
    #allocation19 [shape = 'u8[1536]{0}', space=vmem, size = 0x800, scoped, tag = 'input window, operand 9, single buffered']
    #allocation20 [shape = 's32[1]{0}', space=sflag, size = 0x4, scoped, tag = 'scoped memory for _mpn_forward.4']
    #allocation21 [shape = 'u8[1536]{0}', space=vmem, size = 0x800, scoped, tag = 'input window, operand 10, single buffered']
    #allocation22 [shape = 'u8[20480]{0}', space=vmem, size = 0x5000, scoped, tag = 'output window, operand 0, single buffered']
    #allocation23 [shape = 'u8[20480]{0}', space=vmem, size = 0x5000, scoped, tag = 'output window, operand 1, single buffered']
    #allocation24 [shape = 's32[1]{0}', space=sflag, size = 0x4, scoped, tag = 'scoped memory for _mpn_forward.4']
    %18 = vsyncpa [#allocation5], 0
    %19 = vsyncpa [#allocation8], 0
    %20 = vsyncpa [#allocation11], 0
    %21 = vsyncpa [#allocation14], 0
    %22 = vsyncpa [#allocation17], 0
    %23 = vsyncpa [#allocation20], 0
    %24 = vsyncpa [#allocation6], 0
    %25 = vsyncpa [#allocation24], 0
    // Predicated region
    $region2: #{_mpn_forward.4} parent=1 // pred_check
      _
    $region3: #{_mpn_forward.4} parent=1 // pred_check_branch
      %27 = sbr.rel (0) target = $region5
    $region4: #{_mpn_forward.4} parent=1 // pred_region
      %s29 = ssub.s32 320, 320
      %30 = vsyncadd [#allocation5], %s29
      %s31 = sshll.u32 [#allocation4], 4
      %s32 = int_to_ptr.vmem [resolvable:$true] %s31
      %37 = dma.hbm_to_vmem [thread:$0]  %s0, 320, %s32, [#allocation5], 64, 64, 4
    $region5: #{_mpn_forward.4} parent=1 // pred_fallthru
      _
    // Predicated region
    $region6: #{_mpn_forward.4} parent=1 // pred_check
      _
    $region7: #{_mpn_forward.4} parent=1 // pred_check_branch
      %39 = sbr.rel (0) target = $region9
    $region8: #{_mpn_forward.4} parent=1 // pred_region
      %s41 = ssub.s32 320, 320
      %42 = vsyncadd [#allocation8], %s41
      %s43 = sshll.u32 [#allocation7], 4
      %s44 = int_to_ptr.vmem [resolvable:$true] %s43
      %49 = dma.hbm_to_vmem [thread:$0]  %s1, 320, %s44, [#allocation8], 64, 64, 4
    $region9: #{_mpn_forward.4} parent=1 // pred_fallthru
      _
    // Predicated region
    $region10: #{_mpn_forward.4} parent=1 // pred_check
      _
    $region11: #{_mpn_forward.4} parent=1 // pred_check_branch
      %51 = sbr.rel (0) target = $region13
    $region12: #{_mpn_forward.4} parent=1 // pred_region
      %s53 = ssub.s32 128, 128
      %54 = vsyncadd [#allocation8], %s53
      %s56 = sshll.u32 [#allocation9], 4
      %s57 = int_to_ptr.vmem [resolvable:$true] %s56
      %59 = dma.hbm_to_vmem [thread:$0]  %s2, 128, %s57, [#allocation8]
    $region13: #{_mpn_forward.4} parent=1 // pred_fallthru
      _
    // Predicated region
    $region14: #{_mpn_forward.4} parent=1 // pred_check
      _
    $region15: #{_mpn_forward.4} parent=1 // pred_check_branch
      %61 = sbr.rel (0) target = $region17
    $region16: #{_mpn_forward.4} parent=1 // pred_region
      %s63 = ssub.s32 3072, 3072
      %64 = vsyncadd [#allocation11], %s63
      %s65 = sshll.u32 [#allocation10], 4
      %s66 = int_to_ptr.vmem [resolvable:$true] %s65
      %71 = dma.hbm_to_vmem [thread:$0]  %s3, 3072, %s66, [#allocation11], 192, 192, 12
    $region17: #{_mpn_forward.4} parent=1 // pred_fallthru
      _
    // Predicated region
    $region18: #{_mpn_forward.4} parent=1 // pred_check
      _
    $region19: #{_mpn_forward.4} parent=1 // pred_check_branch
      %73 = sbr.rel (0) target = $region21
    $region20: #{_mpn_forward.4} parent=1 // pred_region
      %s75 = ssub.s32 3072, 3072
      %76 = vsyncadd [#allocation11], %s75
      %s77 = sshll.u32 [#allocation12], 4
      %s78 = int_to_ptr.vmem [resolvable:$true] %s77
      %83 = dma.hbm_to_vmem [thread:$0]  %s4, 3072, %s78, [#allocation11], 192, 192, 12
    $region21: #{_mpn_forward.4} parent=1 // pred_fallthru
      _
    // Predicated region
    $region22: #{_mpn_forward.4} parent=1 // pred_check
      _
    $region23: #{_mpn_forward.4} parent=1 // pred_check_branch
      %85 = sbr.rel (0) target = $region25
    $region24: #{_mpn_forward.4} parent=1 // pred_region
      %s87 = ssub.s32 48, 48
      %88 = vsyncadd [#allocation14], %s87
      %s90 = sshll.u32 [#allocation13], 4
      %s91 = int_to_ptr.vmem [resolvable:$true] %s90
      %93 = dma.hbm_to_vmem [thread:$0]  %s5, 48, %s91, [#allocation14]
    $region25: #{_mpn_forward.4} parent=1 // pred_fallthru
      _
    // Predicated region
    $region26: #{_mpn_forward.4} parent=1 // pred_check
      _
    $region27: #{_mpn_forward.4} parent=1 // pred_check_branch
      %95 = sbr.rel (0) target = $region29
    $region28: #{_mpn_forward.4} parent=1 // pred_region
      %s97 = ssub.s32 48, 48
      %98 = vsyncadd [#allocation14], %s97
      %s100 = sshll.u32 [#allocation15], 4
      %s101 = int_to_ptr.vmem [resolvable:$true] %s100
      %103 = dma.hbm_to_vmem [thread:$0]  %s6, 48, %s101, [#allocation14]
    $region29: #{_mpn_forward.4} parent=1 // pred_fallthru
      _
    // Predicated region
    $region30: #{_mpn_forward.4} parent=1 // pred_check
      _
    $region31: #{_mpn_forward.4} parent=1 // pred_check_branch
      %105 = sbr.rel (0) target = $region33
    $region32: #{_mpn_forward.4} parent=1 // pred_region
      %s107 = ssub.s32 3072, 3072
      %108 = vsyncadd [#allocation17], %s107
      %s109 = sshll.u32 [#allocation16], 4
      %s110 = int_to_ptr.vmem [resolvable:$true] %s109
      %115 = dma.hbm_to_vmem [thread:$0]  %s7, 3072, %s110, [#allocation17], 192, 192, 12
    $region33: #{_mpn_forward.4} parent=1 // pred_fallthru
      _
    // Predicated region
    $region34: #{_mpn_forward.4} parent=1 // pred_check
      _
    $region35: #{_mpn_forward.4} parent=1 // pred_check_branch
      %117 = sbr.rel (0) target = $region37
    $region36: #{_mpn_forward.4} parent=1 // pred_region
      %s119 = ssub.s32 3072, 3072
      %120 = vsyncadd [#allocation17], %s119
      %s121 = sshll.u32 [#allocation18], 4
      %s122 = int_to_ptr.vmem [resolvable:$true] %s121
      %127 = dma.hbm_to_vmem [thread:$0]  %s8, 3072, %s122, [#allocation17], 192, 192, 12
    $region37: #{_mpn_forward.4} parent=1 // pred_fallthru
      _
    // Predicated region
    $region38: #{_mpn_forward.4} parent=1 // pred_check
      _
    $region39: #{_mpn_forward.4} parent=1 // pred_check_branch
      %129 = sbr.rel (0) target = $region41
    $region40: #{_mpn_forward.4} parent=1 // pred_region
      %s131 = ssub.s32 48, 48
      %132 = vsyncadd [#allocation20], %s131
      %s134 = sshll.u32 [#allocation19], 4
      %s135 = int_to_ptr.vmem [resolvable:$true] %s134
      %137 = dma.hbm_to_vmem [thread:$0]  %s9, 48, %s135, [#allocation20]
    $region41: #{_mpn_forward.4} parent=1 // pred_fallthru
      _
    // Predicated region
    $region42: #{_mpn_forward.4} parent=1 // pred_check
      _
    $region43: #{_mpn_forward.4} parent=1 // pred_check_branch
      %139 = sbr.rel (0) target = $region45
    $region44: #{_mpn_forward.4} parent=1 // pred_region
      %s141 = ssub.s32 48, 48
      %142 = vsyncadd [#allocation20], %s141
      %s144 = sshll.u32 [#allocation21], 4
      %s145 = int_to_ptr.vmem [resolvable:$true] %s144
      %147 = dma.hbm_to_vmem [thread:$0]  %s10, 48, %s145, [#allocation20]
    $region45: #{_mpn_forward.4} parent=1 // pred_fallthru
      _
    // Predicated region
    $region46: #{_mpn_forward.4} parent=1 // pred_check
      _
    $region47: #{_mpn_forward.4} parent=1 // pred_check_branch
      %149 = sbr.rel (0) target = $region49
    $region48: #{_mpn_forward.4} parent=1 // pred_region
      %150 = dma.done [#allocation5], 320
    $region49: #{_mpn_forward.4} parent=1 // pred_fallthru
      _
    // Predicated region
    $region50: #{_mpn_forward.4} parent=1 // pred_check
      _
    $region51: #{_mpn_forward.4} parent=1 // pred_check_branch
      %152 = sbr.rel (0) target = $region53
    $region52: #{_mpn_forward.4} parent=1 // pred_region
      %153 = dma.done [#allocation8], 320
    $region53: #{_mpn_forward.4} parent=1 // pred_fallthru
      _
    // Predicated region
    $region54: #{_mpn_forward.4} parent=1 // pred_check
      _
    $region55: #{_mpn_forward.4} parent=1 // pred_check_branch
      %155 = sbr.rel (0) target = $region57
    $region56: #{_mpn_forward.4} parent=1 // pred_region
      %156 = dma.done [#allocation8], 128
    $region57: #{_mpn_forward.4} parent=1 // pred_fallthru
      _
    // Predicated region
    $region58: #{_mpn_forward.4} parent=1 // pred_check
      _
    $region59: #{_mpn_forward.4} parent=1 // pred_check_branch
      %158 = sbr.rel (0) target = $region61
    $region60: #{_mpn_forward.4} parent=1 // pred_region
      %159 = dma.done [#allocation11], 3072
    $region61: #{_mpn_forward.4} parent=1 // pred_fallthru
      _
    // Predicated region
    $region62: #{_mpn_forward.4} parent=1 // pred_check
      _
    $region63: #{_mpn_forward.4} parent=1 // pred_check_branch
      %161 = sbr.rel (0) target = $region65
    $region64: #{_mpn_forward.4} parent=1 // pred_region
      %162 = dma.done [#allocation11], 3072
    $region65: #{_mpn_forward.4} parent=1 // pred_fallthru
      _
    // Predicated region
    $region66: #{_mpn_forward.4} parent=1 // pred_check
      _
    $region67: #{_mpn_forward.4} parent=1 // pred_check_branch
      %164 = sbr.rel (0) target = $region69
    $region68: #{_mpn_forward.4} parent=1 // pred_region
      %165 = dma.done [#allocation14], 48
    $region69: #{_mpn_forward.4} parent=1 // pred_fallthru
      _
    // Predicated region
    $region70: #{_mpn_forward.4} parent=1 // pred_check
      _
    $region71: #{_mpn_forward.4} parent=1 // pred_check_branch
      %167 = sbr.rel (0) target = $region73
    $region72: #{_mpn_forward.4} parent=1 // pred_region
      %168 = dma.done [#allocation14], 48
    $region73: #{_mpn_forward.4} parent=1 // pred_fallthru
      _
    // Predicated region
    $region74: #{_mpn_forward.4} parent=1 // pred_check
      _
    $region75: #{_mpn_forward.4} parent=1 // pred_check_branch
      %170 = sbr.rel (0) target = $region77
    $region76: #{_mpn_forward.4} parent=1 // pred_region
      %171 = dma.done [#allocation17], 3072
    $region77: #{_mpn_forward.4} parent=1 // pred_fallthru
      _
    // Predicated region
    $region78: #{_mpn_forward.4} parent=1 // pred_check
      _
    $region79: #{_mpn_forward.4} parent=1 // pred_check_branch
      %173 = sbr.rel (0) target = $region81
    $region80: #{_mpn_forward.4} parent=1 // pred_region
      %174 = dma.done [#allocation17], 3072
    $region81: #{_mpn_forward.4} parent=1 // pred_fallthru
      _
    // Predicated region
    $region82: #{_mpn_forward.4} parent=1 // pred_check
      _
    $region83: #{_mpn_forward.4} parent=1 // pred_check_branch
      %176 = sbr.rel (0) target = $region85
    $region84: #{_mpn_forward.4} parent=1 // pred_region
      %177 = dma.done [#allocation20], 48
    $region85: #{_mpn_forward.4} parent=1 // pred_fallthru
      _
    // Predicated region
    $region86: #{_mpn_forward.4} parent=1 // pred_check
      _
    $region87: #{_mpn_forward.4} parent=1 // pred_check_branch
      %179 = sbr.rel (0) target = $region89
    $region88: #{_mpn_forward.4} parent=1 // pred_region
      %180 = dma.done [#allocation20], 48
    $region89: #{_mpn_forward.4} parent=1 // pred_fallthru
      _
    %v182 = vld [vmem:[#allocation4] sm:$0xf]
    %v183 = vld [vmem:[#allocation4 + $0x4] sm:$0xf]
    %v184 = vld [vmem:[#allocation4 + $0x8] sm:$0xf]
    %v185 = vld [vmem:[#allocation4 + $0xc] sm:$0xf]
    %v186 = vld [vmem:[#allocation4 + $0x10] sm:$0xf]
    %v187 = vld [vmem:[#allocation10] sm:$0xff]
    %v188 = vld [vmem:[#allocation10 + $0x8] sm:$0xf]
    %v189 = vld [vmem:[#allocation10 + $0xc] sm:$0xff]
    %v190 = vld [vmem:[#allocation10 + $0x14] sm:$0xf]
    %v191 = vld [vmem:[#allocation10 + $0x18] sm:$0xff]
    %v192 = vld [vmem:[#allocation10 + $0x20] sm:$0xf]
    %v193 = vld [vmem:[#allocation10 + $0x24] sm:$0xff]
    %v194 = vld [vmem:[#allocation10 + $0x2c] sm:$0xf]
    %v195 = vld [vmem:[#allocation10 + $0x30] sm:$0xff]
    %v196 = vld [vmem:[#allocation10 + $0x38] sm:$0xf]
    %v197 = vld [vmem:[#allocation10 + $0x3c] sm:$0xff]
    %v198 = vld [vmem:[#allocation10 + $0x44] sm:$0xf]
    %v199 = vld [vmem:[#allocation10 + $0x48] sm:$0xff]
    %v200 = vld [vmem:[#allocation10 + $0x50] sm:$0xf]
    %v201 = vld [vmem:[#allocation10 + $0x54] sm:$0xff]
    %v202 = vld [vmem:[#allocation10 + $0x5c] sm:$0xf]
    %v203 = vld [vmem:[#allocation10 + $0x60] sm:$0xff]
    %v204 = vld [vmem:[#allocation10 + $0x68] sm:$0xf]
    %v205 = vld [vmem:[#allocation10 + $0x6c] sm:$0xff]
    %v206 = vld [vmem:[#allocation10 + $0x74] sm:$0xf]
    %v207 = vld [vmem:[#allocation10 + $0x78] sm:$0xff]
    %v208 = vld [vmem:[#allocation10 + $0x80] sm:$0xf]
    %v209 = vld [vmem:[#allocation10 + $0x84] sm:$0xff]
    %v210 = vld [vmem:[#allocation10 + $0x8c] sm:$0xf]
    %v211 = vld [vmem:[#allocation10 + $0x90] sm:$0xff]
    %v212 = vld [vmem:[#allocation10 + $0x98] sm:$0xf]
    %v213 = vld [vmem:[#allocation10 + $0x9c] sm:$0xff]
    %v214 = vld [vmem:[#allocation10 + $0xa4] sm:$0xf]
    %v215 = vld [vmem:[#allocation10 + $0xa8] sm:$0xff]
    %v216 = vld [vmem:[#allocation10 + $0xb0] sm:$0xf]
    %v217 = vld [vmem:[#allocation10 + $0xb4] sm:$0xff]
    %v218 = vld [vmem:[#allocation10 + $0xbc] sm:$0xf]
    %v219 = vld [vmem:[#allocation13] sm:$0x7]
    %v221 = vlaneseq
    %v222 = vshrl.u32 %v221, 7
    %v223 = vsub.s32 0, %v222
    %v224 = vrot.slane %v219, %v223
    %v225 = vlaneseq
    %v226 = vshrl.u32 %v225, 7
    %v227 = vsub.s32 1, %v226
    %v228 = vrot.slane %v219, %v227
    %v229 = vlaneseq
    %v230 = vshrl.u32 %v229, 7
    %v231 = vsub.s32 2, %v230
    %v232 = vrot.slane %v219, %v231
    %v241 = vunpack.c.l.b16 %v182
    %v242 = vunpack.c.l.b16 %v183
    %v243 = vunpack.c.l.b16 %v184
    %v244 = vunpack.c.l.b16 %v185
    %v245 = vunpack.c.l.b16 %v186
    %v246 = vpack.c.b16 %v242, %v241
    %v247 = vpack.c.b16 %v244, %v243
    %v248 = vpack.c.b16 %v245, %v245
    %v284 = vunpack.c.l.b16 %v187
    %v285 = vunpack.c.h.b16 %v187
    %v286 = vunpack.c.l.b16 %v188
    %v287 = vunpack.c.l.b16 %v189
    %v288 = vunpack.c.h.b16 %v189
    %v289 = vunpack.c.l.b16 %v190
    %v290 = vunpack.c.l.b16 %v191
    %v291 = vunpack.c.h.b16 %v191
    %v292 = vunpack.c.l.b16 %v192
    %v293 = vunpack.c.l.b16 %v193
    %v294 = vunpack.c.h.b16 %v193
    %v295 = vunpack.c.l.b16 %v194
    %v296 = vunpack.c.l.b16 %v195
    %v297 = vunpack.c.h.b16 %v195
    %v298 = vunpack.c.l.b16 %v196
    %v299 = vunpack.c.l.b16 %v197
    %v300 = vunpack.c.h.b16 %v197
    %v301 = vunpack.c.l.b16 %v198
    %v302 = vunpack.c.l.b16 %v199
    %v303 = vunpack.c.h.b16 %v199
    %v304 = vunpack.c.l.b16 %v200
    %v305 = vunpack.c.l.b16 %v201
    %v306 = vunpack.c.h.b16 %v201
    %v307 = vunpack.c.l.b16 %v202
    %v308 = vunpack.c.l.b16 %v203
    %v309 = vunpack.c.h.b16 %v203
    %v310 = vunpack.c.l.b16 %v204
    %v311 = vunpack.c.l.b16 %v205
    %v312 = vunpack.c.h.b16 %v205
    %v313 = vunpack.c.l.b16 %v206
    %v314 = vunpack.c.l.b16 %v207
    %v315 = vunpack.c.h.b16 %v207
    %v316 = vunpack.c.l.b16 %v208
    %v317 = vunpack.c.l.b16 %v209
    %v318 = vunpack.c.h.b16 %v209
    %v319 = vunpack.c.l.b16 %v210
    %v320 = vunpack.c.l.b16 %v211
    %v321 = vunpack.c.h.b16 %v211
    %v322 = vunpack.c.l.b16 %v212
    %v323 = vunpack.c.l.b16 %v213
    %v324 = vunpack.c.h.b16 %v213
    %v325 = vunpack.c.l.b16 %v214
    %v326 = vunpack.c.l.b16 %v215
    %v327 = vunpack.c.h.b16 %v215
    %v328 = vunpack.c.l.b16 %v216
    %v329 = vunpack.c.l.b16 %v217
    %v330 = vunpack.c.h.b16 %v217
    %v331 = vunpack.c.l.b16 %v218
    %v332 = vpack.c.b16 %v287, %v284
    %v333 = vpack.c.b16 %v288, %v285
    %v334 = vpack.c.b16 %v289, %v286
    %v335 = vpack.c.b16 %v293, %v290
    %v336 = vpack.c.b16 %v294, %v291
    %v337 = vpack.c.b16 %v295, %v292
    %v338 = vpack.c.b16 %v299, %v296
    %v339 = vpack.c.b16 %v300, %v297
    %v340 = vpack.c.b16 %v301, %v298
    %v341 = vpack.c.b16 %v305, %v302
    %v342 = vpack.c.b16 %v306, %v303
    %v343 = vpack.c.b16 %v307, %v304
    %v344 = vpack.c.b16 %v311, %v308
    %v345 = vpack.c.b16 %v312, %v309
    %v346 = vpack.c.b16 %v313, %v310
    %v347 = vpack.c.b16 %v317, %v314
    %v348 = vpack.c.b16 %v318, %v315
    %v349 = vpack.c.b16 %v319, %v316
    %v350 = vpack.c.b16 %v323, %v320
    %v351 = vpack.c.b16 %v324, %v321
    %v352 = vpack.c.b16 %v325, %v322
    %v353 = vpack.c.b16 %v329, %v326
    %v354 = vpack.c.b16 %v330, %v327
    %v355 = vpack.c.b16 %v331, %v328
    %380 = vmatprep.subr.bf16.mxu0 %v333
    %381 = vmatpush1.bf16.msra.mxu0 %v332
    %382 = vmatprep.subr.bf16.mxu0 %v336
    %383 = vmatpush1.bf16.msra.mxu0 %v335
    %384 = vmatprep.subr.bf16.mxu0 %v339
    %385 = vmatpush1.bf16.msra.mxu0 %v338
    %386 = vmatprep.subr.bf16.mxu0 %v342
    %387 = vmatpush1.bf16.msra.mxu0 %v341
    %388 = vmatprep.subr.bf16.mxu0 %v345
    %389 = vmatpush1.bf16.msra.mxu0 %v344
    %390 = vmatprep.subr.bf16.mxu0 %v348
    %391 = vmatpush1.bf16.msra.mxu0 %v347
    %392 = vmatprep.subr.bf16.mxu0 %v351
    %393 = vmatpush1.bf16.msra.mxu0 %v350
    %394 = vmatprep.subr.bf16.mxu0 %v354
    %395 = vmatpush1.bf16.msra.mxu0 %v353
    %396 = vmatprep.subr.bf16.mxu0 0
    %397 = vmatpush1.bf16.msra.mxu0 0
    %398 = vmatprep.subr.bf16.mxu0 0
    %399 = vmatpush1.bf16.msra.mxu0 0
    %400 = vmatprep.subr.bf16.mxu0 0
    %401 = vmatpush1.bf16.msra.mxu0 0
    %402 = vmatprep.subr.bf16.mxu0 0
    %403 = vmatpush1.bf16.msra.mxu0 0
    %404 = vmatprep.subr.bf16.mxu0 0
    %405 = vmatpush1.bf16.msra.mxu0 0
    %406 = vmatprep.subr.bf16.mxu0 0
    %407 = vmatpush1.bf16.msra.mxu0 0
    %408 = vmatprep.subr.bf16.mxu0 0
    %409 = vmatpush1.bf16.msra.mxu0 0
    %410 = vmatprep.subr.bf16.mxu0 0
    %411 = vmatpush1.bf16.msra.mxu0 0
    %412 = vmatprep.mubr.bf16.mxu0 0
    %413 = vmatmul.mubr.bf16.gmra.mrb[0].mxu0 %v246
    %v414 = vpop.f32.mrb[0].mxu0
    %v415 = vadd.f32 %v224, %v414
    %v416 = vpop.f32.mrb[0].mxu0
    %v417 = vadd.f32 %v228, %v416
    %v418 = vpop.f32.mrb[0].mxu0
    %v419 = vadd.f32 %v224, %v418
    %v420 = vpop.f32.mrb[0].mxu0
    %v421 = vadd.f32 %v228, %v420
    %422 = vmatprep.mubr.bf16.mxu0 0
    %423 = vmatmul.mubr.bf16.gmra.mrb[0].mxu0 %v247
    %v424 = vpop.f32.mrb[0].mxu0
    %v425 = vadd.f32 %v224, %v424
    %v426 = vpop.f32.mrb[0].mxu0
    %v427 = vadd.f32 %v228, %v426
    %v428 = vpop.f32.mrb[0].mxu0
    %v429 = vadd.f32 %v224, %v428
    %v430 = vpop.f32.mrb[0].mxu0
    %v431 = vadd.f32 %v228, %v430
    %432 = vmatprep.mubr.bf16.mxu0 0
    %433 = vmatmul.mubr.bf16.gmra.mrb[0].mxu0 %v248
    %v434 = vpop.f32.mrb[0].mxu0
    %v435 = vadd.f32 %v224, %v434
    %v436 = vpop.f32.mrb[0].mxu0
    %v437 = vadd.f32 %v228, %v436
    %v438 = vpop.f32.mrb[0].mxu0
    %v439 = vpop.f32.mrb[0].mxu0
    %440 = vdwg.mxu0
    %441 = vmatprep.subr.bf16.mxu0 0
    %442 = vmatpush1.bf16.msra.mxu0 %v334
    %443 = vmatprep.subr.bf16.mxu0 0
    %444 = vmatpush1.bf16.msra.mxu0 %v337
    %445 = vmatprep.subr.bf16.mxu0 0
    %446 = vmatpush1.bf16.msra.mxu0 %v340
    %447 = vmatprep.subr.bf16.mxu0 0
    %448 = vmatpush1.bf16.msra.mxu0 %v343
    %449 = vmatprep.subr.bf16.mxu0 0
    %450 = vmatpush1.bf16.msra.mxu0 %v346
    %451 = vmatprep.subr.bf16.mxu0 0
    %452 = vmatpush1.bf16.msra.mxu0 %v349
    %453 = vmatprep.subr.bf16.mxu0 0
    %454 = vmatpush1.bf16.msra.mxu0 %v352
    %455 = vmatprep.subr.bf16.mxu0 0
    %456 = vmatpush1.bf16.msra.mxu0 %v355
    %457 = vmatprep.subr.bf16.mxu0 0
    %458 = vmatpush1.bf16.msra.mxu0 0
    %459 = vmatprep.subr.bf16.mxu0 0
    %460 = vmatpush1.bf16.msra.mxu0 0
    %461 = vmatprep.subr.bf16.mxu0 0
    %462 = vmatpush1.bf16.msra.mxu0 0
    %463 = vmatprep.subr.bf16.mxu0 0
    %464 = vmatpush1.bf16.msra.mxu0 0
    %465 = vmatprep.subr.bf16.mxu0 0
    %466 = vmatpush1.bf16.msra.mxu0 0
    %467 = vmatprep.subr.bf16.mxu0 0
    %468 = vmatpush1.bf16.msra.mxu0 0
    %469 = vmatprep.subr.bf16.mxu0 0
    %470 = vmatpush1.bf16.msra.mxu0 0
    %471 = vmatprep.subr.bf16.mxu0 0
    %472 = vmatpush1.bf16.msra.mxu0 0
    %473 = vmatprep.mubr.bf16.mxu0 0
    %474 = vmatmul.mubr.bf16.gmra.mrb[0].mxu0 %v246
    %v475 = vpop.f32.mrb[0].mxu0
    %v476 = vadd.f32 %v232, %v475
    %v477 = vpop.f32.mrb[0].mxu0
    %v478 = vpop.f32.mrb[0].mxu0
    %v479 = vadd.f32 %v232, %v478
    %v480 = vpop.f32.mrb[0].mxu0
    %481 = vmatprep.mubr.bf16.mxu0 0
    %482 = vmatmul.mubr.bf16.gmra.mrb[0].mxu0 %v247
    %v483 = vpop.f32.mrb[0].mxu0
    %v484 = vadd.f32 %v232, %v483
    %v485 = vpop.f32.mrb[0].mxu0
    %v486 = vpop.f32.mrb[0].mxu0
    %v487 = vadd.f32 %v232, %v486
    %v488 = vpop.f32.mrb[0].mxu0
    %489 = vmatprep.mubr.bf16.mxu0 0
    %490 = vmatmul.mubr.bf16.gmra.mrb[0].mxu0 %v248
    %v491 = vpop.f32.mrb[0].mxu0
    %v492 = vadd.f32 %v232, %v491
    %v493 = vpop.f32.mrb[0].mxu0
    %v494 = vpop.f32.mrb[0].mxu0
    %v495 = vpop.f32.mrb[0].mxu0
    %496 = vdwg.mxu0
    %497 = vst [vmem:[#allocation2] sm:$0xff] %v415
    %498 = vst [vmem:[#allocation2 + $0x8] sm:$0xff] %v417
    %499 = vst [vmem:[#allocation2 + $0x10] sm:$0xff] %v476
    %500 = vst [vmem:[#allocation2 + $0x18] sm:$0xff] %v419
    %501 = vst [vmem:[#allocation2 + $0x20] sm:$0xff] %v421
    %502 = vst [vmem:[#allocation2 + $0x28] sm:$0xff] %v479
    %503 = vst [vmem:[#allocation2 + $0x30] sm:$0xff] %v425
    %504 = vst [vmem:[#allocation2 + $0x38] sm:$0xff] %v427
    %505 = vst [vmem:[#allocation2 + $0x40] sm:$0xff] %v484
    %506 = vst [vmem:[#allocation2 + $0x48] sm:$0xff] %v429
    %507 = vst [vmem:[#allocation2 + $0x50] sm:$0xff] %v431
    %508 = vst [vmem:[#allocation2 + $0x58] sm:$0xff] %v487
    %509 = vst [vmem:[#allocation2 + $0x60] sm:$0xff] %v435
    %510 = vst [vmem:[#allocation2 + $0x68] sm:$0xff] %v437
    %511 = vst [vmem:[#allocation2 + $0x70] sm:$0xff] %v492
    %v512 = vld [vmem:[#allocation7] sm:$0xf]
    %v513 = vld [vmem:[#allocation7 + $0x4] sm:$0xf]
    %v514 = vld [vmem:[#allocation7 + $0x8] sm:$0xf]
    %v515 = vld [vmem:[#allocation7 + $0xc] sm:$0xf]
    %v516 = vld [vmem:[#allocation7 + $0x10] sm:$0xf]
    %v517 = vld [vmem:[#allocation12] sm:$0xff]
    %v518 = vld [vmem:[#allocation12 + $0x8] sm:$0xf]
    %v519 = vld [vmem:[#allocation12 + $0xc] sm:$0xff]
    %v520 = vld [vmem:[#allocation12 + $0x14] sm:$0xf]
    %v521 = vld [vmem:[#allocation12 + $0x18] sm:$0xff]
    %v522 = vld [vmem:[#allocation12 + $0x20] sm:$0xf]
    %v523 = vld [vmem:[#allocation12 + $0x24] sm:$0xff]
    %v524 = vld [vmem:[#allocation12 + $0x2c] sm:$0xf]
    %v525 = vld [vmem:[#allocation12 + $0x30] sm:$0xff]
    %v526 = vld [vmem:[#allocation12 + $0x38] sm:$0xf]
    %v527 = vld [vmem:[#allocation12 + $0x3c] sm:$0xff]
    %v528 = vld [vmem:[#allocation12 + $0x44] sm:$0xf]
    %v529 = vld [vmem:[#allocation12 + $0x48] sm:$0xff]
    %v530 = vld [vmem:[#allocation12 + $0x50] sm:$0xf]
    %v531 = vld [vmem:[#allocation12 + $0x54] sm:$0xff]
    %v532 = vld [vmem:[#allocation12 + $0x5c] sm:$0xf]
    %v533 = vld [vmem:[#allocation12 + $0x60] sm:$0xff]
    %v534 = vld [vmem:[#allocation12 + $0x68] sm:$0xf]
    %v535 = vld [vmem:[#allocation12 + $0x6c] sm:$0xff]
    %v536 = vld [vmem:[#allocation12 + $0x74] sm:$0xf]
    %v537 = vld [vmem:[#allocation12 + $0x78] sm:$0xff]
    %v538 = vld [vmem:[#allocation12 + $0x80] sm:$0xf]
    %v539 = vld [vmem:[#allocation12 + $0x84] sm:$0xff]
    %v540 = vld [vmem:[#allocation12 + $0x8c] sm:$0xf]
    %v541 = vld [vmem:[#allocation12 + $0x90] sm:$0xff]
    %v542 = vld [vmem:[#allocation12 + $0x98] sm:$0xf]
    %v543 = vld [vmem:[#allocation12 + $0x9c] sm:$0xff]
    %v544 = vld [vmem:[#allocation12 + $0xa4] sm:$0xf]
    %v545 = vld [vmem:[#allocation12 + $0xa8] sm:$0xff]
    %v546 = vld [vmem:[#allocation12 + $0xb0] sm:$0xf]
    %v547 = vld [vmem:[#allocation12 + $0xb4] sm:$0xff]
    %v548 = vld [vmem:[#allocation12 + $0xbc] sm:$0xf]
    %v549 = vld [vmem:[#allocation15] sm:$0x7]
    %v551 = vlaneseq
    %v552 = vshrl.u32 %v551, 7
    %v553 = vsub.s32 0, %v552
    %v554 = vrot.slane %v549, %v553
    %v555 = vlaneseq
    %v556 = vshrl.u32 %v555, 7
    %v557 = vsub.s32 1, %v556
    %v558 = vrot.slane %v549, %v557
    %v559 = vlaneseq
    %v560 = vshrl.u32 %v559, 7
    %v561 = vsub.s32 2, %v560
    %v562 = vrot.slane %v549, %v561
    %v571 = vunpack.c.l.b16 %v512
    %v572 = vunpack.c.l.b16 %v513
    %v573 = vunpack.c.l.b16 %v514
    %v574 = vunpack.c.l.b16 %v515
    %v575 = vunpack.c.l.b16 %v516
    %v576 = vpack.c.b16 %v572, %v571
    %v577 = vpack.c.b16 %v574, %v573
    %v578 = vpack.c.b16 %v575, %v575
    %v614 = vunpack.c.l.b16 %v517
    %v615 = vunpack.c.h.b16 %v517
    %v616 = vunpack.c.l.b16 %v518
    %v617 = vunpack.c.l.b16 %v519
    %v618 = vunpack.c.h.b16 %v519
    %v619 = vunpack.c.l.b16 %v520
    %v620 = vunpack.c.l.b16 %v521
    %v621 = vunpack.c.h.b16 %v521
    %v622 = vunpack.c.l.b16 %v522
    %v623 = vunpack.c.l.b16 %v523
    %v624 = vunpack.c.h.b16 %v523
    %v625 = vunpack.c.l.b16 %v524
    %v626 = vunpack.c.l.b16 %v525
    %v627 = vunpack.c.h.b16 %v525
    %v628 = vunpack.c.l.b16 %v526
    %v629 = vunpack.c.l.b16 %v527
    %v630 = vunpack.c.h.b16 %v527
    %v631 = vunpack.c.l.b16 %v528
    %v632 = vunpack.c.l.b16 %v529
    %v633 = vunpack.c.h.b16 %v529
    %v634 = vunpack.c.l.b16 %v530
    %v635 = vunpack.c.l.b16 %v531
    %v636 = vunpack.c.h.b16 %v531
    %v637 = vunpack.c.l.b16 %v532
    %v638 = vunpack.c.l.b16 %v533
    %v639 = vunpack.c.h.b16 %v533
    %v640 = vunpack.c.l.b16 %v534
    %v641 = vunpack.c.l.b16 %v535
    %v642 = vunpack.c.h.b16 %v535
    %v643 = vunpack.c.l.b16 %v536
    %v644 = vunpack.c.l.b16 %v537
    %v645 = vunpack.c.h.b16 %v537
    %v646 = vunpack.c.l.b16 %v538
    %v647 = vunpack.c.l.b16 %v539
    %v648 = vunpack.c.h.b16 %v539
    %v649 = vunpack.c.l.b16 %v540
    %v650 = vunpack.c.l.b16 %v541
    %v651 = vunpack.c.h.b16 %v541
    %v652 = vunpack.c.l.b16 %v542
    %v653 = vunpack.c.l.b16 %v543
    %v654 = vunpack.c.h.b16 %v543
    %v655 = vunpack.c.l.b16 %v544
    %v656 = vunpack.c.l.b16 %v545
    %v657 = vunpack.c.h.b16 %v545
    %v658 = vunpack.c.l.b16 %v546
    %v659 = vunpack.c.l.b16 %v547
    %v660 = vunpack.c.h.b16 %v547
    %v661 = vunpack.c.l.b16 %v548
    %v662 = vpack.c.b16 %v617, %v614
    %v663 = vpack.c.b16 %v618, %v615
    %v664 = vpack.c.b16 %v619, %v616
    %v665 = vpack.c.b16 %v623, %v620
    %v666 = vpack.c.b16 %v624, %v621
    %v667 = vpack.c.b16 %v625, %v622
    %v668 = vpack.c.b16 %v629, %v626
    %v669 = vpack.c.b16 %v630, %v627
    %v670 = vpack.c.b16 %v631, %v628
    %v671 = vpack.c.b16 %v635, %v632
    %v672 = vpack.c.b16 %v636, %v633
    %v673 = vpack.c.b16 %v637, %v634
    %v674 = vpack.c.b16 %v641, %v638
    %v675 = vpack.c.b16 %v642, %v639
    %v676 = vpack.c.b16 %v643, %v640
    %v677 = vpack.c.b16 %v647, %v644
    %v678 = vpack.c.b16 %v648, %v645
    %v679 = vpack.c.b16 %v649, %v646
    %v680 = vpack.c.b16 %v653, %v650
    %v681 = vpack.c.b16 %v654, %v651
    %v682 = vpack.c.b16 %v655, %v652
    %v683 = vpack.c.b16 %v659, %v656
    %v684 = vpack.c.b16 %v660, %v657
    %v685 = vpack.c.b16 %v661, %v658
    %710 = vmatprep.subr.bf16.mxu0 %v663
    %711 = vmatpush1.bf16.msra.mxu0 %v662
    %712 = vmatprep.subr.bf16.mxu0 %v666
    %713 = vmatpush1.bf16.msra.mxu0 %v665
    %714 = vmatprep.subr.bf16.mxu0 %v669
    %715 = vmatpush1.bf16.msra.mxu0 %v668
    %716 = vmatprep.subr.bf16.mxu0 %v672
    %717 = vmatpush1.bf16.msra.mxu0 %v671
    %718 = vmatprep.subr.bf16.mxu0 %v675
    %719 = vmatpush1.bf16.msra.mxu0 %v674
    %720 = vmatprep.subr.bf16.mxu0 %v678
    %721 = vmatpush1.bf16.msra.mxu0 %v677
    %722 = vmatprep.subr.bf16.mxu0 %v681
    %723 = vmatpush1.bf16.msra.mxu0 %v680
    %724 = vmatprep.subr.bf16.mxu0 %v684
    %725 = vmatpush1.bf16.msra.mxu0 %v683
    %726 = vmatprep.subr.bf16.mxu0 0
    %727 = vmatpush1.bf16.msra.mxu0 0
    %728 = vmatprep.subr.bf16.mxu0 0
    %729 = vmatpush1.bf16.msra.mxu0 0
    %730 = vmatprep.subr.bf16.mxu0 0
    %731 = vmatpush1.bf16.msra.mxu0 0
    %732 = vmatprep.subr.bf16.mxu0 0
    %733 = vmatpush1.bf16.msra.mxu0 0
    %734 = vmatprep.subr.bf16.mxu0 0
    %735 = vmatpush1.bf16.msra.mxu0 0
    %736 = vmatprep.subr.bf16.mxu0 0
    %737 = vmatpush1.bf16.msra.mxu0 0
    %738 = vmatprep.subr.bf16.mxu0 0
    %739 = vmatpush1.bf16.msra.mxu0 0
    %740 = vmatprep.subr.bf16.mxu0 0
    %741 = vmatpush1.bf16.msra.mxu0 0
    %742 = vmatprep.mubr.bf16.mxu0 0
    %743 = vmatmul.mubr.bf16.gmra.mrb[0].mxu0 %v576
    %v744 = vpop.f32.mrb[0].mxu0
    %v745 = vadd.f32 %v554, %v744
    %v746 = vpop.f32.mrb[0].mxu0
    %v747 = vadd.f32 %v558, %v746
    %v748 = vpop.f32.mrb[0].mxu0
    %v749 = vadd.f32 %v554, %v748
    %v750 = vpop.f32.mrb[0].mxu0
    %v751 = vadd.f32 %v558, %v750
    %752 = vmatprep.mubr.bf16.mxu0 0
    %753 = vmatmul.mubr.bf16.gmra.mrb[0].mxu0 %v577
    %v754 = vpop.f32.mrb[0].mxu0
    %v755 = vadd.f32 %v554, %v754
    %v756 = vpop.f32.mrb[0].mxu0
    %v757 = vadd.f32 %v558, %v756
    %v758 = vpop.f32.mrb[0].mxu0
    %v759 = vadd.f32 %v554, %v758
    %v760 = vpop.f32.mrb[0].mxu0
    %v761 = vadd.f32 %v558, %v760
    %762 = vmatprep.mubr.bf16.mxu0 0
    %763 = vmatmul.mubr.bf16.gmra.mrb[0].mxu0 %v578
    %v764 = vpop.f32.mrb[0].mxu0
    %v765 = vadd.f32 %v554, %v764
    %v766 = vpop.f32.mrb[0].mxu0
    %v767 = vadd.f32 %v558, %v766
    %v768 = vpop.f32.mrb[0].mxu0
    %v769 = vpop.f32.mrb[0].mxu0
    %770 = vdwg.mxu0
    %771 = vmatprep.subr.bf16.mxu0 0
    %772 = vmatpush1.bf16.msra.mxu0 %v664
    %773 = vmatprep.subr.bf16.mxu0 0
    %774 = vmatpush1.bf16.msra.mxu0 %v667
    %775 = vmatprep.subr.bf16.mxu0 0
    %776 = vmatpush1.bf16.msra.mxu0 %v670
    %777 = vmatprep.subr.bf16.mxu0 0
    %778 = vmatpush1.bf16.msra.mxu0 %v673
    %779 = vmatprep.subr.bf16.mxu0 0
    %780 = vmatpush1.bf16.msra.mxu0 %v676
    %781 = vmatprep.subr.bf16.mxu0 0
    %782 = vmatpush1.bf16.msra.mxu0 %v679
    %783 = vmatprep.subr.bf16.mxu0 0
    %784 = vmatpush1.bf16.msra.mxu0 %v682
    %785 = vmatprep.subr.bf16.mxu0 0
    %786 = vmatpush1.bf16.msra.mxu0 %v685
    %787 = vmatprep.subr.bf16.mxu0 0
    %788 = vmatpush1.bf16.msra.mxu0 0
    %789 = vmatprep.subr.bf16.mxu0 0
    %790 = vmatpush1.bf16.msra.mxu0 0
    %791 = vmatprep.subr.bf16.mxu0 0
    %792 = vmatpush1.bf16.msra.mxu0 0
    %793 = vmatprep.subr.bf16.mxu0 0
    %794 = vmatpush1.bf16.msra.mxu0 0
    %795 = vmatprep.subr.bf16.mxu0 0
    %796 = vmatpush1.bf16.msra.mxu0 0
    %797 = vmatprep.subr.bf16.mxu0 0
    %798 = vmatpush1.bf16.msra.mxu0 0
    %799 = vmatprep.subr.bf16.mxu0 0
    %800 = vmatpush1.bf16.msra.mxu0 0
    %801 = vmatprep.subr.bf16.mxu0 0
    %802 = vmatpush1.bf16.msra.mxu0 0
    %803 = vmatprep.mubr.bf16.mxu0 0
    %804 = vmatmul.mubr.bf16.gmra.mrb[0].mxu0 %v576
    %v805 = vpop.f32.mrb[0].mxu0
    %v806 = vadd.f32 %v562, %v805
    %v807 = vpop.f32.mrb[0].mxu0
    %v808 = vpop.f32.mrb[0].mxu0
    %v809 = vadd.f32 %v562, %v808
    %v810 = vpop.f32.mrb[0].mxu0
    %811 = vmatprep.mubr.bf16.mxu0 0
    %812 = vmatmul.mubr.bf16.gmra.mrb[0].mxu0 %v577
    %v813 = vpop.f32.mrb[0].mxu0
    %v814 = vadd.f32 %v562, %v813
    %v815 = vpop.f32.mrb[0].mxu0
    %v816 = vpop.f32.mrb[0].mxu0
    %v817 = vadd.f32 %v562, %v816
    %v818 = vpop.f32.mrb[0].mxu0
    %819 = vmatprep.mubr.bf16.mxu0 0
    %820 = vmatmul.mubr.bf16.gmra.mrb[0].mxu0 %v578
    %v821 = vpop.f32.mrb[0].mxu0
    %v822 = vadd.f32 %v562, %v821
    %v823 = vpop.f32.mrb[0].mxu0
    %v824 = vpop.f32.mrb[0].mxu0
    %v825 = vpop.f32.mrb[0].mxu0
    %826 = vdwg.mxu0
    %827 = vst [vmem:[#allocation3] sm:$0xff] %v745
    %828 = vst [vmem:[#allocation3 + $0x8] sm:$0xff] %v747
    %829 = vst [vmem:[#allocation3 + $0x10] sm:$0xff] %v806
    %830 = vst [vmem:[#allocation3 + $0x18] sm:$0xff] %v749
    %831 = vst [vmem:[#allocation3 + $0x20] sm:$0xff] %v751
    %832 = vst [vmem:[#allocation3 + $0x28] sm:$0xff] %v809
    %833 = vst [vmem:[#allocation3 + $0x30] sm:$0xff] %v755
    %834 = vst [vmem:[#allocation3 + $0x38] sm:$0xff] %v757
    %835 = vst [vmem:[#allocation3 + $0x40] sm:$0xff] %v814
    %836 = vst [vmem:[#allocation3 + $0x48] sm:$0xff] %v759
    %837 = vst [vmem:[#allocation3 + $0x50] sm:$0xff] %v761
    %838 = vst [vmem:[#allocation3 + $0x58] sm:$0xff] %v817
    %839 = vst [vmem:[#allocation3 + $0x60] sm:$0xff] %v765
    %840 = vst [vmem:[#allocation3 + $0x68] sm:$0xff] %v767
    %841 = vst [vmem:[#allocation3 + $0x70] sm:$0xff] %v822
    %v842 = vld [vmem:[#allocation16] sm:$0xff]
    %v843 = vld [vmem:[#allocation16 + $0x8] sm:$0xf]
    %v844 = vld [vmem:[#allocation16 + $0xc] sm:$0xff]
    %v845 = vld [vmem:[#allocation16 + $0x14] sm:$0xf]
    %v846 = vld [vmem:[#allocation16 + $0x18] sm:$0xff]
    %v847 = vld [vmem:[#allocation16 + $0x20] sm:$0xf]
    %v848 = vld [vmem:[#allocation16 + $0x24] sm:$0xff]
    %v849 = vld [vmem:[#allocation16 + $0x2c] sm:$0xf]
    %v850 = vld [vmem:[#allocation16 + $0x30] sm:$0xff]
    %v851 = vld [vmem:[#allocation16 + $0x38] sm:$0xf]
    %v852 = vld [vmem:[#allocation16 + $0x3c] sm:$0xff]
    %v853 = vld [vmem:[#allocation16 + $0x44] sm:$0xf]
    %v854 = vld [vmem:[#allocation16 + $0x48] sm:$0xff]
    %v855 = vld [vmem:[#allocation16 + $0x50] sm:$0xf]
    %v856 = vld [vmem:[#allocation16 + $0x54] sm:$0xff]
    %v857 = vld [vmem:[#allocation16 + $0x5c] sm:$0xf]
    %v858 = vld [vmem:[#allocation16 + $0x60] sm:$0xff]
    %v859 = vld [vmem:[#allocation16 + $0x68] sm:$0xf]
    %v860 = vld [vmem:[#allocation16 + $0x6c] sm:$0xff]
    %v861 = vld [vmem:[#allocation16 + $0x74] sm:$0xf]
    %v862 = vld [vmem:[#allocation16 + $0x78] sm:$0xff]
    %v863 = vld [vmem:[#allocation16 + $0x80] sm:$0xf]
    %v864 = vld [vmem:[#allocation16 + $0x84] sm:$0xff]
    %v865 = vld [vmem:[#allocation16 + $0x8c] sm:$0xf]
    %v866 = vld [vmem:[#allocation16 + $0x90] sm:$0xff]
    %v867 = vld [vmem:[#allocation16 + $0x98] sm:$0xf]
    %v868 = vld [vmem:[#allocation16 + $0x9c] sm:$0xff]
    %v869 = vld [vmem:[#allocation16 + $0xa4] sm:$0xf]
    %v870 = vld [vmem:[#allocation16 + $0xa8] sm:$0xff]
    %v871 = vld [vmem:[#allocation16 + $0xb0] sm:$0xf]
    %v872 = vld [vmem:[#allocation16 + $0xb4] sm:$0xff]
    %v873 = vld [vmem:[#allocation16 + $0xbc] sm:$0xf]
    %v874 = vld [vmem:[#allocation18] sm:$0xff]
    %v875 = vld [vmem:[#allocation18 + $0x8] sm:$0xf]
    %v876 = vld [vmem:[#allocation18 + $0xc] sm:$0xff]
    %v877 = vld [vmem:[#allocation18 + $0x14] sm:$0xf]
    %v878 = vld [vmem:[#allocation18 + $0x18] sm:$0xff]
    %v879 = vld [vmem:[#allocation18 + $0x20] sm:$0xf]
    %v880 = vld [vmem:[#allocation18 + $0x24] sm:$0xff]
    %v881 = vld [vmem:[#allocation18 + $0x2c] sm:$0xf]
    %v882 = vld [vmem:[#allocation18 + $0x30] sm:$0xff]
    %v883 = vld [vmem:[#allocation18 + $0x38] sm:$0xf]
    %v884 = vld [vmem:[#allocation18 + $0x3c] sm:$0xff]
    %v885 = vld [vmem:[#allocation18 + $0x44] sm:$0xf]
    %v886 = vld [vmem:[#allocation18 + $0x48] sm:$0xff]
    %v887 = vld [vmem:[#allocation18 + $0x50] sm:$0xf]
    %v888 = vld [vmem:[#allocation18 + $0x54] sm:$0xff]
    %v889 = vld [vmem:[#allocation18 + $0x5c] sm:$0xf]
    %v890 = vld [vmem:[#allocation18 + $0x60] sm:$0xff]
    %v891 = vld [vmem:[#allocation18 + $0x68] sm:$0xf]
    %v892 = vld [vmem:[#allocation18 + $0x6c] sm:$0xff]
    %v893 = vld [vmem:[#allocation18 + $0x74] sm:$0xf]
    %v894 = vld [vmem:[#allocation18 + $0x78] sm:$0xff]
    %v895 = vld [vmem:[#allocation18 + $0x80] sm:$0xf]
    %v896 = vld [vmem:[#allocation18 + $0x84] sm:$0xff]
    %v897 = vld [vmem:[#allocation18 + $0x8c] sm:$0xf]
    %v898 = vld [vmem:[#allocation18 + $0x90] sm:$0xff]
    %v899 = vld [vmem:[#allocation18 + $0x98] sm:$0xf]
    %v900 = vld [vmem:[#allocation18 + $0x9c] sm:$0xff]
    %v901 = vld [vmem:[#allocation18 + $0xa4] sm:$0xf]
    %v902 = vld [vmem:[#allocation18 + $0xa8] sm:$0xff]
    %v903 = vld [vmem:[#allocation18 + $0xb0] sm:$0xf]
    %v904 = vld [vmem:[#allocation18 + $0xb4] sm:$0xff]
    %v905 = vld [vmem:[#allocation18 + $0xbc] sm:$0xf]
    %v906 = vld [vmem:[#allocation19] sm:$0x7]
    %v907 = vld [vmem:[#allocation21] sm:$0x7]
    %v908 = vld [vmem:[#allocation9] sm:$0xff]
    %v909 = vpack.c.bf16 %v908, %v908
    %v911 = vlaneseq
    %v912 = vshrl.u32 %v911, 7
    %v913 = vsub.s32 0, %v912
    %v914 = vrot.slane %v906, %v913
    %v915 = vlaneseq
    %v916 = vshrl.u32 %v915, 7
    %v917 = vsub.s32 1, %v916
    %v918 = vrot.slane %v906, %v917
    %v919 = vlaneseq
    %v920 = vshrl.u32 %v919, 7
    %v921 = vsub.s32 2, %v920
    %v922 = vrot.slane %v906, %v921
    %v958 = vunpack.c.l.b16 %v842
    %v959 = vunpack.c.h.b16 %v842
    %v960 = vunpack.c.l.b16 %v843
    %v961 = vunpack.c.l.b16 %v844
    %v962 = vunpack.c.h.b16 %v844
    %v963 = vunpack.c.l.b16 %v845
    %v964 = vunpack.c.l.b16 %v846
    %v965 = vunpack.c.h.b16 %v846
    %v966 = vunpack.c.l.b16 %v847
    %v967 = vunpack.c.l.b16 %v848
    %v968 = vunpack.c.h.b16 %v848
    %v969 = vunpack.c.l.b16 %v849
    %v970 = vunpack.c.l.b16 %v850
    %v971 = vunpack.c.h.b16 %v850
    %v972 = vunpack.c.l.b16 %v851
    %v973 = vunpack.c.l.b16 %v852
    %v974 = vunpack.c.h.b16 %v852
    %v975 = vunpack.c.l.b16 %v853
    %v976 = vunpack.c.l.b16 %v854
    %v977 = vunpack.c.h.b16 %v854
    %v978 = vunpack.c.l.b16 %v855
    %v979 = vunpack.c.l.b16 %v856
    %v980 = vunpack.c.h.b16 %v856
    %v981 = vunpack.c.l.b16 %v857
    %v982 = vunpack.c.l.b16 %v858
    %v983 = vunpack.c.h.b16 %v858
    %v984 = vunpack.c.l.b16 %v859
    %v985 = vunpack.c.l.b16 %v860
    %v986 = vunpack.c.h.b16 %v860
    %v987 = vunpack.c.l.b16 %v861
    %v988 = vunpack.c.l.b16 %v862
    %v989 = vunpack.c.h.b16 %v862
    %v990 = vunpack.c.l.b16 %v863
    %v991 = vunpack.c.l.b16 %v864
    %v992 = vunpack.c.h.b16 %v864
    %v993 = vunpack.c.l.b16 %v865
    %v994 = vunpack.c.l.b16 %v866
    %v995 = vunpack.c.h.b16 %v866
    %v996 = vunpack.c.l.b16 %v867
    %v997 = vunpack.c.l.b16 %v868
    %v998 = vunpack.c.h.b16 %v868
    %v999 = vunpack.c.l.b16 %v869
    %v1000 = vunpack.c.l.b16 %v870
    %v1001 = vunpack.c.h.b16 %v870
    %v1002 = vunpack.c.l.b16 %v871
    %v1003 = vunpack.c.l.b16 %v872
    %v1004 = vunpack.c.h.b16 %v872
    %v1005 = vunpack.c.l.b16 %v873
    %v1006 = vpack.c.b16 %v961, %v958
    %v1007 = vpack.c.b16 %v962, %v959
    %v1008 = vpack.c.b16 %v963, %v960
    %v1009 = vpack.c.b16 %v967, %v964
    %v1010 = vpack.c.b16 %v968, %v965
    %v1011 = vpack.c.b16 %v969, %v966
    %v1012 = vpack.c.b16 %v973, %v970
    %v1013 = vpack.c.b16 %v974, %v971
    %v1014 = vpack.c.b16 %v975, %v972
    %v1015 = vpack.c.b16 %v979, %v976
    %v1016 = vpack.c.b16 %v980, %v977
    %v1017 = vpack.c.b16 %v981, %v978
    %v1018 = vpack.c.b16 %v985, %v982
    %v1019 = vpack.c.b16 %v986, %v983
    %v1020 = vpack.c.b16 %v987, %v984
    %v1021 = vpack.c.b16 %v991, %v988
    %v1022 = vpack.c.b16 %v992, %v989
    %v1023 = vpack.c.b16 %v993, %v990
    %v1024 = vpack.c.b16 %v997, %v994
    %v1025 = vpack.c.b16 %v998, %v995
    %v1026 = vpack.c.b16 %v999, %v996
    %v1027 = vpack.c.b16 %v1003, %v1000
    %v1028 = vpack.c.b16 %v1004, %v1001
    %v1029 = vpack.c.b16 %v1005, %v1002
    %1054 = vmatprep.subr.bf16.mxu0 %v1007
    %1055 = vmatpush1.bf16.msra.mxu0 %v1006
    %1056 = vmatprep.subr.bf16.mxu0 %v1010
    %1057 = vmatpush1.bf16.msra.mxu0 %v1009
    %1058 = vmatprep.subr.bf16.mxu0 %v1013
    %1059 = vmatpush1.bf16.msra.mxu0 %v1012
    %1060 = vmatprep.subr.bf16.mxu0 %v1016
    %1061 = vmatpush1.bf16.msra.mxu0 %v1015
    %1062 = vmatprep.subr.bf16.mxu0 %v1019
    %1063 = vmatpush1.bf16.msra.mxu0 %v1018
    %1064 = vmatprep.subr.bf16.mxu0 %v1022
    %1065 = vmatpush1.bf16.msra.mxu0 %v1021
    %1066 = vmatprep.subr.bf16.mxu0 %v1025
    %1067 = vmatpush1.bf16.msra.mxu0 %v1024
    %1068 = vmatprep.subr.bf16.mxu0 %v1028
    %1069 = vmatpush1.bf16.msra.mxu0 %v1027
    %1070 = vmatprep.subr.bf16.mxu0 0
    %1071 = vmatpush1.bf16.msra.mxu0 0
    %1072 = vmatprep.subr.bf16.mxu0 0
    %1073 = vmatpush1.bf16.msra.mxu0 0
    %1074 = vmatprep.subr.bf16.mxu0 0
    %1075 = vmatpush1.bf16.msra.mxu0 0
    %1076 = vmatprep.subr.bf16.mxu0 0
    %1077 = vmatpush1.bf16.msra.mxu0 0
    %1078 = vmatprep.subr.bf16.mxu0 0
    %1079 = vmatpush1.bf16.msra.mxu0 0
    %1080 = vmatprep.subr.bf16.mxu0 0
    %1081 = vmatpush1.bf16.msra.mxu0 0
    %1082 = vmatprep.subr.bf16.mxu0 0
    %1083 = vmatpush1.bf16.msra.mxu0 0
    %1084 = vmatprep.subr.bf16.mxu0 0
    %1085 = vmatpush1.bf16.msra.mxu0 0
    %1086 = vmatprep.mubr.bf16.mxu0 0
    %1087 = vmatmul.mubr.bf16.gmra.mrb[0].mxu0 %v909
    %v1088 = vpop.f32.mrb[0].mxu0
    %v1089 = vadd.f32 %v914, %v1088
    %v1090 = vpop.f32.mrb[0].mxu0
    %v1091 = vadd.f32 %v918, %v1090
    %v1092 = vpop.f32.mrb[0].mxu0
    %v1093 = vpop.f32.mrb[0].mxu0
    %1094 = vdwg.mxu0
    %1095 = vmatprep.subr.bf16.mxu0 0
    %1096 = vmatpush1.bf16.msra.mxu0 %v1008
    %1097 = vmatprep.subr.bf16.mxu0 0
    %1098 = vmatpush1.bf16.msra.mxu0 %v1011
    %1099 = vmatprep.subr.bf16.mxu0 0
    %1100 = vmatpush1.bf16.msra.mxu0 %v1014
    %1101 = vmatprep.subr.bf16.mxu0 0
    %1102 = vmatpush1.bf16.msra.mxu0 %v1017
    %1103 = vmatprep.subr.bf16.mxu0 0
    %1104 = vmatpush1.bf16.msra.mxu0 %v1020
    %1105 = vmatprep.subr.bf16.mxu0 0
    %1106 = vmatpush1.bf16.msra.mxu0 %v1023
    %1107 = vmatprep.subr.bf16.mxu0 0
    %1108 = vmatpush1.bf16.msra.mxu0 %v1026
    %1109 = vmatprep.subr.bf16.mxu0 0
    %1110 = vmatpush1.bf16.msra.mxu0 %v1029
    %1111 = vmatprep.subr.bf16.mxu0 0
    %1112 = vmatpush1.bf16.msra.mxu0 0
    %1113 = vmatprep.subr.bf16.mxu0 0
    %1114 = vmatpush1.bf16.msra.mxu0 0
    %1115 = vmatprep.subr.bf16.mxu0 0
    %1116 = vmatpush1.bf16.msra.mxu0 0
    %1117 = vmatprep.subr.bf16.mxu0 0
    %1118 = vmatpush1.bf16.msra.mxu0 0
    %1119 = vmatprep.subr.bf16.mxu0 0
    %1120 = vmatpush1.bf16.msra.mxu0 0
    %1121 = vmatprep.subr.bf16.mxu0 0
    %1122 = vmatpush1.bf16.msra.mxu0 0
    %1123 = vmatprep.subr.bf16.mxu0 0
    %1124 = vmatpush1.bf16.msra.mxu0 0
    %1125 = vmatprep.subr.bf16.mxu0 0
    %1126 = vmatpush1.bf16.msra.mxu0 0
    %1127 = vmatprep.mubr.bf16.mxu0 0
    %1128 = vmatmul.mubr.bf16.gmra.mrb[0].mxu0 %v909
    %v1129 = vpop.f32.mrb[0].mxu0
    %v1130 = vadd.f32 %v922, %v1129
    %v1131 = vpop.f32.mrb[0].mxu0
    %v1132 = vpop.f32.mrb[0].mxu0
    %v1133 = vpop.f32.mrb[0].mxu0
    %1134 = vdwg.mxu0
    %v1136 = vlaneseq
    %v1137 = vshrl.u32 %v1136, 7
    %v1138 = vsub.s32 0, %v1137
    %v1139 = vrot.slane %v907, %v1138
    %v1140 = vlaneseq
    %v1141 = vshrl.u32 %v1140, 7
    %v1142 = vsub.s32 1, %v1141
    %v1143 = vrot.slane %v907, %v1142
    %v1144 = vlaneseq
    %v1145 = vshrl.u32 %v1144, 7
    %v1146 = vsub.s32 2, %v1145
    %v1147 = vrot.slane %v907, %v1146
    %v1183 = vunpack.c.l.b16 %v874
    %v1184 = vunpack.c.h.b16 %v874
    %v1185 = vunpack.c.l.b16 %v875
    %v1186 = vunpack.c.l.b16 %v876
    %v1187 = vunpack.c.h.b16 %v876
    %v1188 = vunpack.c.l.b16 %v877
    %v1189 = vunpack.c.l.b16 %v878
    %v1190 = vunpack.c.h.b16 %v878
    %v1191 = vunpack.c.l.b16 %v879
    %v1192 = vunpack.c.l.b16 %v880
    %v1193 = vunpack.c.h.b16 %v880
    %v1194 = vunpack.c.l.b16 %v881
    %v1195 = vunpack.c.l.b16 %v882
    %v1196 = vunpack.c.h.b16 %v882
    %v1197 = vunpack.c.l.b16 %v883
    %v1198 = vunpack.c.l.b16 %v884
    %v1199 = vunpack.c.h.b16 %v884
    %v1200 = vunpack.c.l.b16 %v885
    %v1201 = vunpack.c.l.b16 %v886
    %v1202 = vunpack.c.h.b16 %v886
    %v1203 = vunpack.c.l.b16 %v887
    %v1204 = vunpack.c.l.b16 %v888
    %v1205 = vunpack.c.h.b16 %v888
    %v1206 = vunpack.c.l.b16 %v889
    %v1207 = vunpack.c.l.b16 %v890
    %v1208 = vunpack.c.h.b16 %v890
    %v1209 = vunpack.c.l.b16 %v891
    %v1210 = vunpack.c.l.b16 %v892
    %v1211 = vunpack.c.h.b16 %v892
    %v1212 = vunpack.c.l.b16 %v893
    %v1213 = vunpack.c.l.b16 %v894
    %v1214 = vunpack.c.h.b16 %v894
    %v1215 = vunpack.c.l.b16 %v895
    %v1216 = vunpack.c.l.b16 %v896
    %v1217 = vunpack.c.h.b16 %v896
    %v1218 = vunpack.c.l.b16 %v897
    %v1219 = vunpack.c.l.b16 %v898
    %v1220 = vunpack.c.h.b16 %v898
    %v1221 = vunpack.c.l.b16 %v899
    %v1222 = vunpack.c.l.b16 %v900
    %v1223 = vunpack.c.h.b16 %v900
    %v1224 = vunpack.c.l.b16 %v901
    %v1225 = vunpack.c.l.b16 %v902
    %v1226 = vunpack.c.h.b16 %v902
    %v1227 = vunpack.c.l.b16 %v903
    %v1228 = vunpack.c.l.b16 %v904
    %v1229 = vunpack.c.h.b16 %v904
    %v1230 = vunpack.c.l.b16 %v905
    %v1231 = vpack.c.b16 %v1186, %v1183
    %v1232 = vpack.c.b16 %v1187, %v1184
    %v1233 = vpack.c.b16 %v1188, %v1185
    %v1234 = vpack.c.b16 %v1192, %v1189
    %v1235 = vpack.c.b16 %v1193, %v1190
    %v1236 = vpack.c.b16 %v1194, %v1191
    %v1237 = vpack.c.b16 %v1198, %v1195
    %v1238 = vpack.c.b16 %v1199, %v1196
    %v1239 = vpack.c.b16 %v1200, %v1197
    %v1240 = vpack.c.b16 %v1204, %v1201
    %v1241 = vpack.c.b16 %v1205, %v1202
    %v1242 = vpack.c.b16 %v1206, %v1203
    %v1243 = vpack.c.b16 %v1210, %v1207
    %v1244 = vpack.c.b16 %v1211, %v1208
    %v1245 = vpack.c.b16 %v1212, %v1209
    %v1246 = vpack.c.b16 %v1216, %v1213
    %v1247 = vpack.c.b16 %v1217, %v1214
    %v1248 = vpack.c.b16 %v1218, %v1215
    %v1249 = vpack.c.b16 %v1222, %v1219
    %v1250 = vpack.c.b16 %v1223, %v1220
    %v1251 = vpack.c.b16 %v1224, %v1221
    %v1252 = vpack.c.b16 %v1228, %v1225
    %v1253 = vpack.c.b16 %v1229, %v1226
    %v1254 = vpack.c.b16 %v1230, %v1227
    %1279 = vmatprep.subr.bf16.mxu0 %v1232
    %1280 = vmatpush1.bf16.msra.mxu0 %v1231
    %1281 = vmatprep.subr.bf16.mxu0 %v1235
    %1282 = vmatpush1.bf16.msra.mxu0 %v1234
    %1283 = vmatprep.subr.bf16.mxu0 %v1238
    %1284 = vmatpush1.bf16.msra.mxu0 %v1237
    %1285 = vmatprep.subr.bf16.mxu0 %v1241
    %1286 = vmatpush1.bf16.msra.mxu0 %v1240
    %1287 = vmatprep.subr.bf16.mxu0 %v1244
    %1288 = vmatpush1.bf16.msra.mxu0 %v1243
    %1289 = vmatprep.subr.bf16.mxu0 %v1247
    %1290 = vmatpush1.bf16.msra.mxu0 %v1246
    %1291 = vmatprep.subr.bf16.mxu0 %v1250
    %1292 = vmatpush1.bf16.msra.mxu0 %v1249
    %1293 = vmatprep.subr.bf16.mxu0 %v1253
    %1294 = vmatpush1.bf16.msra.mxu0 %v1252
    %1295 = vmatprep.subr.bf16.mxu0 0
    %1296 = vmatpush1.bf16.msra.mxu0 0
    %1297 = vmatprep.subr.bf16.mxu0 0
    %1298 = vmatpush1.bf16.msra.mxu0 0
    %1299 = vmatprep.subr.bf16.mxu0 0
    %1300 = vmatpush1.bf16.msra.mxu0 0
    %1301 = vmatprep.subr.bf16.mxu0 0
    %1302 = vmatpush1.bf16.msra.mxu0 0
    %1303 = vmatprep.subr.bf16.mxu0 0
    %1304 = vmatpush1.bf16.msra.mxu0 0
    %1305 = vmatprep.subr.bf16.mxu0 0
    %1306 = vmatpush1.bf16.msra.mxu0 0
    %1307 = vmatprep.subr.bf16.mxu0 0
    %1308 = vmatpush1.bf16.msra.mxu0 0
    %1309 = vmatprep.subr.bf16.mxu0 0
    %1310 = vmatpush1.bf16.msra.mxu0 0
    %1311 = vmatprep.mubr.bf16.mxu0 0
    %1312 = vmatmul.mubr.bf16.gmra.mrb[0].mxu0 %v909
    %v1313 = vpop.f32.mrb[0].mxu0
    %v1314 = vadd.f32 %v1139, %v1313
    %v1315 = vpop.f32.mrb[0].mxu0
    %v1316 = vadd.f32 %v1143, %v1315
    %v1317 = vpop.f32.mrb[0].mxu0
    %v1318 = vpop.f32.mrb[0].mxu0
    %1319 = vdwg.mxu0
    %1320 = vmatprep.subr.bf16.mxu0 0
    %1321 = vmatpush1.bf16.msra.mxu0 %v1233
    %1322 = vmatprep.subr.bf16.mxu0 0
    %1323 = vmatpush1.bf16.msra.mxu0 %v1236
    %1324 = vmatprep.subr.bf16.mxu0 0
    %1325 = vmatpush1.bf16.msra.mxu0 %v1239
    %1326 = vmatprep.subr.bf16.mxu0 0
    %1327 = vmatpush1.bf16.msra.mxu0 %v1242
    %1328 = vmatprep.subr.bf16.mxu0 0
    %1329 = vmatpush1.bf16.msra.mxu0 %v1245
    %1330 = vmatprep.subr.bf16.mxu0 0
    %1331 = vmatpush1.bf16.msra.mxu0 %v1248
    %1332 = vmatprep.subr.bf16.mxu0 0
    %1333 = vmatpush1.bf16.msra.mxu0 %v1251
    %1334 = vmatprep.subr.bf16.mxu0 0
    %1335 = vmatpush1.bf16.msra.mxu0 %v1254
    %1336 = vmatprep.subr.bf16.mxu0 0
    %1337 = vmatpush1.bf16.msra.mxu0 0
    %1338 = vmatprep.subr.bf16.mxu0 0
    %1339 = vmatpush1.bf16.msra.mxu0 0
    %1340 = vmatprep.subr.bf16.mxu0 0
    %1341 = vmatpush1.bf16.msra.mxu0 0
    %1342 = vmatprep.subr.bf16.mxu0 0
    %1343 = vmatpush1.bf16.msra.mxu0 0
    %1344 = vmatprep.subr.bf16.mxu0 0
    %1345 = vmatpush1.bf16.msra.mxu0 0
    %1346 = vmatprep.subr.bf16.mxu0 0
    %1347 = vmatpush1.bf16.msra.mxu0 0
    %1348 = vmatprep.subr.bf16.mxu0 0
    %1349 = vmatpush1.bf16.msra.mxu0 0
    %1350 = vmatprep.subr.bf16.mxu0 0
    %1351 = vmatpush1.bf16.msra.mxu0 0
    %1352 = vmatprep.mubr.bf16.mxu0 0
    %1353 = vmatmul.mubr.bf16.gmra.mrb[0].mxu0 %v909
    %v1354 = vpop.f32.mrb[0].mxu0
    %v1355 = vadd.f32 %v1147, %v1354
    %v1356 = vpop.f32.mrb[0].mxu0
    %v1357 = vpop.f32.mrb[0].mxu0
    %v1358 = vpop.f32.mrb[0].mxu0
    %1359 = vdwg.mxu0
    %s1360 = smul.u32 0, 3
    %s1361 = smul.addr %s1360, 8
    %s1362 = scalar_lea.vmem [#allocation2], %s1361
    %v1363 = vld [vmem:[%s1362] sm:$0xff]
    %v1364 = vld [vmem:[%s1362 + $0x8] sm:$0xff]
    %v1365 = vld [vmem:[%s1362 + $0x10] sm:$0xff]
    %v1366 = vadd.f32 %v1363, %v1089
    %v1367 = vxor.u32 %v1366, 2147483648
    %v1368 = vmul.f32 %v1367, 1.442695
    %v1369 = vpow.pop %v1368
    %v1370 = vadd.f32 %v1369, 1.0
    %v1371 = vrcp.pop %v1370
    %v1372 = vmul.f32 1.0, %v1371
    %v1373 = vadd.f32 %v1364, %v1091
    %v1374 = vxor.u32 %v1373, 2147483648
    %v1375 = vmul.f32 %v1374, 1.442695
    %v1376 = vpow.pop %v1375
    %v1377 = vadd.f32 %v1376, 1.0
    %v1378 = vrcp.pop %v1377
    %v1379 = vmul.f32 1.0, %v1378
    %v1380 = vmul.f32 %v1372, %v1130
    %v1381 = vadd.f32 %v1365, %v1380
    %v1382 = vtanh.pop %v1381
    %v1383 = vsub.f32 1.0, %v1379
    %v1384 = vmul.f32 %v1383, %v1382
    %v1385 = vmul.f32 %v1379, %v908
    %v1386 = vadd.f32 %v1384, %v1385
    %s1387 = smul.addr %s1360, 8
    %s1388 = scalar_lea.vmem [#allocation3], %s1387
    %v1389 = vld [vmem:[%s1388] sm:$0xff]
    %v1390 = vld [vmem:[%s1388 + $0x8] sm:$0xff]
    %v1391 = vld [vmem:[%s1388 + $0x10] sm:$0xff]
    %v1392 = vadd.f32 %v1389, %v1314
    %v1393 = vxor.u32 %v1392, 2147483648
    %v1394 = vmul.f32 %v1393, 1.442695
    %v1395 = vpow.pop %v1394
    %v1396 = vadd.f32 %v1395, 1.0
    %v1397 = vrcp.pop %v1396
    %v1398 = vmul.f32 1.0, %v1397
    %v1399 = vadd.f32 %v1390, %v1316
    %v1400 = vxor.u32 %v1399, 2147483648
    %v1401 = vmul.f32 %v1400, 1.442695
    %v1402 = vpow.pop %v1401
    %v1403 = vadd.f32 %v1402, 1.0
    %v1404 = vrcp.pop %v1403
    %v1405 = vmul.f32 1.0, %v1404
    %v1406 = vmul.f32 %v1398, %v1355
    %v1407 = vadd.f32 %v1391, %v1406
    %v1408 = vtanh.pop %v1407
    %v1409 = vsub.f32 1.0, %v1405
    %v1410 = vmul.f32 %v1409, %v1408
    %v1411 = vmul.f32 %v1405, %v908
    %v1412 = vadd.f32 %v1410, %v1411
    %1413 = vst [vmem:[#allocation22] sm:$0xff] %v1386
    %1414 = vst [vmem:[#allocation23] sm:$0xff] %v1412
    %v1415 = vpack.c.bf16 %v1386, %v1386
    %1416 = vmatprep.subr.bf16.mxu0 %v1007
    %1417 = vmatpush1.bf16.msra.mxu0 %v1006
    %1418 = vmatprep.subr.bf16.mxu0 %v1010
    %1419 = vmatpush1.bf16.msra.mxu0 %v1009
    %1420 = vmatprep.subr.bf16.mxu0 %v1013
    %1421 = vmatpush1.bf16.msra.mxu0 %v1012
    %1422 = vmatprep.subr.bf16.mxu0 %v1016
    %1423 = vmatpush1.bf16.msra.mxu0 %v1015
    %1424 = vmatprep.subr.bf16.mxu0 %v1019
    %1425 = vmatpush1.bf16.msra.mxu0 %v1018
    %1426 = vmatprep.subr.bf16.mxu0 %v1022
    %1427 = vmatpush1.bf16.msra.mxu0 %v1021
    %1428 = vmatprep.subr.bf16.mxu0 %v1025
    %1429 = vmatpush1.bf16.msra.mxu0 %v1024
    %1430 = vmatprep.subr.bf16.mxu0 %v1028
    %1431 = vmatpush1.bf16.msra.mxu0 %v1027
    %1432 = vmatprep.subr.bf16.mxu0 0
    %1433 = vmatpush1.bf16.msra.mxu0 0
    %1434 = vmatprep.subr.bf16.mxu0 0
    %1435 = vmatpush1.bf16.msra.mxu0 0
    %1436 = vmatprep.subr.bf16.mxu0 0
    %1437 = vmatpush1.bf16.msra.mxu0 0
    %1438 = vmatprep.subr.bf16.mxu0 0
    %1439 = vmatpush1.bf16.msra.mxu0 0
    %1440 = vmatprep.subr.bf16.mxu0 0
    %1441 = vmatpush1.bf16.msra.mxu0 0
    %1442 = vmatprep.subr.bf16.mxu0 0
    %1443 = vmatpush1.bf16.msra.mxu0 0
    %1444 = vmatprep.subr.bf16.mxu0 0
    %1445 = vmatpush1.bf16.msra.mxu0 0
    %1446 = vmatprep.subr.bf16.mxu0 0
    %1447 = vmatpush1.bf16.msra.mxu0 0
    %1448 = vmatprep.mubr.bf16.mxu0 0
    %1449 = vmatmul.mubr.bf16.gmra.mrb[0].mxu0 %v1415
    %v1450 = vpop.f32.mrb[0].mxu0
    %v1451 = vadd.f32 %v914, %v1450
    %v1452 = vpop.f32.mrb[0].mxu0
    %v1453 = vadd.f32 %v918, %v1452
    %v1454 = vpop.f32.mrb[0].mxu0
    %v1455 = vpop.f32.mrb[0].mxu0
    %1456 = vdwg.mxu0
    %1457 = vmatprep.subr.bf16.mxu0 0
    %1458 = vmatpush1.bf16.msra.mxu0 %v1008
    %1459 = vmatprep.subr.bf16.mxu0 0
    %1460 = vmatpush1.bf16.msra.mxu0 %v1011
    %1461 = vmatprep.subr.bf16.mxu0 0
    %1462 = vmatpush1.bf16.msra.mxu0 %v1014
    %1463 = vmatprep.subr.bf16.mxu0 0
    %1464 = vmatpush1.bf16.msra.mxu0 %v1017
    %1465 = vmatprep.subr.bf16.mxu0 0
    %1466 = vmatpush1.bf16.msra.mxu0 %v1020
    %1467 = vmatprep.subr.bf16.mxu0 0
    %1468 = vmatpush1.bf16.msra.mxu0 %v1023
    %1469 = vmatprep.subr.bf16.mxu0 0
    %1470 = vmatpush1.bf16.msra.mxu0 %v1026
    %1471 = vmatprep.subr.bf16.mxu0 0
    %1472 = vmatpush1.bf16.msra.mxu0 %v1029
    %1473 = vmatprep.subr.bf16.mxu0 0
    %1474 = vmatpush1.bf16.msra.mxu0 0
    %1475 = vmatprep.subr.bf16.mxu0 0
    %1476 = vmatpush1.bf16.msra.mxu0 0
    %1477 = vmatprep.subr.bf16.mxu0 0
    %1478 = vmatpush1.bf16.msra.mxu0 0
    %1479 = vmatprep.subr.bf16.mxu0 0
    %1480 = vmatpush1.bf16.msra.mxu0 0
    %1481 = vmatprep.subr.bf16.mxu0 0
    %1482 = vmatpush1.bf16.msra.mxu0 0
    %1483 = vmatprep.subr.bf16.mxu0 0
    %1484 = vmatpush1.bf16.msra.mxu0 0
    %1485 = vmatprep.subr.bf16.mxu0 0
    %1486 = vmatpush1.bf16.msra.mxu0 0
    %1487 = vmatprep.subr.bf16.mxu0 0
    %1488 = vmatpush1.bf16.msra.mxu0 0
    %1489 = vmatprep.mubr.bf16.mxu0 0
    %1490 = vmatmul.mubr.bf16.gmra.mrb[0].mxu0 %v1415
    %v1491 = vpop.f32.mrb[0].mxu0
    %v1492 = vadd.f32 %v922, %v1491
    %v1493 = vpop.f32.mrb[0].mxu0
    %v1494 = vpop.f32.mrb[0].mxu0
    %v1495 = vpop.f32.mrb[0].mxu0
    %1496 = vdwg.mxu0
    %v1497 = vpack.c.bf16 %v1412, %v1412
    %1498 = vmatprep.subr.bf16.mxu0 %v1232
    %1499 = vmatpush1.bf16.msra.mxu0 %v1231
    %1500 = vmatprep.subr.bf16.mxu0 %v1235
    %1501 = vmatpush1.bf16.msra.mxu0 %v1234
    %1502 = vmatprep.subr.bf16.mxu0 %v1238
    %1503 = vmatpush1.bf16.msra.mxu0 %v1237
    %1504 = vmatprep.subr.bf16.mxu0 %v1241
    %1505 = vmatpush1.bf16.msra.mxu0 %v1240
    %1506 = vmatprep.subr.bf16.mxu0 %v1244
    %1507 = vmatpush1.bf16.msra.mxu0 %v1243
    %1508 = vmatprep.subr.bf16.mxu0 %v1247
    %1509 = vmatpush1.bf16.msra.mxu0 %v1246
    %1510 = vmatprep.subr.bf16.mxu0 %v1250
    %1511 = vmatpush1.bf16.msra.mxu0 %v1249
    %1512 = vmatprep.subr.bf16.mxu0 %v1253
    %1513 = vmatpush1.bf16.msra.mxu0 %v1252
    %1514 = vmatprep.subr.bf16.mxu0 0
    %1515 = vmatpush1.bf16.msra.mxu0 0
    %1516 = vmatprep.subr.bf16.mxu0 0
    %1517 = vmatpush1.bf16.msra.mxu0 0
    %1518 = vmatprep.subr.bf16.mxu0 0
    %1519 = vmatpush1.bf16.msra.mxu0 0
    %1520 = vmatprep.subr.bf16.mxu0 0
    %1521 = vmatpush1.bf16.msra.mxu0 0
    %1522 = vmatprep.subr.bf16.mxu0 0
    %1523 = vmatpush1.bf16.msra.mxu0 0
    %1524 = vmatprep.subr.bf16.mxu0 0
    %1525 = vmatpush1.bf16.msra.mxu0 0
    %1526 = vmatprep.subr.bf16.mxu0 0
    %1527 = vmatpush1.bf16.msra.mxu0 0
    %1528 = vmatprep.subr.bf16.mxu0 0
    %1529 = vmatpush1.bf16.msra.mxu0 0
    %1530 = vmatprep.mubr.bf16.mxu0 0
    %1531 = vmatmul.mubr.bf16.gmra.mrb[0].mxu0 %v1497
    %v1532 = vpop.f32.mrb[0].mxu0
    %v1533 = vadd.f32 %v1139, %v1532
    %v1534 = vpop.f32.mrb[0].mxu0
    %v1535 = vadd.f32 %v1143, %v1534
    %v1536 = vpop.f32.mrb[0].mxu0
    %v1537 = vpop.f32.mrb[0].mxu0
    %1538 = vdwg.mxu0
    %1539 = vmatprep.subr.bf16.mxu0 0
    %1540 = vmatpush1.bf16.msra.mxu0 %v1233
    %1541 = vmatprep.subr.bf16.mxu0 0
    %1542 = vmatpush1.bf16.msra.mxu0 %v1236
    %1543 = vmatprep.subr.bf16.mxu0 0
    %1544 = vmatpush1.bf16.msra.mxu0 %v1239
    %1545 = vmatprep.subr.bf16.mxu0 0
    %1546 = vmatpush1.bf16.msra.mxu0 %v1242
    %1547 = vmatprep.subr.bf16.mxu0 0
    %1548 = vmatpush1.bf16.msra.mxu0 %v1245
    %1549 = vmatprep.subr.bf16.mxu0 0
    %1550 = vmatpush1.bf16.msra.mxu0 %v1248
    %1551 = vmatprep.subr.bf16.mxu0 0
    %1552 = vmatpush1.bf16.msra.mxu0 %v1251
    %1553 = vmatprep.subr.bf16.mxu0 0
    %1554 = vmatpush1.bf16.msra.mxu0 %v1254
    %1555 = vmatprep.subr.bf16.mxu0 0
    %1556 = vmatpush1.bf16.msra.mxu0 0
    %1557 = vmatprep.subr.bf16.mxu0 0
    %1558 = vmatpush1.bf16.msra.mxu0 0
    %1559 = vmatprep.subr.bf16.mxu0 0
    %1560 = vmatpush1.bf16.msra.mxu0 0
    %1561 = vmatprep.subr.bf16.mxu0 0
    %1562 = vmatpush1.bf16.msra.mxu0 0
    %1563 = vmatprep.subr.bf16.mxu0 0
    %1564 = vmatpush1.bf16.msra.mxu0 0
    %1565 = vmatprep.subr.bf16.mxu0 0
    %1566 = vmatpush1.bf16.msra.mxu0 0
    %1567 = vmatprep.subr.bf16.mxu0 0
    %1568 = vmatpush1.bf16.msra.mxu0 0
    %1569 = vmatprep.subr.bf16.mxu0 0
    %1570 = vmatpush1.bf16.msra.mxu0 0
    %1571 = vmatprep.mubr.bf16.mxu0 0
    %1572 = vmatmul.mubr.bf16.gmra.mrb[0].mxu0 %v1497
    %v1573 = vpop.f32.mrb[0].mxu0
    %v1574 = vadd.f32 %v1147, %v1573
    %v1575 = vpop.f32.mrb[0].mxu0
    %v1576 = vpop.f32.mrb[0].mxu0
    %v1577 = vpop.f32.mrb[0].mxu0
    %1578 = vdwg.mxu0
    %s1579 = smul.u32 1, 3
    %s1580 = smul.addr %s1579, 8
    %s1581 = scalar_lea.vmem [#allocation2], %s1580
    %v1582 = vld [vmem:[%s1581] sm:$0xff]
    %v1583 = vld [vmem:[%s1581 + $0x8] sm:$0xff]
    %v1584 = vld [vmem:[%s1581 + $0x10] sm:$0xff]
    %v1585 = vadd.f32 %v1582, %v1451
    %v1586 = vxor.u32 %v1585, 2147483648
    %v1587 = vmul.f32 %v1586, 1.442695
    %v1588 = vpow.pop %v1587
    %v1589 = vadd.f32 %v1588, 1.0
    %v1590 = vrcp.pop %v1589
    %v1591 = vmul.f32 1.0, %v1590
    %v1592 = vadd.f32 %v1583, %v1453
    %v1593 = vxor.u32 %v1592, 2147483648
    %v1594 = vmul.f32 %v1593, 1.442695
    %v1595 = vpow.pop %v1594
    %v1596 = vadd.f32 %v1595, 1.0
    %v1597 = vrcp.pop %v1596
    %v1598 = vmul.f32 1.0, %v1597
    %v1599 = vmul.f32 %v1591, %v1492
    %v1600 = vadd.f32 %v1584, %v1599
    %v1601 = vtanh.pop %v1600
    %v1602 = vsub.f32 1.0, %v1598
    %v1603 = vmul.f32 %v1602, %v1601
    %v1604 = vmul.f32 %v1598, %v1386
    %v1605 = vadd.f32 %v1603, %v1604
    %s1606 = smul.addr %s1579, 8
    %s1607 = scalar_lea.vmem [#allocation3], %s1606
    %v1608 = vld [vmem:[%s1607] sm:$0xff]
    %v1609 = vld [vmem:[%s1607 + $0x8] sm:$0xff]
    %v1610 = vld [vmem:[%s1607 + $0x10] sm:$0xff]
    %v1611 = vadd.f32 %v1608, %v1533
    %v1612 = vxor.u32 %v1611, 2147483648
    %v1613 = vmul.f32 %v1612, 1.442695
    %v1614 = vpow.pop %v1613
    %v1615 = vadd.f32 %v1614, 1.0
    %v1616 = vrcp.pop %v1615
    %v1617 = vmul.f32 1.0, %v1616
    %v1618 = vadd.f32 %v1609, %v1535
    %v1619 = vxor.u32 %v1618, 2147483648
    %v1620 = vmul.f32 %v1619, 1.442695
    %v1621 = vpow.pop %v1620
    %v1622 = vadd.f32 %v1621, 1.0
    %v1623 = vrcp.pop %v1622
    %v1624 = vmul.f32 1.0, %v1623
    %v1625 = vmul.f32 %v1617, %v1574
    %v1626 = vadd.f32 %v1610, %v1625
    %v1627 = vtanh.pop %v1626
    %v1628 = vsub.f32 1.0, %v1624
    %v1629 = vmul.f32 %v1628, %v1627
    %v1630 = vmul.f32 %v1624, %v1412
    %v1631 = vadd.f32 %v1629, %v1630
    %s1632 = scalar_lea.vmem [#allocation22], 8
    %1633 = vst [vmem:[%s1632] sm:$0xff] %v1605
    %s1634 = scalar_lea.vmem [#allocation23], 8
    %1635 = vst [vmem:[%s1634] sm:$0xff] %v1631
    %v1636 = vpack.c.bf16 %v1605, %v1605
    %1637 = vmatprep.subr.bf16.mxu0 %v1007
    %1638 = vmatpush1.bf16.msra.mxu0 %v1006
    %1639 = vmatprep.subr.bf16.mxu0 %v1010
    %1640 = vmatpush1.bf16.msra.mxu0 %v1009
    %1641 = vmatprep.subr.bf16.mxu0 %v1013
    %1642 = vmatpush1.bf16.msra.mxu0 %v1012
    %1643 = vmatprep.subr.bf16.mxu0 %v1016
    %1644 = vmatpush1.bf16.msra.mxu0 %v1015
    %1645 = vmatprep.subr.bf16.mxu0 %v1019
    %1646 = vmatpush1.bf16.msra.mxu0 %v1018
    %1647 = vmatprep.subr.bf16.mxu0 %v1022
    %1648 = vmatpush1.bf16.msra.mxu0 %v1021
    %1649 = vmatprep.subr.bf16.mxu0 %v1025
    %1650 = vmatpush1.bf16.msra.mxu0 %v1024
    %1651 = vmatprep.subr.bf16.mxu0 %v1028
    %1652 = vmatpush1.bf16.msra.mxu0 %v1027
    %1653 = vmatprep.subr.bf16.mxu0 0
    %1654 = vmatpush1.bf16.msra.mxu0 0
    %1655 = vmatprep.subr.bf16.mxu0 0
    %1656 = vmatpush1.bf16.msra.mxu0 0
    %1657 = vmatprep.subr.bf16.mxu0 0
    %1658 = vmatpush1.bf16.msra.mxu0 0
    %1659 = vmatprep.subr.bf16.mxu0 0
    %1660 = vmatpush1.bf16.msra.mxu0 0
    %1661 = vmatprep.subr.bf16.mxu0 0
    %1662 = vmatpush1.bf16.msra.mxu0 0
    %1663 = vmatprep.subr.bf16.mxu0 0
    %1664 = vmatpush1.bf16.msra.mxu0 0
    %1665 = vmatprep.subr.bf16.mxu0 0
    %1666 = vmatpush1.bf16.msra.mxu0 0
    %1667 = vmatprep.subr.bf16.mxu0 0
    %1668 = vmatpush1.bf16.msra.mxu0 0
    %1669 = vmatprep.mubr.bf16.mxu0 0
    %1670 = vmatmul.mubr.bf16.gmra.mrb[0].mxu0 %v1636
    %v1671 = vpop.f32.mrb[0].mxu0
    %v1672 = vadd.f32 %v914, %v1671
    %v1673 = vpop.f32.mrb[0].mxu0
    %v1674 = vadd.f32 %v918, %v1673
    %v1675 = vpop.f32.mrb[0].mxu0
    %v1676 = vpop.f32.mrb[0].mxu0
    %1677 = vdwg.mxu0
    %1678 = vmatprep.subr.bf16.mxu0 0
    %1679 = vmatpush1.bf16.msra.mxu0 %v1008
    %1680 = vmatprep.subr.bf16.mxu0 0
    %1681 = vmatpush1.bf16.msra.mxu0 %v1011
    %1682 = vmatprep.subr.bf16.mxu0 0
    %1683 = vmatpush1.bf16.msra.mxu0 %v1014
    %1684 = vmatprep.subr.bf16.mxu0 0
    %1685 = vmatpush1.bf16.msra.mxu0 %v1017
    %1686 = vmatprep.subr.bf16.mxu0 0
    %1687 = vmatpush1.bf16.msra.mxu0 %v1020
    %1688 = vmatprep.subr.bf16.mxu0 0
    %1689 = vmatpush1.bf16.msra.mxu0 %v1023
    %1690 = vmatprep.subr.bf16.mxu0 0
    %1691 = vmatpush1.bf16.msra.mxu0 %v1026
    %1692 = vmatprep.subr.bf16.mxu0 0
    %1693 = vmatpush1.bf16.msra.mxu0 %v1029
    %1694 = vmatprep.subr.bf16.mxu0 0
    %1695 = vmatpush1.bf16.msra.mxu0 0
    %1696 = vmatprep.subr.bf16.mxu0 0
    %1697 = vmatpush1.bf16.msra.mxu0 0
    %1698 = vmatprep.subr.bf16.mxu0 0
    %1699 = vmatpush1.bf16.msra.mxu0 0
    %1700 = vmatprep.subr.bf16.mxu0 0
    %1701 = vmatpush1.bf16.msra.mxu0 0
    %1702 = vmatprep.subr.bf16.mxu0 0
    %1703 = vmatpush1.bf16.msra.mxu0 0
    %1704 = vmatprep.subr.bf16.mxu0 0
    %1705 = vmatpush1.bf16.msra.mxu0 0
    %1706 = vmatprep.subr.bf16.mxu0 0
    %1707 = vmatpush1.bf16.msra.mxu0 0
    %1708 = vmatprep.subr.bf16.mxu0 0
    %1709 = vmatpush1.bf16.msra.mxu0 0
    %1710 = vmatprep.mubr.bf16.mxu0 0
    %1711 = vmatmul.mubr.bf16.gmra.mrb[0].mxu0 %v1636
    %v1712 = vpop.f32.mrb[0].mxu0
    %v1713 = vadd.f32 %v922, %v1712
    %v1714 = vpop.f32.mrb[0].mxu0
    %v1715 = vpop.f32.mrb[0].mxu0
    %v1716 = vpop.f32.mrb[0].mxu0
    %1717 = vdwg.mxu0
    %v1718 = vpack.c.bf16 %v1631, %v1631
    %1719 = vmatprep.subr.bf16.mxu0 %v1232
    %1720 = vmatpush1.bf16.msra.mxu0 %v1231
    %1721 = vmatprep.subr.bf16.mxu0 %v1235
    %1722 = vmatpush1.bf16.msra.mxu0 %v1234
    %1723 = vmatprep.subr.bf16.mxu0 %v1238
    %1724 = vmatpush1.bf16.msra.mxu0 %v1237
    %1725 = vmatprep.subr.bf16.mxu0 %v1241
    %1726 = vmatpush1.bf16.msra.mxu0 %v1240
    %1727 = vmatprep.subr.bf16.mxu0 %v1244
    %1728 = vmatpush1.bf16.msra.mxu0 %v1243
    %1729 = vmatprep.subr.bf16.mxu0 %v1247
    %1730 = vmatpush1.bf16.msra.mxu0 %v1246
    %1731 = vmatprep.subr.bf16.mxu0 %v1250
    %1732 = vmatpush1.bf16.msra.mxu0 %v1249
    %1733 = vmatprep.subr.bf16.mxu0 %v1253
    %1734 = vmatpush1.bf16.msra.mxu0 %v1252
    %1735 = vmatprep.subr.bf16.mxu0 0
    %1736 = vmatpush1.bf16.msra.mxu0 0
    %1737 = vmatprep.subr.bf16.mxu0 0
    %1738 = vmatpush1.bf16.msra.mxu0 0
    %1739 = vmatprep.subr.bf16.mxu0 0
    %1740 = vmatpush1.bf16.msra.mxu0 0
    %1741 = vmatprep.subr.bf16.mxu0 0
    %1742 = vmatpush1.bf16.msra.mxu0 0
    %1743 = vmatprep.subr.bf16.mxu0 0
    %1744 = vmatpush1.bf16.msra.mxu0 0
    %1745 = vmatprep.subr.bf16.mxu0 0
    %1746 = vmatpush1.bf16.msra.mxu0 0
    %1747 = vmatprep.subr.bf16.mxu0 0
    %1748 = vmatpush1.bf16.msra.mxu0 0
    %1749 = vmatprep.subr.bf16.mxu0 0
    %1750 = vmatpush1.bf16.msra.mxu0 0
    %1751 = vmatprep.mubr.bf16.mxu0 0
    %1752 = vmatmul.mubr.bf16.gmra.mrb[0].mxu0 %v1718
    %v1753 = vpop.f32.mrb[0].mxu0
    %v1754 = vadd.f32 %v1139, %v1753
    %v1755 = vpop.f32.mrb[0].mxu0
    %v1756 = vadd.f32 %v1143, %v1755
    %v1757 = vpop.f32.mrb[0].mxu0
    %v1758 = vpop.f32.mrb[0].mxu0
    %1759 = vdwg.mxu0
    %1760 = vmatprep.subr.bf16.mxu0 0
    %1761 = vmatpush1.bf16.msra.mxu0 %v1233
    %1762 = vmatprep.subr.bf16.mxu0 0
    %1763 = vmatpush1.bf16.msra.mxu0 %v1236
    %1764 = vmatprep.subr.bf16.mxu0 0
    %1765 = vmatpush1.bf16.msra.mxu0 %v1239
    %1766 = vmatprep.subr.bf16.mxu0 0
    %1767 = vmatpush1.bf16.msra.mxu0 %v1242
    %1768 = vmatprep.subr.bf16.mxu0 0
    %1769 = vmatpush1.bf16.msra.mxu0 %v1245
    %1770 = vmatprep.subr.bf16.mxu0 0
    %1771 = vmatpush1.bf16.msra.mxu0 %v1248
    %1772 = vmatprep.subr.bf16.mxu0 0
    %1773 = vmatpush1.bf16.msra.mxu0 %v1251
    %1774 = vmatprep.subr.bf16.mxu0 0
    %1775 = vmatpush1.bf16.msra.mxu0 %v1254
    %1776 = vmatprep.subr.bf16.mxu0 0
    %1777 = vmatpush1.bf16.msra.mxu0 0
    %1778 = vmatprep.subr.bf16.mxu0 0
    %1779 = vmatpush1.bf16.msra.mxu0 0
    %1780 = vmatprep.subr.bf16.mxu0 0
    %1781 = vmatpush1.bf16.msra.mxu0 0
    %1782 = vmatprep.subr.bf16.mxu0 0
    %1783 = vmatpush1.bf16.msra.mxu0 0
    %1784 = vmatprep.subr.bf16.mxu0 0
    %1785 = vmatpush1.bf16.msra.mxu0 0
    %1786 = vmatprep.subr.bf16.mxu0 0
    %1787 = vmatpush1.bf16.msra.mxu0 0
    %1788 = vmatprep.subr.bf16.mxu0 0
    %1789 = vmatpush1.bf16.msra.mxu0 0
    %1790 = vmatprep.subr.bf16.mxu0 0
    %1791 = vmatpush1.bf16.msra.mxu0 0
    %1792 = vmatprep.mubr.bf16.mxu0 0
    %1793 = vmatmul.mubr.bf16.gmra.mrb[0].mxu0 %v1718
    %v1794 = vpop.f32.mrb[0].mxu0
    %v1795 = vadd.f32 %v1147, %v1794
    %v1796 = vpop.f32.mrb[0].mxu0
    %v1797 = vpop.f32.mrb[0].mxu0
    %v1798 = vpop.f32.mrb[0].mxu0
    %1799 = vdwg.mxu0
    %s1800 = smul.u32 2, 3
    %s1801 = smul.addr %s1800, 8
    %s1802 = scalar_lea.vmem [#allocation2], %s1801
    %v1803 = vld [vmem:[%s1802] sm:$0xff]
    %v1804 = vld [vmem:[%s1802 + $0x8] sm:$0xff]
    %v1805 = vld [vmem:[%s1802 + $0x10] sm:$0xff]
    %v1806 = vadd.f32 %v1803, %v1672
    %v1807 = vxor.u32 %v1806, 2147483648
    %v1808 = vmul.f32 %v1807, 1.442695
    %v1809 = vpow.pop %v1808
    %v1810 = vadd.f32 %v1809, 1.0
    %v1811 = vrcp.pop %v1810
    %v1812 = vmul.f32 1.0, %v1811
    %v1813 = vadd.f32 %v1804, %v1674
    %v1814 = vxor.u32 %v1813, 2147483648
    %v1815 = vmul.f32 %v1814, 1.442695
    %v1816 = vpow.pop %v1815
    %v1817 = vadd.f32 %v1816, 1.0
    %v1818 = vrcp.pop %v1817
    %v1819 = vmul.f32 1.0, %v1818
    %v1820 = vmul.f32 %v1812, %v1713
    %v1821 = vadd.f32 %v1805, %v1820
    %v1822 = vtanh.pop %v1821
    %v1823 = vsub.f32 1.0, %v1819
    %v1824 = vmul.f32 %v1823, %v1822
    %v1825 = vmul.f32 %v1819, %v1605
    %v1826 = vadd.f32 %v1824, %v1825
    %s1827 = smul.addr %s1800, 8
    %s1828 = scalar_lea.vmem [#allocation3], %s1827
    %v1829 = vld [vmem:[%s1828] sm:$0xff]
    %v1830 = vld [vmem:[%s1828 + $0x8] sm:$0xff]
    %v1831 = vld [vmem:[%s1828 + $0x10] sm:$0xff]
    %v1832 = vadd.f32 %v1829, %v1754
    %v1833 = vxor.u32 %v1832, 2147483648
    %v1834 = vmul.f32 %v1833, 1.442695
    %v1835 = vpow.pop %v1834
    %v1836 = vadd.f32 %v1835, 1.0
    %v1837 = vrcp.pop %v1836
    %v1838 = vmul.f32 1.0, %v1837
    %v1839 = vadd.f32 %v1830, %v1756
    %v1840 = vxor.u32 %v1839, 2147483648
    %v1841 = vmul.f32 %v1840, 1.442695
    %v1842 = vpow.pop %v1841
    %v1843 = vadd.f32 %v1842, 1.0
    %v1844 = vrcp.pop %v1843
    %v1845 = vmul.f32 1.0, %v1844
    %v1846 = vmul.f32 %v1838, %v1795
    %v1847 = vadd.f32 %v1831, %v1846
    %v1848 = vtanh.pop %v1847
    %v1849 = vsub.f32 1.0, %v1845
    %v1850 = vmul.f32 %v1849, %v1848
    %v1851 = vmul.f32 %v1845, %v1631
    %v1852 = vadd.f32 %v1850, %v1851
    %s1853 = scalar_lea.vmem [#allocation22], 16
    %1854 = vst [vmem:[%s1853] sm:$0xff] %v1826
    %s1855 = scalar_lea.vmem [#allocation23], 16
    %1856 = vst [vmem:[%s1855] sm:$0xff] %v1852
    %v1857 = vpack.c.bf16 %v1826, %v1826
    %1858 = vmatprep.subr.bf16.mxu0 %v1007
    %1859 = vmatpush1.bf16.msra.mxu0 %v1006
    %1860 = vmatprep.subr.bf16.mxu0 %v1010
    %1861 = vmatpush1.bf16.msra.mxu0 %v1009
    %1862 = vmatprep.subr.bf16.mxu0 %v1013
    %1863 = vmatpush1.bf16.msra.mxu0 %v1012
    %1864 = vmatprep.subr.bf16.mxu0 %v1016
    %1865 = vmatpush1.bf16.msra.mxu0 %v1015
    %1866 = vmatprep.subr.bf16.mxu0 %v1019
    %1867 = vmatpush1.bf16.msra.mxu0 %v1018
    %1868 = vmatprep.subr.bf16.mxu0 %v1022
    %1869 = vmatpush1.bf16.msra.mxu0 %v1021
    %1870 = vmatprep.subr.bf16.mxu0 %v1025
    %1871 = vmatpush1.bf16.msra.mxu0 %v1024
    %1872 = vmatprep.subr.bf16.mxu0 %v1028
    %1873 = vmatpush1.bf16.msra.mxu0 %v1027
    %1874 = vmatprep.subr.bf16.mxu0 0
    %1875 = vmatpush1.bf16.msra.mxu0 0
    %1876 = vmatprep.subr.bf16.mxu0 0
    %1877 = vmatpush1.bf16.msra.mxu0 0
    %1878 = vmatprep.subr.bf16.mxu0 0
    %1879 = vmatpush1.bf16.msra.mxu0 0
    %1880 = vmatprep.subr.bf16.mxu0 0
    %1881 = vmatpush1.bf16.msra.mxu0 0
    %1882 = vmatprep.subr.bf16.mxu0 0
    %1883 = vmatpush1.bf16.msra.mxu0 0
    %1884 = vmatprep.subr.bf16.mxu0 0
    %1885 = vmatpush1.bf16.msra.mxu0 0
    %1886 = vmatprep.subr.bf16.mxu0 0
    %1887 = vmatpush1.bf16.msra.mxu0 0
    %1888 = vmatprep.subr.bf16.mxu0 0
    %1889 = vmatpush1.bf16.msra.mxu0 0
    %1890 = vmatprep.mubr.bf16.mxu0 0
    %1891 = vmatmul.mubr.bf16.gmra.mrb[0].mxu0 %v1857
    %v1892 = vpop.f32.mrb[0].mxu0
    %v1893 = vadd.f32 %v914, %v1892
    %v1894 = vpop.f32.mrb[0].mxu0
    %v1895 = vadd.f32 %v918, %v1894
    %v1896 = vpop.f32.mrb[0].mxu0
    %v1897 = vpop.f32.mrb[0].mxu0
    %1898 = vdwg.mxu0
    %1899 = vmatprep.subr.bf16.mxu0 0
    %1900 = vmatpush1.bf16.msra.mxu0 %v1008
    %1901 = vmatprep.subr.bf16.mxu0 0
    %1902 = vmatpush1.bf16.msra.mxu0 %v1011
    %1903 = vmatprep.subr.bf16.mxu0 0
    %1904 = vmatpush1.bf16.msra.mxu0 %v1014
    %1905 = vmatprep.subr.bf16.mxu0 0
    %1906 = vmatpush1.bf16.msra.mxu0 %v1017
    %1907 = vmatprep.subr.bf16.mxu0 0
    %1908 = vmatpush1.bf16.msra.mxu0 %v1020
    %1909 = vmatprep.subr.bf16.mxu0 0
    %1910 = vmatpush1.bf16.msra.mxu0 %v1023
    %1911 = vmatprep.subr.bf16.mxu0 0
    %1912 = vmatpush1.bf16.msra.mxu0 %v1026
    %1913 = vmatprep.subr.bf16.mxu0 0
    %1914 = vmatpush1.bf16.msra.mxu0 %v1029
    %1915 = vmatprep.subr.bf16.mxu0 0
    %1916 = vmatpush1.bf16.msra.mxu0 0
    %1917 = vmatprep.subr.bf16.mxu0 0
    %1918 = vmatpush1.bf16.msra.mxu0 0
    %1919 = vmatprep.subr.bf16.mxu0 0
    %1920 = vmatpush1.bf16.msra.mxu0 0
    %1921 = vmatprep.subr.bf16.mxu0 0
    %1922 = vmatpush1.bf16.msra.mxu0 0
    %1923 = vmatprep.subr.bf16.mxu0 0
    %1924 = vmatpush1.bf16.msra.mxu0 0
    %1925 = vmatprep.subr.bf16.mxu0 0
    %1926 = vmatpush1.bf16.msra.mxu0 0
    %1927 = vmatprep.subr.bf16.mxu0 0
    %1928 = vmatpush1.bf16.msra.mxu0 0
    %1929 = vmatprep.subr.bf16.mxu0 0
    %1930 = vmatpush1.bf16.msra.mxu0 0
    %1931 = vmatprep.mubr.bf16.mxu0 0
    %1932 = vmatmul.mubr.bf16.gmra.mrb[0].mxu0 %v1857
    %v1933 = vpop.f32.mrb[0].mxu0
    %v1934 = vadd.f32 %v922, %v1933
    %v1935 = vpop.f32.mrb[0].mxu0
    %v1936 = vpop.f32.mrb[0].mxu0
    %v1937 = vpop.f32.mrb[0].mxu0
    %1938 = vdwg.mxu0
    %v1939 = vpack.c.bf16 %v1852, %v1852
    %1940 = vmatprep.subr.bf16.mxu0 %v1232
    %1941 = vmatpush1.bf16.msra.mxu0 %v1231
    %1942 = vmatprep.subr.bf16.mxu0 %v1235
    %1943 = vmatpush1.bf16.msra.mxu0 %v1234
    %1944 = vmatprep.subr.bf16.mxu0 %v1238
    %1945 = vmatpush1.bf16.msra.mxu0 %v1237
    %1946 = vmatprep.subr.bf16.mxu0 %v1241
    %1947 = vmatpush1.bf16.msra.mxu0 %v1240
    %1948 = vmatprep.subr.bf16.mxu0 %v1244
    %1949 = vmatpush1.bf16.msra.mxu0 %v1243
    %1950 = vmatprep.subr.bf16.mxu0 %v1247
    %1951 = vmatpush1.bf16.msra.mxu0 %v1246
    %1952 = vmatprep.subr.bf16.mxu0 %v1250
    %1953 = vmatpush1.bf16.msra.mxu0 %v1249
    %1954 = vmatprep.subr.bf16.mxu0 %v1253
    %1955 = vmatpush1.bf16.msra.mxu0 %v1252
    %1956 = vmatprep.subr.bf16.mxu0 0
    %1957 = vmatpush1.bf16.msra.mxu0 0
    %1958 = vmatprep.subr.bf16.mxu0 0
    %1959 = vmatpush1.bf16.msra.mxu0 0
    %1960 = vmatprep.subr.bf16.mxu0 0
    %1961 = vmatpush1.bf16.msra.mxu0 0
    %1962 = vmatprep.subr.bf16.mxu0 0
    %1963 = vmatpush1.bf16.msra.mxu0 0
    %1964 = vmatprep.subr.bf16.mxu0 0
    %1965 = vmatpush1.bf16.msra.mxu0 0
    %1966 = vmatprep.subr.bf16.mxu0 0
    %1967 = vmatpush1.bf16.msra.mxu0 0
    %1968 = vmatprep.subr.bf16.mxu0 0
    %1969 = vmatpush1.bf16.msra.mxu0 0
    %1970 = vmatprep.subr.bf16.mxu0 0
    %1971 = vmatpush1.bf16.msra.mxu0 0
    %1972 = vmatprep.mubr.bf16.mxu0 0
    %1973 = vmatmul.mubr.bf16.gmra.mrb[0].mxu0 %v1939
    %v1974 = vpop.f32.mrb[0].mxu0
    %v1975 = vadd.f32 %v1139, %v1974
    %v1976 = vpop.f32.mrb[0].mxu0
    %v1977 = vadd.f32 %v1143, %v1976
    %v1978 = vpop.f32.mrb[0].mxu0
    %v1979 = vpop.f32.mrb[0].mxu0
    %1980 = vdwg.mxu0
    %1981 = vmatprep.subr.bf16.mxu0 0
    %1982 = vmatpush1.bf16.msra.mxu0 %v1233
    %1983 = vmatprep.subr.bf16.mxu0 0
    %1984 = vmatpush1.bf16.msra.mxu0 %v1236
    %1985 = vmatprep.subr.bf16.mxu0 0
    %1986 = vmatpush1.bf16.msra.mxu0 %v1239
    %1987 = vmatprep.subr.bf16.mxu0 0
    %1988 = vmatpush1.bf16.msra.mxu0 %v1242
    %1989 = vmatprep.subr.bf16.mxu0 0
    %1990 = vmatpush1.bf16.msra.mxu0 %v1245
    %1991 = vmatprep.subr.bf16.mxu0 0
    %1992 = vmatpush1.bf16.msra.mxu0 %v1248
    %1993 = vmatprep.subr.bf16.mxu0 0
    %1994 = vmatpush1.bf16.msra.mxu0 %v1251
    %1995 = vmatprep.subr.bf16.mxu0 0
    %1996 = vmatpush1.bf16.msra.mxu0 %v1254
    %1997 = vmatprep.subr.bf16.mxu0 0
    %1998 = vmatpush1.bf16.msra.mxu0 0
    %1999 = vmatprep.subr.bf16.mxu0 0
    %2000 = vmatpush1.bf16.msra.mxu0 0
    %2001 = vmatprep.subr.bf16.mxu0 0
    %2002 = vmatpush1.bf16.msra.mxu0 0
    %2003 = vmatprep.subr.bf16.mxu0 0
    %2004 = vmatpush1.bf16.msra.mxu0 0
    %2005 = vmatprep.subr.bf16.mxu0 0
    %2006 = vmatpush1.bf16.msra.mxu0 0
    %2007 = vmatprep.subr.bf16.mxu0 0
    %2008 = vmatpush1.bf16.msra.mxu0 0
    %2009 = vmatprep.subr.bf16.mxu0 0
    %2010 = vmatpush1.bf16.msra.mxu0 0
    %2011 = vmatprep.subr.bf16.mxu0 0
    %2012 = vmatpush1.bf16.msra.mxu0 0
    %2013 = vmatprep.mubr.bf16.mxu0 0
    %2014 = vmatmul.mubr.bf16.gmra.mrb[0].mxu0 %v1939
    %v2015 = vpop.f32.mrb[0].mxu0
    %v2016 = vadd.f32 %v1147, %v2015
    %v2017 = vpop.f32.mrb[0].mxu0
    %v2018 = vpop.f32.mrb[0].mxu0
    %v2019 = vpop.f32.mrb[0].mxu0
    %2020 = vdwg.mxu0
    %s2021 = smul.u32 3, 3
    %s2022 = smul.addr %s2021, 8
    %s2023 = scalar_lea.vmem [#allocation2], %s2022
    %v2024 = vld [vmem:[%s2023] sm:$0xff]
    %v2025 = vld [vmem:[%s2023 + $0x8] sm:$0xff]
    %v2026 = vld [vmem:[%s2023 + $0x10] sm:$0xff]
    %v2027 = vadd.f32 %v2024, %v1893
    %v2028 = vxor.u32 %v2027, 2147483648
    %v2029 = vmul.f32 %v2028, 1.442695
    %v2030 = vpow.pop %v2029
    %v2031 = vadd.f32 %v2030, 1.0
    %v2032 = vrcp.pop %v2031
    %v2033 = vmul.f32 1.0, %v2032
    %v2034 = vadd.f32 %v2025, %v1895
    %v2035 = vxor.u32 %v2034, 2147483648
    %v2036 = vmul.f32 %v2035, 1.442695
    %v2037 = vpow.pop %v2036
    %v2038 = vadd.f32 %v2037, 1.0
    %v2039 = vrcp.pop %v2038
    %v2040 = vmul.f32 1.0, %v2039
    %v2041 = vmul.f32 %v2033, %v1934
    %v2042 = vadd.f32 %v2026, %v2041
    %v2043 = vtanh.pop %v2042
    %v2044 = vsub.f32 1.0, %v2040
    %v2045 = vmul.f32 %v2044, %v2043
    %v2046 = vmul.f32 %v2040, %v1826
    %v2047 = vadd.f32 %v2045, %v2046
    %s2048 = smul.addr %s2021, 8
    %s2049 = scalar_lea.vmem [#allocation3], %s2048
    %v2050 = vld [vmem:[%s2049] sm:$0xff]
    %v2051 = vld [vmem:[%s2049 + $0x8] sm:$0xff]
    %v2052 = vld [vmem:[%s2049 + $0x10] sm:$0xff]
    %v2053 = vadd.f32 %v2050, %v1975
    %v2054 = vxor.u32 %v2053, 2147483648
    %v2055 = vmul.f32 %v2054, 1.442695
    %v2056 = vpow.pop %v2055
    %v2057 = vadd.f32 %v2056, 1.0
    %v2058 = vrcp.pop %v2057
    %v2059 = vmul.f32 1.0, %v2058
    %v2060 = vadd.f32 %v2051, %v1977
    %v2061 = vxor.u32 %v2060, 2147483648
    %v2062 = vmul.f32 %v2061, 1.442695
    %v2063 = vpow.pop %v2062
    %v2064 = vadd.f32 %v2063, 1.0
    %v2065 = vrcp.pop %v2064
    %v2066 = vmul.f32 1.0, %v2065
    %v2067 = vmul.f32 %v2059, %v2016
    %v2068 = vadd.f32 %v2052, %v2067
    %v2069 = vtanh.pop %v2068
    %v2070 = vsub.f32 1.0, %v2066
    %v2071 = vmul.f32 %v2070, %v2069
    %v2072 = vmul.f32 %v2066, %v1852
    %v2073 = vadd.f32 %v2071, %v2072
    %s2074 = scalar_lea.vmem [#allocation22], 24
    %2075 = vst [vmem:[%s2074] sm:$0xff] %v2047
    %s2076 = scalar_lea.vmem [#allocation23], 24
    %2077 = vst [vmem:[%s2076] sm:$0xff] %v2073
    %v2078 = vpack.c.bf16 %v2047, %v2047
    %2079 = vmatprep.subr.bf16.mxu0 %v1007
    %2080 = vmatpush1.bf16.msra.mxu0 %v1006
    %2081 = vmatprep.subr.bf16.mxu0 %v1010
    %2082 = vmatpush1.bf16.msra.mxu0 %v1009
    %2083 = vmatprep.subr.bf16.mxu0 %v1013
    %2084 = vmatpush1.bf16.msra.mxu0 %v1012
    %2085 = vmatprep.subr.bf16.mxu0 %v1016
    %2086 = vmatpush1.bf16.msra.mxu0 %v1015
    %2087 = vmatprep.subr.bf16.mxu0 %v1019
    %2088 = vmatpush1.bf16.msra.mxu0 %v1018
    %2089 = vmatprep.subr.bf16.mxu0 %v1022
    %2090 = vmatpush1.bf16.msra.mxu0 %v1021
    %2091 = vmatprep.subr.bf16.mxu0 %v1025
    %2092 = vmatpush1.bf16.msra.mxu0 %v1024
    %2093 = vmatprep.subr.bf16.mxu0 %v1028
    %2094 = vmatpush1.bf16.msra.mxu0 %v1027
    %2095 = vmatprep.subr.bf16.mxu0 0
    %2096 = vmatpush1.bf16.msra.mxu0 0
    %2097 = vmatprep.subr.bf16.mxu0 0
    %2098 = vmatpush1.bf16.msra.mxu0 0
    %2099 = vmatprep.subr.bf16.mxu0 0
    %2100 = vmatpush1.bf16.msra.mxu0 0
    %2101 = vmatprep.subr.bf16.mxu0 0
    %2102 = vmatpush1.bf16.msra.mxu0 0
    %2103 = vmatprep.subr.bf16.mxu0 0
    %2104 = vmatpush1.bf16.msra.mxu0 0
    %2105 = vmatprep.subr.bf16.mxu0 0
    %2106 = vmatpush1.bf16.msra.mxu0 0
    %2107 = vmatprep.subr.bf16.mxu0 0
    %2108 = vmatpush1.bf16.msra.mxu0 0
    %2109 = vmatprep.subr.bf16.mxu0 0
    %2110 = vmatpush1.bf16.msra.mxu0 0
    %2111 = vmatprep.mubr.bf16.mxu0 0
    %2112 = vmatmul.mubr.bf16.gmra.mrb[0].mxu0 %v2078
    %v2113 = vpop.f32.mrb[0].mxu0
    %v2114 = vadd.f32 %v914, %v2113
    %v2115 = vpop.f32.mrb[0].mxu0
    %v2116 = vadd.f32 %v918, %v2115
    %v2117 = vpop.f32.mrb[0].mxu0
    %v2118 = vpop.f32.mrb[0].mxu0
    %2119 = vdwg.mxu0
    %2120 = vmatprep.subr.bf16.mxu0 0
    %2121 = vmatpush1.bf16.msra.mxu0 %v1008
    %2122 = vmatprep.subr.bf16.mxu0 0
    %2123 = vmatpush1.bf16.msra.mxu0 %v1011
    %2124 = vmatprep.subr.bf16.mxu0 0
    %2125 = vmatpush1.bf16.msra.mxu0 %v1014
    %2126 = vmatprep.subr.bf16.mxu0 0
    %2127 = vmatpush1.bf16.msra.mxu0 %v1017
    %2128 = vmatprep.subr.bf16.mxu0 0
    %2129 = vmatpush1.bf16.msra.mxu0 %v1020
    %2130 = vmatprep.subr.bf16.mxu0 0
    %2131 = vmatpush1.bf16.msra.mxu0 %v1023
    %2132 = vmatprep.subr.bf16.mxu0 0
    %2133 = vmatpush1.bf16.msra.mxu0 %v1026
    %2134 = vmatprep.subr.bf16.mxu0 0
    %2135 = vmatpush1.bf16.msra.mxu0 %v1029
    %2136 = vmatprep.subr.bf16.mxu0 0
    %2137 = vmatpush1.bf16.msra.mxu0 0
    %2138 = vmatprep.subr.bf16.mxu0 0
    %2139 = vmatpush1.bf16.msra.mxu0 0
    %2140 = vmatprep.subr.bf16.mxu0 0
    %2141 = vmatpush1.bf16.msra.mxu0 0
    %2142 = vmatprep.subr.bf16.mxu0 0
    %2143 = vmatpush1.bf16.msra.mxu0 0
    %2144 = vmatprep.subr.bf16.mxu0 0
    %2145 = vmatpush1.bf16.msra.mxu0 0
    %2146 = vmatprep.subr.bf16.mxu0 0
    %2147 = vmatpush1.bf16.msra.mxu0 0
    %2148 = vmatprep.subr.bf16.mxu0 0
    %2149 = vmatpush1.bf16.msra.mxu0 0
    %2150 = vmatprep.subr.bf16.mxu0 0
    %2151 = vmatpush1.bf16.msra.mxu0 0
    %2152 = vmatprep.mubr.bf16.mxu0 0
    %2153 = vmatmul.mubr.bf16.gmra.mrb[0].mxu0 %v2078
    %v2154 = vpop.f32.mrb[0].mxu0
    %v2155 = vadd.f32 %v922, %v2154
    %v2156 = vpop.f32.mrb[0].mxu0
    %v2157 = vpop.f32.mrb[0].mxu0
    %v2158 = vpop.f32.mrb[0].mxu0
    %2159 = vdwg.mxu0
    %v2160 = vpack.c.bf16 %v2073, %v2073
    %2161 = vmatprep.subr.bf16.mxu0 %v1232
    %2162 = vmatpush1.bf16.msra.mxu0 %v1231
    %2163 = vmatprep.subr.bf16.mxu0 %v1235
    %2164 = vmatpush1.bf16.msra.mxu0 %v1234
    %2165 = vmatprep.subr.bf16.mxu0 %v1238
    %2166 = vmatpush1.bf16.msra.mxu0 %v1237
    %2167 = vmatprep.subr.bf16.mxu0 %v1241
    %2168 = vmatpush1.bf16.msra.mxu0 %v1240
    %2169 = vmatprep.subr.bf16.mxu0 %v1244
    %2170 = vmatpush1.bf16.msra.mxu0 %v1243
    %2171 = vmatprep.subr.bf16.mxu0 %v1247
    %2172 = vmatpush1.bf16.msra.mxu0 %v1246
    %2173 = vmatprep.subr.bf16.mxu0 %v1250
    %2174 = vmatpush1.bf16.msra.mxu0 %v1249
    %2175 = vmatprep.subr.bf16.mxu0 %v1253
    %2176 = vmatpush1.bf16.msra.mxu0 %v1252
    %2177 = vmatprep.subr.bf16.mxu0 0
    %2178 = vmatpush1.bf16.msra.mxu0 0
    %2179 = vmatprep.subr.bf16.mxu0 0
    %2180 = vmatpush1.bf16.msra.mxu0 0
    %2181 = vmatprep.subr.bf16.mxu0 0
    %2182 = vmatpush1.bf16.msra.mxu0 0
    %2183 = vmatprep.subr.bf16.mxu0 0
    %2184 = vmatpush1.bf16.msra.mxu0 0
    %2185 = vmatprep.subr.bf16.mxu0 0
    %2186 = vmatpush1.bf16.msra.mxu0 0
    %2187 = vmatprep.subr.bf16.mxu0 0
    %2188 = vmatpush1.bf16.msra.mxu0 0
    %2189 = vmatprep.subr.bf16.mxu0 0
    %2190 = vmatpush1.bf16.msra.mxu0 0
    %2191 = vmatprep.subr.bf16.mxu0 0
    %2192 = vmatpush1.bf16.msra.mxu0 0
    %2193 = vmatprep.mubr.bf16.mxu0 0
    %2194 = vmatmul.mubr.bf16.gmra.mrb[0].mxu0 %v2160
    %v2195 = vpop.f32.mrb[0].mxu0
    %v2196 = vadd.f32 %v1139, %v2195
    %v2197 = vpop.f32.mrb[0].mxu0
    %v2198 = vadd.f32 %v1143, %v2197
    %v2199 = vpop.f32.mrb[0].mxu0
    %v2200 = vpop.f32.mrb[0].mxu0
    %2201 = vdwg.mxu0
    %2202 = vmatprep.subr.bf16.mxu0 0
    %2203 = vmatpush1.bf16.msra.mxu0 %v1233
    %2204 = vmatprep.subr.bf16.mxu0 0
    %2205 = vmatpush1.bf16.msra.mxu0 %v1236
    %2206 = vmatprep.subr.bf16.mxu0 0
    %2207 = vmatpush1.bf16.msra.mxu0 %v1239
    %2208 = vmatprep.subr.bf16.mxu0 0
    %2209 = vmatpush1.bf16.msra.mxu0 %v1242
    %2210 = vmatprep.subr.bf16.mxu0 0
    %2211 = vmatpush1.bf16.msra.mxu0 %v1245
    %2212 = vmatprep.subr.bf16.mxu0 0
    %2213 = vmatpush1.bf16.msra.mxu0 %v1248
    %2214 = vmatprep.subr.bf16.mxu0 0
    %2215 = vmatpush1.bf16.msra.mxu0 %v1251
    %2216 = vmatprep.subr.bf16.mxu0 0
    %2217 = vmatpush1.bf16.msra.mxu0 %v1254
    %2218 = vmatprep.subr.bf16.mxu0 0
    %2219 = vmatpush1.bf16.msra.mxu0 0
    %2220 = vmatprep.subr.bf16.mxu0 0
    %2221 = vmatpush1.bf16.msra.mxu0 0
    %2222 = vmatprep.subr.bf16.mxu0 0
    %2223 = vmatpush1.bf16.msra.mxu0 0
    %2224 = vmatprep.subr.bf16.mxu0 0
    %2225 = vmatpush1.bf16.msra.mxu0 0
    %2226 = vmatprep.subr.bf16.mxu0 0
    %2227 = vmatpush1.bf16.msra.mxu0 0
    %2228 = vmatprep.subr.bf16.mxu0 0
    %2229 = vmatpush1.bf16.msra.mxu0 0
    %2230 = vmatprep.subr.bf16.mxu0 0
    %2231 = vmatpush1.bf16.msra.mxu0 0
    %2232 = vmatprep.subr.bf16.mxu0 0
    %2233 = vmatpush1.bf16.msra.mxu0 0
    %2234 = vmatprep.mubr.bf16.mxu0 0
    %2235 = vmatmul.mubr.bf16.gmra.mrb[0].mxu0 %v2160
    %v2236 = vpop.f32.mrb[0].mxu0
    %v2237 = vadd.f32 %v1147, %v2236
    %v2238 = vpop.f32.mrb[0].mxu0
    %v2239 = vpop.f32.mrb[0].mxu0
    %v2240 = vpop.f32.mrb[0].mxu0
    %2241 = vdwg.mxu0
    %s2242 = smul.u32 4, 3
    %s2243 = smul.addr %s2242, 8
    %s2244 = scalar_lea.vmem [#allocation2], %s2243
    %v2245 = vld [vmem:[%s2244] sm:$0xff]
    %v2246 = vld [vmem:[%s2244 + $0x8] sm:$0xff]
    %v2247 = vld [vmem:[%s2244 + $0x10] sm:$0xff]
    %v2248 = vadd.f32 %v2245, %v2114
    %v2249 = vxor.u32 %v2248, 2147483648
    %v2250 = vmul.f32 %v2249, 1.442695
    %v2251 = vpow.pop %v2250
    %v2252 = vadd.f32 %v2251, 1.0
    %v2253 = vrcp.pop %v2252
    %v2254 = vmul.f32 1.0, %v2253
    %v2255 = vadd.f32 %v2246, %v2116
    %v2256 = vxor.u32 %v2255, 2147483648
    %v2257 = vmul.f32 %v2256, 1.442695
    %v2258 = vpow.pop %v2257
    %v2259 = vadd.f32 %v2258, 1.0
    %v2260 = vrcp.pop %v2259
    %v2261 = vmul.f32 1.0, %v2260
    %v2262 = vmul.f32 %v2254, %v2155
    %v2263 = vadd.f32 %v2247, %v2262
    %v2264 = vtanh.pop %v2263
    %v2265 = vsub.f32 1.0, %v2261
    %v2266 = vmul.f32 %v2265, %v2264
    %v2267 = vmul.f32 %v2261, %v2047
    %v2268 = vadd.f32 %v2266, %v2267
    %s2269 = smul.addr %s2242, 8
    %s2270 = scalar_lea.vmem [#allocation3], %s2269
    %v2271 = vld [vmem:[%s2270] sm:$0xff]
    %v2272 = vld [vmem:[%s2270 + $0x8] sm:$0xff]
    %v2273 = vld [vmem:[%s2270 + $0x10] sm:$0xff]
    %v2274 = vadd.f32 %v2271, %v2196
    %v2275 = vxor.u32 %v2274, 2147483648
    %v2276 = vmul.f32 %v2275, 1.442695
    %v2277 = vpow.pop %v2276
    %v2278 = vadd.f32 %v2277, 1.0
    %v2279 = vrcp.pop %v2278
    %v2280 = vmul.f32 1.0, %v2279
    %v2281 = vadd.f32 %v2272, %v2198
    %v2282 = vxor.u32 %v2281, 2147483648
    %v2283 = vmul.f32 %v2282, 1.442695
    %v2284 = vpow.pop %v2283
    %v2285 = vadd.f32 %v2284, 1.0
    %v2286 = vrcp.pop %v2285
    %v2287 = vmul.f32 1.0, %v2286
    %v2288 = vmul.f32 %v2280, %v2237
    %v2289 = vadd.f32 %v2273, %v2288
    %v2290 = vtanh.pop %v2289
    %v2291 = vsub.f32 1.0, %v2287
    %v2292 = vmul.f32 %v2291, %v2290
    %v2293 = vmul.f32 %v2287, %v2073
    %v2294 = vadd.f32 %v2292, %v2293
    %s2295 = scalar_lea.vmem [#allocation22], 32
    %2296 = vst [vmem:[%s2295] sm:$0xff] %v2268
    %s2297 = scalar_lea.vmem [#allocation23], 32
    %2298 = vst [vmem:[%s2297] sm:$0xff] %v2294
    // Predicated region
    $region90: #{_mpn_forward.4} parent=1 // pred_check
      _
    $region91: #{_mpn_forward.4} parent=1 // pred_check_branch
      %2300 = sbr.rel (0) target = $region93
    $region92: #{_mpn_forward.4} parent=1 // pred_region
      %s2302 = ssub.s32 640, 640
      %2303 = vsyncadd [#allocation6], %s2302
      %s2304 = sshll.u32 [#allocation22], 4
      %s2305 = int_to_ptr.vmem [resolvable:$true] %s2304
      %2310 = dma.vmem_to_hbm [thread:$0]  %s2305, 640, %s11, [#allocation6], 128, 128, 8
    $region93: #{_mpn_forward.4} parent=1 // pred_fallthru
      _
    // Predicated region
    $region94: #{_mpn_forward.4} parent=1 // pred_check
      _
    $region95: #{_mpn_forward.4} parent=1 // pred_check_branch
      %2312 = sbr.rel (0) target = $region97
    $region96: #{_mpn_forward.4} parent=1 // pred_region
      %s2314 = ssub.s32 640, 640
      %2315 = vsyncadd [#allocation24], %s2314
      %s2316 = sshll.u32 [#allocation23], 4
      %s2317 = int_to_ptr.vmem [resolvable:$true] %s2316
      %2322 = dma.vmem_to_hbm [thread:$0]  %s2317, 640, %s12, [#allocation24], 128, 128, 8
    $region97: #{_mpn_forward.4} parent=1 // pred_fallthru
      _
    // Predicated region
    $region98: #{_mpn_forward.4} parent=1 // pred_check
      _
    $region99: #{_mpn_forward.4} parent=1 // pred_check_branch
      %2324 = sbr.rel (0) target = $region101
    $region100: #{_mpn_forward.4} parent=1 // pred_region
      %2325 = dma.done [#allocation6], 640
    $region101: #{_mpn_forward.4} parent=1 // pred_fallthru
      _
    // Predicated region
    $region102: #{_mpn_forward.4} parent=1 // pred_check
      _
    $region103: #{_mpn_forward.4} parent=1 // pred_check_branch
      %2327 = sbr.rel (0) target = $region105
    $region104: #{_mpn_forward.4} parent=1 // pred_region
      %2328 = dma.done [#allocation24], 640
    $region105: #{_mpn_forward.4} parent=1 // pred_fallthru
      _
    %2329 = vsyncpa [#allocation5], 1
    %2330 = vsyncpa [#allocation8], 1
    %2331 = vsyncpa [#allocation11], 1
    %2332 = vsyncpa [#allocation14], 1
    %2333 = vsyncpa [#allocation17], 1
    %2334 = vsyncpa [#allocation20], 1
    %2335 = vsyncpa [#allocation6], 1
    %2336 = vsyncpa [#allocation24], 1

</llo_original>
